<compile_context>
chip_gen: v7x
topology: tpu7x:2x2x1
jax: 0.10.0
libtpu: 0.0.40
codegen_flags: <defaults>
</compile_context>

<pallas_src>
import jax
import jax.numpy as jnp
from jax import lax
from jax.experimental import pallas as pl
from jax.experimental.pallas import tpu as pltpu


_PADW = 8  # sublane-aligned left offset of the conv interior inside scratch


# ---------------------------------------------------------------------------
# Kernel A: AttentionGate 1x1 convs (fused) on the low-res grid.
#   att = sigmoid( relu([x@Wg+bg , x_ds@Wx+bx]) @ Wsi + bsi )
# The channel concat before the si conv is expressed by splitting Wsi.
# ---------------------------------------------------------------------------
def attention_gate_kernel(x_ref, xd_ref, wg_ref, bg_ref, wx_ref, bx_ref,
                          wsig_ref, wsix_ref, bsi_ref, att_ref):
    g = jnp.dot(x_ref[...], wg_ref[...],
                preferred_element_type=jnp.float32) + bg_ref[...]
    s = jnp.dot(xd_ref[...], wx_ref[...],
                preferred_element_type=jnp.float32) + bx_ref[...]
    g = jnp.maximum(g, 0.0)
    s = jnp.maximum(s, 0.0)
    # 1x1 conv down to a single channel == weighted cross-lane reduction.
    logit = (jnp.sum(g * wsig_ref[...], axis=1, keepdims=True)
             + jnp.sum(s * wsix_ref[...], axis=1, keepdims=True)
             + bsi_ref[...])
    att_ref[...] = jax.nn.sigmoid(logit)


def attention_gate(x2d, xd2d, params):
    m = x2d.shape[0]
    out_c = xd2d.shape[-1]
    wsi = params["wsi"]  # (2*out_c, 1); rows ordered [g-branch, skip-branch]
    vspec = pl.BlockSpec(memory_space=pltpu.MemorySpace.VMEM)
    return pl.pallas_call(
        attention_gate_kernel,
        out_shape=jax.ShapeDtypeStruct((m, 1), jnp.float32),
        in_specs=[vspec] * 9,
        out_specs=vspec,
    )(x2d, xd2d,
      params["wg"], params["bg"].reshape(1, out_c),
      params["wx"], params["bx"].reshape(1, out_c),
      wsi[:out_c, 0].reshape(1, out_c), wsi[out_c:, 0].reshape(1, out_c),
      params["bsi"].reshape(1, 1))


# ---------------------------------------------------------------------------
# Kernel B: gating * skip, concat (via split weights), conv3x3, conv3x3, ReLU.
# All intermediates (padded operands, conv1 activation) stay in VMEM.
# ---------------------------------------------------------------------------
def _accum_conv3x3(xpad, w, hh, wh, acc):
    """Accumulate a 3x3 conv as 9 shifted [hh*wh, Cin] x [Cin, Cout] matmuls."""
    cin = xpad.shape[-1]
    for dy in range(3):
        for dx in range(3):
            patch = xpad[dy:dy + hh, _PADW - 1 + dx:_PADW - 1 + dx + wh, :]
            acc = acc + jnp.dot(patch.reshape(hh * wh, cin), w[dy, dx],
                                preferred_element_type=jnp.float32)
    return acc


def upsample_block_kernel(xup_ref, inter_ref, att_ref,
                          w1x_ref, w1g_ref, b1_ref, w2_ref, b2_ref,
                          o_ref, pad_a, pad_b, pad_c):
    hh, wh, _ = xup_ref.shape
    out_c = inter_ref.shape[-1]

    # Hoisted weight / bias loads (outside the tap loops).
    w1x = w1x_ref[...]
    w1g = w1g_ref[...]
    w2 = w2_ref[...]
    b1 = b1_ref[...]
    b2 = b2_ref[...]

    # Attention gating (VPU, broadcast along the channel/lane dim) and
    # zero-padded operands built directly in VMEM scratch.  Interior stores
    # are sublane-aligned (column offset _PADW); only tap reads are shifted.
    pad_a[...] = jnp.zeros_like(pad_a)
    pad_b[...] = jnp.zeros_like(pad_b)
    pad_c[...] = jnp.zeros_like(pad_c)
    pad_a[1:hh + 1, _PADW:_PADW + wh, :] = xup_ref[...]
    pad_b[1:hh + 1, _PADW:_PADW + wh, :] = inter_ref[...] * att_ref[...]

    # conv1 over concat([x_up, gated]) via split weights (no concat op), + b1.
    acc = jnp.zeros((hh * wh, out_c), jnp.float32)
    acc = _accum_conv3x3(pad_a[...], w1x, hh, wh, acc)
    acc = _accum_conv3x3(pad_b[...], w1g, hh, wh, acc)
    acc = acc + b1                                     # conv1: no ReLU

    # conv1 activation never leaves VMEM: re-pad it for conv2.
    pad_c[1:hh + 1, _PADW:_PADW + wh, :] = acc.reshape(hh, wh, out_c)

    acc2 = jnp.zeros((hh * wh, out_c), jnp.float32)
    acc2 = _accum_conv3x3(pad_c[...], w2, hh, wh, acc2)
    acc2 = jnp.maximum(acc2 + b2, 0.0)                 # ConvLayers' final ReLU
    o_ref[...] = acc2.reshape(hh, wh, out_c).astype(o_ref.dtype)


def upsample_convs(x_up, inter, att_up, params):
    n, hh, wh, in_c = x_up.shape
    out_c = inter.shape[-1]
    w1 = params["w1"]                                   # (3,3,in_c+out_c,out_c)
    w1x, w1g = w1[:, :, :in_c, :], w1[:, :, in_c:, :]
    w2 = params["w2"]
    b1 = params["b1"].reshape(1, out_c)
    b2 = params["b2"].reshape(1, out_c)

    def batched(c):
        return pl.BlockSpec((None, hh, wh, c), lambda i: (i, 0, 0, 0))

    def replicated(shape):
        nd = len(shape)
        return pl.BlockSpec(shape, lambda i: (0,) * nd)

    flops = int(2 * n * hh * wh * 9 * ((in_c + out_c) * out_c + out_c * out_c))
    bytes_accessed = int(4 * (x_up.size + inter.size + att_up.size + w1.size
                              + w2.size + 2 * out_c + n * hh * wh * out_c))

    return pl.pallas_call(
        upsample_block_kernel,
        grid=(n,),
        out_shape=jax.ShapeDtypeStruct((n, hh, wh, out_c), jnp.float32),
        in_specs=[batched(in_c), batched(out_c), batched(1),
                  replicated(w1x.shape), replicated(w1g.shape),
                  replicated(b1.shape), replicated(w2.shape),
                  replicated(b2.shape)],
        out_specs=batched(out_c),
        scratch_shapes=[
            pltpu.VMEM((hh + 2, wh + 2 * _PADW, in_c), jnp.float32),
            pltpu.VMEM((hh + 2, wh + 2 * _PADW, out_c), jnp.float32),
            pltpu.VMEM((hh + 2, wh + 2 * _PADW, out_c), jnp.float32),
        ],
        compiler_params=pltpu.CompilerParams(
            dimension_semantics=("parallel",)),
        cost_estimate=pl.CostEstimate(flops=flops, transcendentals=0,
                                      bytes_accessed=bytes_accessed),
    )(x_up, inter, att_up, w1x, w1g, b1, w2, b2)


# ---------------------------------------------------------------------------
# UpSampling module: params + forward
# ---------------------------------------------------------------------------
def init_params(key, in_c, out_c):
    def w(k, shape):
        return 0.1 * jax.random.normal(k, shape, jnp.float32)
    ks = jax.random.split(key, 10)
    return {
        "wg": w(ks[0], (in_c, out_c)),   "bg": w(ks[1], (out_c,)),
        "wx": w(ks[2], (out_c, out_c)),  "bx": w(ks[3], (out_c,)),
        "wsi": w(ks[4], (2 * out_c, 1)), "bsi": w(ks[5], (1,)),
        "w1": w(ks[6], (3, 3, in_c + out_c, out_c)), "b1": w(ks[7], (out_c,)),
        "w2": w(ks[8], (3, 3, out_c, out_c)),        "b2": w(ks[9], (out_c,)),
    }


def upsampling_forward(params, x_nchw, inter_nchw):
    """x: (N, in_c, H, W); intermediate_value: (N, out_c, 2H, 2W) -> NCHW out."""
    n, in_c, h, w = x_nchw.shape
    out_c = inter_nchw.shape[1]

    x = jnp.transpose(x_nchw, (0, 2, 3, 1))           # (n, h, w, in_c)
    inter = jnp.transpose(inter_nchw, (0, 2, 3, 1))   # (n, 2h, 2w, out_c)

    # AttentionGate: all compute on the low-res grid inside kernel A.
    inter_ds = inter[:, ::2, ::2, :]                  # 1x1 / stride-2 sampling
    att = attention_gate(x.reshape(n * h * w, in_c),
                         inter_ds.reshape(n * h * w, out_c), params)
    att = att.reshape(n, h, w, 1)

    # Nearest 2x upsamples are pure data movement -> left to XLA.
    att_up = jnp.repeat(jnp.repeat(att, 2, axis=1), 2, axis=2)
    x_up = jnp.repeat(jnp.repeat(x, 2, axis=1), 2, axis=2)

    y = upsample_convs(x_up, inter, att_up, params)   # (n, 2h, 2w, out_c)
    return jnp.transpose(y, (0, 3, 1, 2))


# ---------------------------------------------------------------------------
# Pure-JAX reference for verification
# ---------------------------------------------------------------------------
def _conv_nhwc(x, w_hwio, b, stride, padding):
    y = lax.conv_general_dilated(
        x, w_hwio, window_strides=(stride, stride), padding=padding,
        dimension_numbers=("NHWC", "HWIO", "NHWC"))
    return y + b


def upsampling_ref(params, x_nchw, inter_nchw):
    x = jnp.transpose(x_nchw, (0, 2, 3, 1))
    inter = jnp.transpose(inter_nchw, (0, 2, 3, 1))
    in_c, out_c = x.shape[-1], inter.shape[-1]
    g = _conv_nhwc(x, params["wg"].reshape(1, 1, in_c, out_c),
                   params["bg"], 1, "VALID")
    s = _conv_nhwc(inter, params["wx"].reshape(1, 1, out_c, out_c),
                   params["bx"], 2, "VALID")
    cat = jnp.maximum(jnp.concatenate([g, s], axis=-1), 0.0)
    att = jax.nn.sigmoid(_conv_nhwc(
        cat, params["wsi"].reshape(1, 1, 2 * out_c, 1),
        params["bsi"], 1, "VALID"))
    att_up = jnp.repeat(jnp.repeat(att, 2, axis=1), 2, axis=2)
    x_up = jnp.repeat(jnp.repeat(x, 2, axis=1), 2, axis=2)
    cat2 = jnp.concatenate([x_up, inter * att_up], axis=-1)
    y = _conv_nhwc(cat2, params["w1"], params["b1"], 1, "SAME")
    y = _conv_nhwc(y, params["w2"], params["b2"], 1, "SAME")
    return jnp.transpose(jnp.maximum(y, 0.0), (0, 3, 1, 2))


# ---------------------------------------------------------------------------
if __name__ == "__main__":
    key = jax.random.PRNGKey(0)
    n, in_c, out_c, h, w = 2, 4, 8, 8, 8

    kx, ki, kp = jax.random.split(key, 3)
    x = jax.random.normal(kx, (n, in_c, h, w), jnp.float32)               # NCHW
    inter = jax.random.normal(ki, (n, out_c, 2 * h, 2 * w), jnp.float32)  # NCHW
    params = init_params(kp, in_c, out_c)

    y = jax.jit(upsampling_forward)(params, x, inter)
    jax.block_until_ready(y)

    y_ref = upsampling_ref(params, x, inter)
    assert y.shape == (n, out_c, 2 * h, 2 * w)
    assert jnp.allclose(y, y_ref, atol=1e-4, rtol=1e-4), float(
        jnp.max(jnp.abs(y - y_ref)))

    print("KERNEL_OK")
</pallas_src>

<mosaic_0001>
module attributes {stable_mosaic.version = 11 : i64} {
  func.func @attention_gate_kernel(%arg0: memref<128x4xf32, #tpu.memory_space<vmem>>, %arg1: memref<128x8xf32, #tpu.memory_space<vmem>>, %arg2: memref<4x8xf32, #tpu.memory_space<vmem>>, %arg3: memref<1x8xf32, #tpu.memory_space<vmem>>, %arg4: memref<8x8xf32, #tpu.memory_space<vmem>>, %arg5: memref<1x8xf32, #tpu.memory_space<vmem>>, %arg6: memref<1x8xf32, #tpu.memory_space<vmem>>, %arg7: memref<1x8xf32, #tpu.memory_space<vmem>>, %arg8: memref<1x1xf32, #tpu.memory_space<vmem>>, %arg9: memref<128x1xf32, #tpu.memory_space<vmem>>) attributes {dimension_semantics = [], scalar_prefetch = 0 : i64, scratch_operands = 0 : i64, tpu.core_type = #tpu.core_type<tc>} {
    %c0 = arith.constant 0 : index
    %c0_0 = arith.constant 0 : index
    %0 = vector.load %arg0[%c0, %c0_0] : memref<128x4xf32, #tpu.memory_space<vmem>>, vector<128x4xf32>
    %c0_1 = arith.constant 0 : index
    %c0_2 = arith.constant 0 : index
    %1 = vector.load %arg2[%c0_1, %c0_2] : memref<4x8xf32, #tpu.memory_space<vmem>>, vector<4x8xf32>
    %cst = arith.constant dense<0.000000e+00> : vector<128x8xf32>
    %2 = tpu.matmul %0, %1, %cst {dimension_numbers = #tpu.dot_dimension_numbers<[1], [0], [0], [1], [0, 0, 1, 1], [], []>} : vector<128x4xf32>, vector<4x8xf32>, vector<128x8xf32> -> vector<128x8xf32>
    %c0_3 = arith.constant 0 : index
    %c0_4 = arith.constant 0 : index
    %3 = vector.load %arg3[%c0_3, %c0_4] : memref<1x8xf32, #tpu.memory_space<vmem>>, vector<1x8xf32>
    %4 = vector.broadcast %3 : vector<1x8xf32> to vector<128x8xf32>
    %5 = arith.addf %2, %4 : vector<128x8xf32>
    %c0_5 = arith.constant 0 : index
    %c0_6 = arith.constant 0 : index
    %6 = vector.load %arg1[%c0_5, %c0_6] : memref<128x8xf32, #tpu.memory_space<vmem>>, vector<128x8xf32>
    %c0_7 = arith.constant 0 : index
    %c0_8 = arith.constant 0 : index
    %7 = vector.load %arg4[%c0_7, %c0_8] : memref<8x8xf32, #tpu.memory_space<vmem>>, vector<8x8xf32>
    %cst_9 = arith.constant dense<0.000000e+00> : vector<128x8xf32>
    %8 = tpu.matmul %6, %7, %cst_9 {dimension_numbers = #tpu.dot_dimension_numbers<[1], [0], [0], [1], [0, 0, 1, 1], [], []>} : vector<128x8xf32>, vector<8x8xf32>, vector<128x8xf32> -> vector<128x8xf32>
    %c0_10 = arith.constant 0 : index
    %c0_11 = arith.constant 0 : index
    %9 = vector.load %arg5[%c0_10, %c0_11] : memref<1x8xf32, #tpu.memory_space<vmem>>, vector<1x8xf32>
    %10 = vector.broadcast %9 : vector<1x8xf32> to vector<128x8xf32>
    %11 = arith.addf %8, %10 : vector<128x8xf32>
    %cst_12 = arith.constant 0.000000e+00 : f32
    %12 = vector.broadcast %cst_12 : f32 to vector<128x8xf32>
    %13 = arith.maximumf %5, %12 : vector<128x8xf32>
    %cst_13 = arith.constant 0.000000e+00 : f32
    %14 = vector.broadcast %cst_13 : f32 to vector<128x8xf32>
    %15 = arith.maximumf %11, %14 : vector<128x8xf32>
    %c0_14 = arith.constant 0 : index
    %c0_15 = arith.constant 0 : index
    %16 = vector.load %arg6[%c0_14, %c0_15] : memref<1x8xf32, #tpu.memory_space<vmem>>, vector<1x8xf32>
    %17 = vector.broadcast %16 : vector<1x8xf32> to vector<128x8xf32>
    %18 = arith.mulf %13, %17 : vector<128x8xf32>
    %cst_16 = arith.constant dense<0.000000e+00> : vector<128xf32>
    %19 = vector.multi_reduction <add>, %18, %cst_16 [1] : vector<128x8xf32> to vector<128xf32>
    %20 = vector.shape_cast %19 : vector<128xf32> to vector<128x1xf32>
    %c0_17 = arith.constant 0 : index
    %c0_18 = arith.constant 0 : index
    %21 = vector.load %arg7[%c0_17, %c0_18] : memref<1x8xf32, #tpu.memory_space<vmem>>, vector<1x8xf32>
    %22 = vector.broadcast %21 : vector<1x8xf32> to vector<128x8xf32>
    %23 = arith.mulf %15, %22 : vector<128x8xf32>
    %cst_19 = arith.constant dense<0.000000e+00> : vector<128xf32>
    %24 = vector.multi_reduction <add>, %23, %cst_19 [1] : vector<128x8xf32> to vector<128xf32>
    %25 = vector.shape_cast %24 : vector<128xf32> to vector<128x1xf32>
    %26 = arith.addf %20, %25 : vector<128x1xf32>
    %c0_20 = arith.constant 0 : index
    %c0_21 = arith.constant 0 : index
    %27 = vector.load %arg8[%c0_20, %c0_21] : memref<1x1xf32, #tpu.memory_space<vmem>>, vector<1x1xf32>
    %28 = vector.broadcast %27 : vector<1x1xf32> to vector<128x1xf32>
    %29 = arith.addf %26, %28 : vector<128x1xf32>
    %30 = arith.negf %29 : vector<128x1xf32>
    %31 = math.exp %30 : vector<128x1xf32>
    %cst_22 = arith.constant 1.000000e+00 : f32
    %32 = vector.broadcast %cst_22 : f32 to vector<128x1xf32>
    %33 = arith.addf %32, %31 : vector<128x1xf32>
    %34 = arith.divf %32, %33 : vector<128x1xf32>
    %c0_23 = arith.constant 0 : index
    %c0_24 = arith.constant 0 : index
    %35 = vector.load %arg9[%c0_23, %c0_24] : memref<128x1xf32, #tpu.memory_space<vmem>>, vector<128x1xf32>
    tpu.vector_store %arg9[%c0_23, %c0_24], %34 {strides = array<i32>} : memref<128x1xf32, #tpu.memory_space<vmem>>, vector<128x1xf32>,
    return
  }
}

module attributes {stable_mosaic.version = 11 : i64} {
  func.func @upsample_block_kernel(%arg0: i32, %arg1: memref<1x16x16x4xf32, #tpu.memory_space<vmem>>, %arg2: memref<1x16x16x8xf32, #tpu.memory_space<vmem>>, %arg3: memref<1x16x16x1xf32, #tpu.memory_space<vmem>>, %arg4: memref<3x3x4x8xf32, #tpu.memory_space<vmem>>, %arg5: memref<3x3x8x8xf32, #tpu.memory_space<vmem>>, %arg6: memref<1x8xf32, #tpu.memory_space<vmem>>, %arg7: memref<3x3x8x8xf32, #tpu.memory_space<vmem>>, %arg8: memref<1x8xf32, #tpu.memory_space<vmem>>, %arg9: memref<1x16x16x8xf32, #tpu.memory_space<vmem>>, %arg10: memref<18x32x4xf32, #tpu.memory_space<vmem>>, %arg11: memref<18x32x8xf32, #tpu.memory_space<vmem>>, %arg12: memref<18x32x8xf32, #tpu.memory_space<vmem>>) attributes {dimension_semantics = [#tpu.dimension_semantics<parallel>], iteration_bounds = array<i64: 2>, scalar_prefetch = 0 : i64, scratch_operands = 3 : i64, tpu.core_type = #tpu.core_type<tc>, window_params = [{transform_indices = @transform_0, window_bounds = array<i64: 1, 16, 16, 4>}, {transform_indices = @transform_1, window_bounds = array<i64: 1, 16, 16, 8>}, {transform_indices = @transform_2, window_bounds = array<i64: 1, 16, 16, 1>}, {pipeline_mode = #tpu.pipeline_mode<synchronous>, transform_indices = @transform_3, window_bounds = array<i64: 3, 3, 4, 8>}, {pipeline_mode = #tpu.pipeline_mode<synchronous>, transform_indices = @transform_4, window_bounds = array<i64: 3, 3, 8, 8>}, {pipeline_mode = #tpu.pipeline_mode<synchronous>, transform_indices = @transform_5, window_bounds = array<i64: 1, 8>}, {pipeline_mode = #tpu.pipeline_mode<synchronous>, transform_indices = @transform_6, window_bounds = array<i64: 3, 3, 8, 8>}, {pipeline_mode = #tpu.pipeline_mode<synchronous>, transform_indices = @transform_7, window_bounds = array<i64: 1, 8>}, {transform_indices = @transform_8, window_bounds = array<i64: 1, 16, 16, 8>}]} {
    %c0 = arith.constant 0 : index
    %c0_0 = arith.constant 0 : index
    %c0_1 = arith.constant 0 : index
    %c0_2 = arith.constant 0 : index
    %0 = vector.load %arg4[%c0, %c0_0, %c0_1, %c0_2] : memref<3x3x4x8xf32, #tpu.memory_space<vmem>>, vector<3x3x4x8xf32>
    %c0_3 = arith.constant 0 : index
    %c0_4 = arith.constant 0 : index
    %c0_5 = arith.constant 0 : index
    %c0_6 = arith.constant 0 : index
    %1 = vector.load %arg5[%c0_3, %c0_4, %c0_5, %c0_6] : memref<3x3x8x8xf32, #tpu.memory_space<vmem>>, vector<3x3x8x8xf32>
    %c0_7 = arith.constant 0 : index
    %c0_8 = arith.constant 0 : index
    %c0_9 = arith.constant 0 : index
    %c0_10 = arith.constant 0 : index
    %2 = vector.load %arg7[%c0_7, %c0_8, %c0_9, %c0_10] : memref<3x3x8x8xf32, #tpu.memory_space<vmem>>, vector<3x3x8x8xf32>
    %c0_11 = arith.constant 0 : index
    %c0_12 = arith.constant 0 : index
    %3 = vector.load %arg6[%c0_11, %c0_12] : memref<1x8xf32, #tpu.memory_space<vmem>>, vector<1x8xf32>
    %c0_13 = arith.constant 0 : index
    %c0_14 = arith.constant 0 : index
    %4 = vector.load %arg8[%c0_13, %c0_14] : memref<1x8xf32, #tpu.memory_space<vmem>>, vector<1x8xf32>
    %cst = arith.constant 0.000000e+00 : f32
    %5 = vector.broadcast %cst : f32 to vector<18x32x4xf32>
    %c0_15 = arith.constant 0 : index
    %c0_16 = arith.constant 0 : index
    %c0_17 = arith.constant 0 : index
    %6 = vector.load %arg10[%c0_15, %c0_16, %c0_17] : memref<18x32x4xf32, #tpu.memory_space<vmem>>, vector<18x32x4xf32>
    tpu.vector_store %arg10[%c0_15, %c0_16, %c0_17], %5 {strides = array<i32>} : memref<18x32x4xf32, #tpu.memory_space<vmem>>, vector<18x32x4xf32>,
    %cst_18 = arith.constant 0.000000e+00 : f32
    %7 = vector.broadcast %cst_18 : f32 to vector<18x32x8xf32>
    %c0_19 = arith.constant 0 : index
    %c0_20 = arith.constant 0 : index
    %c0_21 = arith.constant 0 : index
    %8 = vector.load %arg11[%c0_19, %c0_20, %c0_21] : memref<18x32x8xf32, #tpu.memory_space<vmem>>, vector<18x32x8xf32>
    tpu.vector_store %arg11[%c0_19, %c0_20, %c0_21], %7 {strides = array<i32>} : memref<18x32x8xf32, #tpu.memory_space<vmem>>, vector<18x32x8xf32>,
    %cst_22 = arith.constant 0.000000e+00 : f32
    %9 = vector.broadcast %cst_22 : f32 to vector<18x32x8xf32>
    %c0_23 = arith.constant 0 : index
    %c0_24 = arith.constant 0 : index
    %c0_25 = arith.constant 0 : index
    %10 = vector.load %arg12[%c0_23, %c0_24, %c0_25] : memref<18x32x8xf32, #tpu.memory_space<vmem>>, vector<18x32x8xf32>
    tpu.vector_store %arg12[%c0_23, %c0_24, %c0_25], %9 {strides = array<i32>} : memref<18x32x8xf32, #tpu.memory_space<vmem>>, vector<18x32x8xf32>,
    %c0_26 = arith.constant 0 : index
    %c0_27 = arith.constant 0 : index
    %c0_28 = arith.constant 0 : index
    %c0_29 = arith.constant 0 : index
    %11 = vector.load %arg1[%c0_26, %c0_27, %c0_28, %c0_29] : memref<1x16x16x4xf32, #tpu.memory_space<vmem>>, vector<1x16x16x4xf32>
    %12 = vector.shape_cast %11 : vector<1x16x16x4xf32> to vector<16x16x4xf32>
    %c1 = arith.constant 1 : index
    %c8 = arith.constant 8 : index
    %c0_30 = arith.constant 0 : index
    %13 = vector.load %arg10[%c1, %c8, %c0_30] : memref<18x32x4xf32, #tpu.memory_space<vmem>>, vector<16x16x4xf32>
    tpu.vector_store %arg10[%c1, %c8, %c0_30], %12 {strides = array<i32>} : memref<18x32x4xf32, #tpu.memory_space<vmem>>, vector<16x16x4xf32>,
    %c0_31 = arith.constant 0 : index
    %c0_32 = arith.constant 0 : index
    %c0_33 = arith.constant 0 : index
    %c0_34 = arith.constant 0 : index
    %14 = vector.load %arg2[%c0_31, %c0_32, %c0_33, %c0_34] : memref<1x16x16x8xf32, #tpu.memory_space<vmem>>, vector<1x16x16x8xf32>
    %15 = vector.shape_cast %14 : vector<1x16x16x8xf32> to vector<16x16x8xf32>
    %c0_35 = arith.constant 0 : index
    %c0_36 = arith.constant 0 : index
    %c0_37 = arith.constant 0 : index
    %c0_38 = arith.constant 0 : index
    %16 = vector.load %arg3[%c0_35, %c0_36, %c0_37, %c0_38] : memref<1x16x16x1xf32, #tpu.memory_space<vmem>>, vector<1x16x16x1xf32>
    %17 = vector.shape_cast %16 : vector<1x16x16x1xf32> to vector<16x16x1xf32>
    %18 = vector.broadcast %17 : vector<16x16x1xf32> to vector<16x16x8xf32>
    %19 = arith.mulf %15, %18 : vector<16x16x8xf32>
    %c1_39 = arith.constant 1 : index
    %c8_40 = arith.constant 8 : index
    %c0_41 = arith.constant 0 : index
    %20 = vector.load %arg11[%c1_39, %c8_40, %c0_41] : memref<18x32x8xf32, #tpu.memory_space<vmem>>, vector<16x16x8xf32>
    tpu.vector_store %arg11[%c1_39, %c8_40, %c0_41], %19 {strides = array<i32>} : memref<18x32x8xf32, #tpu.memory_space<vmem>>, vector<16x16x8xf32>,
    %cst_42 = arith.constant 0.000000e+00 : f32
    %21 = vector.broadcast %cst_42 : f32 to vector<256x8xf32>
    %c0_43 = arith.constant 0 : index
    %c0_44 = arith.constant 0 : index
    %c0_45 = arith.constant 0 : index
    %22 = vector.load %arg10[%c0_43, %c0_44, %c0_45] : memref<18x32x4xf32, #tpu.memory_space<vmem>>, vector<18x32x4xf32>
    %23 = vector.extract_strided_slice %22 {offsets = [0, 7, 0], sizes = [16, 16, 4], strides = [1, 1, 1]} : vector<18x32x4xf32> to vector<16x16x4xf32>
    %24 = vector.shape_cast %23 : vector<16x16x4xf32> to vector<256x4xf32>
    %25 = vector.extract_strided_slice %0 {offsets = [0, 0, 0, 0], sizes = [1, 1, 4, 8], strides = [1, 1, 1, 1]} : vector<3x3x4x8xf32> to vector<1x1x4x8xf32>
    %26 = vector.shape_cast %25 : vector<1x1x4x8xf32> to vector<4x8xf32>
    %cst_46 = arith.constant dense<0.000000e+00> : vector<256x8xf32>
    %27 = tpu.matmul %24, %26, %cst_46 {dimension_numbers = #tpu.dot_dimension_numbers<[1], [0], [0], [1], [0, 0, 1, 1], [], []>} : vector<256x4xf32>, vector<4x8xf32>, vector<256x8xf32> -> vector<256x8xf32>
    %28 = arith.addf %21, %27 : vector<256x8xf32>
    %29 = vector.extract_strided_slice %22 {offsets = [0, 8, 0], sizes = [16, 16, 4], strides = [1, 1, 1]} : vector<18x32x4xf32> to vector<16x16x4xf32>
    %30 = vector.shape_cast %29 : vector<16x16x4xf32> to vector<256x4xf32>
    %31 = vector.extract_strided_slice %0 {offsets = [0, 1, 0, 0], sizes = [1, 1, 4, 8], strides = [1, 1, 1, 1]} : vector<3x3x4x8xf32> to vector<1x1x4x8xf32>
    %32 = vector.shape_cast %31 : vector<1x1x4x8xf32> to vector<4x8xf32>
    %cst_47 = arith.constant dense<0.000000e+00> : vector<256x8xf32>
    %33 = tpu.matmul %30, %32, %cst_47 {dimension_numbers = #tpu.dot_dimension_numbers<[1], [0], [0], [1], [0, 0, 1, 1], [], []>} : vector<256x4xf32>, vector<4x8xf32>, vector<256x8xf32> -> vector<256x8xf32>
    %34 = arith.addf %28, %33 : vector<256x8xf32>
    %35 = vector.extract_strided_slice %22 {offsets = [0, 9, 0], sizes = [16, 16, 4], strides = [1, 1, 1]} : vector<18x32x4xf32> to vector<16x16x4xf32>
    %36 = vector.shape_cast %35 : vector<16x16x4xf32> to vector<256x4xf32>
    %37 = vector.extract_strided_slice %0 {offsets = [0, 2, 0, 0], sizes = [1, 1, 4, 8], strides = [1, 1, 1, 1]} : vector<3x3x4x8xf32> to vector<1x1x4x8xf32>
    %38 = vector.shape_cast %37 : vector<1x1x4x8xf32> to vector<4x8xf32>
    %cst_48 = arith.constant dense<0.000000e+00> : vector<256x8xf32>
    %39 = tpu.matmul %36, %38, %cst_48 {dimension_numbers = #tpu.dot_dimension_numbers<[1], [0], [0], [1], [0, 0, 1, 1], [], []>} : vector<256x4xf32>, vector<4x8xf32>, vector<256x8xf32> -> vector<256x8xf32>
    %40 = arith.addf %34, %39 : vector<256x8xf32>
    %41 = vector.extract_strided_slice %22 {offsets = [1, 7, 0], sizes = [16, 16, 4], strides = [1, 1, 1]} : vector<18x32x4xf32> to vector<16x16x4xf32>
    %42 = vector.shape_cast %41 : vector<16x16x4xf32> to vector<256x4xf32>
    %43 = vector.extract_strided_slice %0 {offsets = [1, 0, 0, 0], sizes = [1, 1, 4, 8], strides = [1, 1, 1, 1]} : vector<3x3x4x8xf32> to vector<1x1x4x8xf32>
    %44 = vector.shape_cast %43 : vector<1x1x4x8xf32> to vector<4x8xf32>
    %cst_49 = arith.constant dense<0.000000e+00> : vector<256x8xf32>
    %45 = tpu.matmul %42, %44, %cst_49 {dimension_numbers = #tpu.dot_dimension_numbers<[1], [0], [0], [1], [0, 0, 1, 1], [], []>} : vector<256x4xf32>, vector<4x8xf32>, vector<256x8xf32> -> vector<256x8xf32>
    %46 = arith.addf %40, %45 : vector<256x8xf32>
    %47 = vector.extract_strided_slice %22 {offsets = [1, 8, 0], sizes = [16, 16, 4], strides = [1, 1, 1]} : vector<18x32x4xf32> to vector<16x16x4xf32>
    %48 = vector.shape_cast %47 : vector<16x16x4xf32> to vector<256x4xf32>
    %49 = vector.extract_strided_slice %0 {offsets = [1, 1, 0, 0], sizes = [1, 1, 4, 8], strides = [1, 1, 1, 1]} : vector<3x3x4x8xf32> to vector<1x1x4x8xf32>
    %50 = vector.shape_cast %49 : vector<1x1x4x8xf32> to vector<4x8xf32>
    %cst_50 = arith.constant dense<0.000000e+00> : vector<256x8xf32>
    %51 = tpu.matmul %48, %50, %cst_50 {dimension_numbers = #tpu.dot_dimension_numbers<[1], [0], [0], [1], [0, 0, 1, 1], [], []>} : vector<256x4xf32>, vector<4x8xf32>, vector<256x8xf32> -> vector<256x8xf32>
    %52 = arith.addf %46, %51 : vector<256x8xf32>
    %53 = vector.extract_strided_slice %22 {offsets = [1, 9, 0], sizes = [16, 16, 4], strides = [1, 1, 1]} : vector<18x32x4xf32> to vector<16x16x4xf32>
    %54 = vector.shape_cast %53 : vector<16x16x4xf32> to vector<256x4xf32>
    %55 = vector.extract_strided_slice %0 {offsets = [1, 2, 0, 0], sizes = [1, 1, 4, 8], strides = [1, 1, 1, 1]} : vector<3x3x4x8xf32> to vector<1x1x4x8xf32>
    %56 = vector.shape_cast %55 : vector<1x1x4x8xf32> to vector<4x8xf32>
    %cst_51 = arith.constant dense<0.000000e+00> : vector<256x8xf32>
    %57 = tpu.matmul %54, %56, %cst_51 {dimension_numbers = #tpu.dot_dimension_numbers<[1], [0], [0], [1], [0, 0, 1, 1], [], []>} : vector<256x4xf32>, vector<4x8xf32>, vector<256x8xf32> -> vector<256x8xf32>
    %58 = arith.addf %52, %57 : vector<256x8xf32>
    %59 = vector.extract_strided_slice %22 {offsets = [2, 7, 0], sizes = [16, 16, 4], strides = [1, 1, 1]} : vector<18x32x4xf32> to vector<16x16x4xf32>
    %60 = vector.shape_cast %59 : vector<16x16x4xf32> to vector<256x4xf32>
    %61 = vector.extract_strided_slice %0 {offsets = [2, 0, 0, 0], sizes = [1, 1, 4, 8], strides = [1, 1, 1, 1]} : vector<3x3x4x8xf32> to vector<1x1x4x8xf32>
    %62 = vector.shape_cast %61 : vector<1x1x4x8xf32> to vector<4x8xf32>
    %cst_52 = arith.constant dense<0.000000e+00> : vector<256x8xf32>
    %63 = tpu.matmul %60, %62, %cst_52 {dimension_numbers = #tpu.dot_dimension_numbers<[1], [0], [0], [1], [0, 0, 1, 1], [], []>} : vector<256x4xf32>, vector<4x8xf32>, vector<256x8xf32> -> vector<256x8xf32>
    %64 = arith.addf %58, %63 : vector<256x8xf32>
    %65 = vector.extract_strided_slice %22 {offsets = [2, 8, 0], sizes = [16, 16, 4], strides = [1, 1, 1]} : vector<18x32x4xf32> to vector<16x16x4xf32>
    %66 = vector.shape_cast %65 : vector<16x16x4xf32> to vector<256x4xf32>
    %67 = vector.extract_strided_slice %0 {offsets = [2, 1, 0, 0], sizes = [1, 1, 4, 8], strides = [1, 1, 1, 1]} : vector<3x3x4x8xf32> to vector<1x1x4x8xf32>
    %68 = vector.shape_cast %67 : vector<1x1x4x8xf32> to vector<4x8xf32>
    %cst_53 = arith.constant dense<0.000000e+00> : vector<256x8xf32>
    %69 = tpu.matmul %66, %68, %cst_53 {dimension_numbers = #tpu.dot_dimension_numbers<[1], [0], [0], [1], [0, 0, 1, 1], [], []>} : vector<256x4xf32>, vector<4x8xf32>, vector<256x8xf32> -> vector<256x8xf32>
    %70 = arith.addf %64, %69 : vector<256x8xf32>
    %71 = vector.extract_strided_slice %22 {offsets = [2, 9, 0], sizes = [16, 16, 4], strides = [1, 1, 1]} : vector<18x32x4xf32> to vector<16x16x4xf32>
    %72 = vector.shape_cast %71 : vector<16x16x4xf32> to vector<256x4xf32>
    %73 = vector.extract_strided_slice %0 {offsets = [2, 2, 0, 0], sizes = [1, 1, 4, 8], strides = [1, 1, 1, 1]} : vector<3x3x4x8xf32> to vector<1x1x4x8xf32>
    %74 = vector.shape_cast %73 : vector<1x1x4x8xf32> to vector<4x8xf32>
    %cst_54 = arith.constant dense<0.000000e+00> : vector<256x8xf32>
    %75 = tpu.matmul %72, %74, %cst_54 {dimension_numbers = #tpu.dot_dimension_numbers<[1], [0], [0], [1], [0, 0, 1, 1], [], []>} : vector<256x4xf32>, vector<4x8xf32>, vector<256x8xf32> -> vector<256x8xf32>
    %76 = arith.addf %70, %75 : vector<256x8xf32>
    %c0_55 = arith.constant 0 : index
    %c0_56 = arith.constant 0 : index
    %c0_57 = arith.constant 0 : index
    %77 = vector.load %arg11[%c0_55, %c0_56, %c0_57] : memref<18x32x8xf32, #tpu.memory_space<vmem>>, vector<18x32x8xf32>
    %78 = vector.extract_strided_slice %77 {offsets = [0, 7, 0], sizes = [16, 16, 8], strides = [1, 1, 1]} : vector<18x32x8xf32> to vector<16x16x8xf32>
    %79 = vector.shape_cast %78 : vector<16x16x8xf32> to vector<256x8xf32>
    %80 = vector.extract_strided_slice %1 {offsets = [0, 0, 0, 0], sizes = [1, 1, 8, 8], strides = [1, 1, 1, 1]} : vector<3x3x8x8xf32> to vector<1x1x8x8xf32>
    %81 = vector.shape_cast %80 : vector<1x1x8x8xf32> to vector<8x8xf32>
    %cst_58 = arith.constant dense<0.000000e+00> : vector<256x8xf32>
    %82 = tpu.matmul %79, %81, %cst_58 {dimension_numbers = #tpu.dot_dimension_numbers<[1], [0], [0], [1], [0, 0, 1, 1], [], []>} : vector<256x8xf32>, vector<8x8xf32>, vector<256x8xf32> -> vector<256x8xf32>
    %83 = arith.addf %76, %82 : vector<256x8xf32>
    %84 = vector.extract_strided_slice %77 {offsets = [0, 8, 0], sizes = [16, 16, 8], strides = [1, 1, 1]} : vector<18x32x8xf32> to vector<16x16x8xf32>
    %85 = vector.shape_cast %84 : vector<16x16x8xf32> to vector<256x8xf32>
    %86 = vector.extract_strided_slice %1 {offsets = [0, 1, 0, 0], sizes = [1, 1, 8, 8], strides = [1, 1, 1, 1]} : vector<3x3x8x8xf32> to vector<1x1x8x8xf32>
    %87 = vector.shape_cast %86 : vector<1x1x8x8xf32> to vector<8x8xf32>
    %cst_59 = arith.constant dense<0.000000e+00> : vector<256x8xf32>
    %88 = tpu.matmul %85, %87, %cst_59 {dimension_numbers = #tpu.dot_dimension_numbers<[1], [0], [0], [1], [0, 0, 1, 1], [], []>} : vector<256x8xf32>, vector<8x8xf32>, vector<256x8xf32> -> vector<256x8xf32>
    %89 = arith.addf %83, %88 : vector<256x8xf32>
    %90 = vector.extract_strided_slice %77 {offsets = [0, 9, 0], sizes = [16, 16, 8], strides = [1, 1, 1]} : vector<18x32x8xf32> to vector<16x16x8xf32>
    %91 = vector.shape_cast %90 : vector<16x16x8xf32> to vector<256x8xf32>
    %92 = vector.extract_strided_slice %1 {offsets = [0, 2, 0, 0], sizes = [1, 1, 8, 8], strides = [1, 1, 1, 1]} : vector<3x3x8x8xf32> to vector<1x1x8x8xf32>
    %93 = vector.shape_cast %92 : vector<1x1x8x8xf32> to vector<8x8xf32>
    %cst_60 = arith.constant dense<0.000000e+00> : vector<256x8xf32>
    %94 = tpu.matmul %91, %93, %cst_60 {dimension_numbers = #tpu.dot_dimension_numbers<[1], [0], [0], [1], [0, 0, 1, 1], [], []>} : vector<256x8xf32>, vector<8x8xf32>, vector<256x8xf32> -> vector<256x8xf32>
    %95 = arith.addf %89, %94 : vector<256x8xf32>
    %96 = vector.extract_strided_slice %77 {offsets = [1, 7, 0], sizes = [16, 16, 8], strides = [1, 1, 1]} : vector<18x32x8xf32> to vector<16x16x8xf32>
    %97 = vector.shape_cast %96 : vector<16x16x8xf32> to vector<256x8xf32>
    %98 = vector.extract_strided_slice %1 {offsets = [1, 0, 0, 0], sizes = [1, 1, 8, 8], strides = [1, 1, 1, 1]} : vector<3x3x8x8xf32> to vector<1x1x8x8xf32>
    %99 = vector.shape_cast %98 : vector<1x1x8x8xf32> to vector<8x8xf32>
    %cst_61 = arith.constant dense<0.000000e+00> : vector<256x8xf32>
    %100 = tpu.matmul %97, %99, %cst_61 {dimension_numbers = #tpu.dot_dimension_numbers<[1], [0], [0], [1], [0, 0, 1, 1], [], []>} : vector<256x8xf32>, vector<8x8xf32>, vector<256x8xf32> -> vector<256x8xf32>
    %101 = arith.addf %95, %100 : vector<256x8xf32>
    %102 = vector.extract_strided_slice %77 {offsets = [1, 8, 0], sizes = [16, 16, 8], strides = [1, 1, 1]} : vector<18x32x8xf32> to vector<16x16x8xf32>
    %103 = vector.shape_cast %102 : vector<16x16x8xf32> to vector<256x8xf32>
    %104 = vector.extract_strided_slice %1 {offsets = [1, 1, 0, 0], sizes = [1, 1, 8, 8], strides = [1, 1, 1, 1]} : vector<3x3x8x8xf32> to vector<1x1x8x8xf32>
    %105 = vector.shape_cast %104 : vector<1x1x8x8xf32> to vector<8x8xf32>
    %cst_62 = arith.constant dense<0.000000e+00> : vector<256x8xf32>
    %106 = tpu.matmul %103, %105, %cst_62 {dimension_numbers = #tpu.dot_dimension_numbers<[1], [0], [0], [1], [0, 0, 1, 1], [], []>} : vector<256x8xf32>, vector<8x8xf32>, vector<256x8xf32> -> vector<256x8xf32>
    %107 = arith.addf %101, %106 : vector<256x8xf32>
    %108 = vector.extract_strided_slice %77 {offsets = [1, 9, 0], sizes = [16, 16, 8], strides = [1, 1, 1]} : vector<18x32x8xf32> to vector<16x16x8xf32>
    %109 = vector.shape_cast %108 : vector<16x16x8xf32> to vector<256x8xf32>
    %110 = vector.extract_strided_slice %1 {offsets = [1, 2, 0, 0], sizes = [1, 1, 8, 8], strides = [1, 1, 1, 1]} : vector<3x3x8x8xf32> to vector<1x1x8x8xf32>
    %111 = vector.shape_cast %110 : vector<1x1x8x8xf32> to vector<8x8xf32>
    %cst_63 = arith.constant dense<0.000000e+00> : vector<256x8xf32>
    %112 = tpu.matmul %109, %111, %cst_63 {dimension_numbers = #tpu.dot_dimension_numbers<[1], [0], [0], [1], [0, 0, 1, 1], [], []>} : vector<256x8xf32>, vector<8x8xf32>, vector<256x8xf32> -> vector<256x8xf32>
    %113 = arith.addf %107, %112 : vector<256x8xf32>
    %114 = vector.extract_strided_slice %77 {offsets = [2, 7, 0], sizes = [16, 16, 8], strides = [1, 1, 1]} : vector<18x32x8xf32> to vector<16x16x8xf32>
    %115 = vector.shape_cast %114 : vector<16x16x8xf32> to vector<256x8xf32>
    %116 = vector.extract_strided_slice %1 {offsets = [2, 0, 0, 0], sizes = [1, 1, 8, 8], strides = [1, 1, 1, 1]} : vector<3x3x8x8xf32> to vector<1x1x8x8xf32>
    %117 = vector.shape_cast %116 : vector<1x1x8x8xf32> to vector<8x8xf32>
    %cst_64 = arith.constant dense<0.000000e+00> : vector<256x8xf32>
    %118 = tpu.matmul %115, %117, %cst_64 {dimension_numbers = #tpu.dot_dimension_numbers<[1], [0], [0], [1], [0, 0, 1, 1], [], []>} : vector<256x8xf32>, vector<8x8xf32>, vector<256x8xf32> -> vector<256x8xf32>
    %119 = arith.addf %113, %118 : vector<256x8xf32>
    %120 = vector.extract_strided_slice %77 {offsets = [2, 8, 0], sizes = [16, 16, 8], strides = [1, 1, 1]} : vector<18x32x8xf32> to vector<16x16x8xf32>
    %121 = vector.shape_cast %120 : vector<16x16x8xf32> to vector<256x8xf32>
    %122 = vector.extract_strided_slice %1 {offsets = [2, 1, 0, 0], sizes = [1, 1, 8, 8], strides = [1, 1, 1, 1]} : vector<3x3x8x8xf32> to vector<1x1x8x8xf32>
    %123 = vector.shape_cast %122 : vector<1x1x8x8xf32> to vector<8x8xf32>
    %cst_65 = arith.constant dense<0.000000e+00> : vector<256x8xf32>
    %124 = tpu.matmul %121, %123, %cst_65 {dimension_numbers = #tpu.dot_dimension_numbers<[1], [0], [0], [1], [0, 0, 1, 1], [], []>} : vector<256x8xf32>, vector<8x8xf32>, vector<256x8xf32> -> vector<256x8xf32>
    %125 = arith.addf %119, %124 : vector<256x8xf32>
    %126 = vector.extract_strided_slice %77 {offsets = [2, 9, 0], sizes = [16, 16, 8], strides = [1, 1, 1]} : vector<18x32x8xf32> to vector<16x16x8xf32>
    %127 = vector.shape_cast %126 : vector<16x16x8xf32> to vector<256x8xf32>
    %128 = vector.extract_strided_slice %1 {offsets = [2, 2, 0, 0], sizes = [1, 1, 8, 8], strides = [1, 1, 1, 1]} : vector<3x3x8x8xf32> to vector<1x1x8x8xf32>
    %129 = vector.shape_cast %128 : vector<1x1x8x8xf32> to vector<8x8xf32>
    %cst_66 = arith.constant dense<0.000000e+00> : vector<256x8xf32>
    %130 = tpu.matmul %127, %129, %cst_66 {dimension_numbers = #tpu.dot_dimension_numbers<[1], [0], [0], [1], [0, 0, 1, 1], [], []>} : vector<256x8xf32>, vector<8x8xf32>, vector<256x8xf32> -> vector<256x8xf32>
    %131 = arith.addf %125, %130 : vector<256x8xf32>
    %132 = vector.broadcast %3 : vector<1x8xf32> to vector<256x8xf32>
    %133 = arith.addf %131, %132 : vector<256x8xf32>
    %134 = vector.shape_cast %133 : vector<256x8xf32> to vector<16x16x8xf32>
    %c1_67 = arith.constant 1 : index
    %c8_68 = arith.constant 8 : index
    %c0_69 = arith.constant 0 : index
    %135 = vector.load %arg12[%c1_67, %c8_68, %c0_69] : memref<18x32x8xf32, #tpu.memory_space<vmem>>, vector<16x16x8xf32>
    tpu.vector_store %arg12[%c1_67, %c8_68, %c0_69], %134 {strides = array<i32>} : memref<18x32x8xf32, #tpu.memory_space<vmem>>, vector<16x16x8xf32>,
    %cst_70 = arith.constant 0.000000e+00 : f32
    %136 = vector.broadcast %cst_70 : f32 to vector<256x8xf32>
    %c0_71 = arith.constant 0 : index
    %c0_72 = arith.constant 0 : index
    %c0_73 = arith.constant 0 : index
    %137 = vector.load %arg12[%c0_71, %c0_72, %c0_73] : memref<18x32x8xf32, #tpu.memory_space<vmem>>, vector<18x32x8xf32>
    %138 = vector.extract_strided_slice %137 {offsets = [0, 7, 0], sizes = [16, 16, 8], strides = [1, 1, 1]} : vector<18x32x8xf32> to vector<16x16x8xf32>
    %139 = vector.shape_cast %138 : vector<16x16x8xf32> to vector<256x8xf32>
    %140 = vector.extract_strided_slice %2 {offsets = [0, 0, 0, 0], sizes = [1, 1, 8, 8], strides = [1, 1, 1, 1]} : vector<3x3x8x8xf32> to vector<1x1x8x8xf32>
    %141 = vector.shape_cast %140 : vector<1x1x8x8xf32> to vector<8x8xf32>
    %cst_74 = arith.constant dense<0.000000e+00> : vector<256x8xf32>
    %142 = tpu.matmul %139, %141, %cst_74 {dimension_numbers = #tpu.dot_dimension_numbers<[1], [0], [0], [1], [0, 0, 1, 1], [], []>} : vector<256x8xf32>, vector<8x8xf32>, vector<256x8xf32> -> vector<256x8xf32>
    %143 = arith.addf %136, %142 : vector<256x8xf32>
    %144 = vector.extract_strided_slice %137 {offsets = [0, 8, 0], sizes = [16, 16, 8], strides = [1, 1, 1]} : vector<18x32x8xf32> to vector<16x16x8xf32>
    %145 = vector.shape_cast %144 : vector<16x16x8xf32> to vector<256x8xf32>
    %146 = vector.extract_strided_slice %2 {offsets = [0, 1, 0, 0], sizes = [1, 1, 8, 8], strides = [1, 1, 1, 1]} : vector<3x3x8x8xf32> to vector<1x1x8x8xf32>
    %147 = vector.shape_cast %146 : vector<1x1x8x8xf32> to vector<8x8xf32>
    %cst_75 = arith.constant dense<0.000000e+00> : vector<256x8xf32>
    %148 = tpu.matmul %145, %147, %cst_75 {dimension_numbers = #tpu.dot_dimension_numbers<[1], [0], [0], [1], [0, 0, 1, 1], [], []>} : vector<256x8xf32>, vector<8x8xf32>, vector<256x8xf32> -> vector<256x8xf32>
    %149 = arith.addf %143, %148 : vector<256x8xf32>
    %150 = vector.extract_strided_slice %137 {offsets = [0, 9, 0], sizes = [16, 16, 8], strides = [1, 1, 1]} : vector<18x32x8xf32> to vector<16x16x8xf32>
    %151 = vector.shape_cast %150 : vector<16x16x8xf32> to vector<256x8xf32>
    %152 = vector.extract_strided_slice %2 {offsets = [0, 2, 0, 0], sizes = [1, 1, 8, 8], strides = [1, 1, 1, 1]} : vector<3x3x8x8xf32> to vector<1x1x8x8xf32>
    %153 = vector.shape_cast %152 : vector<1x1x8x8xf32> to vector<8x8xf32>
    %cst_76 = arith.constant dense<0.000000e+00> : vector<256x8xf32>
    %154 = tpu.matmul %151, %153, %cst_76 {dimension_numbers = #tpu.dot_dimension_numbers<[1], [0], [0], [1], [0, 0, 1, 1], [], []>} : vector<256x8xf32>, vector<8x8xf32>, vector<256x8xf32> -> vector<256x8xf32>
    %155 = arith.addf %149, %154 : vector<256x8xf32>
    %156 = vector.extract_strided_slice %137 {offsets = [1, 7, 0], sizes = [16, 16, 8], strides = [1, 1, 1]} : vector<18x32x8xf32> to vector<16x16x8xf32>
    %157 = vector.shape_cast %156 : vector<16x16x8xf32> to vector<256x8xf32>
    %158 = vector.extract_strided_slice %2 {offsets = [1, 0, 0, 0], sizes = [1, 1, 8, 8], strides = [1, 1, 1, 1]} : vector<3x3x8x8xf32> to vector<1x1x8x8xf32>
    %159 = vector.shape_cast %158 : vector<1x1x8x8xf32> to vector<8x8xf32>
    %cst_77 = arith.constant dense<0.000000e+00> : vector<256x8xf32>
    %160 = tpu.matmul %157, %159, %cst_77 {dimension_numbers = #tpu.dot_dimension_numbers<[1], [0], [0], [1], [0, 0, 1, 1], [], []>} : vector<256x8xf32>, vector<8x8xf32>, vector<256x8xf32> -> vector<256x8xf32>
    %161 = arith.addf %155, %160 : vector<256x8xf32>
    %162 = vector.extract_strided_slice %137 {offsets = [1, 8, 0], sizes = [16, 16, 8], strides = [1, 1, 1]} : vector<18x32x8xf32> to vector<16x16x8xf32>
    %163 = vector.shape_cast %162 : vector<16x16x8xf32> to vector<256x8xf32>
    %164 = vector.extract_strided_slice %2 {offsets = [1, 1, 0, 0], sizes = [1, 1, 8, 8], strides = [1, 1, 1, 1]} : vector<3x3x8x8xf32> to vector<1x1x8x8xf32>
    %165 = vector.shape_cast %164 : vector<1x1x8x8xf32> to vector<8x8xf32>
    %cst_78 = arith.constant dense<0.000000e+00> : vector<256x8xf32>
    %166 = tpu.matmul %163, %165, %cst_78 {dimension_numbers = #tpu.dot_dimension_numbers<[1], [0], [0], [1], [0, 0, 1, 1], [], []>} : vector<256x8xf32>, vector<8x8xf32>, vector<256x8xf32> -> vector<256x8xf32>
    %167 = arith.addf %161, %166 : vector<256x8xf32>
    %168 = vector.extract_strided_slice %137 {offsets = [1, 9, 0], sizes = [16, 16, 8], strides = [1, 1, 1]} : vector<18x32x8xf32> to vector<16x16x8xf32>
    %169 = vector.shape_cast %168 : vector<16x16x8xf32> to vector<256x8xf32>
    %170 = vector.extract_strided_slice %2 {offsets = [1, 2, 0, 0], sizes = [1, 1, 8, 8], strides = [1, 1, 1, 1]} : vector<3x3x8x8xf32> to vector<1x1x8x8xf32>
    %171 = vector.shape_cast %170 : vector<1x1x8x8xf32> to vector<8x8xf32>
    %cst_79 = arith.constant dense<0.000000e+00> : vector<256x8xf32>
    %172 = tpu.matmul %169, %171, %cst_79 {dimension_numbers = #tpu.dot_dimension_numbers<[1], [0], [0], [1], [0, 0, 1, 1], [], []>} : vector<256x8xf32>, vector<8x8xf32>, vector<256x8xf32> -> vector<256x8xf32>
    %173 = arith.addf %167, %172 : vector<256x8xf32>
    %174 = vector.extract_strided_slice %137 {offsets = [2, 7, 0], sizes = [16, 16, 8], strides = [1, 1, 1]} : vector<18x32x8xf32> to vector<16x16x8xf32>
    %175 = vector.shape_cast %174 : vector<16x16x8xf32> to vector<256x8xf32>
    %176 = vector.extract_strided_slice %2 {offsets = [2, 0, 0, 0], sizes = [1, 1, 8, 8], strides = [1, 1, 1, 1]} : vector<3x3x8x8xf32> to vector<1x1x8x8xf32>
    %177 = vector.shape_cast %176 : vector<1x1x8x8xf32> to vector<8x8xf32>
    %cst_80 = arith.constant dense<0.000000e+00> : vector<256x8xf32>
    %178 = tpu.matmul %175, %177, %cst_80 {dimension_numbers = #tpu.dot_dimension_numbers<[1], [0], [0], [1], [0, 0, 1, 1], [], []>} : vector<256x8xf32>, vector<8x8xf32>, vector<256x8xf32> -> vector<256x8xf32>
    %179 = arith.addf %173, %178 : vector<256x8xf32>
    %180 = vector.extract_strided_slice %137 {offsets = [2, 8, 0], sizes = [16, 16, 8], strides = [1, 1, 1]} : vector<18x32x8xf32> to vector<16x16x8xf32>
    %181 = vector.shape_cast %180 : vector<16x16x8xf32> to vector<256x8xf32>
    %182 = vector.extract_strided_slice %2 {offsets = [2, 1, 0, 0], sizes = [1, 1, 8, 8], strides = [1, 1, 1, 1]} : vector<3x3x8x8xf32> to vector<1x1x8x8xf32>
    %183 = vector.shape_cast %182 : vector<1x1x8x8xf32> to vector<8x8xf32>
    %cst_81 = arith.constant dense<0.000000e+00> : vector<256x8xf32>
    %184 = tpu.matmul %181, %183, %cst_81 {dimension_numbers = #tpu.dot_dimension_numbers<[1], [0], [0], [1], [0, 0, 1, 1], [], []>} : vector<256x8xf32>, vector<8x8xf32>, vector<256x8xf32> -> vector<256x8xf32>
    %185 = arith.addf %179, %184 : vector<256x8xf32>
    %186 = vector.extract_strided_slice %137 {offsets = [2, 9, 0], sizes = [16, 16, 8], strides = [1, 1, 1]} : vector<18x32x8xf32> to vector<16x16x8xf32>
    %187 = vector.shape_cast %186 : vector<16x16x8xf32> to vector<256x8xf32>
    %188 = vector.extract_strided_slice %2 {offsets = [2, 2, 0, 0], sizes = [1, 1, 8, 8], strides = [1, 1, 1, 1]} : vector<3x3x8x8xf32> to vector<1x1x8x8xf32>
    %189 = vector.shape_cast %188 : vector<1x1x8x8xf32> to vector<8x8xf32>
    %cst_82 = arith.constant dense<0.000000e+00> : vector<256x8xf32>
    %190 = tpu.matmul %187, %189, %cst_82 {dimension_numbers = #tpu.dot_dimension_numbers<[1], [0], [0], [1], [0, 0, 1, 1], [], []>} : vector<256x8xf32>, vector<8x8xf32>, vector<256x8xf32> -> vector<256x8xf32>
    %191 = arith.addf %185, %190 : vector<256x8xf32>
    %192 = vector.broadcast %4 : vector<1x8xf32> to vector<256x8xf32>
    %193 = arith.addf %191, %192 : vector<256x8xf32>
    %cst_83 = arith.constant 0.000000e+00 : f32
    %194 = vector.broadcast %cst_83 : f32 to vector<256x8xf32>
    %195 = arith.maximumf %193, %194 : vector<256x8xf32>
    %196 = vector.shape_cast %195 : vector<256x8xf32> to vector<16x16x8xf32>
    %c0_84 = arith.constant 0 : index
    %c0_85 = arith.constant 0 : index
    %c0_86 = arith.constant 0 : index
    %c0_87 = arith.constant 0 : index
    %197 = vector.load %arg9[%c0_84, %c0_85, %c0_86, %c0_87] : memref<1x16x16x8xf32, #tpu.memory_space<vmem>>, vector<1x16x16x8xf32>
    %198 = vector.shape_cast %197 : vector<1x16x16x8xf32> to vector<16x16x8xf32>
    %199 = vector.shape_cast %196 : vector<16x16x8xf32> to vector<1x16x16x8xf32>
    tpu.vector_store %arg9[%c0_84, %c0_85, %c0_86, %c0_87], %199 {strides = array<i32>} : memref<1x16x16x8xf32, #tpu.memory_space<vmem>>, vector<1x16x16x8xf32>,
    return
  }
  func.func @transform_0(%arg0: i32) -> (i32, i32, i32, i32) {
    %c0_i32 = arith.constant 0 : i32
    %c0_i32_0 = arith.constant 0 : i32
    %c0_i32_1 = arith.constant 0 : i32
    %c0_i32_2 = arith.constant 0 : i32
    return %arg0, %c0_i32, %c0_i32_0, %c0_i32_1 : i32, i32, i32, i32
  }
  func.func @transform_1(%arg0: i32) -> (i32, i32, i32, i32) {
    %c0_i32 = arith.constant 0 : i32
    %c0_i32_0 = arith.constant 0 : i32
    %c0_i32_1 = arith.constant 0 : i32
    %c0_i32_2 = arith.constant 0 : i32
    return %arg0, %c0_i32, %c0_i32_0, %c0_i32_1 : i32, i32, i32, i32
  }
  func.func @transform_2(%arg0: i32) -> (i32, i32, i32, i32) {
    %c0_i32 = arith.constant 0 : i32
    %c0_i32_0 = arith.constant 0 : i32
    %c0_i32_1 = arith.constant 0 : i32
    %c0_i32_2 = arith.constant 0 : i32
    return %arg0, %c0_i32, %c0_i32_0, %c0_i32_1 : i32, i32, i32, i32
  }
  func.func @transform_3(%arg0: i32) -> (i32, i32, i32, i32) {
    %c0_i32 = arith.constant 0 : i32
    %c0_i32_0 = arith.constant 0 : i32
    %c0_i32_1 = arith.constant 0 : i32
    %c0_i32_2 = arith.constant 0 : i32
    %c0_i32_3 = arith.constant 0 : i32
    return %c0_i32, %c0_i32_0, %c0_i32_1, %c0_i32_2 : i32, i32, i32, i32
  }
  func.func @transform_4(%arg0: i32) -> (i32, i32, i32, i32) {
    %c0_i32 = arith.constant 0 : i32
    %c0_i32_0 = arith.constant 0 : i32
    %c0_i32_1 = arith.constant 0 : i32
    %c0_i32_2 = arith.constant 0 : i32
    %c0_i32_3 = arith.constant 0 : i32
    return %c0_i32, %c0_i32_0, %c0_i32_1, %c0_i32_2 : i32, i32, i32, i32
  }
  func.func @transform_5(%arg0: i32) -> (i32, i32) {
    %c0_i32 = arith.constant 0 : i32
    %c0_i32_0 = arith.constant 0 : i32
    %c0_i32_1 = arith.constant 0 : i32
    return %c0_i32, %c0_i32_0 : i32, i32
  }
  func.func @transform_6(%arg0: i32) -> (i32, i32, i32, i32) {
    %c0_i32 = arith.constant 0 : i32
    %c0_i32_0 = arith.constant 0 : i32
    %c0_i32_1 = arith.constant 0 : i32
    %c0_i32_2 = arith.constant 0 : i32
    %c0_i32_3 = arith.constant 0 : i32
    return %c0_i32, %c0_i32_0, %c0_i32_1, %c0_i32_2 : i32, i32, i32, i32
  }
  func.func @transform_7(%arg0: i32) -> (i32, i32) {
    %c0_i32 = arith.constant 0 : i32
    %c0_i32_0 = arith.constant 0 : i32
    %c0_i32_1 = arith.constant 0 : i32
    return %c0_i32, %c0_i32_0 : i32, i32
  }
  func.func @transform_8(%arg0: i32) -> (i32, i32, i32, i32) {
    %c0_i32 = arith.constant 0 : i32
    %c0_i32_0 = arith.constant 0 : i32
    %c0_i32_1 = arith.constant 0 : i32
    %c0_i32_2 = arith.constant 0 : i32
    return %arg0, %c0_i32, %c0_i32_0, %c0_i32_1 : i32, i32, i32, i32
  }
}

</mosaic_0001>

<llo_original>
// kernel: upsampling_forward.2
$region0: #{upsampling_forward.2}
  #allocation0 [shape = 'u32[]', space=smem, size = 0x4, offset = 0x4, fixed_abs, tag = 'smem constant byte address 0x4 - core index']
  #allocation1 [shape = 'u32[144,128]{1,0:T(1,128)}', space=vmem, size = 0x12000, scoped, tag = 'internal scratch']
  #allocation2 [shape = 'f32[1,1]{1,0:T(1,128)S(1)}', space=vmem, size = 0x200, scoped, tag = 'scoped memory for upsampling_forward.2']
  %s0 = inlined_call_operand.vmem [shape: f32[128,4], index: 0, kind: input, shape index: {}]
  %s1 = inlined_call_operand.vmem [shape: f32[128,8], index: 1, kind: input, shape index: {}]
  %s2 = inlined_call_operand.vmem [shape: f32[4,8], index: 2, kind: input, shape index: {}]
  %s3 = inlined_call_operand.vmem [shape: f32[1,8], index: 3, kind: input, shape index: {}]
  %s4 = inlined_call_operand.vmem [shape: f32[8,8], index: 4, kind: input, shape index: {}]
  %s5 = inlined_call_operand.vmem [shape: f32[1,8], index: 5, kind: input, shape index: {}]
  %s6 = inlined_call_operand.vmem [shape: f32[1,8], index: 6, kind: input, shape index: {}]
  %s7 = inlined_call_operand.vmem [shape: f32[1,8], index: 7, kind: input, shape index: {}]
  %s8 = inlined_call_operand.<no memory space> [shape: f32[1,1], index: 8, kind: input, shape index: {}]
  %s9 = inlined_call_operand.vmem [shape: f32[128,1], index: 9, kind: output, shape index: {}]
  %s10 = sld [smem:[#allocation0]]
  $region46: #{upsampling_forward.2} parent=0
    _
  %s12 = ssub.s32 1, %s10
  %s13 = scalar_select 0, %s12, %s10
  %v14 = vstv %s8
  %15 = vst [vmem:[#allocation2] sm:$0x1] %v14
  // Predicated region
  $region2: #{upsampling_forward.2} parent=0 // pred_check
    _
  $region3: #{upsampling_forward.2} parent=0 // pred_check_branch
    %17 = sbr.rel (0) target = $region5
  $region4: #{upsampling_forward.2} parent=0 // pred_region
    _
  $region5: #{upsampling_forward.2} parent=0 // pred_fallthru
    _
  // Predicated region
  $region6: #{upsampling_forward.2} parent=0 // pred_check
    _
  $region7: #{upsampling_forward.2} parent=0 // pred_check_branch
    %19 = sbr.rel (0) target = $region9
  $region8: #{upsampling_forward.2} parent=0 // pred_region
    _
  $region9: #{upsampling_forward.2} parent=0 // pred_fallthru
    _
  // Predicated region
  $region10: #{upsampling_forward.2} parent=0 // pred_check
    _
  $region11: #{upsampling_forward.2} parent=0 // pred_check_branch
    %21 = sbr.rel (0) target = $region13
  $region12: #{upsampling_forward.2} parent=0 // pred_region
    _
  $region13: #{upsampling_forward.2} parent=0 // pred_fallthru
    _
  // Predicated region
  $region14: #{upsampling_forward.2} parent=0 // pred_check
    _
  $region15: #{upsampling_forward.2} parent=0 // pred_check_branch
    %23 = sbr.rel (0) target = $region17
  $region16: #{upsampling_forward.2} parent=0 // pred_region
    _
  $region17: #{upsampling_forward.2} parent=0 // pred_fallthru
    _
  // Predicated region
  $region18: #{upsampling_forward.2} parent=0 // pred_check
    _
  $region19: #{upsampling_forward.2} parent=0 // pred_check_branch
    %25 = sbr.rel (0) target = $region21
  $region20: #{upsampling_forward.2} parent=0 // pred_region
    _
  $region21: #{upsampling_forward.2} parent=0 // pred_fallthru
    _
  // Predicated region
  $region22: #{upsampling_forward.2} parent=0 // pred_check
    _
  $region23: #{upsampling_forward.2} parent=0 // pred_check_branch
    %27 = sbr.rel (0) target = $region25
  $region24: #{upsampling_forward.2} parent=0 // pred_region
    _
  $region25: #{upsampling_forward.2} parent=0 // pred_fallthru
    _
  // Predicated region
  $region26: #{upsampling_forward.2} parent=0 // pred_check
    _
  $region27: #{upsampling_forward.2} parent=0 // pred_check_branch
    %29 = sbr.rel (0) target = $region29
  $region28: #{upsampling_forward.2} parent=0 // pred_region
    _
  $region29: #{upsampling_forward.2} parent=0 // pred_fallthru
    _
  // Predicated region
  $region30: #{upsampling_forward.2} parent=0 // pred_check
    _
  $region31: #{upsampling_forward.2} parent=0 // pred_check_branch
    %31 = sbr.rel (0) target = $region33
  $region32: #{upsampling_forward.2} parent=0 // pred_region
    _
  $region33: #{upsampling_forward.2} parent=0 // pred_fallthru
    _
  // Predicated region
  $region34: #{upsampling_forward.2} parent=0 // pred_check
    _
  $region35: #{upsampling_forward.2} parent=0 // pred_check_branch
    %33 = sbr.rel (0) target = $region37
  $region36: #{upsampling_forward.2} parent=0 // pred_region
    _
  $region37: #{upsampling_forward.2} parent=0 // pred_fallthru
    _
  %v34 = vld [vmem:[%s0] sm:$0xff]
  %v35 = vld [vmem:[%s0 + $0x8] sm:$0xff]
  %v36 = vld [vmem:[%s0 + $0x10] sm:$0xff]
  %v37 = vld [vmem:[%s0 + $0x18] sm:$0xff]
  %v38 = vld [vmem:[%s0 + $0x20] sm:$0xff]
  %v39 = vld [vmem:[%s0 + $0x28] sm:$0xff]
  %v40 = vld [vmem:[%s0 + $0x30] sm:$0xff]
  %v41 = vld [vmem:[%s0 + $0x38] sm:$0xff]
  %v42 = vld [vmem:[%s0 + $0x40] sm:$0xff]
  %v43 = vld [vmem:[%s0 + $0x48] sm:$0xff]
  %v44 = vld [vmem:[%s0 + $0x50] sm:$0xff]
  %v45 = vld [vmem:[%s0 + $0x58] sm:$0xff]
  %v46 = vld [vmem:[%s0 + $0x60] sm:$0xff]
  %v47 = vld [vmem:[%s0 + $0x68] sm:$0xff]
  %v48 = vld [vmem:[%s0 + $0x70] sm:$0xff]
  %v49 = vld [vmem:[%s0 + $0x78] sm:$0xff]
  %v50 = vld [vmem:[%s2] sm:$0xf]
  %v51 = vld [vmem:[%s3] sm:$0x1]
  %v53 = vlaneseq
  %v54 = vshrl.u32 %v53, 7
  %v55 = vsub.s32 0, %v54
  %v56 = vrot.slane %v51, %v55
  %vm58 = vcmask 31744
  %v60 = vsel %vm58, %v34, 0
  %v63 = vsel %vm58, %v35, 0
  %v66 = vsel %vm58, %v36, 0
  %v69 = vsel %vm58, %v37, 0
  %v72 = vsel %vm58, %v38, 0
  %v75 = vsel %vm58, %v39, 0
  %v78 = vsel %vm58, %v40, 0
  %v81 = vsel %vm58, %v41, 0
  %v84 = vsel %vm58, %v42, 0
  %v87 = vsel %vm58, %v43, 0
  %v90 = vsel %vm58, %v44, 0
  %v93 = vsel %vm58, %v45, 0
  %v96 = vsel %vm58, %v46, 0
  %v99 = vsel %vm58, %v47, 0
  %v102 = vsel %vm58, %v48, 0
  %v105 = vsel %vm58, %v49, 0
  %vm107 = vcmask 1043456
  %v109 = vsel %vm107, %v50, 0
  %111 = vmatprep.subr.mxu0 0.0
  %112 = vmatpush1.msra.mxu0 %v109
  %113 = vmatprep.subr.mxu0 0.0
  %114 = vmatpush1.msra.mxu0 0.0
  %115 = vmatprep.subr.mxu0 0.0
  %116 = vmatpush1.msra.mxu0 0.0
  %117 = vmatprep.subr.mxu0 0.0
  %118 = vmatpush1.msra.mxu0 0.0
  %119 = vmatprep.subr.mxu0 0.0
  %120 = vmatpush1.msra.mxu0 0.0
  %121 = vmatprep.subr.mxu0 0.0
  %122 = vmatpush1.msra.mxu0 0.0
  %123 = vmatprep.subr.mxu0 0.0
  %124 = vmatpush1.msra.mxu0 0.0
  %125 = vmatprep.subr.mxu0 0.0
  %126 = vmatpush1.msra.mxu0 0.0
  %127 = vmatprep.subr.mxu0 0.0
  %128 = vmatpush1.msra.mxu0 0.0
  %129 = vmatprep.subr.mxu0 0.0
  %130 = vmatpush1.msra.mxu0 0.0
  %131 = vmatprep.subr.mxu0 0.0
  %132 = vmatpush1.msra.mxu0 0.0
  %133 = vmatprep.subr.mxu0 0.0
  %134 = vmatpush1.msra.mxu0 0.0
  %135 = vmatprep.subr.mxu0 0.0
  %136 = vmatpush1.msra.mxu0 0.0
  %137 = vmatprep.subr.mxu0 0.0
  %138 = vmatpush1.msra.mxu0 0.0
  %139 = vmatprep.subr.mxu0 0.0
  %140 = vmatpush1.msra.mxu0 0.0
  %141 = vmatprep.subr.mxu0 0.0
  %142 = vmatpush1.msra.mxu0 0.0
  %143 = vmatprep.subr.mxu0 0.0
  %144 = vmatpush1.msra.mxu0 0.0
  %145 = vmatprep.subr.mxu0 0.0
  %146 = vmatpush1.msra.mxu0 0.0
  %147 = vmatprep.subr.mxu0 0.0
  %148 = vmatpush1.msra.mxu0 0.0
  %149 = vmatprep.subr.mxu0 0.0
  %150 = vmatpush1.msra.mxu0 0.0
  %151 = vmatprep.subr.mxu0 0.0
  %152 = vmatpush1.msra.mxu0 0.0
  %153 = vmatprep.subr.mxu0 0.0
  %154 = vmatpush1.msra.mxu0 0.0
  %155 = vmatprep.subr.mxu0 0.0
  %156 = vmatpush1.msra.mxu0 0.0
  %157 = vmatprep.subr.mxu0 0.0
  %158 = vmatpush1.msra.mxu0 0.0
  %159 = vmatprep.subr.mxu0 0.0
  %160 = vmatpush1.msra.mxu0 0.0
  %161 = vmatprep.subr.mxu0 0.0
  %162 = vmatpush1.msra.mxu0 0.0
  %163 = vmatprep.subr.mxu0 0.0
  %164 = vmatpush1.msra.mxu0 0.0
  %165 = vmatprep.subr.mxu0 0.0
  %166 = vmatpush1.msra.mxu0 0.0
  %167 = vmatprep.subr.mxu0 0.0
  %168 = vmatpush1.msra.mxu0 0.0
  %169 = vmatprep.subr.mxu0 0.0
  %170 = vmatpush1.msra.mxu0 0.0
  %171 = vmatprep.subr.mxu0 0.0
  %172 = vmatpush1.msra.mxu0 0.0
  %173 = vmatprep.subr.mxu0 0.0
  %174 = vmatpush1.msra.mxu0 0.0
  %175 = vmatprep.mubr.f32.mxu0 0.0
  %176 = vmatmul.mubr.f32.gmra.mrb[0].mxu0 %v60
  %v177 = vpop.f32.mrb[0].mxu0
  %v178 = vadd.f32 %v56, %v177
  %v179 = vpop.f32.mrb[0].mxu0
  %180 = vmatprep.mubr.f32.mxu0 0.0
  %181 = vmatmul.mubr.f32.gmra.mrb[0].mxu0 %v63
  %v182 = vpop.f32.mrb[0].mxu0
  %v183 = vadd.f32 %v56, %v182
  %v184 = vpop.f32.mrb[0].mxu0
  %185 = vmatprep.mubr.f32.mxu0 0.0
  %186 = vmatmul.mubr.f32.gmra.mrb[0].mxu0 %v66
  %v187 = vpop.f32.mrb[0].mxu0
  %v188 = vadd.f32 %v56, %v187
  %v189 = vpop.f32.mrb[0].mxu0
  %190 = vmatprep.mubr.f32.mxu0 0.0
  %191 = vmatmul.mubr.f32.gmra.mrb[0].mxu0 %v69
  %v192 = vpop.f32.mrb[0].mxu0
  %v193 = vadd.f32 %v56, %v192
  %v194 = vpop.f32.mrb[0].mxu0
  %195 = vmatprep.mubr.f32.mxu0 0.0
  %196 = vmatmul.mubr.f32.gmra.mrb[0].mxu0 %v72
  %v197 = vpop.f32.mrb[0].mxu0
  %v198 = vadd.f32 %v56, %v197
  %v199 = vpop.f32.mrb[0].mxu0
  %200 = vmatprep.mubr.f32.mxu0 0.0
  %201 = vmatmul.mubr.f32.gmra.mrb[0].mxu0 %v75
  %v202 = vpop.f32.mrb[0].mxu0
  %v203 = vadd.f32 %v56, %v202
  %v204 = vpop.f32.mrb[0].mxu0
  %205 = vmatprep.mubr.f32.mxu0 0.0
  %206 = vmatmul.mubr.f32.gmra.mrb[0].mxu0 %v78
  %v207 = vpop.f32.mrb[0].mxu0
  %v208 = vadd.f32 %v56, %v207
  %v209 = vpop.f32.mrb[0].mxu0
  %210 = vmatprep.mubr.f32.mxu0 0.0
  %211 = vmatmul.mubr.f32.gmra.mrb[0].mxu0 %v81
  %v212 = vpop.f32.mrb[0].mxu0
  %v213 = vadd.f32 %v56, %v212
  %v214 = vpop.f32.mrb[0].mxu0
  %215 = vmatprep.mubr.f32.mxu0 0.0
  %216 = vmatmul.mubr.f32.gmra.mrb[0].mxu0 %v84
  %v217 = vpop.f32.mrb[0].mxu0
  %v218 = vadd.f32 %v56, %v217
  %v219 = vpop.f32.mrb[0].mxu0
  %220 = vmatprep.mubr.f32.mxu0 0.0
  %221 = vmatmul.mubr.f32.gmra.mrb[0].mxu0 %v87
  %v222 = vpop.f32.mrb[0].mxu0
  %v223 = vadd.f32 %v56, %v222
  %v224 = vpop.f32.mrb[0].mxu0
  %225 = vmatprep.mubr.f32.mxu0 0.0
  %226 = vmatmul.mubr.f32.gmra.mrb[0].mxu0 %v90
  %v227 = vpop.f32.mrb[0].mxu0
  %v228 = vadd.f32 %v56, %v227
  %v229 = vpop.f32.mrb[0].mxu0
  %230 = vmatprep.mubr.f32.mxu0 0.0
  %231 = vmatmul.mubr.f32.gmra.mrb[0].mxu0 %v93
  %v232 = vpop.f32.mrb[0].mxu0
  %v233 = vadd.f32 %v56, %v232
  %v234 = vpop.f32.mrb[0].mxu0
  %235 = vmatprep.mubr.f32.mxu0 0.0
  %236 = vmatmul.mubr.f32.gmra.mrb[0].mxu0 %v96
  %v237 = vpop.f32.mrb[0].mxu0
  %v238 = vadd.f32 %v56, %v237
  %v239 = vpop.f32.mrb[0].mxu0
  %240 = vmatprep.mubr.f32.mxu0 0.0
  %241 = vmatmul.mubr.f32.gmra.mrb[0].mxu0 %v99
  %v242 = vpop.f32.mrb[0].mxu0
  %v243 = vadd.f32 %v56, %v242
  %v244 = vpop.f32.mrb[0].mxu0
  %245 = vmatprep.mubr.f32.mxu0 0.0
  %246 = vmatmul.mubr.f32.gmra.mrb[0].mxu0 %v102
  %v247 = vpop.f32.mrb[0].mxu0
  %v248 = vadd.f32 %v56, %v247
  %v249 = vpop.f32.mrb[0].mxu0
  %250 = vmatprep.mubr.f32.mxu0 0.0
  %251 = vmatmul.mubr.f32.gmra.mrb[0].mxu0 %v105
  %v252 = vpop.f32.mrb[0].mxu0
  %v253 = vadd.f32 %v56, %v252
  %v254 = vpop.f32.mrb[0].mxu0
  %255 = vdwg.mxu0
  %v256 = vld [vmem:[%s1] sm:$0xff]
  %v257 = vld [vmem:[%s1 + $0x8] sm:$0xff]
  %v258 = vld [vmem:[%s1 + $0x10] sm:$0xff]
  %v259 = vld [vmem:[%s1 + $0x18] sm:$0xff]
  %v260 = vld [vmem:[%s1 + $0x20] sm:$0xff]
  %v261 = vld [vmem:[%s1 + $0x28] sm:$0xff]
  %v262 = vld [vmem:[%s1 + $0x30] sm:$0xff]
  %v263 = vld [vmem:[%s1 + $0x38] sm:$0xff]
  %v264 = vld [vmem:[%s1 + $0x40] sm:$0xff]
  %v265 = vld [vmem:[%s1 + $0x48] sm:$0xff]
  %v266 = vld [vmem:[%s1 + $0x50] sm:$0xff]
  %v267 = vld [vmem:[%s1 + $0x58] sm:$0xff]
  %v268 = vld [vmem:[%s1 + $0x60] sm:$0xff]
  %v269 = vld [vmem:[%s1 + $0x68] sm:$0xff]
  %v270 = vld [vmem:[%s1 + $0x70] sm:$0xff]
  %v271 = vld [vmem:[%s1 + $0x78] sm:$0xff]
  %v272 = vld [vmem:[%s4] sm:$0xff]
  %v273 = vld [vmem:[%s5] sm:$0x1]
  %v275 = vlaneseq
  %v276 = vshrl.u32 %v275, 7
  %v277 = vsub.s32 0, %v276
  %v278 = vrot.slane %v273, %v277
  %vm280 = vcmask 64512
  %v282 = vsel %vm280, %v256, 0
  %v285 = vsel %vm280, %v257, 0
  %v288 = vsel %vm280, %v258, 0
  %v291 = vsel %vm280, %v259, 0
  %v294 = vsel %vm280, %v260, 0
  %v297 = vsel %vm280, %v261, 0
  %v300 = vsel %vm280, %v262, 0
  %v303 = vsel %vm280, %v263, 0
  %v306 = vsel %vm280, %v264, 0
  %v309 = vsel %vm280, %v265, 0
  %v312 = vsel %vm280, %v266, 0
  %v315 = vsel %vm280, %v267, 0
  %v318 = vsel %vm280, %v268, 0
  %v321 = vsel %vm280, %v269, 0
  %v324 = vsel %vm280, %v270, 0
  %v327 = vsel %vm280, %v271, 0
  %329 = vmatprep.subr.mxu0 0.0
  %330 = vmatpush1.msra.mxu0 %v272
  %331 = vmatprep.subr.mxu0 0.0
  %332 = vmatpush1.msra.mxu0 0.0
  %333 = vmatprep.subr.mxu0 0.0
  %334 = vmatpush1.msra.mxu0 0.0
  %335 = vmatprep.subr.mxu0 0.0
  %336 = vmatpush1.msra.mxu0 0.0
  %337 = vmatprep.subr.mxu0 0.0
  %338 = vmatpush1.msra.mxu0 0.0
  %339 = vmatprep.subr.mxu0 0.0
  %340 = vmatpush1.msra.mxu0 0.0
  %341 = vmatprep.subr.mxu0 0.0
  %342 = vmatpush1.msra.mxu0 0.0
  %343 = vmatprep.subr.mxu0 0.0
  %344 = vmatpush1.msra.mxu0 0.0
  %345 = vmatprep.subr.mxu0 0.0
  %346 = vmatpush1.msra.mxu0 0.0
  %347 = vmatprep.subr.mxu0 0.0
  %348 = vmatpush1.msra.mxu0 0.0
  %349 = vmatprep.subr.mxu0 0.0
  %350 = vmatpush1.msra.mxu0 0.0
  %351 = vmatprep.subr.mxu0 0.0
  %352 = vmatpush1.msra.mxu0 0.0
  %353 = vmatprep.subr.mxu0 0.0
  %354 = vmatpush1.msra.mxu0 0.0
  %355 = vmatprep.subr.mxu0 0.0
  %356 = vmatpush1.msra.mxu0 0.0
  %357 = vmatprep.subr.mxu0 0.0
  %358 = vmatpush1.msra.mxu0 0.0
  %359 = vmatprep.subr.mxu0 0.0
  %360 = vmatpush1.msra.mxu0 0.0
  %361 = vmatprep.subr.mxu0 0.0
  %362 = vmatpush1.msra.mxu0 0.0
  %363 = vmatprep.subr.mxu0 0.0
  %364 = vmatpush1.msra.mxu0 0.0
  %365 = vmatprep.subr.mxu0 0.0
  %366 = vmatpush1.msra.mxu0 0.0
  %367 = vmatprep.subr.mxu0 0.0
  %368 = vmatpush1.msra.mxu0 0.0
  %369 = vmatprep.subr.mxu0 0.0
  %370 = vmatpush1.msra.mxu0 0.0
  %371 = vmatprep.subr.mxu0 0.0
  %372 = vmatpush1.msra.mxu0 0.0
  %373 = vmatprep.subr.mxu0 0.0
  %374 = vmatpush1.msra.mxu0 0.0
  %375 = vmatprep.subr.mxu0 0.0
  %376 = vmatpush1.msra.mxu0 0.0
  %377 = vmatprep.subr.mxu0 0.0
  %378 = vmatpush1.msra.mxu0 0.0
  %379 = vmatprep.subr.mxu0 0.0
  %380 = vmatpush1.msra.mxu0 0.0
  %381 = vmatprep.subr.mxu0 0.0
  %382 = vmatpush1.msra.mxu0 0.0
  %383 = vmatprep.subr.mxu0 0.0
  %384 = vmatpush1.msra.mxu0 0.0
  %385 = vmatprep.subr.mxu0 0.0
  %386 = vmatpush1.msra.mxu0 0.0
  %387 = vmatprep.subr.mxu0 0.0
  %388 = vmatpush1.msra.mxu0 0.0
  %389 = vmatprep.subr.mxu0 0.0
  %390 = vmatpush1.msra.mxu0 0.0
  %391 = vmatprep.subr.mxu0 0.0
  %392 = vmatpush1.msra.mxu0 0.0
  %393 = vmatprep.mubr.f32.mxu0 0.0
  %394 = vmatmul.mubr.f32.gmra.mrb[0].mxu0 %v282
  %v395 = vpop.f32.mrb[0].mxu0
  %v396 = vadd.f32 %v278, %v395
  %v397 = vpop.f32.mrb[0].mxu0
  %398 = vmatprep.mubr.f32.mxu0 0.0
  %399 = vmatmul.mubr.f32.gmra.mrb[0].mxu0 %v285
  %v400 = vpop.f32.mrb[0].mxu0
  %v401 = vadd.f32 %v278, %v400
  %v402 = vpop.f32.mrb[0].mxu0
  %403 = vmatprep.mubr.f32.mxu0 0.0
  %404 = vmatmul.mubr.f32.gmra.mrb[0].mxu0 %v288
  %v405 = vpop.f32.mrb[0].mxu0
  %v406 = vadd.f32 %v278, %v405
  %v407 = vpop.f32.mrb[0].mxu0
  %408 = vmatprep.mubr.f32.mxu0 0.0
  %409 = vmatmul.mubr.f32.gmra.mrb[0].mxu0 %v291
  %v410 = vpop.f32.mrb[0].mxu0
  %v411 = vadd.f32 %v278, %v410
  %v412 = vpop.f32.mrb[0].mxu0
  %413 = vmatprep.mubr.f32.mxu0 0.0
  %414 = vmatmul.mubr.f32.gmra.mrb[0].mxu0 %v294
  %v415 = vpop.f32.mrb[0].mxu0
  %v416 = vadd.f32 %v278, %v415
  %v417 = vpop.f32.mrb[0].mxu0
  %418 = vmatprep.mubr.f32.mxu0 0.0
  %419 = vmatmul.mubr.f32.gmra.mrb[0].mxu0 %v297
  %v420 = vpop.f32.mrb[0].mxu0
  %v421 = vadd.f32 %v278, %v420
  %v422 = vpop.f32.mrb[0].mxu0
  %423 = vmatprep.mubr.f32.mxu0 0.0
  %424 = vmatmul.mubr.f32.gmra.mrb[0].mxu0 %v300
  %v425 = vpop.f32.mrb[0].mxu0
  %v426 = vadd.f32 %v278, %v425
  %v427 = vpop.f32.mrb[0].mxu0
  %428 = vmatprep.mubr.f32.mxu0 0.0
  %429 = vmatmul.mubr.f32.gmra.mrb[0].mxu0 %v303
  %v430 = vpop.f32.mrb[0].mxu0
  %v431 = vadd.f32 %v278, %v430
  %v432 = vpop.f32.mrb[0].mxu0
  %433 = vmatprep.mubr.f32.mxu0 0.0
  %434 = vmatmul.mubr.f32.gmra.mrb[0].mxu0 %v306
  %v435 = vpop.f32.mrb[0].mxu0
  %v436 = vadd.f32 %v278, %v435
  %v437 = vpop.f32.mrb[0].mxu0
  %438 = vmatprep.mubr.f32.mxu0 0.0
  %439 = vmatmul.mubr.f32.gmra.mrb[0].mxu0 %v309
  %v440 = vpop.f32.mrb[0].mxu0
  %v441 = vadd.f32 %v278, %v440
  %v442 = vpop.f32.mrb[0].mxu0
  %443 = vmatprep.mubr.f32.mxu0 0.0
  %444 = vmatmul.mubr.f32.gmra.mrb[0].mxu0 %v312
  %v445 = vpop.f32.mrb[0].mxu0
  %v446 = vadd.f32 %v278, %v445
  %v447 = vpop.f32.mrb[0].mxu0
  %448 = vmatprep.mubr.f32.mxu0 0.0
  %449 = vmatmul.mubr.f32.gmra.mrb[0].mxu0 %v315
  %v450 = vpop.f32.mrb[0].mxu0
  %v451 = vadd.f32 %v278, %v450
  %v452 = vpop.f32.mrb[0].mxu0
  %453 = vmatprep.mubr.f32.mxu0 0.0
  %454 = vmatmul.mubr.f32.gmra.mrb[0].mxu0 %v318
  %v455 = vpop.f32.mrb[0].mxu0
  %v456 = vadd.f32 %v278, %v455
  %v457 = vpop.f32.mrb[0].mxu0
  %458 = vmatprep.mubr.f32.mxu0 0.0
  %459 = vmatmul.mubr.f32.gmra.mrb[0].mxu0 %v321
  %v460 = vpop.f32.mrb[0].mxu0
  %v461 = vadd.f32 %v278, %v460
  %v462 = vpop.f32.mrb[0].mxu0
  %463 = vmatprep.mubr.f32.mxu0 0.0
  %464 = vmatmul.mubr.f32.gmra.mrb[0].mxu0 %v324
  %v465 = vpop.f32.mrb[0].mxu0
  %v466 = vadd.f32 %v278, %v465
  %v467 = vpop.f32.mrb[0].mxu0
  %468 = vmatprep.mubr.f32.mxu0 0.0
  %469 = vmatmul.mubr.f32.gmra.mrb[0].mxu0 %v327
  %v470 = vpop.f32.mrb[0].mxu0
  %v471 = vadd.f32 %v278, %v470
  %v472 = vpop.f32.mrb[0].mxu0
  %473 = vdwg.mxu0
  %v474 = vmax.f32 %v178, 0.0
  %v475 = vmax.f32 %v183, 0.0
  %v476 = vmax.f32 %v188, 0.0
  %v477 = vmax.f32 %v193, 0.0
  %v478 = vmax.f32 %v198, 0.0
  %v479 = vmax.f32 %v203, 0.0
  %v480 = vmax.f32 %v208, 0.0
  %v481 = vmax.f32 %v213, 0.0
  %v482 = vmax.f32 %v218, 0.0
  %v483 = vmax.f32 %v223, 0.0
  %v484 = vmax.f32 %v228, 0.0
  %v485 = vmax.f32 %v233, 0.0
  %v486 = vmax.f32 %v238, 0.0
  %v487 = vmax.f32 %v243, 0.0
  %v488 = vmax.f32 %v248, 0.0
  %v489 = vmax.f32 %v253, 0.0
  %v490 = vmax.f32 %v396, 0.0
  %v491 = vmax.f32 %v401, 0.0
  %v492 = vmax.f32 %v406, 0.0
  %v493 = vmax.f32 %v411, 0.0
  %v494 = vmax.f32 %v416, 0.0
  %v495 = vmax.f32 %v421, 0.0
  %v496 = vmax.f32 %v426, 0.0
  %v497 = vmax.f32 %v431, 0.0
  %v498 = vmax.f32 %v436, 0.0
  %v499 = vmax.f32 %v441, 0.0
  %v500 = vmax.f32 %v446, 0.0
  %v501 = vmax.f32 %v451, 0.0
  %v502 = vmax.f32 %v456, 0.0
  %v503 = vmax.f32 %v461, 0.0
  %v504 = vmax.f32 %v466, 0.0
  %v505 = vmax.f32 %v471, 0.0
  %v506 = vld [vmem:[%s6] sm:$0x1]
  %v508 = vlaneseq
  %v509 = vshrl.u32 %v508, 7
  %v510 = vsub.s32 0, %v509
  %v511 = vrot.slane %v506, %v510
  %v513 = vmul.f32 %v474, %v511
  %v514 = vmul.f32 %v475, %v511
  %v515 = vmul.f32 %v476, %v511
  %v516 = vmul.f32 %v477, %v511
  %v517 = vmul.f32 %v478, %v511
  %v518 = vmul.f32 %v479, %v511
  %v519 = vmul.f32 %v480, %v511
  %v520 = vmul.f32 %v481, %v511
  %v521 = vmul.f32 %v482, %v511
  %v522 = vmul.f32 %v483, %v511
  %v523 = vmul.f32 %v484, %v511
  %v524 = vmul.f32 %v485, %v511
  %v525 = vmul.f32 %v486, %v511
  %v526 = vmul.f32 %v487, %v511
  %v527 = vmul.f32 %v488, %v511
  %v528 = vmul.f32 %v489, %v511
  %v529 = vsel %vm280, %v513, 0.0
  %530 = vadd.xlane.f32.xlu0 %v529
  %v531 = vpop.xlane.xlu0 %530
  %v532 = vsel %vm280, %v514, 0.0
  %533 = vadd.xlane.f32.xlu0 %v532
  %v534 = vpop.xlane.xlu0 %533
  %v535 = vsel %vm280, %v515, 0.0
  %536 = vadd.xlane.f32.xlu0 %v535
  %v537 = vpop.xlane.xlu0 %536
  %v538 = vsel %vm280, %v516, 0.0
  %539 = vadd.xlane.f32.xlu0 %v538
  %v540 = vpop.xlane.xlu0 %539
  %v541 = vsel %vm280, %v517, 0.0
  %542 = vadd.xlane.f32.xlu0 %v541
  %v543 = vpop.xlane.xlu0 %542
  %v544 = vsel %vm280, %v518, 0.0
  %545 = vadd.xlane.f32.xlu0 %v544
  %v546 = vpop.xlane.xlu0 %545
  %v547 = vsel %vm280, %v519, 0.0
  %548 = vadd.xlane.f32.xlu0 %v547
  %v549 = vpop.xlane.xlu0 %548
  %v550 = vsel %vm280, %v520, 0.0
  %551 = vadd.xlane.f32.xlu0 %v550
  %v552 = vpop.xlane.xlu0 %551
  %v553 = vsel %vm280, %v521, 0.0
  %554 = vadd.xlane.f32.xlu0 %v553
  %v555 = vpop.xlane.xlu0 %554
  %v556 = vsel %vm280, %v522, 0.0
  %557 = vadd.xlane.f32.xlu0 %v556
  %v558 = vpop.xlane.xlu0 %557
  %v559 = vsel %vm280, %v523, 0.0
  %560 = vadd.xlane.f32.xlu0 %v559
  %v561 = vpop.xlane.xlu0 %560
  %v562 = vsel %vm280, %v524, 0.0
  %563 = vadd.xlane.f32.xlu0 %v562
  %v564 = vpop.xlane.xlu0 %563
  %v565 = vsel %vm280, %v525, 0.0
  %566 = vadd.xlane.f32.xlu0 %v565
  %v567 = vpop.xlane.xlu0 %566
  %v568 = vsel %vm280, %v526, 0.0
  %569 = vadd.xlane.f32.xlu0 %v568
  %v570 = vpop.xlane.xlu0 %569
  %v571 = vsel %vm280, %v527, 0.0
  %572 = vadd.xlane.f32.xlu0 %v571
  %v573 = vpop.xlane.xlu0 %572
  %v574 = vsel %vm280, %v528, 0.0
  %575 = vadd.xlane.f32.xlu0 %v574
  %v576 = vpop.xlane.xlu0 %575
  %v577 = vld [vmem:[%s7] sm:$0x1]
  %v579 = vlaneseq
  %v580 = vshrl.u32 %v579, 7
  %v581 = vsub.s32 0, %v580
  %v582 = vrot.slane %v577, %v581
  %v584 = vmul.f32 %v490, %v582
  %v585 = vmul.f32 %v491, %v582
  %v586 = vmul.f32 %v492, %v582
  %v587 = vmul.f32 %v493, %v582
  %v588 = vmul.f32 %v494, %v582
  %v589 = vmul.f32 %v495, %v582
  %v590 = vmul.f32 %v496, %v582
  %v591 = vmul.f32 %v497, %v582
  %v592 = vmul.f32 %v498, %v582
  %v593 = vmul.f32 %v499, %v582
  %v594 = vmul.f32 %v500, %v582
  %v595 = vmul.f32 %v501, %v582
  %v596 = vmul.f32 %v502, %v582
  %v597 = vmul.f32 %v503, %v582
  %v598 = vmul.f32 %v504, %v582
  %v599 = vmul.f32 %v505, %v582
  %v600 = vsel %vm280, %v584, 0.0
  %601 = vadd.xlane.f32.xlu0 %v600
  %v602 = vpop.xlane.xlu0 %601
  %v603 = vsel %vm280, %v585, 0.0
  %604 = vadd.xlane.f32.xlu0 %v603
  %v605 = vpop.xlane.xlu0 %604
  %v606 = vsel %vm280, %v586, 0.0
  %607 = vadd.xlane.f32.xlu0 %v606
  %v608 = vpop.xlane.xlu0 %607
  %v609 = vsel %vm280, %v587, 0.0
  %610 = vadd.xlane.f32.xlu0 %v609
  %v611 = vpop.xlane.xlu0 %610
  %v612 = vsel %vm280, %v588, 0.0
  %613 = vadd.xlane.f32.xlu0 %v612
  %v614 = vpop.xlane.xlu0 %613
  %v615 = vsel %vm280, %v589, 0.0
  %616 = vadd.xlane.f32.xlu0 %v615
  %v617 = vpop.xlane.xlu0 %616
  %v618 = vsel %vm280, %v590, 0.0
  %619 = vadd.xlane.f32.xlu0 %v618
  %v620 = vpop.xlane.xlu0 %619
  %v621 = vsel %vm280, %v591, 0.0
  %622 = vadd.xlane.f32.xlu0 %v621
  %v623 = vpop.xlane.xlu0 %622
  %v624 = vsel %vm280, %v592, 0.0
  %625 = vadd.xlane.f32.xlu0 %v624
  %v626 = vpop.xlane.xlu0 %625
  %v627 = vsel %vm280, %v593, 0.0
  %628 = vadd.xlane.f32.xlu0 %v627
  %v629 = vpop.xlane.xlu0 %628
  %v630 = vsel %vm280, %v594, 0.0
  %631 = vadd.xlane.f32.xlu0 %v630
  %v632 = vpop.xlane.xlu0 %631
  %v633 = vsel %vm280, %v595, 0.0
  %634 = vadd.xlane.f32.xlu0 %v633
  %v635 = vpop.xlane.xlu0 %634
  %v636 = vsel %vm280, %v596, 0.0
  %637 = vadd.xlane.f32.xlu0 %v636
  %v638 = vpop.xlane.xlu0 %637
  %v639 = vsel %vm280, %v597, 0.0
  %640 = vadd.xlane.f32.xlu0 %v639
  %v641 = vpop.xlane.xlu0 %640
  %v642 = vsel %vm280, %v598, 0.0
  %643 = vadd.xlane.f32.xlu0 %v642
  %v644 = vpop.xlane.xlu0 %643
  %v645 = vsel %vm280, %v599, 0.0
  %646 = vadd.xlane.f32.xlu0 %v645
  %v647 = vpop.xlane.xlu0 %646
  %v648 = vadd.f32 %v531, %v602
  %v649 = vadd.f32 %v534, %v605
  %v650 = vadd.f32 %v537, %v608
  %v651 = vadd.f32 %v540, %v611
  %v652 = vadd.f32 %v543, %v614
  %v653 = vadd.f32 %v546, %v617
  %v654 = vadd.f32 %v549, %v620
  %v655 = vadd.f32 %v552, %v623
  %v656 = vadd.f32 %v555, %v626
  %v657 = vadd.f32 %v558, %v629
  %v658 = vadd.f32 %v561, %v632
  %v659 = vadd.f32 %v564, %v635
  %v660 = vadd.f32 %v567, %v638
  %v661 = vadd.f32 %v570, %v641
  %v662 = vadd.f32 %v573, %v644
  %v663 = vadd.f32 %v576, %v647
  %v664 = vld [vmem:[#allocation2] sm:$0x1]
  %v666 = vlaneseq
  %v667 = vshrl.u32 %v666, 7
  %v668 = vsub.s32 0, %v667
  %v669 = vrot.slane %v664, %v668
  %v671 = vadd.f32 %v648, %v669
  %v672 = vadd.f32 %v649, %v669
  %v673 = vadd.f32 %v650, %v669
  %v674 = vadd.f32 %v651, %v669
  %v675 = vadd.f32 %v652, %v669
  %v676 = vadd.f32 %v653, %v669
  %v677 = vadd.f32 %v654, %v669
  %v678 = vadd.f32 %v655, %v669
  %v679 = vadd.f32 %v656, %v669
  %v680 = vadd.f32 %v657, %v669
  %v681 = vadd.f32 %v658, %v669
  %v682 = vadd.f32 %v659, %v669
  %v683 = vadd.f32 %v660, %v669
  %v684 = vadd.f32 %v661, %v669
  %v685 = vadd.f32 %v662, %v669
  %v686 = vadd.f32 %v663, %v669
  %v687 = vxor.u32 %v671, 2147483648
  %v688 = vxor.u32 %v672, 2147483648
  %v689 = vxor.u32 %v673, 2147483648
  %v690 = vxor.u32 %v674, 2147483648
  %v691 = vxor.u32 %v675, 2147483648
  %v692 = vxor.u32 %v676, 2147483648
  %v693 = vxor.u32 %v677, 2147483648
  %v694 = vxor.u32 %v678, 2147483648
  %v695 = vxor.u32 %v679, 2147483648
  %v696 = vxor.u32 %v680, 2147483648
  %v697 = vxor.u32 %v681, 2147483648
  %v698 = vxor.u32 %v682, 2147483648
  %v699 = vxor.u32 %v683, 2147483648
  %v700 = vxor.u32 %v684, 2147483648
  %v701 = vxor.u32 %v685, 2147483648
  %v702 = vxor.u32 %v686, 2147483648
  %v703 = vmul.f32 %v687, 1.442695
  %v704 = vpow.pop %v703
  %v705 = vmul.f32 %v688, 1.442695
  %v706 = vpow.pop %v705
  %v707 = vmul.f32 %v689, 1.442695
  %v708 = vpow.pop %v707
  %v709 = vmul.f32 %v690, 1.442695
  %v710 = vpow.pop %v709
  %v711 = vmul.f32 %v691, 1.442695
  %v712 = vpow.pop %v711
  %v713 = vmul.f32 %v692, 1.442695
  %v714 = vpow.pop %v713
  %v715 = vmul.f32 %v693, 1.442695
  %v716 = vpow.pop %v715
  %v717 = vmul.f32 %v694, 1.442695
  %v718 = vpow.pop %v717
  %v719 = vmul.f32 %v695, 1.442695
  %v720 = vpow.pop %v719
  %v721 = vmul.f32 %v696, 1.442695
  %v722 = vpow.pop %v721
  %v723 = vmul.f32 %v697, 1.442695
  %v724 = vpow.pop %v723
  %v725 = vmul.f32 %v698, 1.442695
  %v726 = vpow.pop %v725
  %v727 = vmul.f32 %v699, 1.442695
  %v728 = vpow.pop %v727
  %v729 = vmul.f32 %v700, 1.442695
  %v730 = vpow.pop %v729
  %v731 = vmul.f32 %v701, 1.442695
  %v732 = vpow.pop %v731
  %v733 = vmul.f32 %v702, 1.442695
  %v734 = vpow.pop %v733
  %v735 = vadd.f32 %v704, 1.0
  %v736 = vadd.f32 %v706, 1.0
  %v737 = vadd.f32 %v708, 1.0
  %v738 = vadd.f32 %v710, 1.0
  %v739 = vadd.f32 %v712, 1.0
  %v740 = vadd.f32 %v714, 1.0
  %v741 = vadd.f32 %v716, 1.0
  %v742 = vadd.f32 %v718, 1.0
  %v743 = vadd.f32 %v720, 1.0
  %v744 = vadd.f32 %v722, 1.0
  %v745 = vadd.f32 %v724, 1.0
  %v746 = vadd.f32 %v726, 1.0
  %v747 = vadd.f32 %v728, 1.0
  %v748 = vadd.f32 %v730, 1.0
  %v749 = vadd.f32 %v732, 1.0
  %v750 = vadd.f32 %v734, 1.0
  %v751 = vrcp.pop %v735
  %v752 = vmul.f32 1.0, %v751
  %v753 = vrcp.pop %v736
  %v754 = vmul.f32 1.0, %v753
  %v755 = vrcp.pop %v737
  %v756 = vmul.f32 1.0, %v755
  %v757 = vrcp.pop %v738
  %v758 = vmul.f32 1.0, %v757
  %v759 = vrcp.pop %v739
  %v760 = vmul.f32 1.0, %v759
  %v761 = vrcp.pop %v740
  %v762 = vmul.f32 1.0, %v761
  %v763 = vrcp.pop %v741
  %v764 = vmul.f32 1.0, %v763
  %v765 = vrcp.pop %v742
  %v766 = vmul.f32 1.0, %v765
  %v767 = vrcp.pop %v743
  %v768 = vmul.f32 1.0, %v767
  %v769 = vrcp.pop %v744
  %v770 = vmul.f32 1.0, %v769
  %v771 = vrcp.pop %v745
  %v772 = vmul.f32 1.0, %v771
  %v773 = vrcp.pop %v746
  %v774 = vmul.f32 1.0, %v773
  %v775 = vrcp.pop %v747
  %v776 = vmul.f32 1.0, %v775
  %v777 = vrcp.pop %v748
  %v778 = vmul.f32 1.0, %v777
  %v779 = vrcp.pop %v749
  %v780 = vmul.f32 1.0, %v779
  %v781 = vrcp.pop %v750
  %v782 = vmul.f32 1.0, %v781
  %vm783 = vcmask 7168
  %784 = vst.msk [vmem:[%s9] sm:$0xff] %vm783, %v752
  %785 = vst.msk [vmem:[%s9 + $0x8] sm:$0xff] %vm783, %v754
  %786 = vst.msk [vmem:[%s9 + $0x10] sm:$0xff] %vm783, %v756
  %787 = vst.msk [vmem:[%s9 + $0x18] sm:$0xff] %vm783, %v758
  %788 = vst.msk [vmem:[%s9 + $0x20] sm:$0xff] %vm783, %v760
  %789 = vst.msk [vmem:[%s9 + $0x28] sm:$0xff] %vm783, %v762
  %790 = vst.msk [vmem:[%s9 + $0x30] sm:$0xff] %vm783, %v764
  %791 = vst.msk [vmem:[%s9 + $0x38] sm:$0xff] %vm783, %v766
  %792 = vst.msk [vmem:[%s9 + $0x40] sm:$0xff] %vm783, %v768
  %793 = vst.msk [vmem:[%s9 + $0x48] sm:$0xff] %vm783, %v770
  %794 = vst.msk [vmem:[%s9 + $0x50] sm:$0xff] %vm783, %v772
  %795 = vst.msk [vmem:[%s9 + $0x58] sm:$0xff] %vm783, %v774
  %796 = vst.msk [vmem:[%s9 + $0x60] sm:$0xff] %vm783, %v776
  %797 = vst.msk [vmem:[%s9 + $0x68] sm:$0xff] %vm783, %v778
  %798 = vst.msk [vmem:[%s9 + $0x70] sm:$0xff] %vm783, %v780
  %799 = vst.msk [vmem:[%s9 + $0x78] sm:$0xff] %vm783, %v782
  // Predicated region
  $region38: #{upsampling_forward.2} parent=0 // pred_check
    _
  $region39: #{upsampling_forward.2} parent=0 // pred_check_branch
    %801 = sbr.rel (0) target = $region41
  $region40: #{upsampling_forward.2} parent=0 // pred_region
    _
  $region41: #{upsampling_forward.2} parent=0 // pred_fallthru
    _
  // Predicated region
  $region42: #{upsampling_forward.2} parent=0 // pred_check
    _
  $region43: #{upsampling_forward.2} parent=0 // pred_check_branch
    %803 = sbr.rel (0) target = $region45
  $region44: #{upsampling_forward.2} parent=0 // pred_region
    _
  $region45: #{upsampling_forward.2} parent=0 // pred_fallthru
    _

// kernel: upsampling_forward.3
$region0: #{upsampling_forward.3}
  #allocation0 [shape = 'u32[]', space=smem, size = 0x4, offset = 0x4, fixed_abs, tag = 'smem constant byte address 0x4 - core index']
  #allocation1 [shape = 'u32[144,128]{1,0:T(1,128)}', space=vmem, size = 0x12000, scoped, tag = 'internal scratch']
  #allocation2 [shape = 'f32[18,32,4]{2,1,0:T(8,128)}', space=vmem, size = 0x48000, scoped, tag = 'scratch operand']
  #allocation3 [shape = 'f32[18,32,8]{2,1,0:T(8,128)}', space=vmem, size = 0x48000, scoped, tag = 'scratch operand']
  #allocation4 [shape = 'f32[18,32,8]{2,1,0:T(8,128)}', space=vmem, size = 0x48000, scoped, tag = 'scratch operand']
  %s0 = inlined_call_operand.vmem [shape: f32[2,16,16,4], index: 0, kind: input, shape index: {}]
  %s1 = inlined_call_operand.vmem [shape: f32[2,16,16,8], index: 1, kind: input, shape index: {}]
  %s2 = inlined_call_operand.vmem [shape: f32[2,16,16,1], index: 2, kind: input, shape index: {}]
  %s3 = inlined_call_operand.vmem [shape: f32[3,3,4,8], index: 3, kind: input, shape index: {}]
  %s4 = inlined_call_operand.vmem [shape: f32[3,3,8,8], index: 4, kind: input, shape index: {}]
  %s5 = inlined_call_operand.vmem [shape: f32[1,8], index: 5, kind: input, shape index: {}]
  %s6 = inlined_call_operand.vmem [shape: f32[3,3,8,8], index: 6, kind: input, shape index: {}]
  %s7 = inlined_call_operand.vmem [shape: f32[1,8], index: 7, kind: input, shape index: {}]
  %s8 = inlined_call_operand.vmem [shape: f32[2,16,16,8], index: 8, kind: output, shape index: {}]
  %s9 = sld [smem:[#allocation0]]
  $region65: #{upsampling_forward.3} parent=0
    _
  %s11 = ssub.s32 1, %s9
  %s12 = scalar_select 0, %s11, %s9
  loop: start=0, step=1, limit=4
  $region2: #{upsampling_forward.3} parent=0 // loop_pre_header
    _
  $region3: #{upsampling_forward.3} parent=0 // loop_header
    %s14 = sphi 0, %s18
    %p15 = scmp.ge.s32.totalorder %s14, 4
    %s24 = sphi 0, %s26
    %s27 = sphi 0, %s24
    %s28 = sphi 0, %s27
    %s44 = sphi 0, %s28
    %s50 = sphi 0, %s52
    %s53 = sphi 0, %s50
    %s54 = sphi 0, %s53
    %s70 = sphi 0, %s54
    %s76 = sphi 0, %s78
    %s79 = sphi 0, %s76
    %s80 = sphi 0, %s79
    %s96 = sphi 0, %s80
    %s100 = sphi 0, %s100
    %s102 = sphi 0, %s100
    %s103 = sphi 0, %s102
    %s117 = sphi 0, %s103
    %s121 = sphi 0, %s121
    %s123 = sphi 0, %s121
    %s124 = sphi 0, %s123
    %s138 = sphi 0, %s124
    %s142 = sphi 0, %s142
    %s144 = sphi 0, %s142
    %s145 = sphi 0, %s144
    %s159 = sphi 0, %s145
    %s163 = sphi 0, %s163
    %s165 = sphi 0, %s163
    %s166 = sphi 0, %s165
    %s180 = sphi 0, %s166
    %s184 = sphi 0, %s184
    %s186 = sphi 0, %s184
    %s187 = sphi 0, %s186
    %s201 = sphi 0, %s187
    %s207 = sphi 0, %s209
    %s210 = sphi 0, %s207
    %s211 = sphi 0, %s210
    %s227 = sphi 0, %s211
  $region4: #{upsampling_forward.3} parent=0 // loop_header_branch
    %17 = sbr.rel (%p15) target = $region8
  $region5: #{upsampling_forward.3} parent=0 // loop_body
    %s19 = ssub.s32 %s14, 1
    %s20 = ssub.s32 %s14, 2
    %s21 = sadd.s32 %s14, 1
    %s22 = ssub.s32 %s14, %s21
    %p23 = scmp.eq.s32.totalorder %s22, 0
    %s25 = sadd.s32 %s24, 1
    %s26 = scalar_select %p23, %s24, %s25
    %p29 = pneg %p23
    %p30 = scmp.eq.s32.totalorder %s14, 1
    %p31 = por %p29, %p30
    %p32 = scmp.ne.s32.totalorder %s24, %s27
    %p33 = scmp.eq.s32.totalorder %s14, 0
    %p34 = por %p32, %p33
    %p35 = scmp.ne.s32.totalorder %s24, %s27
    %p36 = scmp.eq.s32.totalorder %s19, 1
    %p37 = por %p35, %p36
    %p38 = scmp.ne.s32.totalorder %s27, %s28
    %p39 = scmp.eq.s32.totalorder %s19, 0
    %p40 = por %p38, %p39
    %p41 = scmp.ne.s32.totalorder %s27, %s28
    %p42 = scmp.eq.s32.totalorder %s20, 1
    %p43 = por %p41, %p42
    %p45 = scmp.ne.s32.totalorder %s28, %s44
    %p46 = scmp.eq.s32.totalorder %s20, 0
    %p47 = por %p45, %p46
    %s48 = ssub.s32 %s14, %s21
    %p49 = scmp.eq.s32.totalorder %s48, 0
    %s51 = sadd.s32 %s50, 1
    %s52 = scalar_select %p49, %s50, %s51
    %p55 = pneg %p49
    %p56 = scmp.eq.s32.totalorder %s14, 1
    %p57 = por %p55, %p56
    %p58 = scmp.ne.s32.totalorder %s50, %s53
    %p59 = scmp.eq.s32.totalorder %s14, 0
    %p60 = por %p58, %p59
    %p61 = scmp.ne.s32.totalorder %s50, %s53
    %p62 = scmp.eq.s32.totalorder %s19, 1
    %p63 = por %p61, %p62
    %p64 = scmp.ne.s32.totalorder %s53, %s54
    %p65 = scmp.eq.s32.totalorder %s19, 0
    %p66 = por %p64, %p65
    %p67 = scmp.ne.s32.totalorder %s53, %s54
    %p68 = scmp.eq.s32.totalorder %s20, 1
    %p69 = por %p67, %p68
    %p71 = scmp.ne.s32.totalorder %s54, %s70
    %p72 = scmp.eq.s32.totalorder %s20, 0
    %p73 = por %p71, %p72
    %s74 = ssub.s32 %s14, %s21
    %p75 = scmp.eq.s32.totalorder %s74, 0
    %s77 = sadd.s32 %s76, 1
    %s78 = scalar_select %p75, %s76, %s77
    %p81 = pneg %p75
    %p82 = scmp.eq.s32.totalorder %s14, 1
    %p83 = por %p81, %p82
    %p84 = scmp.ne.s32.totalorder %s76, %s79
    %p85 = scmp.eq.s32.totalorder %s14, 0
    %p86 = por %p84, %p85
    %p87 = scmp.ne.s32.totalorder %s76, %s79
    %p88 = scmp.eq.s32.totalorder %s19, 1
    %p89 = por %p87, %p88
    %p90 = scmp.ne.s32.totalorder %s79, %s80
    %p91 = scmp.eq.s32.totalorder %s19, 0
    %p92 = por %p90, %p91
    %p93 = scmp.ne.s32.totalorder %s79, %s80
    %p94 = scmp.eq.s32.totalorder %s20, 1
    %p95 = por %p93, %p94
    %p97 = scmp.ne.s32.totalorder %s80, %s96
    %p98 = scmp.eq.s32.totalorder %s20, 0
    %p99 = por %p97, %p98
    %s101 = sadd.s32 %s100, 1
    %p104 = scmp.eq.s32.totalorder %s14, 1
    %p105 = scmp.ne.s32.totalorder %s100, %s102
    %p106 = scmp.eq.s32.totalorder %s14, 0
    %p107 = por %p105, %p106
    %p108 = scmp.ne.s32.totalorder %s100, %s102
    %p109 = scmp.eq.s32.totalorder %s19, 1
    %p110 = por %p108, %p109
    %p111 = scmp.ne.s32.totalorder %s102, %s103
    %p112 = scmp.eq.s32.totalorder %s19, 0
    %p113 = por %p111, %p112
    %p114 = scmp.ne.s32.totalorder %s102, %s103
    %p115 = scmp.eq.s32.totalorder %s20, 1
    %p116 = por %p114, %p115
    %p118 = scmp.ne.s32.totalorder %s103, %s117
    %p119 = scmp.eq.s32.totalorder %s20, 0
    %p120 = por %p118, %p119
    %s122 = sadd.s32 %s121, 1
    %p125 = scmp.eq.s32.totalorder %s14, 1
    %p126 = scmp.ne.s32.totalorder %s121, %s123
    %p127 = scmp.eq.s32.totalorder %s14, 0
    %p128 = por %p126, %p127
    %p129 = scmp.ne.s32.totalorder %s121, %s123
    %p130 = scmp.eq.s32.totalorder %s19, 1
    %p131 = por %p129, %p130
    %p132 = scmp.ne.s32.totalorder %s123, %s124
    %p133 = scmp.eq.s32.totalorder %s19, 0
    %p134 = por %p132, %p133
    %p135 = scmp.ne.s32.totalorder %s123, %s124
    %p136 = scmp.eq.s32.totalorder %s20, 1
    %p137 = por %p135, %p136
    %p139 = scmp.ne.s32.totalorder %s124, %s138
    %p140 = scmp.eq.s32.totalorder %s20, 0
    %p141 = por %p139, %p140
    %s143 = sadd.s32 %s142, 1
    %p146 = scmp.eq.s32.totalorder %s14, 1
    %p147 = scmp.ne.s32.totalorder %s142, %s144
    %p148 = scmp.eq.s32.totalorder %s14, 0
    %p149 = por %p147, %p148
    %p150 = scmp.ne.s32.totalorder %s142, %s144
    %p151 = scmp.eq.s32.totalorder %s19, 1
    %p152 = por %p150, %p151
    %p153 = scmp.ne.s32.totalorder %s144, %s145
    %p154 = scmp.eq.s32.totalorder %s19, 0
    %p155 = por %p153, %p154
    %p156 = scmp.ne.s32.totalorder %s144, %s145
    %p157 = scmp.eq.s32.totalorder %s20, 1
    %p158 = por %p156, %p157
    %p160 = scmp.ne.s32.totalorder %s145, %s159
    %p161 = scmp.eq.s32.totalorder %s20, 0
    %p162 = por %p160, %p161
    %s164 = sadd.s32 %s163, 1
    %p167 = scmp.eq.s32.totalorder %s14, 1
    %p168 = scmp.ne.s32.totalorder %s163, %s165
    %p169 = scmp.eq.s32.totalorder %s14, 0
    %p170 = por %p168, %p169
    %p171 = scmp.ne.s32.totalorder %s163, %s165
    %p172 = scmp.eq.s32.totalorder %s19, 1
    %p173 = por %p171, %p172
    %p174 = scmp.ne.s32.totalorder %s165, %s166
    %p175 = scmp.eq.s32.totalorder %s19, 0
    %p176 = por %p174, %p175
    %p177 = scmp.ne.s32.totalorder %s165, %s166
    %p178 = scmp.eq.s32.totalorder %s20, 1
    %p179 = por %p177, %p178
    %p181 = scmp.ne.s32.totalorder %s166, %s180
    %p182 = scmp.eq.s32.totalorder %s20, 0
    %p183 = por %p181, %p182
    %s185 = sadd.s32 %s184, 1
    %p188 = scmp.eq.s32.totalorder %s14, 1
    %p189 = scmp.ne.s32.totalorder %s184, %s186
    %p190 = scmp.eq.s32.totalorder %s14, 0
    %p191 = por %p189, %p190
    %p192 = scmp.ne.s32.totalorder %s184, %s186
    %p193 = scmp.eq.s32.totalorder %s19, 1
    %p194 = por %p192, %p193
    %p195 = scmp.ne.s32.totalorder %s186, %s187
    %p196 = scmp.eq.s32.totalorder %s19, 0
    %p197 = por %p195, %p196
    %p198 = scmp.ne.s32.totalorder %s186, %s187
    %p199 = scmp.eq.s32.totalorder %s20, 1
    %p200 = por %p198, %p199
    %p202 = scmp.ne.s32.totalorder %s187, %s201
    %p203 = scmp.eq.s32.totalorder %s20, 0
    %p204 = por %p202, %p203
    %s205 = ssub.s32 %s14, %s21
    %p206 = scmp.eq.s32.totalorder %s205, 0
    %s208 = sadd.s32 %s207, 1
    %s209 = scalar_select %p206, %s207, %s208
    %p212 = pneg %p206
    %p213 = scmp.eq.s32.totalorder %s14, 1
    %p214 = por %p212, %p213
    %p215 = scmp.ne.s32.totalorder %s207, %s210
    %p216 = scmp.eq.s32.totalorder %s14, 0
    %p217 = por %p215, %p216
    %p218 = scmp.ne.s32.totalorder %s207, %s210
    %p219 = scmp.eq.s32.totalorder %s19, 1
    %p220 = por %p218, %p219
    %p221 = scmp.ne.s32.totalorder %s210, %s211
    %p222 = scmp.eq.s32.totalorder %s19, 0
    %p223 = por %p221, %p222
    %p224 = scmp.ne.s32.totalorder %s210, %s211
    %p225 = scmp.eq.s32.totalorder %s20, 1
    %p226 = por %p224, %p225
    %p228 = scmp.ne.s32.totalorder %s211, %s227
    %p229 = scmp.eq.s32.totalorder %s20, 0
    %p230 = por %p228, %p229
    %p231 = scmp.le.s32.totalorder 1, %s14
    %p232 = scmp.lt.s32.totalorder %s14, 3
    %p233 = pnand %p231, %p232
    %p234 = pneg %p233
    // Predicated region
    $region9: #{upsampling_forward.3} parent=5 // pred_check
      _
    $region10: #{upsampling_forward.3} parent=5 // pred_check_branch
      %236 = sbr.rel (%p233) target = $region12
    $region11: #{upsampling_forward.3} parent=5 // pred_region
      %s237 = ssub.s32 %s14, 1
      // Predicated region
      $region13: #{upsampling_forward.3} parent=11 // pred_check
        %p238 = pneg %p113
      $region14: #{upsampling_forward.3} parent=11 // pred_check_branch
        %240 = sbr.rel (%p238) target = $region16
      $region15: #{upsampling_forward.3} parent=11 // pred_region
        _
      $region16: #{upsampling_forward.3} parent=11 // pred_fallthru
        _
      // Predicated region
      $region17: #{upsampling_forward.3} parent=11 // pred_check
        %p241 = pneg %p134
      $region18: #{upsampling_forward.3} parent=11 // pred_check_branch
        %243 = sbr.rel (%p241) target = $region20
      $region19: #{upsampling_forward.3} parent=11 // pred_region
        _
      $region20: #{upsampling_forward.3} parent=11 // pred_fallthru
        _
      // Predicated region
      $region21: #{upsampling_forward.3} parent=11 // pred_check
        %p244 = pneg %p155
      $region22: #{upsampling_forward.3} parent=11 // pred_check_branch
        %246 = sbr.rel (%p244) target = $region24
      $region23: #{upsampling_forward.3} parent=11 // pred_region
        _
      $region24: #{upsampling_forward.3} parent=11 // pred_fallthru
        _
      // Predicated region
      $region25: #{upsampling_forward.3} parent=11 // pred_check
        %p247 = pneg %p176
      $region26: #{upsampling_forward.3} parent=11 // pred_check_branch
        %249 = sbr.rel (%p247) target = $region28
      $region27: #{upsampling_forward.3} parent=11 // pred_region
        _
      $region28: #{upsampling_forward.3} parent=11 // pred_fallthru
        _
      // Predicated region
      $region29: #{upsampling_forward.3} parent=11 // pred_check
        %p250 = pneg %p197
      $region30: #{upsampling_forward.3} parent=11 // pred_check_branch
        %252 = sbr.rel (%p250) target = $region32
      $region31: #{upsampling_forward.3} parent=11 // pred_region
        _
      $region32: #{upsampling_forward.3} parent=11 // pred_fallthru
        _
    $region12: #{upsampling_forward.3} parent=5 // pred_fallthru
      _
    %p253 = scmp.lt.s32.totalorder %s14, 2
    // Predicated region
    $region33: #{upsampling_forward.3} parent=5 // pred_check
      %p254 = pneg %p253
    $region34: #{upsampling_forward.3} parent=5 // pred_check_branch
      %256 = sbr.rel (%p254) target = $region36
    $region35: #{upsampling_forward.3} parent=5 // pred_region
      // Predicated region
      $region37: #{upsampling_forward.3} parent=35 // pred_check
        %p257 = pneg %p34
      $region38: #{upsampling_forward.3} parent=35 // pred_check_branch
        %259 = sbr.rel (%p257) target = $region40
      $region39: #{upsampling_forward.3} parent=35 // pred_region
        %p260 = scmp.lt.s32.totalorder %s14, 1
        %s261 = scalar_select %p260, %s14, 1
        %s262 = smul.addr %s261, 32
        %s263 = smul.addr %s262, 8
        %s264 = scalar_lea.vmem %s0, %s263
      $region40: #{upsampling_forward.3} parent=35 // pred_fallthru
        _
      // Predicated region
      $region41: #{upsampling_forward.3} parent=35 // pred_check
        %p265 = pneg %p60
      $region42: #{upsampling_forward.3} parent=35 // pred_check_branch
        %267 = sbr.rel (%p265) target = $region44
      $region43: #{upsampling_forward.3} parent=35 // pred_region
        %p268 = scmp.lt.s32.totalorder %s14, 1
        %s269 = scalar_select %p268, %s14, 1
        %s270 = smul.addr %s269, 32
        %s271 = smul.addr %s270, 8
        %s272 = scalar_lea.vmem %s1, %s271
      $region44: #{upsampling_forward.3} parent=35 // pred_fallthru
        _
      // Predicated region
      $region45: #{upsampling_forward.3} parent=35 // pred_check
        %p273 = pneg %p86
      $region46: #{upsampling_forward.3} parent=35 // pred_check_branch
        %275 = sbr.rel (%p273) target = $region48
      $region47: #{upsampling_forward.3} parent=35 // pred_region
        %p276 = scmp.lt.s32.totalorder %s14, 1
        %s277 = scalar_select %p276, %s14, 1
        %s278 = smul.addr %s277, 32
        %s279 = smul.addr %s278, 8
        %s280 = scalar_lea.vmem %s2, %s279
      $region48: #{upsampling_forward.3} parent=35 // pred_fallthru
        _
    $region36: #{upsampling_forward.3} parent=5 // pred_fallthru
      _
    %p281 = scmp.le.s32.totalorder 1, %s14
    %p282 = scmp.lt.s32.totalorder %s14, 3
    %p283 = pnand %p281, %p282
    %p284 = pneg %p283
    // Predicated region
    $region49: #{upsampling_forward.3} parent=5 // pred_check
      _
    $region50: #{upsampling_forward.3} parent=5 // pred_check_branch
      %286 = sbr.rel (%p283) target = $region52
    $region51: #{upsampling_forward.3} parent=5 // pred_region
      %s287 = ssub.s32 %s14, 1
      %p288 = scmp.lt.s32.totalorder %s19, 1
      %s289 = scalar_select %p288, %s19, 1
      %s290 = smul.addr %s289, 32
      %s291 = smul.addr %s290, 8
      %s292 = scalar_lea.vmem %s0, %s291
      %p293 = pneg %p40
      %p294 = pneg %p37
      %p295 = scmp.lt.s32.totalorder %s19, 1
      %s296 = scalar_select %p295, %s19, 1
      %s297 = smul.addr %s296, 32
      %s298 = smul.addr %s297, 8
      %s299 = scalar_lea.vmem %s1, %s298
      %p300 = pneg %p66
      %p301 = pneg %p63
      %p302 = scmp.lt.s32.totalorder %s19, 1
      %s303 = scalar_select %p302, %s19, 1
      %s304 = smul.addr %s303, 32
      %s305 = smul.addr %s304, 8
      %s306 = scalar_lea.vmem %s2, %s305
      %p307 = pneg %p92
      %p308 = pneg %p89
      %p309 = pneg %p113
      %p310 = pneg %p110
      %p311 = pneg %p134
      %p312 = pneg %p131
      %p313 = pneg %p155
      %p314 = pneg %p152
      %p315 = pneg %p176
      %p316 = pneg %p173
      %p317 = pneg %p197
      %p318 = pneg %p194
      %p319 = pneg %p223
      %p320 = pneg %p220
      %p321 = scmp.lt.s32.totalorder %s19, 1
      %s322 = scalar_select %p321, %s19, 1
      %s323 = smul.addr %s322, 32
      %s324 = smul.addr %s323, 8
      %s325 = scalar_lea.vmem %s8, %s324
      %p326 = scmp.lt.s32.totalorder %s19, 1
      %s327 = scalar_select %p326, %s19, 1
      %s328 = smul.addr %s327, 32
      %s329 = smul.addr %s328, 8
      %s330 = scalar_lea.vmem %s0, %s329
      %p331 = scmp.lt.s32.totalorder %s19, 1
      %s332 = scalar_select %p331, %s19, 1
      %s333 = smul.addr %s332, 32
      %s334 = smul.addr %s333, 8
      %s335 = scalar_lea.vmem %s1, %s334
      %p336 = scmp.lt.s32.totalorder %s19, 1
      %s337 = scalar_select %p336, %s19, 1
      %s338 = smul.addr %s337, 32
      %s339 = smul.addr %s338, 8
      %s340 = scalar_lea.vmem %s2, %s339
      %p341 = scmp.lt.s32.totalorder %s19, 1
      %s342 = scalar_select %p341, %s19, 1
      %s343 = smul.addr %s342, 32
      %s344 = smul.addr %s343, 8
      %s345 = scalar_lea.vmem %s8, %s344
      %v346 = vld [vmem:[%s3] sm:$0xf]
      %v347 = vld [vmem:[%s3 + $0x4] sm:$0xf]
      %v348 = vld [vmem:[%s3 + $0x8] sm:$0xf]
      %v349 = vld [vmem:[%s3 + $0xc] sm:$0xf]
      %v350 = vld [vmem:[%s3 + $0x10] sm:$0xf]
      %v351 = vld [vmem:[%s3 + $0x14] sm:$0xf]
      %v352 = vld [vmem:[%s3 + $0x18] sm:$0xf]
      %v353 = vld [vmem:[%s3 + $0x1c] sm:$0xf]
      %v354 = vld [vmem:[%s3 + $0x20] sm:$0xf]
      %v355 = vld [vmem:[%s4] sm:$0xff]
      %v356 = vld [vmem:[%s4 + $0x8] sm:$0xff]
      %v357 = vld [vmem:[%s4 + $0x10] sm:$0xff]
      %v358 = vld [vmem:[%s4 + $0x18] sm:$0xff]
      %v359 = vld [vmem:[%s4 + $0x20] sm:$0xff]
      %v360 = vld [vmem:[%s4 + $0x28] sm:$0xff]
      %v361 = vld [vmem:[%s4 + $0x30] sm:$0xff]
      %v362 = vld [vmem:[%s4 + $0x38] sm:$0xff]
      %v363 = vld [vmem:[%s4 + $0x40] sm:$0xff]
      %v364 = vld [vmem:[%s6] sm:$0xff]
      %v365 = vld [vmem:[%s6 + $0x8] sm:$0xff]
      %v366 = vld [vmem:[%s6 + $0x10] sm:$0xff]
      %v367 = vld [vmem:[%s6 + $0x18] sm:$0xff]
      %v368 = vld [vmem:[%s6 + $0x20] sm:$0xff]
      %v369 = vld [vmem:[%s6 + $0x28] sm:$0xff]
      %v370 = vld [vmem:[%s6 + $0x30] sm:$0xff]
      %v371 = vld [vmem:[%s6 + $0x38] sm:$0xff]
      %v372 = vld [vmem:[%s6 + $0x40] sm:$0xff]
      %v373 = vld [vmem:[%s5] sm:$0x1]
      %v374 = vld [vmem:[%s7] sm:$0x1]
      %vm375 = vcmask 31744
      %376 = vst.msk [vmem:[#allocation2] sm:$0xff] %vm375, 0.0
      %377 = vst.msk [vmem:[#allocation2 + $0x8] sm:$0xff] %vm375, 0.0
      %378 = vst.msk [vmem:[#allocation2 + $0x10] sm:$0xff] %vm375, 0.0
      %379 = vst.msk [vmem:[#allocation2 + $0x18] sm:$0xff] %vm375, 0.0
      %380 = vst.msk [vmem:[#allocation2 + $0x20] sm:$0xff] %vm375, 0.0
      %381 = vst.msk [vmem:[#allocation2 + $0x28] sm:$0xff] %vm375, 0.0
      %382 = vst.msk [vmem:[#allocation2 + $0x30] sm:$0xff] %vm375, 0.0
      %383 = vst.msk [vmem:[#allocation2 + $0x38] sm:$0xff] %vm375, 0.0
      %384 = vst.msk [vmem:[#allocation2 + $0x40] sm:$0xff] %vm375, 0.0
      %385 = vst.msk [vmem:[#allocation2 + $0x48] sm:$0xff] %vm375, 0.0
      %386 = vst.msk [vmem:[#allocation2 + $0x50] sm:$0xff] %vm375, 0.0
      %387 = vst.msk [vmem:[#allocation2 + $0x58] sm:$0xff] %vm375, 0.0
      %388 = vst.msk [vmem:[#allocation2 + $0x60] sm:$0xff] %vm375, 0.0
      %389 = vst.msk [vmem:[#allocation2 + $0x68] sm:$0xff] %vm375, 0.0
      %390 = vst.msk [vmem:[#allocation2 + $0x70] sm:$0xff] %vm375, 0.0
      %391 = vst.msk [vmem:[#allocation2 + $0x78] sm:$0xff] %vm375, 0.0
      %392 = vst.msk [vmem:[#allocation2 + $0x80] sm:$0xff] %vm375, 0.0
      %393 = vst.msk [vmem:[#allocation2 + $0x88] sm:$0xff] %vm375, 0.0
      %394 = vst.msk [vmem:[#allocation2 + $0x90] sm:$0xff] %vm375, 0.0
      %395 = vst.msk [vmem:[#allocation2 + $0x98] sm:$0xff] %vm375, 0.0
      %396 = vst.msk [vmem:[#allocation2 + $0xa0] sm:$0xff] %vm375, 0.0
      %397 = vst.msk [vmem:[#allocation2 + $0xa8] sm:$0xff] %vm375, 0.0
      %398 = vst.msk [vmem:[#allocation2 + $0xb0] sm:$0xff] %vm375, 0.0
      %399 = vst.msk [vmem:[#allocation2 + $0xb8] sm:$0xff] %vm375, 0.0
      %400 = vst.msk [vmem:[#allocation2 + $0xc0] sm:$0xff] %vm375, 0.0
      %401 = vst.msk [vmem:[#allocation2 + $0xc8] sm:$0xff] %vm375, 0.0
      %402 = vst.msk [vmem:[#allocation2 + $0xd0] sm:$0xff] %vm375, 0.0
      %403 = vst.msk [vmem:[#allocation2 + $0xd8] sm:$0xff] %vm375, 0.0
      %404 = vst.msk [vmem:[#allocation2 + $0xe0] sm:$0xff] %vm375, 0.0
      %405 = vst.msk [vmem:[#allocation2 + $0xe8] sm:$0xff] %vm375, 0.0
      %406 = vst.msk [vmem:[#allocation2 + $0xf0] sm:$0xff] %vm375, 0.0
      %407 = vst.msk [vmem:[#allocation2 + $0xf8] sm:$0xff] %vm375, 0.0
      %408 = vst.msk [vmem:[#allocation2 + $0x100] sm:$0xff] %vm375, 0.0
      %409 = vst.msk [vmem:[#allocation2 + $0x108] sm:$0xff] %vm375, 0.0
      %410 = vst.msk [vmem:[#allocation2 + $0x110] sm:$0xff] %vm375, 0.0
      %411 = vst.msk [vmem:[#allocation2 + $0x118] sm:$0xff] %vm375, 0.0
      %412 = vst.msk [vmem:[#allocation2 + $0x120] sm:$0xff] %vm375, 0.0
      %413 = vst.msk [vmem:[#allocation2 + $0x128] sm:$0xff] %vm375, 0.0
      %414 = vst.msk [vmem:[#allocation2 + $0x130] sm:$0xff] %vm375, 0.0
      %415 = vst.msk [vmem:[#allocation2 + $0x138] sm:$0xff] %vm375, 0.0
      %416 = vst.msk [vmem:[#allocation2 + $0x140] sm:$0xff] %vm375, 0.0
      %417 = vst.msk [vmem:[#allocation2 + $0x148] sm:$0xff] %vm375, 0.0
      %418 = vst.msk [vmem:[#allocation2 + $0x150] sm:$0xff] %vm375, 0.0
      %419 = vst.msk [vmem:[#allocation2 + $0x158] sm:$0xff] %vm375, 0.0
      %420 = vst.msk [vmem:[#allocation2 + $0x160] sm:$0xff] %vm375, 0.0
      %421 = vst.msk [vmem:[#allocation2 + $0x168] sm:$0xff] %vm375, 0.0
      %422 = vst.msk [vmem:[#allocation2 + $0x170] sm:$0xff] %vm375, 0.0
      %423 = vst.msk [vmem:[#allocation2 + $0x178] sm:$0xff] %vm375, 0.0
      %424 = vst.msk [vmem:[#allocation2 + $0x180] sm:$0xff] %vm375, 0.0
      %425 = vst.msk [vmem:[#allocation2 + $0x188] sm:$0xff] %vm375, 0.0
      %426 = vst.msk [vmem:[#allocation2 + $0x190] sm:$0xff] %vm375, 0.0
      %427 = vst.msk [vmem:[#allocation2 + $0x198] sm:$0xff] %vm375, 0.0
      %428 = vst.msk [vmem:[#allocation2 + $0x1a0] sm:$0xff] %vm375, 0.0
      %429 = vst.msk [vmem:[#allocation2 + $0x1a8] sm:$0xff] %vm375, 0.0
      %430 = vst.msk [vmem:[#allocation2 + $0x1b0] sm:$0xff] %vm375, 0.0
      %431 = vst.msk [vmem:[#allocation2 + $0x1b8] sm:$0xff] %vm375, 0.0
      %432 = vst.msk [vmem:[#allocation2 + $0x1c0] sm:$0xff] %vm375, 0.0
      %433 = vst.msk [vmem:[#allocation2 + $0x1c8] sm:$0xff] %vm375, 0.0
      %434 = vst.msk [vmem:[#allocation2 + $0x1d0] sm:$0xff] %vm375, 0.0
      %435 = vst.msk [vmem:[#allocation2 + $0x1d8] sm:$0xff] %vm375, 0.0
      %436 = vst.msk [vmem:[#allocation2 + $0x1e0] sm:$0xff] %vm375, 0.0
      %437 = vst.msk [vmem:[#allocation2 + $0x1e8] sm:$0xff] %vm375, 0.0
      %438 = vst.msk [vmem:[#allocation2 + $0x1f0] sm:$0xff] %vm375, 0.0
      %439 = vst.msk [vmem:[#allocation2 + $0x1f8] sm:$0xff] %vm375, 0.0
      %440 = vst.msk [vmem:[#allocation2 + $0x200] sm:$0xff] %vm375, 0.0
      %441 = vst.msk [vmem:[#allocation2 + $0x208] sm:$0xff] %vm375, 0.0
      %442 = vst.msk [vmem:[#allocation2 + $0x210] sm:$0xff] %vm375, 0.0
      %443 = vst.msk [vmem:[#allocation2 + $0x218] sm:$0xff] %vm375, 0.0
      %444 = vst.msk [vmem:[#allocation2 + $0x220] sm:$0xff] %vm375, 0.0
      %445 = vst.msk [vmem:[#allocation2 + $0x228] sm:$0xff] %vm375, 0.0
      %446 = vst.msk [vmem:[#allocation2 + $0x230] sm:$0xff] %vm375, 0.0
      %447 = vst.msk [vmem:[#allocation2 + $0x238] sm:$0xff] %vm375, 0.0
      %vm448 = vcmask 64512
      %449 = vst.msk [vmem:[#allocation3] sm:$0xff] %vm448, 0.0
      %450 = vst.msk [vmem:[#allocation3 + $0x8] sm:$0xff] %vm448, 0.0
      %451 = vst.msk [vmem:[#allocation3 + $0x10] sm:$0xff] %vm448, 0.0
      %452 = vst.msk [vmem:[#allocation3 + $0x18] sm:$0xff] %vm448, 0.0
      %453 = vst.msk [vmem:[#allocation3 + $0x20] sm:$0xff] %vm448, 0.0
      %454 = vst.msk [vmem:[#allocation3 + $0x28] sm:$0xff] %vm448, 0.0
      %455 = vst.msk [vmem:[#allocation3 + $0x30] sm:$0xff] %vm448, 0.0
      %456 = vst.msk [vmem:[#allocation3 + $0x38] sm:$0xff] %vm448, 0.0
      %457 = vst.msk [vmem:[#allocation3 + $0x40] sm:$0xff] %vm448, 0.0
      %458 = vst.msk [vmem:[#allocation3 + $0x48] sm:$0xff] %vm448, 0.0
      %459 = vst.msk [vmem:[#allocation3 + $0x50] sm:$0xff] %vm448, 0.0
      %460 = vst.msk [vmem:[#allocation3 + $0x58] sm:$0xff] %vm448, 0.0
      %461 = vst.msk [vmem:[#allocation3 + $0x60] sm:$0xff] %vm448, 0.0
      %462 = vst.msk [vmem:[#allocation3 + $0x68] sm:$0xff] %vm448, 0.0
      %463 = vst.msk [vmem:[#allocation3 + $0x70] sm:$0xff] %vm448, 0.0
      %464 = vst.msk [vmem:[#allocation3 + $0x78] sm:$0xff] %vm448, 0.0
      %465 = vst.msk [vmem:[#allocation3 + $0x80] sm:$0xff] %vm448, 0.0
      %466 = vst.msk [vmem:[#allocation3 + $0x88] sm:$0xff] %vm448, 0.0
      %467 = vst.msk [vmem:[#allocation3 + $0x90] sm:$0xff] %vm448, 0.0
      %468 = vst.msk [vmem:[#allocation3 + $0x98] sm:$0xff] %vm448, 0.0
      %469 = vst.msk [vmem:[#allocation3 + $0xa0] sm:$0xff] %vm448, 0.0
      %470 = vst.msk [vmem:[#allocation3 + $0xa8] sm:$0xff] %vm448, 0.0
      %471 = vst.msk [vmem:[#allocation3 + $0xb0] sm:$0xff] %vm448, 0.0
      %472 = vst.msk [vmem:[#allocation3 + $0xb8] sm:$0xff] %vm448, 0.0
      %473 = vst.msk [vmem:[#allocation3 + $0xc0] sm:$0xff] %vm448, 0.0
      %474 = vst.msk [vmem:[#allocation3 + $0xc8] sm:$0xff] %vm448, 0.0
      %475 = vst.msk [vmem:[#allocation3 + $0xd0] sm:$0xff] %vm448, 0.0
      %476 = vst.msk [vmem:[#allocation3 + $0xd8] sm:$0xff] %vm448, 0.0
      %477 = vst.msk [vmem:[#allocation3 + $0xe0] sm:$0xff] %vm448, 0.0
      %478 = vst.msk [vmem:[#allocation3 + $0xe8] sm:$0xff] %vm448, 0.0
      %479 = vst.msk [vmem:[#allocation3 + $0xf0] sm:$0xff] %vm448, 0.0
      %480 = vst.msk [vmem:[#allocation3 + $0xf8] sm:$0xff] %vm448, 0.0
      %481 = vst.msk [vmem:[#allocation3 + $0x100] sm:$0xff] %vm448, 0.0
      %482 = vst.msk [vmem:[#allocation3 + $0x108] sm:$0xff] %vm448, 0.0
      %483 = vst.msk [vmem:[#allocation3 + $0x110] sm:$0xff] %vm448, 0.0
      %484 = vst.msk [vmem:[#allocation3 + $0x118] sm:$0xff] %vm448, 0.0
      %485 = vst.msk [vmem:[#allocation3 + $0x120] sm:$0xff] %vm448, 0.0
      %486 = vst.msk [vmem:[#allocation3 + $0x128] sm:$0xff] %vm448, 0.0
      %487 = vst.msk [vmem:[#allocation3 + $0x130] sm:$0xff] %vm448, 0.0
      %488 = vst.msk [vmem:[#allocation3 + $0x138] sm:$0xff] %vm448, 0.0
      %489 = vst.msk [vmem:[#allocation3 + $0x140] sm:$0xff] %vm448, 0.0
      %490 = vst.msk [vmem:[#allocation3 + $0x148] sm:$0xff] %vm448, 0.0
      %491 = vst.msk [vmem:[#allocation3 + $0x150] sm:$0xff] %vm448, 0.0
      %492 = vst.msk [vmem:[#allocation3 + $0x158] sm:$0xff] %vm448, 0.0
      %493 = vst.msk [vmem:[#allocation3 + $0x160] sm:$0xff] %vm448, 0.0
      %494 = vst.msk [vmem:[#allocation3 + $0x168] sm:$0xff] %vm448, 0.0
      %495 = vst.msk [vmem:[#allocation3 + $0x170] sm:$0xff] %vm448, 0.0
      %496 = vst.msk [vmem:[#allocation3 + $0x178] sm:$0xff] %vm448, 0.0
      %497 = vst.msk [vmem:[#allocation3 + $0x180] sm:$0xff] %vm448, 0.0
      %498 = vst.msk [vmem:[#allocation3 + $0x188] sm:$0xff] %vm448, 0.0
      %499 = vst.msk [vmem:[#allocation3 + $0x190] sm:$0xff] %vm448, 0.0
      %500 = vst.msk [vmem:[#allocation3 + $0x198] sm:$0xff] %vm448, 0.0
      %501 = vst.msk [vmem:[#allocation3 + $0x1a0] sm:$0xff] %vm448, 0.0
      %502 = vst.msk [vmem:[#allocation3 + $0x1a8] sm:$0xff] %vm448, 0.0
      %503 = vst.msk [vmem:[#allocation3 + $0x1b0] sm:$0xff] %vm448, 0.0
      %504 = vst.msk [vmem:[#allocation3 + $0x1b8] sm:$0xff] %vm448, 0.0
      %505 = vst.msk [vmem:[#allocation3 + $0x1c0] sm:$0xff] %vm448, 0.0
      %506 = vst.msk [vmem:[#allocation3 + $0x1c8] sm:$0xff] %vm448, 0.0
      %507 = vst.msk [vmem:[#allocation3 + $0x1d0] sm:$0xff] %vm448, 0.0
      %508 = vst.msk [vmem:[#allocation3 + $0x1d8] sm:$0xff] %vm448, 0.0
      %509 = vst.msk [vmem:[#allocation3 + $0x1e0] sm:$0xff] %vm448, 0.0
      %510 = vst.msk [vmem:[#allocation3 + $0x1e8] sm:$0xff] %vm448, 0.0
      %511 = vst.msk [vmem:[#allocation3 + $0x1f0] sm:$0xff] %vm448, 0.0
      %512 = vst.msk [vmem:[#allocation3 + $0x1f8] sm:$0xff] %vm448, 0.0
      %513 = vst.msk [vmem:[#allocation3 + $0x200] sm:$0xff] %vm448, 0.0
      %514 = vst.msk [vmem:[#allocation3 + $0x208] sm:$0xff] %vm448, 0.0
      %515 = vst.msk [vmem:[#allocation3 + $0x210] sm:$0xff] %vm448, 0.0
      %516 = vst.msk [vmem:[#allocation3 + $0x218] sm:$0xff] %vm448, 0.0
      %517 = vst.msk [vmem:[#allocation3 + $0x220] sm:$0xff] %vm448, 0.0
      %518 = vst.msk [vmem:[#allocation3 + $0x228] sm:$0xff] %vm448, 0.0
      %519 = vst.msk [vmem:[#allocation3 + $0x230] sm:$0xff] %vm448, 0.0
      %520 = vst.msk [vmem:[#allocation3 + $0x238] sm:$0xff] %vm448, 0.0
      %521 = vst.msk [vmem:[#allocation4] sm:$0xff] %vm448, 0.0
      %522 = vst.msk [vmem:[#allocation4 + $0x8] sm:$0xff] %vm448, 0.0
      %523 = vst.msk [vmem:[#allocation4 + $0x10] sm:$0xff] %vm448, 0.0
      %524 = vst.msk [vmem:[#allocation4 + $0x18] sm:$0xff] %vm448, 0.0
      %525 = vst.msk [vmem:[#allocation4 + $0x20] sm:$0xff] %vm448, 0.0
      %526 = vst.msk [vmem:[#allocation4 + $0x28] sm:$0xff] %vm448, 0.0
      %527 = vst.msk [vmem:[#allocation4 + $0x30] sm:$0xff] %vm448, 0.0
      %528 = vst.msk [vmem:[#allocation4 + $0x38] sm:$0xff] %vm448, 0.0
      %529 = vst.msk [vmem:[#allocation4 + $0x40] sm:$0xff] %vm448, 0.0
      %530 = vst.msk [vmem:[#allocation4 + $0x48] sm:$0xff] %vm448, 0.0
      %531 = vst.msk [vmem:[#allocation4 + $0x50] sm:$0xff] %vm448, 0.0
      %532 = vst.msk [vmem:[#allocation4 + $0x58] sm:$0xff] %vm448, 0.0
      %533 = vst.msk [vmem:[#allocation4 + $0x60] sm:$0xff] %vm448, 0.0
      %534 = vst.msk [vmem:[#allocation4 + $0x68] sm:$0xff] %vm448, 0.0
      %535 = vst.msk [vmem:[#allocation4 + $0x70] sm:$0xff] %vm448, 0.0
      %536 = vst.msk [vmem:[#allocation4 + $0x78] sm:$0xff] %vm448, 0.0
      %537 = vst.msk [vmem:[#allocation4 + $0x80] sm:$0xff] %vm448, 0.0
      %538 = vst.msk [vmem:[#allocation4 + $0x88] sm:$0xff] %vm448, 0.0
      %539 = vst.msk [vmem:[#allocation4 + $0x90] sm:$0xff] %vm448, 0.0
      %540 = vst.msk [vmem:[#allocation4 + $0x98] sm:$0xff] %vm448, 0.0
      %541 = vst.msk [vmem:[#allocation4 + $0xa0] sm:$0xff] %vm448, 0.0
      %542 = vst.msk [vmem:[#allocation4 + $0xa8] sm:$0xff] %vm448, 0.0
      %543 = vst.msk [vmem:[#allocation4 + $0xb0] sm:$0xff] %vm448, 0.0
      %544 = vst.msk [vmem:[#allocation4 + $0xb8] sm:$0xff] %vm448, 0.0
      %545 = vst.msk [vmem:[#allocation4 + $0xc0] sm:$0xff] %vm448, 0.0
      %546 = vst.msk [vmem:[#allocation4 + $0xc8] sm:$0xff] %vm448, 0.0
      %547 = vst.msk [vmem:[#allocation4 + $0xd0] sm:$0xff] %vm448, 0.0
      %548 = vst.msk [vmem:[#allocation4 + $0xd8] sm:$0xff] %vm448, 0.0
      %549 = vst.msk [vmem:[#allocation4 + $0xe0] sm:$0xff] %vm448, 0.0
      %550 = vst.msk [vmem:[#allocation4 + $0xe8] sm:$0xff] %vm448, 0.0
      %551 = vst.msk [vmem:[#allocation4 + $0xf0] sm:$0xff] %vm448, 0.0
      %552 = vst.msk [vmem:[#allocation4 + $0xf8] sm:$0xff] %vm448, 0.0
      %553 = vst.msk [vmem:[#allocation4 + $0x100] sm:$0xff] %vm448, 0.0
      %554 = vst.msk [vmem:[#allocation4 + $0x108] sm:$0xff] %vm448, 0.0
      %555 = vst.msk [vmem:[#allocation4 + $0x110] sm:$0xff] %vm448, 0.0
      %556 = vst.msk [vmem:[#allocation4 + $0x118] sm:$0xff] %vm448, 0.0
      %557 = vst.msk [vmem:[#allocation4 + $0x120] sm:$0xff] %vm448, 0.0
      %558 = vst.msk [vmem:[#allocation4 + $0x128] sm:$0xff] %vm448, 0.0
      %559 = vst.msk [vmem:[#allocation4 + $0x130] sm:$0xff] %vm448, 0.0
      %560 = vst.msk [vmem:[#allocation4 + $0x138] sm:$0xff] %vm448, 0.0
      %561 = vst.msk [vmem:[#allocation4 + $0x140] sm:$0xff] %vm448, 0.0
      %562 = vst.msk [vmem:[#allocation4 + $0x148] sm:$0xff] %vm448, 0.0
      %563 = vst.msk [vmem:[#allocation4 + $0x150] sm:$0xff] %vm448, 0.0
      %564 = vst.msk [vmem:[#allocation4 + $0x158] sm:$0xff] %vm448, 0.0
      %565 = vst.msk [vmem:[#allocation4 + $0x160] sm:$0xff] %vm448, 0.0
      %566 = vst.msk [vmem:[#allocation4 + $0x168] sm:$0xff] %vm448, 0.0
      %567 = vst.msk [vmem:[#allocation4 + $0x170] sm:$0xff] %vm448, 0.0
      %568 = vst.msk [vmem:[#allocation4 + $0x178] sm:$0xff] %vm448, 0.0
      %569 = vst.msk [vmem:[#allocation4 + $0x180] sm:$0xff] %vm448, 0.0
      %570 = vst.msk [vmem:[#allocation4 + $0x188] sm:$0xff] %vm448, 0.0
      %571 = vst.msk [vmem:[#allocation4 + $0x190] sm:$0xff] %vm448, 0.0
      %572 = vst.msk [vmem:[#allocation4 + $0x198] sm:$0xff] %vm448, 0.0
      %573 = vst.msk [vmem:[#allocation4 + $0x1a0] sm:$0xff] %vm448, 0.0
      %574 = vst.msk [vmem:[#allocation4 + $0x1a8] sm:$0xff] %vm448, 0.0
      %575 = vst.msk [vmem:[#allocation4 + $0x1b0] sm:$0xff] %vm448, 0.0
      %576 = vst.msk [vmem:[#allocation4 + $0x1b8] sm:$0xff] %vm448, 0.0
      %577 = vst.msk [vmem:[#allocation4 + $0x1c0] sm:$0xff] %vm448, 0.0
      %578 = vst.msk [vmem:[#allocation4 + $0x1c8] sm:$0xff] %vm448, 0.0
      %579 = vst.msk [vmem:[#allocation4 + $0x1d0] sm:$0xff] %vm448, 0.0
      %580 = vst.msk [vmem:[#allocation4 + $0x1d8] sm:$0xff] %vm448, 0.0
      %581 = vst.msk [vmem:[#allocation4 + $0x1e0] sm:$0xff] %vm448, 0.0
      %582 = vst.msk [vmem:[#allocation4 + $0x1e8] sm:$0xff] %vm448, 0.0
      %583 = vst.msk [vmem:[#allocation4 + $0x1f0] sm:$0xff] %vm448, 0.0
      %584 = vst.msk [vmem:[#allocation4 + $0x1f8] sm:$0xff] %vm448, 0.0
      %585 = vst.msk [vmem:[#allocation4 + $0x200] sm:$0xff] %vm448, 0.0
      %586 = vst.msk [vmem:[#allocation4 + $0x208] sm:$0xff] %vm448, 0.0
      %587 = vst.msk [vmem:[#allocation4 + $0x210] sm:$0xff] %vm448, 0.0
      %588 = vst.msk [vmem:[#allocation4 + $0x218] sm:$0xff] %vm448, 0.0
      %589 = vst.msk [vmem:[#allocation4 + $0x220] sm:$0xff] %vm448, 0.0
      %590 = vst.msk [vmem:[#allocation4 + $0x228] sm:$0xff] %vm448, 0.0
      %591 = vst.msk [vmem:[#allocation4 + $0x230] sm:$0xff] %vm448, 0.0
      %592 = vst.msk [vmem:[#allocation4 + $0x238] sm:$0xff] %vm448, 0.0
      %v593 = vld [vmem:[%s330] sm:$0xff]
      %v594 = vld [vmem:[%s330 + $0x8] sm:$0xff]
      %v595 = vld [vmem:[%s330 + $0x10] sm:$0xff]
      %v596 = vld [vmem:[%s330 + $0x18] sm:$0xff]
      %v597 = vld [vmem:[%s330 + $0x20] sm:$0xff]
      %v598 = vld [vmem:[%s330 + $0x28] sm:$0xff]
      %v599 = vld [vmem:[%s330 + $0x30] sm:$0xff]
      %v600 = vld [vmem:[%s330 + $0x38] sm:$0xff]
      %v601 = vld [vmem:[%s330 + $0x40] sm:$0xff]
      %v602 = vld [vmem:[%s330 + $0x48] sm:$0xff]
      %v603 = vld [vmem:[%s330 + $0x50] sm:$0xff]
      %v604 = vld [vmem:[%s330 + $0x58] sm:$0xff]
      %v605 = vld [vmem:[%s330 + $0x60] sm:$0xff]
      %v606 = vld [vmem:[%s330 + $0x68] sm:$0xff]
      %v607 = vld [vmem:[%s330 + $0x70] sm:$0xff]
      %v608 = vld [vmem:[%s330 + $0x78] sm:$0xff]
      %v609 = vld [vmem:[%s330 + $0x80] sm:$0xff]
      %v610 = vld [vmem:[%s330 + $0x88] sm:$0xff]
      %v611 = vld [vmem:[%s330 + $0x90] sm:$0xff]
      %v612 = vld [vmem:[%s330 + $0x98] sm:$0xff]
      %v613 = vld [vmem:[%s330 + $0xa0] sm:$0xff]
      %v614 = vld [vmem:[%s330 + $0xa8] sm:$0xff]
      %v615 = vld [vmem:[%s330 + $0xb0] sm:$0xff]
      %v616 = vld [vmem:[%s330 + $0xb8] sm:$0xff]
      %v617 = vld [vmem:[%s330 + $0xc0] sm:$0xff]
      %v618 = vld [vmem:[%s330 + $0xc8] sm:$0xff]
      %v619 = vld [vmem:[%s330 + $0xd0] sm:$0xff]
      %v620 = vld [vmem:[%s330 + $0xd8] sm:$0xff]
      %v621 = vld [vmem:[%s330 + $0xe0] sm:$0xff]
      %v622 = vld [vmem:[%s330 + $0xe8] sm:$0xff]
      %v623 = vld [vmem:[%s330 + $0xf0] sm:$0xff]
      %v624 = vld [vmem:[%s330 + $0xf8] sm:$0xff]
      %s625 = scalar_lea.vmem [#allocation2], 32
      %626 = vst.msk [vmem:[%s625 + $0x8] sm:$0xff] %vm375, %v593
      %627 = vst.msk [vmem:[%s625 + $0x10] sm:$0xff] %vm375, %v594
      %628 = vst.msk [vmem:[%s625 + $0x28] sm:$0xff] %vm375, %v595
      %629 = vst.msk [vmem:[%s625 + $0x30] sm:$0xff] %vm375, %v596
      %630 = vst.msk [vmem:[%s625 + $0x48] sm:$0xff] %vm375, %v597
      %631 = vst.msk [vmem:[%s625 + $0x50] sm:$0xff] %vm375, %v598
      %632 = vst.msk [vmem:[%s625 + $0x68] sm:$0xff] %vm375, %v599
      %633 = vst.msk [vmem:[%s625 + $0x70] sm:$0xff] %vm375, %v600
      %634 = vst.msk [vmem:[%s625 + $0x88] sm:$0xff] %vm375, %v601
      %635 = vst.msk [vmem:[%s625 + $0x90] sm:$0xff] %vm375, %v602
      %636 = vst.msk [vmem:[%s625 + $0xa8] sm:$0xff] %vm375, %v603
      %637 = vst.msk [vmem:[%s625 + $0xb0] sm:$0xff] %vm375, %v604
      %638 = vst.msk [vmem:[%s625 + $0xc8] sm:$0xff] %vm375, %v605
      %639 = vst.msk [vmem:[%s625 + $0xd0] sm:$0xff] %vm375, %v606
      %640 = vst.msk [vmem:[%s625 + $0xe8] sm:$0xff] %vm375, %v607
      %641 = vst.msk [vmem:[%s625 + $0xf0] sm:$0xff] %vm375, %v608
      %642 = vst.msk [vmem:[%s625 + $0x108] sm:$0xff] %vm375, %v609
      %643 = vst.msk [vmem:[%s625 + $0x110] sm:$0xff] %vm375, %v610
      %644 = vst.msk [vmem:[%s625 + $0x128] sm:$0xff] %vm375, %v611
      %645 = vst.msk [vmem:[%s625 + $0x130] sm:$0xff] %vm375, %v612
      %646 = vst.msk [vmem:[%s625 + $0x148] sm:$0xff] %vm375, %v613
      %647 = vst.msk [vmem:[%s625 + $0x150] sm:$0xff] %vm375, %v614
      %648 = vst.msk [vmem:[%s625 + $0x168] sm:$0xff] %vm375, %v615
      %649 = vst.msk [vmem:[%s625 + $0x170] sm:$0xff] %vm375, %v616
      %650 = vst.msk [vmem:[%s625 + $0x188] sm:$0xff] %vm375, %v617
      %651 = vst.msk [vmem:[%s625 + $0x190] sm:$0xff] %vm375, %v618
      %652 = vst.msk [vmem:[%s625 + $0x1a8] sm:$0xff] %vm375, %v619
      %653 = vst.msk [vmem:[%s625 + $0x1b0] sm:$0xff] %vm375, %v620
      %654 = vst.msk [vmem:[%s625 + $0x1c8] sm:$0xff] %vm375, %v621
      %655 = vst.msk [vmem:[%s625 + $0x1d0] sm:$0xff] %vm375, %v622
      %656 = vst.msk [vmem:[%s625 + $0x1e8] sm:$0xff] %vm375, %v623
      %657 = vst.msk [vmem:[%s625 + $0x1f0] sm:$0xff] %vm375, %v624
      %v658 = vld [vmem:[%s335] sm:$0xff]
      %v659 = vld [vmem:[%s335 + $0x8] sm:$0xff]
      %v660 = vld [vmem:[%s335 + $0x10] sm:$0xff]
      %v661 = vld [vmem:[%s335 + $0x18] sm:$0xff]
      %v662 = vld [vmem:[%s335 + $0x20] sm:$0xff]
      %v663 = vld [vmem:[%s335 + $0x28] sm:$0xff]
      %v664 = vld [vmem:[%s335 + $0x30] sm:$0xff]
      %v665 = vld [vmem:[%s335 + $0x38] sm:$0xff]
      %v666 = vld [vmem:[%s335 + $0x40] sm:$0xff]
      %v667 = vld [vmem:[%s335 + $0x48] sm:$0xff]
      %v668 = vld [vmem:[%s335 + $0x50] sm:$0xff]
      %v669 = vld [vmem:[%s335 + $0x58] sm:$0xff]
      %v670 = vld [vmem:[%s335 + $0x60] sm:$0xff]
      %v671 = vld [vmem:[%s335 + $0x68] sm:$0xff]
      %v672 = vld [vmem:[%s335 + $0x70] sm:$0xff]
      %v673 = vld [vmem:[%s335 + $0x78] sm:$0xff]
      %v674 = vld [vmem:[%s335 + $0x80] sm:$0xff]
      %v675 = vld [vmem:[%s335 + $0x88] sm:$0xff]
      %v676 = vld [vmem:[%s335 + $0x90] sm:$0xff]
      %v677 = vld [vmem:[%s335 + $0x98] sm:$0xff]
      %v678 = vld [vmem:[%s335 + $0xa0] sm:$0xff]
      %v679 = vld [vmem:[%s335 + $0xa8] sm:$0xff]
      %v680 = vld [vmem:[%s335 + $0xb0] sm:$0xff]
      %v681 = vld [vmem:[%s335 + $0xb8] sm:$0xff]
      %v682 = vld [vmem:[%s335 + $0xc0] sm:$0xff]
      %v683 = vld [vmem:[%s335 + $0xc8] sm:$0xff]
      %v684 = vld [vmem:[%s335 + $0xd0] sm:$0xff]
      %v685 = vld [vmem:[%s335 + $0xd8] sm:$0xff]
      %v686 = vld [vmem:[%s335 + $0xe0] sm:$0xff]
      %v687 = vld [vmem:[%s335 + $0xe8] sm:$0xff]
      %v688 = vld [vmem:[%s335 + $0xf0] sm:$0xff]
      %v689 = vld [vmem:[%s335 + $0xf8] sm:$0xff]
      %v690 = vld [vmem:[%s340] sm:$0xff]
      %v691 = vld [vmem:[%s340 + $0x8] sm:$0xff]
      %v692 = vld [vmem:[%s340 + $0x10] sm:$0xff]
      %v693 = vld [vmem:[%s340 + $0x18] sm:$0xff]
      %v694 = vld [vmem:[%s340 + $0x20] sm:$0xff]
      %v695 = vld [vmem:[%s340 + $0x28] sm:$0xff]
      %v696 = vld [vmem:[%s340 + $0x30] sm:$0xff]
      %v697 = vld [vmem:[%s340 + $0x38] sm:$0xff]
      %v698 = vld [vmem:[%s340 + $0x40] sm:$0xff]
      %v699 = vld [vmem:[%s340 + $0x48] sm:$0xff]
      %v700 = vld [vmem:[%s340 + $0x50] sm:$0xff]
      %v701 = vld [vmem:[%s340 + $0x58] sm:$0xff]
      %v702 = vld [vmem:[%s340 + $0x60] sm:$0xff]
      %v703 = vld [vmem:[%s340 + $0x68] sm:$0xff]
      %v704 = vld [vmem:[%s340 + $0x70] sm:$0xff]
      %v705 = vld [vmem:[%s340 + $0x78] sm:$0xff]
      %v706 = vld [vmem:[%s340 + $0x80] sm:$0xff]
      %v707 = vld [vmem:[%s340 + $0x88] sm:$0xff]
      %v708 = vld [vmem:[%s340 + $0x90] sm:$0xff]
      %v709 = vld [vmem:[%s340 + $0x98] sm:$0xff]
      %v710 = vld [vmem:[%s340 + $0xa0] sm:$0xff]
      %v711 = vld [vmem:[%s340 + $0xa8] sm:$0xff]
      %v712 = vld [vmem:[%s340 + $0xb0] sm:$0xff]
      %v713 = vld [vmem:[%s340 + $0xb8] sm:$0xff]
      %v714 = vld [vmem:[%s340 + $0xc0] sm:$0xff]
      %v715 = vld [vmem:[%s340 + $0xc8] sm:$0xff]
      %v716 = vld [vmem:[%s340 + $0xd0] sm:$0xff]
      %v717 = vld [vmem:[%s340 + $0xd8] sm:$0xff]
      %v718 = vld [vmem:[%s340 + $0xe0] sm:$0xff]
      %v719 = vld [vmem:[%s340 + $0xe8] sm:$0xff]
      %v720 = vld [vmem:[%s340 + $0xf0] sm:$0xff]
      %v721 = vld [vmem:[%s340 + $0xf8] sm:$0xff]
      %723 = vset.pattern.permute.xlu0 0
      %724 = vperm.xlu0 %723, %v690
      %v725 = vpop.permute.xlu0 %724
      %728 = vset.pattern.permute.xlu0 0
      %729 = vperm.xlu0 %728, %v691
      %v730 = vpop.permute.xlu0 %729
      %733 = vset.pattern.permute.xlu0 0
      %734 = vperm.xlu0 %733, %v692
      %v735 = vpop.permute.xlu0 %734
      %738 = vset.pattern.permute.xlu0 0
      %739 = vperm.xlu0 %738, %v693
      %v740 = vpop.permute.xlu0 %739
      %743 = vset.pattern.permute.xlu0 0
      %744 = vperm.xlu0 %743, %v694
      %v745 = vpop.permute.xlu0 %744
      %748 = vset.pattern.permute.xlu0 0
      %749 = vperm.xlu0 %748, %v695
      %v750 = vpop.permute.xlu0 %749
      %753 = vset.pattern.permute.xlu0 0
      %754 = vperm.xlu0 %753, %v696
      %v755 = vpop.permute.xlu0 %754
      %758 = vset.pattern.permute.xlu0 0
      %759 = vperm.xlu0 %758, %v697
      %v760 = vpop.permute.xlu0 %759
      %763 = vset.pattern.permute.xlu0 0
      %764 = vperm.xlu0 %763, %v698
      %v765 = vpop.permute.xlu0 %764
      %768 = vset.pattern.permute.xlu0 0
      %769 = vperm.xlu0 %768, %v699
      %v770 = vpop.permute.xlu0 %769
      %773 = vset.pattern.permute.xlu0 0
      %774 = vperm.xlu0 %773, %v700
      %v775 = vpop.permute.xlu0 %774
      %778 = vset.pattern.permute.xlu0 0
      %779 = vperm.xlu0 %778, %v701
      %v780 = vpop.permute.xlu0 %779
      %783 = vset.pattern.permute.xlu0 0
      %784 = vperm.xlu0 %783, %v702
      %v785 = vpop.permute.xlu0 %784
      %788 = vset.pattern.permute.xlu0 0
      %789 = vperm.xlu0 %788, %v703
      %v790 = vpop.permute.xlu0 %789
      %793 = vset.pattern.permute.xlu0 0
      %794 = vperm.xlu0 %793, %v704
      %v795 = vpop.permute.xlu0 %794
      %798 = vset.pattern.permute.xlu0 0
      %799 = vperm.xlu0 %798, %v705
      %v800 = vpop.permute.xlu0 %799
      %803 = vset.pattern.permute.xlu0 0
      %804 = vperm.xlu0 %803, %v706
      %v805 = vpop.permute.xlu0 %804
      %808 = vset.pattern.permute.xlu0 0
      %809 = vperm.xlu0 %808, %v707
      %v810 = vpop.permute.xlu0 %809
      %813 = vset.pattern.permute.xlu0 0
      %814 = vperm.xlu0 %813, %v708
      %v815 = vpop.permute.xlu0 %814
      %818 = vset.pattern.permute.xlu0 0
      %819 = vperm.xlu0 %818, %v709
      %v820 = vpop.permute.xlu0 %819
      %823 = vset.pattern.permute.xlu0 0
      %824 = vperm.xlu0 %823, %v710
      %v825 = vpop.permute.xlu0 %824
      %828 = vset.pattern.permute.xlu0 0
      %829 = vperm.xlu0 %828, %v711
      %v830 = vpop.permute.xlu0 %829
      %833 = vset.pattern.permute.xlu0 0
      %834 = vperm.xlu0 %833, %v712
      %v835 = vpop.permute.xlu0 %834
      %838 = vset.pattern.permute.xlu0 0
      %839 = vperm.xlu0 %838, %v713
      %v840 = vpop.permute.xlu0 %839
      %843 = vset.pattern.permute.xlu0 0
      %844 = vperm.xlu0 %843, %v714
      %v845 = vpop.permute.xlu0 %844
      %848 = vset.pattern.permute.xlu0 0
      %849 = vperm.xlu0 %848, %v715
      %v850 = vpop.permute.xlu0 %849
      %853 = vset.pattern.permute.xlu0 0
      %854 = vperm.xlu0 %853, %v716
      %v855 = vpop.permute.xlu0 %854
      %858 = vset.pattern.permute.xlu0 0
      %859 = vperm.xlu0 %858, %v717
      %v860 = vpop.permute.xlu0 %859
      %863 = vset.pattern.permute.xlu0 0
      %864 = vperm.xlu0 %863, %v718
      %v865 = vpop.permute.xlu0 %864
      %868 = vset.pattern.permute.xlu0 0
      %869 = vperm.xlu0 %868, %v719
      %v870 = vpop.permute.xlu0 %869
      %873 = vset.pattern.permute.xlu0 0
      %874 = vperm.xlu0 %873, %v720
      %v875 = vpop.permute.xlu0 %874
      %878 = vset.pattern.permute.xlu0 0
      %879 = vperm.xlu0 %878, %v721
      %v880 = vpop.permute.xlu0 %879
      %v882 = vmul.f32 %v658, %v725
      %v883 = vmul.f32 %v659, %v730
      %v884 = vmul.f32 %v660, %v735
      %v885 = vmul.f32 %v661, %v740
      %v886 = vmul.f32 %v662, %v745
      %v887 = vmul.f32 %v663, %v750
      %v888 = vmul.f32 %v664, %v755
      %v889 = vmul.f32 %v665, %v760
      %v890 = vmul.f32 %v666, %v765
      %v891 = vmul.f32 %v667, %v770
      %v892 = vmul.f32 %v668, %v775
      %v893 = vmul.f32 %v669, %v780
      %v894 = vmul.f32 %v670, %v785
      %v895 = vmul.f32 %v671, %v790
      %v896 = vmul.f32 %v672, %v795
      %v897 = vmul.f32 %v673, %v800
      %v898 = vmul.f32 %v674, %v805
      %v899 = vmul.f32 %v675, %v810
      %v900 = vmul.f32 %v676, %v815
      %v901 = vmul.f32 %v677, %v820
      %v902 = vmul.f32 %v678, %v825
      %v903 = vmul.f32 %v679, %v830
      %v904 = vmul.f32 %v680, %v835
      %v905 = vmul.f32 %v681, %v840
      %v906 = vmul.f32 %v682, %v845
      %v907 = vmul.f32 %v683, %v850
      %v908 = vmul.f32 %v684, %v855
      %v909 = vmul.f32 %v685, %v860
      %v910 = vmul.f32 %v686, %v865
      %v911 = vmul.f32 %v687, %v870
      %v912 = vmul.f32 %v688, %v875
      %v913 = vmul.f32 %v689, %v880
      %s914 = scalar_lea.vmem [#allocation3], 32
      %915 = vst.msk [vmem:[%s914 + $0x8] sm:$0xff] %vm448, %v882
      %916 = vst.msk [vmem:[%s914 + $0x10] sm:$0xff] %vm448, %v883
      %917 = vst.msk [vmem:[%s914 + $0x28] sm:$0xff] %vm448, %v884
      %918 = vst.msk [vmem:[%s914 + $0x30] sm:$0xff] %vm448, %v885
      %919 = vst.msk [vmem:[%s914 + $0x48] sm:$0xff] %vm448, %v886
      %920 = vst.msk [vmem:[%s914 + $0x50] sm:$0xff] %vm448, %v887
      %921 = vst.msk [vmem:[%s914 + $0x68] sm:$0xff] %vm448, %v888
      %922 = vst.msk [vmem:[%s914 + $0x70] sm:$0xff] %vm448, %v889
      %923 = vst.msk [vmem:[%s914 + $0x88] sm:$0xff] %vm448, %v890
      %924 = vst.msk [vmem:[%s914 + $0x90] sm:$0xff] %vm448, %v891
      %925 = vst.msk [vmem:[%s914 + $0xa8] sm:$0xff] %vm448, %v892
      %926 = vst.msk [vmem:[%s914 + $0xb0] sm:$0xff] %vm448, %v893
      %927 = vst.msk [vmem:[%s914 + $0xc8] sm:$0xff] %vm448, %v894
      %928 = vst.msk [vmem:[%s914 + $0xd0] sm:$0xff] %vm448, %v895
      %929 = vst.msk [vmem:[%s914 + $0xe8] sm:$0xff] %vm448, %v896
      %930 = vst.msk [vmem:[%s914 + $0xf0] sm:$0xff] %vm448, %v897
      %931 = vst.msk [vmem:[%s914 + $0x108] sm:$0xff] %vm448, %v898
      %932 = vst.msk [vmem:[%s914 + $0x110] sm:$0xff] %vm448, %v899
      %933 = vst.msk [vmem:[%s914 + $0x128] sm:$0xff] %vm448, %v900
      %934 = vst.msk [vmem:[%s914 + $0x130] sm:$0xff] %vm448, %v901
      %935 = vst.msk [vmem:[%s914 + $0x148] sm:$0xff] %vm448, %v902
      %936 = vst.msk [vmem:[%s914 + $0x150] sm:$0xff] %vm448, %v903
      %937 = vst.msk [vmem:[%s914 + $0x168] sm:$0xff] %vm448, %v904
      %938 = vst.msk [vmem:[%s914 + $0x170] sm:$0xff] %vm448, %v905
      %939 = vst.msk [vmem:[%s914 + $0x188] sm:$0xff] %vm448, %v906
      %940 = vst.msk [vmem:[%s914 + $0x190] sm:$0xff] %vm448, %v907
      %941 = vst.msk [vmem:[%s914 + $0x1a8] sm:$0xff] %vm448, %v908
      %942 = vst.msk [vmem:[%s914 + $0x1b0] sm:$0xff] %vm448, %v909
      %943 = vst.msk [vmem:[%s914 + $0x1c8] sm:$0xff] %vm448, %v910
      %944 = vst.msk [vmem:[%s914 + $0x1d0] sm:$0xff] %vm448, %v911
      %945 = vst.msk [vmem:[%s914 + $0x1e8] sm:$0xff] %vm448, %v912
      %946 = vst.msk [vmem:[%s914 + $0x1f0] sm:$0xff] %vm448, %v913
      %v947 = vld [vmem:[#allocation2] sm:$0xff]
      %v948 = vld [vmem:[#allocation2 + $0x8] sm:$0xff]
      %v949 = vld [vmem:[#allocation2 + $0x10] sm:$0xff]
      %v950 = vld [vmem:[#allocation2 + $0x18] sm:$0xff]
      %v951 = vld [vmem:[#allocation2 + $0x20] sm:$0xff]
      %v952 = vld [vmem:[#allocation2 + $0x28] sm:$0xff]
      %v953 = vld [vmem:[#allocation2 + $0x30] sm:$0xff]
      %v954 = vld [vmem:[#allocation2 + $0x38] sm:$0xff]
      %v955 = vld [vmem:[#allocation2 + $0x40] sm:$0xff]
      %v956 = vld [vmem:[#allocation2 + $0x48] sm:$0xff]
      %v957 = vld [vmem:[#allocation2 + $0x50] sm:$0xff]
      %v958 = vld [vmem:[#allocation2 + $0x58] sm:$0xff]
      %v959 = vld [vmem:[#allocation2 + $0x60] sm:$0xff]
      %v960 = vld [vmem:[#allocation2 + $0x68] sm:$0xff]
      %v961 = vld [vmem:[#allocation2 + $0x70] sm:$0xff]
      %v962 = vld [vmem:[#allocation2 + $0x78] sm:$0xff]
      %v963 = vld [vmem:[#allocation2 + $0x80] sm:$0xff]
      %v964 = vld [vmem:[#allocation2 + $0x88] sm:$0xff]
      %v965 = vld [vmem:[#allocation2 + $0x90] sm:$0xff]
      %v966 = vld [vmem:[#allocation2 + $0x98] sm:$0xff]
      %v967 = vld [vmem:[#allocation2 + $0xa0] sm:$0xff]
      %v968 = vld [vmem:[#allocation2 + $0xa8] sm:$0xff]
      %v969 = vld [vmem:[#allocation2 + $0xb0] sm:$0xff]
      %v970 = vld [vmem:[#allocation2 + $0xb8] sm:$0xff]
      %v971 = vld [vmem:[#allocation2 + $0xc0] sm:$0xff]
      %v972 = vld [vmem:[#allocation2 + $0xc8] sm:$0xff]
      %v973 = vld [vmem:[#allocation2 + $0xd0] sm:$0xff]
      %v974 = vld [vmem:[#allocation2 + $0xd8] sm:$0xff]
      %v975 = vld [vmem:[#allocation2 + $0xe0] sm:$0xff]
      %v976 = vld [vmem:[#allocation2 + $0xe8] sm:$0xff]
      %v977 = vld [vmem:[#allocation2 + $0xf0] sm:$0xff]
      %v978 = vld [vmem:[#allocation2 + $0xf8] sm:$0xff]
      %v979 = vld [vmem:[#allocation2 + $0x100] sm:$0xff]
      %v980 = vld [vmem:[#allocation2 + $0x108] sm:$0xff]
      %v981 = vld [vmem:[#allocation2 + $0x110] sm:$0xff]
      %v982 = vld [vmem:[#allocation2 + $0x118] sm:$0xff]
      %v983 = vld [vmem:[#allocation2 + $0x120] sm:$0xff]
      %v984 = vld [vmem:[#allocation2 + $0x128] sm:$0xff]
      %v985 = vld [vmem:[#allocation2 + $0x130] sm:$0xff]
      %v986 = vld [vmem:[#allocation2 + $0x138] sm:$0xff]
      %v987 = vld [vmem:[#allocation2 + $0x140] sm:$0xff]
      %v988 = vld [vmem:[#allocation2 + $0x148] sm:$0xff]
      %v989 = vld [vmem:[#allocation2 + $0x150] sm:$0xff]
      %v990 = vld [vmem:[#allocation2 + $0x158] sm:$0xff]
      %v991 = vld [vmem:[#allocation2 + $0x160] sm:$0xff]
      %v992 = vld [vmem:[#allocation2 + $0x168] sm:$0xff]
      %v993 = vld [vmem:[#allocation2 + $0x170] sm:$0xff]
      %v994 = vld [vmem:[#allocation2 + $0x178] sm:$0xff]
      %v995 = vld [vmem:[#allocation2 + $0x180] sm:$0xff]
      %v996 = vld [vmem:[#allocation2 + $0x188] sm:$0xff]
      %v997 = vld [vmem:[#allocation2 + $0x190] sm:$0xff]
      %v998 = vld [vmem:[#allocation2 + $0x198] sm:$0xff]
      %v999 = vld [vmem:[#allocation2 + $0x1a0] sm:$0xff]
      %v1000 = vld [vmem:[#allocation2 + $0x1a8] sm:$0xff]
      %v1001 = vld [vmem:[#allocation2 + $0x1b0] sm:$0xff]
      %v1002 = vld [vmem:[#allocation2 + $0x1b8] sm:$0xff]
      %v1003 = vld [vmem:[#allocation2 + $0x1c0] sm:$0xff]
      %v1004 = vld [vmem:[#allocation2 + $0x1c8] sm:$0xff]
      %v1005 = vld [vmem:[#allocation2 + $0x1d0] sm:$0xff]
      %v1006 = vld [vmem:[#allocation2 + $0x1d8] sm:$0xff]
      %v1007 = vld [vmem:[#allocation2 + $0x1e0] sm:$0xff]
      %v1008 = vld [vmem:[#allocation2 + $0x1e8] sm:$0xff]
      %v1009 = vld [vmem:[#allocation2 + $0x1f0] sm:$0xff]
      %v1010 = vld [vmem:[#allocation2 + $0x1f8] sm:$0xff]
      %v1011 = vld [vmem:[#allocation2 + $0x200] sm:$0xff]
      %v1012 = vld [vmem:[#allocation2 + $0x208] sm:$0xff]
      %v1013 = vld [vmem:[#allocation2 + $0x210] sm:$0xff]
      %v1014 = vld [vmem:[#allocation2 + $0x218] sm:$0xff]
      %v1015 = vld [vmem:[#allocation2 + $0x220] sm:$0xff]
      %v1016 = vld [vmem:[#allocation2 + $0x228] sm:$0xff]
      %v1017 = vld [vmem:[#allocation2 + $0x230] sm:$0xff]
      %v1018 = vld [vmem:[#allocation2 + $0x238] sm:$0xff]
      %vm1067 = vcmask 1040384
      %v1068 = vrot.slane %v947, 7
      %v1069 = vrot.slane %v948, 7
      %v1070 = vsel %vm1067, %v1068, %v1069
      %v1071 = vrot.slane %v949, 7
      %v1072 = vsel %vm1067, %v1069, %v1071
      %v1073 = vrot.slane %v951, 7
      %v1074 = vrot.slane %v952, 7
      %v1075 = vsel %vm1067, %v1073, %v1074
      %v1076 = vrot.slane %v953, 7
      %v1077 = vsel %vm1067, %v1074, %v1076
      %v1078 = vrot.slane %v955, 7
      %v1079 = vrot.slane %v956, 7
      %v1080 = vsel %vm1067, %v1078, %v1079
      %v1081 = vrot.slane %v957, 7
      %v1082 = vsel %vm1067, %v1079, %v1081
      %v1083 = vrot.slane %v959, 7
      %v1084 = vrot.slane %v960, 7
      %v1085 = vsel %vm1067, %v1083, %v1084
      %v1086 = vrot.slane %v961, 7
      %v1087 = vsel %vm1067, %v1084, %v1086
      %v1088 = vrot.slane %v963, 7
      %v1089 = vrot.slane %v964, 7
      %v1090 = vsel %vm1067, %v1088, %v1089
      %v1091 = vrot.slane %v965, 7
      %v1092 = vsel %vm1067, %v1089, %v1091
      %v1093 = vrot.slane %v967, 7
      %v1094 = vrot.slane %v968, 7
      %v1095 = vsel %vm1067, %v1093, %v1094
      %v1096 = vrot.slane %v969, 7
      %v1097 = vsel %vm1067, %v1094, %v1096
      %v1098 = vrot.slane %v971, 7
      %v1099 = vrot.slane %v972, 7
      %v1100 = vsel %vm1067, %v1098, %v1099
      %v1101 = vrot.slane %v973, 7
      %v1102 = vsel %vm1067, %v1099, %v1101
      %v1103 = vrot.slane %v975, 7
      %v1104 = vrot.slane %v976, 7
      %v1105 = vsel %vm1067, %v1103, %v1104
      %v1106 = vrot.slane %v977, 7
      %v1107 = vsel %vm1067, %v1104, %v1106
      %v1108 = vrot.slane %v979, 7
      %v1109 = vrot.slane %v980, 7
      %v1110 = vsel %vm1067, %v1108, %v1109
      %v1111 = vrot.slane %v981, 7
      %v1112 = vsel %vm1067, %v1109, %v1111
      %v1113 = vrot.slane %v983, 7
      %v1114 = vrot.slane %v984, 7
      %v1115 = vsel %vm1067, %v1113, %v1114
      %v1116 = vrot.slane %v985, 7
      %v1117 = vsel %vm1067, %v1114, %v1116
      %v1118 = vrot.slane %v987, 7
      %v1119 = vrot.slane %v988, 7
      %v1120 = vsel %vm1067, %v1118, %v1119
      %v1121 = vrot.slane %v989, 7
      %v1122 = vsel %vm1067, %v1119, %v1121
      %v1123 = vrot.slane %v991, 7
      %v1124 = vrot.slane %v992, 7
      %v1125 = vsel %vm1067, %v1123, %v1124
      %v1126 = vrot.slane %v993, 7
      %v1127 = vsel %vm1067, %v1124, %v1126
      %v1128 = vrot.slane %v995, 7
      %v1129 = vrot.slane %v996, 7
      %v1130 = vsel %vm1067, %v1128, %v1129
      %v1131 = vrot.slane %v997, 7
      %v1132 = vsel %vm1067, %v1129, %v1131
      %v1133 = vrot.slane %v999, 7
      %v1134 = vrot.slane %v1000, 7
      %v1135 = vsel %vm1067, %v1133, %v1134
      %v1136 = vrot.slane %v1001, 7
      %v1137 = vsel %vm1067, %v1134, %v1136
      %v1138 = vrot.slane %v1003, 7
      %v1139 = vrot.slane %v1004, 7
      %v1140 = vsel %vm1067, %v1138, %v1139
      %v1141 = vrot.slane %v1005, 7
      %v1142 = vsel %vm1067, %v1139, %v1141
      %v1143 = vrot.slane %v1007, 7
      %v1144 = vrot.slane %v1008, 7
      %v1145 = vsel %vm1067, %v1143, %v1144
      %v1146 = vrot.slane %v1009, 7
      %v1147 = vsel %vm1067, %v1144, %v1146
      %v1148 = vsel %vm375, %v948, 0
      %v1150 = vsel %vm375, %v949, 0
      %v1152 = vsel %vm375, %v952, 0
      %v1154 = vsel %vm375, %v953, 0
      %v1156 = vsel %vm375, %v956, 0
      %v1158 = vsel %vm375, %v957, 0
      %v1160 = vsel %vm375, %v960, 0
      %v1162 = vsel %vm375, %v961, 0
      %v1164 = vsel %vm375, %v964, 0
      %v1166 = vsel %vm375, %v965, 0
      %v1168 = vsel %vm375, %v968, 0
      %v1170 = vsel %vm375, %v969, 0
      %v1172 = vsel %vm375, %v972, 0
      %v1174 = vsel %vm375, %v973, 0
      %v1176 = vsel %vm375, %v976, 0
      %v1178 = vsel %vm375, %v977, 0
      %v1180 = vsel %vm375, %v980, 0
      %v1182 = vsel %vm375, %v981, 0
      %v1184 = vsel %vm375, %v984, 0
      %v1186 = vsel %vm375, %v985, 0
      %v1188 = vsel %vm375, %v988, 0
      %v1190 = vsel %vm375, %v989, 0
      %v1192 = vsel %vm375, %v992, 0
      %v1194 = vsel %vm375, %v993, 0
      %v1196 = vsel %vm375, %v996, 0
      %v1198 = vsel %vm375, %v997, 0
      %v1200 = vsel %vm375, %v1000, 0
      %v1202 = vsel %vm375, %v1001, 0
      %v1204 = vsel %vm375, %v1004, 0
      %v1206 = vsel %vm375, %v1005, 0
      %v1208 = vsel %vm375, %v1008, 0
      %v1210 = vsel %vm375, %v1009, 0
      %vm1212 = vcmask 1043456
      %v1214 = vsel %vm1212, %v347, 0
      %1216 = vmatprep.subr.mxu0 0.0
      %1217 = vmatpush1.msra.mxu0 %v1214
      %1218 = vmatprep.subr.mxu0 0.0
      %1219 = vmatpush1.msra.mxu0 0.0
      %1220 = vmatprep.subr.mxu0 0.0
      %1221 = vmatpush1.msra.mxu0 0.0
      %1222 = vmatprep.subr.mxu0 0.0
      %1223 = vmatpush1.msra.mxu0 0.0
      %1224 = vmatprep.subr.mxu0 0.0
      %1225 = vmatpush1.msra.mxu0 0.0
      %1226 = vmatprep.subr.mxu0 0.0
      %1227 = vmatpush1.msra.mxu0 0.0
      %1228 = vmatprep.subr.mxu0 0.0
      %1229 = vmatpush1.msra.mxu0 0.0
      %1230 = vmatprep.subr.mxu0 0.0
      %1231 = vmatpush1.msra.mxu0 0.0
      %1232 = vmatprep.subr.mxu0 0.0
      %1233 = vmatpush1.msra.mxu0 0.0
      %1234 = vmatprep.subr.mxu0 0.0
      %1235 = vmatpush1.msra.mxu0 0.0
      %1236 = vmatprep.subr.mxu0 0.0
      %1237 = vmatpush1.msra.mxu0 0.0
      %1238 = vmatprep.subr.mxu0 0.0
      %1239 = vmatpush1.msra.mxu0 0.0
      %1240 = vmatprep.subr.mxu0 0.0
      %1241 = vmatpush1.msra.mxu0 0.0
      %1242 = vmatprep.subr.mxu0 0.0
      %1243 = vmatpush1.msra.mxu0 0.0
      %1244 = vmatprep.subr.mxu0 0.0
      %1245 = vmatpush1.msra.mxu0 0.0
      %1246 = vmatprep.subr.mxu0 0.0
      %1247 = vmatpush1.msra.mxu0 0.0
      %1248 = vmatprep.subr.mxu0 0.0
      %1249 = vmatpush1.msra.mxu0 0.0
      %1250 = vmatprep.subr.mxu0 0.0
      %1251 = vmatpush1.msra.mxu0 0.0
      %1252 = vmatprep.subr.mxu0 0.0
      %1253 = vmatpush1.msra.mxu0 0.0
      %1254 = vmatprep.subr.mxu0 0.0
      %1255 = vmatpush1.msra.mxu0 0.0
      %1256 = vmatprep.subr.mxu0 0.0
      %1257 = vmatpush1.msra.mxu0 0.0
      %1258 = vmatprep.subr.mxu0 0.0
      %1259 = vmatpush1.msra.mxu0 0.0
      %1260 = vmatprep.subr.mxu0 0.0
      %1261 = vmatpush1.msra.mxu0 0.0
      %1262 = vmatprep.subr.mxu0 0.0
      %1263 = vmatpush1.msra.mxu0 0.0
      %1264 = vmatprep.subr.mxu0 0.0
      %1265 = vmatpush1.msra.mxu0 0.0
      %1266 = vmatprep.subr.mxu0 0.0
      %1267 = vmatpush1.msra.mxu0 0.0
      %1268 = vmatprep.subr.mxu0 0.0
      %1269 = vmatpush1.msra.mxu0 0.0
      %1270 = vmatprep.subr.mxu0 0.0
      %1271 = vmatpush1.msra.mxu0 0.0
      %1272 = vmatprep.subr.mxu0 0.0
      %1273 = vmatpush1.msra.mxu0 0.0
      %1274 = vmatprep.subr.mxu0 0.0
      %1275 = vmatpush1.msra.mxu0 0.0
      %1276 = vmatprep.subr.mxu0 0.0
      %1277 = vmatpush1.msra.mxu0 0.0
      %1278 = vmatprep.subr.mxu0 0.0
      %1279 = vmatpush1.msra.mxu0 0.0
      %1280 = vmatprep.mubr.f32.mxu0 0.0
      %1281 = vmatmul.mubr.f32.gmra.mrb[0].mxu0 %v1148
      %v1282 = vpop.f32.mrb[0].mxu0
      %v1283 = vadd.f32 0.0, %v1282
      %v1284 = vpop.f32.mrb[0].mxu0
      %1285 = vmatprep.mubr.f32.mxu0 0.0
      %1286 = vmatmul.mubr.f32.gmra.mrb[0].mxu0 %v1150
      %v1287 = vpop.f32.mrb[0].mxu0
      %v1288 = vadd.f32 0.0, %v1287
      %v1289 = vpop.f32.mrb[0].mxu0
      %1290 = vmatprep.mubr.f32.mxu0 0.0
      %1291 = vmatmul.mubr.f32.gmra.mrb[0].mxu0 %v1152
      %v1292 = vpop.f32.mrb[0].mxu0
      %v1293 = vadd.f32 0.0, %v1292
      %v1294 = vpop.f32.mrb[0].mxu0
      %1295 = vmatprep.mubr.f32.mxu0 0.0
      %1296 = vmatmul.mubr.f32.gmra.mrb[0].mxu0 %v1154
      %v1297 = vpop.f32.mrb[0].mxu0
      %v1298 = vadd.f32 0.0, %v1297
      %v1299 = vpop.f32.mrb[0].mxu0
      %1300 = vmatprep.mubr.f32.mxu0 0.0
      %1301 = vmatmul.mubr.f32.gmra.mrb[0].mxu0 %v1156
      %v1302 = vpop.f32.mrb[0].mxu0
      %v1303 = vadd.f32 0.0, %v1302
      %v1304 = vpop.f32.mrb[0].mxu0
      %1305 = vmatprep.mubr.f32.mxu0 0.0
      %1306 = vmatmul.mubr.f32.gmra.mrb[0].mxu0 %v1158
      %v1307 = vpop.f32.mrb[0].mxu0
      %v1308 = vadd.f32 0.0, %v1307
      %v1309 = vpop.f32.mrb[0].mxu0
      %1310 = vmatprep.mubr.f32.mxu0 0.0
      %1311 = vmatmul.mubr.f32.gmra.mrb[0].mxu0 %v1160
      %v1312 = vpop.f32.mrb[0].mxu0
      %v1313 = vadd.f32 0.0, %v1312
      %v1314 = vpop.f32.mrb[0].mxu0
      %1315 = vmatprep.mubr.f32.mxu0 0.0
      %1316 = vmatmul.mubr.f32.gmra.mrb[0].mxu0 %v1162
      %v1317 = vpop.f32.mrb[0].mxu0
      %v1318 = vadd.f32 0.0, %v1317
      %v1319 = vpop.f32.mrb[0].mxu0
      %1320 = vmatprep.mubr.f32.mxu0 0.0
      %1321 = vmatmul.mubr.f32.gmra.mrb[0].mxu0 %v1164
      %v1322 = vpop.f32.mrb[0].mxu0
      %v1323 = vadd.f32 0.0, %v1322
      %v1324 = vpop.f32.mrb[0].mxu0
      %1325 = vmatprep.mubr.f32.mxu0 0.0
      %1326 = vmatmul.mubr.f32.gmra.mrb[0].mxu0 %v1166
      %v1327 = vpop.f32.mrb[0].mxu0
      %v1328 = vadd.f32 0.0, %v1327
      %v1329 = vpop.f32.mrb[0].mxu0
      %1330 = vmatprep.mubr.f32.mxu0 0.0
      %1331 = vmatmul.mubr.f32.gmra.mrb[0].mxu0 %v1168
      %v1332 = vpop.f32.mrb[0].mxu0
      %v1333 = vadd.f32 0.0, %v1332
      %v1334 = vpop.f32.mrb[0].mxu0
      %1335 = vmatprep.mubr.f32.mxu0 0.0
      %1336 = vmatmul.mubr.f32.gmra.mrb[0].mxu0 %v1170
      %v1337 = vpop.f32.mrb[0].mxu0
      %v1338 = vadd.f32 0.0, %v1337
      %v1339 = vpop.f32.mrb[0].mxu0
      %1340 = vmatprep.mubr.f32.mxu0 0.0
      %1341 = vmatmul.mubr.f32.gmra.mrb[0].mxu0 %v1172
      %v1342 = vpop.f32.mrb[0].mxu0
      %v1343 = vadd.f32 0.0, %v1342
      %v1344 = vpop.f32.mrb[0].mxu0
      %1345 = vmatprep.mubr.f32.mxu0 0.0
      %1346 = vmatmul.mubr.f32.gmra.mrb[0].mxu0 %v1174
      %v1347 = vpop.f32.mrb[0].mxu0
      %v1348 = vadd.f32 0.0, %v1347
      %v1349 = vpop.f32.mrb[0].mxu0
      %1350 = vmatprep.mubr.f32.mxu0 0.0
      %1351 = vmatmul.mubr.f32.gmra.mrb[0].mxu0 %v1176
      %v1352 = vpop.f32.mrb[0].mxu0
      %v1353 = vadd.f32 0.0, %v1352
      %v1354 = vpop.f32.mrb[0].mxu0
      %1355 = vmatprep.mubr.f32.mxu0 0.0
      %1356 = vmatmul.mubr.f32.gmra.mrb[0].mxu0 %v1178
      %v1357 = vpop.f32.mrb[0].mxu0
      %v1358 = vadd.f32 0.0, %v1357
      %v1359 = vpop.f32.mrb[0].mxu0
      %1360 = vmatprep.mubr.f32.mxu0 0.0
      %1361 = vmatmul.mubr.f32.gmra.mrb[0].mxu0 %v1180
      %v1362 = vpop.f32.mrb[0].mxu0
      %v1363 = vadd.f32 0.0, %v1362
      %v1364 = vpop.f32.mrb[0].mxu0
      %1365 = vmatprep.mubr.f32.mxu0 0.0
      %1366 = vmatmul.mubr.f32.gmra.mrb[0].mxu0 %v1182
      %v1367 = vpop.f32.mrb[0].mxu0
      %v1368 = vadd.f32 0.0, %v1367
      %v1369 = vpop.f32.mrb[0].mxu0
      %1370 = vmatprep.mubr.f32.mxu0 0.0
      %1371 = vmatmul.mubr.f32.gmra.mrb[0].mxu0 %v1184
      %v1372 = vpop.f32.mrb[0].mxu0
      %v1373 = vadd.f32 0.0, %v1372
      %v1374 = vpop.f32.mrb[0].mxu0
      %1375 = vmatprep.mubr.f32.mxu0 0.0
      %1376 = vmatmul.mubr.f32.gmra.mrb[0].mxu0 %v1186
      %v1377 = vpop.f32.mrb[0].mxu0
      %v1378 = vadd.f32 0.0, %v1377
      %v1379 = vpop.f32.mrb[0].mxu0
      %1380 = vmatprep.mubr.f32.mxu0 0.0
      %1381 = vmatmul.mubr.f32.gmra.mrb[0].mxu0 %v1188
      %v1382 = vpop.f32.mrb[0].mxu0
      %v1383 = vadd.f32 0.0, %v1382
      %v1384 = vpop.f32.mrb[0].mxu0
      %1385 = vmatprep.mubr.f32.mxu0 0.0
      %1386 = vmatmul.mubr.f32.gmra.mrb[0].mxu0 %v1190
      %v1387 = vpop.f32.mrb[0].mxu0
      %v1388 = vadd.f32 0.0, %v1387
      %v1389 = vpop.f32.mrb[0].mxu0
      %1390 = vmatprep.mubr.f32.mxu0 0.0
      %1391 = vmatmul.mubr.f32.gmra.mrb[0].mxu0 %v1192
      %v1392 = vpop.f32.mrb[0].mxu0
      %v1393 = vadd.f32 0.0, %v1392
      %v1394 = vpop.f32.mrb[0].mxu0
      %1395 = vmatprep.mubr.f32.mxu0 0.0
      %1396 = vmatmul.mubr.f32.gmra.mrb[0].mxu0 %v1194
      %v1397 = vpop.f32.mrb[0].mxu0
      %v1398 = vadd.f32 0.0, %v1397
      %v1399 = vpop.f32.mrb[0].mxu0
      %1400 = vmatprep.mubr.f32.mxu0 0.0
      %1401 = vmatmul.mubr.f32.gmra.mrb[0].mxu0 %v1196
      %v1402 = vpop.f32.mrb[0].mxu0
      %v1403 = vadd.f32 0.0, %v1402
      %v1404 = vpop.f32.mrb[0].mxu0
      %1405 = vmatprep.mubr.f32.mxu0 0.0
      %1406 = vmatmul.mubr.f32.gmra.mrb[0].mxu0 %v1198
      %v1407 = vpop.f32.mrb[0].mxu0
      %v1408 = vadd.f32 0.0, %v1407
      %v1409 = vpop.f32.mrb[0].mxu0
      %1410 = vmatprep.mubr.f32.mxu0 0.0
      %1411 = vmatmul.mubr.f32.gmra.mrb[0].mxu0 %v1200
      %v1412 = vpop.f32.mrb[0].mxu0
      %v1413 = vadd.f32 0.0, %v1412
      %v1414 = vpop.f32.mrb[0].mxu0
      %1415 = vmatprep.mubr.f32.mxu0 0.0
      %1416 = vmatmul.mubr.f32.gmra.mrb[0].mxu0 %v1202
      %v1417 = vpop.f32.mrb[0].mxu0
      %v1418 = vadd.f32 0.0, %v1417
      %v1419 = vpop.f32.mrb[0].mxu0
      %1420 = vmatprep.mubr.f32.mxu0 0.0
      %1421 = vmatmul.mubr.f32.gmra.mrb[0].mxu0 %v1204
      %v1422 = vpop.f32.mrb[0].mxu0
      %v1423 = vadd.f32 0.0, %v1422
      %v1424 = vpop.f32.mrb[0].mxu0
      %1425 = vmatprep.mubr.f32.mxu0 0.0
      %1426 = vmatmul.mubr.f32.gmra.mrb[0].mxu0 %v1206
      %v1427 = vpop.f32.mrb[0].mxu0
      %v1428 = vadd.f32 0.0, %v1427
      %v1429 = vpop.f32.mrb[0].mxu0
      %1430 = vmatprep.mubr.f32.mxu0 0.0
      %1431 = vmatmul.mubr.f32.gmra.mrb[0].mxu0 %v1208
      %v1432 = vpop.f32.mrb[0].mxu0
      %v1433 = vadd.f32 0.0, %v1432
      %v1434 = vpop.f32.mrb[0].mxu0
      %1435 = vmatprep.mubr.f32.mxu0 0.0
      %1436 = vmatmul.mubr.f32.gmra.mrb[0].mxu0 %v1210
      %v1437 = vpop.f32.mrb[0].mxu0
      %v1438 = vadd.f32 0.0, %v1437
      %v1439 = vpop.f32.mrb[0].mxu0
      %1440 = vdwg.mxu0
      %v1441 = vsel %vm375, %v1070, 0
      %v1443 = vsel %vm375, %v1072, 0
      %v1445 = vsel %vm375, %v1075, 0
      %v1447 = vsel %vm375, %v1077, 0
      %v1449 = vsel %vm375, %v1080, 0
      %v1451 = vsel %vm375, %v1082, 0
      %v1453 = vsel %vm375, %v1085, 0
      %v1455 = vsel %vm375, %v1087, 0
      %v1457 = vsel %vm375, %v1090, 0
      %v1459 = vsel %vm375, %v1092, 0
      %v1461 = vsel %vm375, %v1095, 0
      %v1463 = vsel %vm375, %v1097, 0
      %v1465 = vsel %vm375, %v1100, 0
      %v1467 = vsel %vm375, %v1102, 0
      %v1469 = vsel %vm375, %v1105, 0
      %v1471 = vsel %vm375, %v1107, 0
      %v1473 = vsel %vm375, %v1110, 0
      %v1475 = vsel %vm375, %v1112, 0
      %v1477 = vsel %vm375, %v1115, 0
      %v1479 = vsel %vm375, %v1117, 0
      %v1481 = vsel %vm375, %v1120, 0
      %v1483 = vsel %vm375, %v1122, 0
      %v1485 = vsel %vm375, %v1125, 0
      %v1487 = vsel %vm375, %v1127, 0
      %v1489 = vsel %vm375, %v1130, 0
      %v1491 = vsel %vm375, %v1132, 0
      %v1493 = vsel %vm375, %v1135, 0
      %v1495 = vsel %vm375, %v1137, 0
      %v1497 = vsel %vm375, %v1140, 0
      %v1499 = vsel %vm375, %v1142, 0
      %v1501 = vsel %vm375, %v1145, 0
      %v1503 = vsel %vm375, %v1147, 0
      %v1506 = vsel %vm1212, %v346, 0
      %1508 = vmatprep.subr.mxu0 0.0
      %1509 = vmatpush1.msra.mxu0 %v1506
      %1510 = vmatprep.subr.mxu0 0.0
      %1511 = vmatpush1.msra.mxu0 0.0
      %1512 = vmatprep.subr.mxu0 0.0
      %1513 = vmatpush1.msra.mxu0 0.0
      %1514 = vmatprep.subr.mxu0 0.0
      %1515 = vmatpush1.msra.mxu0 0.0
      %1516 = vmatprep.subr.mxu0 0.0
      %1517 = vmatpush1.msra.mxu0 0.0
      %1518 = vmatprep.subr.mxu0 0.0
      %1519 = vmatpush1.msra.mxu0 0.0
      %1520 = vmatprep.subr.mxu0 0.0
      %1521 = vmatpush1.msra.mxu0 0.0
      %1522 = vmatprep.subr.mxu0 0.0
      %1523 = vmatpush1.msra.mxu0 0.0
      %1524 = vmatprep.subr.mxu0 0.0
      %1525 = vmatpush1.msra.mxu0 0.0
      %1526 = vmatprep.subr.mxu0 0.0
      %1527 = vmatpush1.msra.mxu0 0.0
      %1528 = vmatprep.subr.mxu0 0.0
      %1529 = vmatpush1.msra.mxu0 0.0
      %1530 = vmatprep.subr.mxu0 0.0
      %1531 = vmatpush1.msra.mxu0 0.0
      %1532 = vmatprep.subr.mxu0 0.0
      %1533 = vmatpush1.msra.mxu0 0.0
      %1534 = vmatprep.subr.mxu0 0.0
      %1535 = vmatpush1.msra.mxu0 0.0
      %1536 = vmatprep.subr.mxu0 0.0
      %1537 = vmatpush1.msra.mxu0 0.0
      %1538 = vmatprep.subr.mxu0 0.0
      %1539 = vmatpush1.msra.mxu0 0.0
      %1540 = vmatprep.subr.mxu0 0.0
      %1541 = vmatpush1.msra.mxu0 0.0
      %1542 = vmatprep.subr.mxu0 0.0
      %1543 = vmatpush1.msra.mxu0 0.0
      %1544 = vmatprep.subr.mxu0 0.0
      %1545 = vmatpush1.msra.mxu0 0.0
      %1546 = vmatprep.subr.mxu0 0.0
      %1547 = vmatpush1.msra.mxu0 0.0
      %1548 = vmatprep.subr.mxu0 0.0
      %1549 = vmatpush1.msra.mxu0 0.0
      %1550 = vmatprep.subr.mxu0 0.0
      %1551 = vmatpush1.msra.mxu0 0.0
      %1552 = vmatprep.subr.mxu0 0.0
      %1553 = vmatpush1.msra.mxu0 0.0
      %1554 = vmatprep.subr.mxu0 0.0
      %1555 = vmatpush1.msra.mxu0 0.0
      %1556 = vmatprep.subr.mxu0 0.0
      %1557 = vmatpush1.msra.mxu0 0.0
      %1558 = vmatprep.subr.mxu0 0.0
      %1559 = vmatpush1.msra.mxu0 0.0
      %1560 = vmatprep.subr.mxu0 0.0
      %1561 = vmatpush1.msra.mxu0 0.0
      %1562 = vmatprep.subr.mxu0 0.0
      %1563 = vmatpush1.msra.mxu0 0.0
      %1564 = vmatprep.subr.mxu0 0.0
      %1565 = vmatpush1.msra.mxu0 0.0
      %1566 = vmatprep.subr.mxu0 0.0
      %1567 = vmatpush1.msra.mxu0 0.0
      %1568 = vmatprep.subr.mxu0 0.0
      %1569 = vmatpush1.msra.mxu0 0.0
      %1570 = vmatprep.subr.mxu0 0.0
      %1571 = vmatpush1.msra.mxu0 0.0
      %1572 = vmatprep.mubr.f32.mxu0 0.0
      %1573 = vmatmul.mubr.f32.gmra.mrb[0].mxu0 %v1441
      %v1574 = vpop.f32.mrb[0].mxu0
      %v1575 = vadd.f32 %v1283, %v1574
      %v1576 = vpop.f32.mrb[0].mxu0
      %1577 = vmatprep.mubr.f32.mxu0 0.0
      %1578 = vmatmul.mubr.f32.gmra.mrb[0].mxu0 %v1443
      %v1579 = vpop.f32.mrb[0].mxu0
      %v1580 = vadd.f32 %v1288, %v1579
      %v1581 = vpop.f32.mrb[0].mxu0
      %1582 = vmatprep.mubr.f32.mxu0 0.0
      %1583 = vmatmul.mubr.f32.gmra.mrb[0].mxu0 %v1445
      %v1584 = vpop.f32.mrb[0].mxu0
      %v1585 = vadd.f32 %v1293, %v1584
      %v1586 = vpop.f32.mrb[0].mxu0
      %1587 = vmatprep.mubr.f32.mxu0 0.0
      %1588 = vmatmul.mubr.f32.gmra.mrb[0].mxu0 %v1447
      %v1589 = vpop.f32.mrb[0].mxu0
      %v1590 = vadd.f32 %v1298, %v1589
      %v1591 = vpop.f32.mrb[0].mxu0
      %1592 = vmatprep.mubr.f32.mxu0 0.0
      %1593 = vmatmul.mubr.f32.gmra.mrb[0].mxu0 %v1449
      %v1594 = vpop.f32.mrb[0].mxu0
      %v1595 = vadd.f32 %v1303, %v1594
      %v1596 = vpop.f32.mrb[0].mxu0
      %1597 = vmatprep.mubr.f32.mxu0 0.0
      %1598 = vmatmul.mubr.f32.gmra.mrb[0].mxu0 %v1451
      %v1599 = vpop.f32.mrb[0].mxu0
      %v1600 = vadd.f32 %v1308, %v1599
      %v1601 = vpop.f32.mrb[0].mxu0
      %1602 = vmatprep.mubr.f32.mxu0 0.0
      %1603 = vmatmul.mubr.f32.gmra.mrb[0].mxu0 %v1453
      %v1604 = vpop.f32.mrb[0].mxu0
      %v1605 = vadd.f32 %v1313, %v1604
      %v1606 = vpop.f32.mrb[0].mxu0
      %1607 = vmatprep.mubr.f32.mxu0 0.0
      %1608 = vmatmul.mubr.f32.gmra.mrb[0].mxu0 %v1455
      %v1609 = vpop.f32.mrb[0].mxu0
      %v1610 = vadd.f32 %v1318, %v1609
      %v1611 = vpop.f32.mrb[0].mxu0
      %1612 = vmatprep.mubr.f32.mxu0 0.0
      %1613 = vmatmul.mubr.f32.gmra.mrb[0].mxu0 %v1457
      %v1614 = vpop.f32.mrb[0].mxu0
      %v1615 = vadd.f32 %v1323, %v1614
      %v1616 = vpop.f32.mrb[0].mxu0
      %1617 = vmatprep.mubr.f32.mxu0 0.0
      %1618 = vmatmul.mubr.f32.gmra.mrb[0].mxu0 %v1459
      %v1619 = vpop.f32.mrb[0].mxu0
      %v1620 = vadd.f32 %v1328, %v1619
      %v1621 = vpop.f32.mrb[0].mxu0
      %1622 = vmatprep.mubr.f32.mxu0 0.0
      %1623 = vmatmul.mubr.f32.gmra.mrb[0].mxu0 %v1461
      %v1624 = vpop.f32.mrb[0].mxu0
      %v1625 = vadd.f32 %v1333, %v1624
      %v1626 = vpop.f32.mrb[0].mxu0
      %1627 = vmatprep.mubr.f32.mxu0 0.0
      %1628 = vmatmul.mubr.f32.gmra.mrb[0].mxu0 %v1463
      %v1629 = vpop.f32.mrb[0].mxu0
      %v1630 = vadd.f32 %v1338, %v1629
      %v1631 = vpop.f32.mrb[0].mxu0
      %1632 = vmatprep.mubr.f32.mxu0 0.0
      %1633 = vmatmul.mubr.f32.gmra.mrb[0].mxu0 %v1465
      %v1634 = vpop.f32.mrb[0].mxu0
      %v1635 = vadd.f32 %v1343, %v1634
      %v1636 = vpop.f32.mrb[0].mxu0
      %1637 = vmatprep.mubr.f32.mxu0 0.0
      %1638 = vmatmul.mubr.f32.gmra.mrb[0].mxu0 %v1467
      %v1639 = vpop.f32.mrb[0].mxu0
      %v1640 = vadd.f32 %v1348, %v1639
      %v1641 = vpop.f32.mrb[0].mxu0
      %1642 = vmatprep.mubr.f32.mxu0 0.0
      %1643 = vmatmul.mubr.f32.gmra.mrb[0].mxu0 %v1469
      %v1644 = vpop.f32.mrb[0].mxu0
      %v1645 = vadd.f32 %v1353, %v1644
      %v1646 = vpop.f32.mrb[0].mxu0
      %1647 = vmatprep.mubr.f32.mxu0 0.0
      %1648 = vmatmul.mubr.f32.gmra.mrb[0].mxu0 %v1471
      %v1649 = vpop.f32.mrb[0].mxu0
      %v1650 = vadd.f32 %v1358, %v1649
      %v1651 = vpop.f32.mrb[0].mxu0
      %1652 = vmatprep.mubr.f32.mxu0 0.0
      %1653 = vmatmul.mubr.f32.gmra.mrb[0].mxu0 %v1473
      %v1654 = vpop.f32.mrb[0].mxu0
      %v1655 = vadd.f32 %v1363, %v1654
      %v1656 = vpop.f32.mrb[0].mxu0
      %1657 = vmatprep.mubr.f32.mxu0 0.0
      %1658 = vmatmul.mubr.f32.gmra.mrb[0].mxu0 %v1475
      %v1659 = vpop.f32.mrb[0].mxu0
      %v1660 = vadd.f32 %v1368, %v1659
      %v1661 = vpop.f32.mrb[0].mxu0
      %1662 = vmatprep.mubr.f32.mxu0 0.0
      %1663 = vmatmul.mubr.f32.gmra.mrb[0].mxu0 %v1477
      %v1664 = vpop.f32.mrb[0].mxu0
      %v1665 = vadd.f32 %v1373, %v1664
      %v1666 = vpop.f32.mrb[0].mxu0
      %1667 = vmatprep.mubr.f32.mxu0 0.0
      %1668 = vmatmul.mubr.f32.gmra.mrb[0].mxu0 %v1479
      %v1669 = vpop.f32.mrb[0].mxu0
      %v1670 = vadd.f32 %v1378, %v1669
      %v1671 = vpop.f32.mrb[0].mxu0
      %1672 = vmatprep.mubr.f32.mxu0 0.0
      %1673 = vmatmul.mubr.f32.gmra.mrb[0].mxu0 %v1481
      %v1674 = vpop.f32.mrb[0].mxu0
      %v1675 = vadd.f32 %v1383, %v1674
      %v1676 = vpop.f32.mrb[0].mxu0
      %1677 = vmatprep.mubr.f32.mxu0 0.0
      %1678 = vmatmul.mubr.f32.gmra.mrb[0].mxu0 %v1483
      %v1679 = vpop.f32.mrb[0].mxu0
      %v1680 = vadd.f32 %v1388, %v1679
      %v1681 = vpop.f32.mrb[0].mxu0
      %1682 = vmatprep.mubr.f32.mxu0 0.0
      %1683 = vmatmul.mubr.f32.gmra.mrb[0].mxu0 %v1485
      %v1684 = vpop.f32.mrb[0].mxu0
      %v1685 = vadd.f32 %v1393, %v1684
      %v1686 = vpop.f32.mrb[0].mxu0
      %1687 = vmatprep.mubr.f32.mxu0 0.0
      %1688 = vmatmul.mubr.f32.gmra.mrb[0].mxu0 %v1487
      %v1689 = vpop.f32.mrb[0].mxu0
      %v1690 = vadd.f32 %v1398, %v1689
      %v1691 = vpop.f32.mrb[0].mxu0
      %1692 = vmatprep.mubr.f32.mxu0 0.0
      %1693 = vmatmul.mubr.f32.gmra.mrb[0].mxu0 %v1489
      %v1694 = vpop.f32.mrb[0].mxu0
      %v1695 = vadd.f32 %v1403, %v1694
      %v1696 = vpop.f32.mrb[0].mxu0
      %1697 = vmatprep.mubr.f32.mxu0 0.0
      %1698 = vmatmul.mubr.f32.gmra.mrb[0].mxu0 %v1491
      %v1699 = vpop.f32.mrb[0].mxu0
      %v1700 = vadd.f32 %v1408, %v1699
      %v1701 = vpop.f32.mrb[0].mxu0
      %1702 = vmatprep.mubr.f32.mxu0 0.0
      %1703 = vmatmul.mubr.f32.gmra.mrb[0].mxu0 %v1493
      %v1704 = vpop.f32.mrb[0].mxu0
      %v1705 = vadd.f32 %v1413, %v1704
      %v1706 = vpop.f32.mrb[0].mxu0
      %1707 = vmatprep.mubr.f32.mxu0 0.0
      %1708 = vmatmul.mubr.f32.gmra.mrb[0].mxu0 %v1495
      %v1709 = vpop.f32.mrb[0].mxu0
      %v1710 = vadd.f32 %v1418, %v1709
      %v1711 = vpop.f32.mrb[0].mxu0
      %1712 = vmatprep.mubr.f32.mxu0 0.0
      %1713 = vmatmul.mubr.f32.gmra.mrb[0].mxu0 %v1497
      %v1714 = vpop.f32.mrb[0].mxu0
      %v1715 = vadd.f32 %v1423, %v1714
      %v1716 = vpop.f32.mrb[0].mxu0
      %1717 = vmatprep.mubr.f32.mxu0 0.0
      %1718 = vmatmul.mubr.f32.gmra.mrb[0].mxu0 %v1499
      %v1719 = vpop.f32.mrb[0].mxu0
      %v1720 = vadd.f32 %v1428, %v1719
      %v1721 = vpop.f32.mrb[0].mxu0
      %1722 = vmatprep.mubr.f32.mxu0 0.0
      %1723 = vmatmul.mubr.f32.gmra.mrb[0].mxu0 %v1501
      %v1724 = vpop.f32.mrb[0].mxu0
      %v1725 = vadd.f32 %v1433, %v1724
      %v1726 = vpop.f32.mrb[0].mxu0
      %1727 = vmatprep.mubr.f32.mxu0 0.0
      %1728 = vmatmul.mubr.f32.gmra.mrb[0].mxu0 %v1503
      %v1729 = vpop.f32.mrb[0].mxu0
      %v1730 = vadd.f32 %v1438, %v1729
      %v1731 = vpop.f32.mrb[0].mxu0
      %1732 = vdwg.mxu0
      %vm1749 = vcmask 1046528
      %v1750 = vrot.slane %v948, 1
      %v1751 = vrot.slane %v949, 1
      %v1752 = vsel %vm1749, %v1750, %v1751
      %v1753 = vrot.slane %v950, 1
      %v1754 = vsel %vm1749, %v1751, %v1753
      %v1755 = vrot.slane %v952, 1
      %v1756 = vrot.slane %v953, 1
      %v1757 = vsel %vm1749, %v1755, %v1756
      %v1758 = vrot.slane %v954, 1
      %v1759 = vsel %vm1749, %v1756, %v1758
      %v1760 = vrot.slane %v956, 1
      %v1761 = vrot.slane %v957, 1
      %v1762 = vsel %vm1749, %v1760, %v1761
      %v1763 = vrot.slane %v958, 1
      %v1764 = vsel %vm1749, %v1761, %v1763
      %v1765 = vrot.slane %v960, 1
      %v1766 = vrot.slane %v961, 1
      %v1767 = vsel %vm1749, %v1765, %v1766
      %v1768 = vrot.slane %v962, 1
      %v1769 = vsel %vm1749, %v1766, %v1768
      %v1770 = vrot.slane %v964, 1
      %v1771 = vrot.slane %v965, 1
      %v1772 = vsel %vm1749, %v1770, %v1771
      %v1773 = vrot.slane %v966, 1
      %v1774 = vsel %vm1749, %v1771, %v1773
      %v1775 = vrot.slane %v968, 1
      %v1776 = vrot.slane %v969, 1
      %v1777 = vsel %vm1749, %v1775, %v1776
      %v1778 = vrot.slane %v970, 1
      %v1779 = vsel %vm1749, %v1776, %v1778
      %v1780 = vrot.slane %v972, 1
      %v1781 = vrot.slane %v973, 1
      %v1782 = vsel %vm1749, %v1780, %v1781
      %v1783 = vrot.slane %v974, 1
      %v1784 = vsel %vm1749, %v1781, %v1783
      %v1785 = vrot.slane %v976, 1
      %v1786 = vrot.slane %v977, 1
      %v1787 = vsel %vm1749, %v1785, %v1786
      %v1788 = vrot.slane %v978, 1
      %v1789 = vsel %vm1749, %v1786, %v1788
      %v1790 = vrot.slane %v980, 1
      %v1791 = vrot.slane %v981, 1
      %v1792 = vsel %vm1749, %v1790, %v1791
      %v1793 = vrot.slane %v982, 1
      %v1794 = vsel %vm1749, %v1791, %v1793
      %v1795 = vrot.slane %v984, 1
      %v1796 = vrot.slane %v985, 1
      %v1797 = vsel %vm1749, %v1795, %v1796
      %v1798 = vrot.slane %v986, 1
      %v1799 = vsel %vm1749, %v1796, %v1798
      %v1800 = vrot.slane %v988, 1
      %v1801 = vrot.slane %v989, 1
      %v1802 = vsel %vm1749, %v1800, %v1801
      %v1803 = vrot.slane %v990, 1
      %v1804 = vsel %vm1749, %v1801, %v1803
      %v1805 = vrot.slane %v992, 1
      %v1806 = vrot.slane %v993, 1
      %v1807 = vsel %vm1749, %v1805, %v1806
      %v1808 = vrot.slane %v994, 1
      %v1809 = vsel %vm1749, %v1806, %v1808
      %v1810 = vrot.slane %v996, 1
      %v1811 = vrot.slane %v997, 1
      %v1812 = vsel %vm1749, %v1810, %v1811
      %v1813 = vrot.slane %v998, 1
      %v1814 = vsel %vm1749, %v1811, %v1813
      %v1815 = vrot.slane %v1000, 1
      %v1816 = vrot.slane %v1001, 1
      %v1817 = vsel %vm1749, %v1815, %v1816
      %v1818 = vrot.slane %v1002, 1
      %v1819 = vsel %vm1749, %v1816, %v1818
      %v1820 = vrot.slane %v1004, 1
      %v1821 = vrot.slane %v1005, 1
      %v1822 = vsel %vm1749, %v1820, %v1821
      %v1823 = vrot.slane %v1006, 1
      %v1824 = vsel %vm1749, %v1821, %v1823
      %v1825 = vrot.slane %v1008, 1
      %v1826 = vrot.slane %v1009, 1
      %v1827 = vsel %vm1749, %v1825, %v1826
      %v1828 = vrot.slane %v1010, 1
      %v1829 = vsel %vm1749, %v1826, %v1828
      %v1830 = vsel %vm375, %v1752, 0
      %v1832 = vsel %vm375, %v1754, 0
      %v1834 = vsel %vm375, %v1757, 0
      %v1836 = vsel %vm375, %v1759, 0
      %v1838 = vsel %vm375, %v1762, 0
      %v1840 = vsel %vm375, %v1764, 0
      %v1842 = vsel %vm375, %v1767, 0
      %v1844 = vsel %vm375, %v1769, 0
      %v1846 = vsel %vm375, %v1772, 0
      %v1848 = vsel %vm375, %v1774, 0
      %v1850 = vsel %vm375, %v1777, 0
      %v1852 = vsel %vm375, %v1779, 0
      %v1854 = vsel %vm375, %v1782, 0
      %v1856 = vsel %vm375, %v1784, 0
      %v1858 = vsel %vm375, %v1787, 0
      %v1860 = vsel %vm375, %v1789, 0
      %v1862 = vsel %vm375, %v1792, 0
      %v1864 = vsel %vm375, %v1794, 0
      %v1866 = vsel %vm375, %v1797, 0
      %v1868 = vsel %vm375, %v1799, 0
      %v1870 = vsel %vm375, %v1802, 0
      %v1872 = vsel %vm375, %v1804, 0
      %v1874 = vsel %vm375, %v1807, 0
      %v1876 = vsel %vm375, %v1809, 0
      %v1878 = vsel %vm375, %v1812, 0
      %v1880 = vsel %vm375, %v1814, 0
      %v1882 = vsel %vm375, %v1817, 0
      %v1884 = vsel %vm375, %v1819, 0
      %v1886 = vsel %vm375, %v1822, 0
      %v1888 = vsel %vm375, %v1824, 0
      %v1890 = vsel %vm375, %v1827, 0
      %v1892 = vsel %vm375, %v1829, 0
      %v1895 = vsel %vm1212, %v348, 0
      %1897 = vmatprep.subr.mxu0 0.0
      %1898 = vmatpush1.msra.mxu0 %v1895
      %1899 = vmatprep.subr.mxu0 0.0
      %1900 = vmatpush1.msra.mxu0 0.0
      %1901 = vmatprep.subr.mxu0 0.0
      %1902 = vmatpush1.msra.mxu0 0.0
      %1903 = vmatprep.subr.mxu0 0.0
      %1904 = vmatpush1.msra.mxu0 0.0
      %1905 = vmatprep.subr.mxu0 0.0
      %1906 = vmatpush1.msra.mxu0 0.0
      %1907 = vmatprep.subr.mxu0 0.0
      %1908 = vmatpush1.msra.mxu0 0.0
      %1909 = vmatprep.subr.mxu0 0.0
      %1910 = vmatpush1.msra.mxu0 0.0
      %1911 = vmatprep.subr.mxu0 0.0
      %1912 = vmatpush1.msra.mxu0 0.0
      %1913 = vmatprep.subr.mxu0 0.0
      %1914 = vmatpush1.msra.mxu0 0.0
      %1915 = vmatprep.subr.mxu0 0.0
      %1916 = vmatpush1.msra.mxu0 0.0
      %1917 = vmatprep.subr.mxu0 0.0
      %1918 = vmatpush1.msra.mxu0 0.0
      %1919 = vmatprep.subr.mxu0 0.0
      %1920 = vmatpush1.msra.mxu0 0.0
      %1921 = vmatprep.subr.mxu0 0.0
      %1922 = vmatpush1.msra.mxu0 0.0
      %1923 = vmatprep.subr.mxu0 0.0
      %1924 = vmatpush1.msra.mxu0 0.0
      %1925 = vmatprep.subr.mxu0 0.0
      %1926 = vmatpush1.msra.mxu0 0.0
      %1927 = vmatprep.subr.mxu0 0.0
      %1928 = vmatpush1.msra.mxu0 0.0
      %1929 = vmatprep.subr.mxu0 0.0
      %1930 = vmatpush1.msra.mxu0 0.0
      %1931 = vmatprep.subr.mxu0 0.0
      %1932 = vmatpush1.msra.mxu0 0.0
      %1933 = vmatprep.subr.mxu0 0.0
      %1934 = vmatpush1.msra.mxu0 0.0
      %1935 = vmatprep.subr.mxu0 0.0
      %1936 = vmatpush1.msra.mxu0 0.0
      %1937 = vmatprep.subr.mxu0 0.0
      %1938 = vmatpush1.msra.mxu0 0.0
      %1939 = vmatprep.subr.mxu0 0.0
      %1940 = vmatpush1.msra.mxu0 0.0
      %1941 = vmatprep.subr.mxu0 0.0
      %1942 = vmatpush1.msra.mxu0 0.0
      %1943 = vmatprep.subr.mxu0 0.0
      %1944 = vmatpush1.msra.mxu0 0.0
      %1945 = vmatprep.subr.mxu0 0.0
      %1946 = vmatpush1.msra.mxu0 0.0
      %1947 = vmatprep.subr.mxu0 0.0
      %1948 = vmatpush1.msra.mxu0 0.0
      %1949 = vmatprep.subr.mxu0 0.0
      %1950 = vmatpush1.msra.mxu0 0.0
      %1951 = vmatprep.subr.mxu0 0.0
      %1952 = vmatpush1.msra.mxu0 0.0
      %1953 = vmatprep.subr.mxu0 0.0
      %1954 = vmatpush1.msra.mxu0 0.0
      %1955 = vmatprep.subr.mxu0 0.0
      %1956 = vmatpush1.msra.mxu0 0.0
      %1957 = vmatprep.subr.mxu0 0.0
      %1958 = vmatpush1.msra.mxu0 0.0
      %1959 = vmatprep.subr.mxu0 0.0
      %1960 = vmatpush1.msra.mxu0 0.0
      %1961 = vmatprep.mubr.f32.mxu0 0.0
      %1962 = vmatmul.mubr.f32.gmra.mrb[0].mxu0 %v1830
      %v1963 = vpop.f32.mrb[0].mxu0
      %v1964 = vadd.f32 0.0, %v1963
      %v1965 = vpop.f32.mrb[0].mxu0
      %1966 = vmatprep.mubr.f32.mxu0 0.0
      %1967 = vmatmul.mubr.f32.gmra.mrb[0].mxu0 %v1832
      %v1968 = vpop.f32.mrb[0].mxu0
      %v1969 = vadd.f32 0.0, %v1968
      %v1970 = vpop.f32.mrb[0].mxu0
      %1971 = vmatprep.mubr.f32.mxu0 0.0
      %1972 = vmatmul.mubr.f32.gmra.mrb[0].mxu0 %v1834
      %v1973 = vpop.f32.mrb[0].mxu0
      %v1974 = vadd.f32 0.0, %v1973
      %v1975 = vpop.f32.mrb[0].mxu0
      %1976 = vmatprep.mubr.f32.mxu0 0.0
      %1977 = vmatmul.mubr.f32.gmra.mrb[0].mxu0 %v1836
      %v1978 = vpop.f32.mrb[0].mxu0
      %v1979 = vadd.f32 0.0, %v1978
      %v1980 = vpop.f32.mrb[0].mxu0
      %1981 = vmatprep.mubr.f32.mxu0 0.0
      %1982 = vmatmul.mubr.f32.gmra.mrb[0].mxu0 %v1838
      %v1983 = vpop.f32.mrb[0].mxu0
      %v1984 = vadd.f32 0.0, %v1983
      %v1985 = vpop.f32.mrb[0].mxu0
      %1986 = vmatprep.mubr.f32.mxu0 0.0
      %1987 = vmatmul.mubr.f32.gmra.mrb[0].mxu0 %v1840
      %v1988 = vpop.f32.mrb[0].mxu0
      %v1989 = vadd.f32 0.0, %v1988
      %v1990 = vpop.f32.mrb[0].mxu0
      %1991 = vmatprep.mubr.f32.mxu0 0.0
      %1992 = vmatmul.mubr.f32.gmra.mrb[0].mxu0 %v1842
      %v1993 = vpop.f32.mrb[0].mxu0
      %v1994 = vadd.f32 0.0, %v1993
      %v1995 = vpop.f32.mrb[0].mxu0
      %1996 = vmatprep.mubr.f32.mxu0 0.0
      %1997 = vmatmul.mubr.f32.gmra.mrb[0].mxu0 %v1844
      %v1998 = vpop.f32.mrb[0].mxu0
      %v1999 = vadd.f32 0.0, %v1998
      %v2000 = vpop.f32.mrb[0].mxu0
      %2001 = vmatprep.mubr.f32.mxu0 0.0
      %2002 = vmatmul.mubr.f32.gmra.mrb[0].mxu0 %v1846
      %v2003 = vpop.f32.mrb[0].mxu0
      %v2004 = vadd.f32 0.0, %v2003
      %v2005 = vpop.f32.mrb[0].mxu0
      %2006 = vmatprep.mubr.f32.mxu0 0.0
      %2007 = vmatmul.mubr.f32.gmra.mrb[0].mxu0 %v1848
      %v2008 = vpop.f32.mrb[0].mxu0
      %v2009 = vadd.f32 0.0, %v2008
      %v2010 = vpop.f32.mrb[0].mxu0
      %2011 = vmatprep.mubr.f32.mxu0 0.0
      %2012 = vmatmul.mubr.f32.gmra.mrb[0].mxu0 %v1850
      %v2013 = vpop.f32.mrb[0].mxu0
      %v2014 = vadd.f32 0.0, %v2013
      %v2015 = vpop.f32.mrb[0].mxu0
      %2016 = vmatprep.mubr.f32.mxu0 0.0
      %2017 = vmatmul.mubr.f32.gmra.mrb[0].mxu0 %v1852
      %v2018 = vpop.f32.mrb[0].mxu0
      %v2019 = vadd.f32 0.0, %v2018
      %v2020 = vpop.f32.mrb[0].mxu0
      %2021 = vmatprep.mubr.f32.mxu0 0.0
      %2022 = vmatmul.mubr.f32.gmra.mrb[0].mxu0 %v1854
      %v2023 = vpop.f32.mrb[0].mxu0
      %v2024 = vadd.f32 0.0, %v2023
      %v2025 = vpop.f32.mrb[0].mxu0
      %2026 = vmatprep.mubr.f32.mxu0 0.0
      %2027 = vmatmul.mubr.f32.gmra.mrb[0].mxu0 %v1856
      %v2028 = vpop.f32.mrb[0].mxu0
      %v2029 = vadd.f32 0.0, %v2028
      %v2030 = vpop.f32.mrb[0].mxu0
      %2031 = vmatprep.mubr.f32.mxu0 0.0
      %2032 = vmatmul.mubr.f32.gmra.mrb[0].mxu0 %v1858
      %v2033 = vpop.f32.mrb[0].mxu0
      %v2034 = vadd.f32 0.0, %v2033
      %v2035 = vpop.f32.mrb[0].mxu0
      %2036 = vmatprep.mubr.f32.mxu0 0.0
      %2037 = vmatmul.mubr.f32.gmra.mrb[0].mxu0 %v1860
      %v2038 = vpop.f32.mrb[0].mxu0
      %v2039 = vadd.f32 0.0, %v2038
      %v2040 = vpop.f32.mrb[0].mxu0
      %2041 = vmatprep.mubr.f32.mxu0 0.0
      %2042 = vmatmul.mubr.f32.gmra.mrb[0].mxu0 %v1862
      %v2043 = vpop.f32.mrb[0].mxu0
      %v2044 = vadd.f32 0.0, %v2043
      %v2045 = vpop.f32.mrb[0].mxu0
      %2046 = vmatprep.mubr.f32.mxu0 0.0
      %2047 = vmatmul.mubr.f32.gmra.mrb[0].mxu0 %v1864
      %v2048 = vpop.f32.mrb[0].mxu0
      %v2049 = vadd.f32 0.0, %v2048
      %v2050 = vpop.f32.mrb[0].mxu0
      %2051 = vmatprep.mubr.f32.mxu0 0.0
      %2052 = vmatmul.mubr.f32.gmra.mrb[0].mxu0 %v1866
      %v2053 = vpop.f32.mrb[0].mxu0
      %v2054 = vadd.f32 0.0, %v2053
      %v2055 = vpop.f32.mrb[0].mxu0
      %2056 = vmatprep.mubr.f32.mxu0 0.0
      %2057 = vmatmul.mubr.f32.gmra.mrb[0].mxu0 %v1868
      %v2058 = vpop.f32.mrb[0].mxu0
      %v2059 = vadd.f32 0.0, %v2058
      %v2060 = vpop.f32.mrb[0].mxu0
      %2061 = vmatprep.mubr.f32.mxu0 0.0
      %2062 = vmatmul.mubr.f32.gmra.mrb[0].mxu0 %v1870
      %v2063 = vpop.f32.mrb[0].mxu0
      %v2064 = vadd.f32 0.0, %v2063
      %v2065 = vpop.f32.mrb[0].mxu0
      %2066 = vmatprep.mubr.f32.mxu0 0.0
      %2067 = vmatmul.mubr.f32.gmra.mrb[0].mxu0 %v1872
      %v2068 = vpop.f32.mrb[0].mxu0
      %v2069 = vadd.f32 0.0, %v2068
      %v2070 = vpop.f32.mrb[0].mxu0
      %2071 = vmatprep.mubr.f32.mxu0 0.0
      %2072 = vmatmul.mubr.f32.gmra.mrb[0].mxu0 %v1874
      %v2073 = vpop.f32.mrb[0].mxu0
      %v2074 = vadd.f32 0.0, %v2073
      %v2075 = vpop.f32.mrb[0].mxu0
      %2076 = vmatprep.mubr.f32.mxu0 0.0
      %2077 = vmatmul.mubr.f32.gmra.mrb[0].mxu0 %v1876
      %v2078 = vpop.f32.mrb[0].mxu0
      %v2079 = vadd.f32 0.0, %v2078
      %v2080 = vpop.f32.mrb[0].mxu0
      %2081 = vmatprep.mubr.f32.mxu0 0.0
      %2082 = vmatmul.mubr.f32.gmra.mrb[0].mxu0 %v1878
      %v2083 = vpop.f32.mrb[0].mxu0
      %v2084 = vadd.f32 0.0, %v2083
      %v2085 = vpop.f32.mrb[0].mxu0
      %2086 = vmatprep.mubr.f32.mxu0 0.0
      %2087 = vmatmul.mubr.f32.gmra.mrb[0].mxu0 %v1880
      %v2088 = vpop.f32.mrb[0].mxu0
      %v2089 = vadd.f32 0.0, %v2088
      %v2090 = vpop.f32.mrb[0].mxu0
      %2091 = vmatprep.mubr.f32.mxu0 0.0
      %2092 = vmatmul.mubr.f32.gmra.mrb[0].mxu0 %v1882
      %v2093 = vpop.f32.mrb[0].mxu0
      %v2094 = vadd.f32 0.0, %v2093
      %v2095 = vpop.f32.mrb[0].mxu0
      %2096 = vmatprep.mubr.f32.mxu0 0.0
      %2097 = vmatmul.mubr.f32.gmra.mrb[0].mxu0 %v1884
      %v2098 = vpop.f32.mrb[0].mxu0
      %v2099 = vadd.f32 0.0, %v2098
      %v2100 = vpop.f32.mrb[0].mxu0
      %2101 = vmatprep.mubr.f32.mxu0 0.0
      %2102 = vmatmul.mubr.f32.gmra.mrb[0].mxu0 %v1886
      %v2103 = vpop.f32.mrb[0].mxu0
      %v2104 = vadd.f32 0.0, %v2103
      %v2105 = vpop.f32.mrb[0].mxu0
      %2106 = vmatprep.mubr.f32.mxu0 0.0
      %2107 = vmatmul.mubr.f32.gmra.mrb[0].mxu0 %v1888
      %v2108 = vpop.f32.mrb[0].mxu0
      %v2109 = vadd.f32 0.0, %v2108
      %v2110 = vpop.f32.mrb[0].mxu0
      %2111 = vmatprep.mubr.f32.mxu0 0.0
      %2112 = vmatmul.mubr.f32.gmra.mrb[0].mxu0 %v1890
      %v2113 = vpop.f32.mrb[0].mxu0
      %v2114 = vadd.f32 0.0, %v2113
      %v2115 = vpop.f32.mrb[0].mxu0
      %2116 = vmatprep.mubr.f32.mxu0 0.0
      %2117 = vmatmul.mubr.f32.gmra.mrb[0].mxu0 %v1892
      %v2118 = vpop.f32.mrb[0].mxu0
      %v2119 = vadd.f32 0.0, %v2118
      %v2120 = vpop.f32.mrb[0].mxu0
      %2121 = vdwg.mxu0
      %v2122 = vadd.f32 %v1575, %v1964
      %v2123 = vadd.f32 %v1580, %v1969
      %v2124 = vadd.f32 %v1585, %v1974
      %v2125 = vadd.f32 %v1590, %v1979
      %v2126 = vadd.f32 %v1595, %v1984
      %v2127 = vadd.f32 %v1600, %v1989
      %v2128 = vadd.f32 %v1605, %v1994
      %v2129 = vadd.f32 %v1610, %v1999
      %v2130 = vadd.f32 %v1615, %v2004
      %v2131 = vadd.f32 %v1620, %v2009
      %v2132 = vadd.f32 %v1625, %v2014
      %v2133 = vadd.f32 %v1630, %v2019
      %v2134 = vadd.f32 %v1635, %v2024
      %v2135 = vadd.f32 %v1640, %v2029
      %v2136 = vadd.f32 %v1645, %v2034
      %v2137 = vadd.f32 %v1650, %v2039
      %v2138 = vadd.f32 %v1655, %v2044
      %v2139 = vadd.f32 %v1660, %v2049
      %v2140 = vadd.f32 %v1665, %v2054
      %v2141 = vadd.f32 %v1670, %v2059
      %v2142 = vadd.f32 %v1675, %v2064
      %v2143 = vadd.f32 %v1680, %v2069
      %v2144 = vadd.f32 %v1685, %v2074
      %v2145 = vadd.f32 %v1690, %v2079
      %v2146 = vadd.f32 %v1695, %v2084
      %v2147 = vadd.f32 %v1700, %v2089
      %v2148 = vadd.f32 %v1705, %v2094
      %v2149 = vadd.f32 %v1710, %v2099
      %v2150 = vadd.f32 %v1715, %v2104
      %v2151 = vadd.f32 %v1720, %v2109
      %v2152 = vadd.f32 %v1725, %v2114
      %v2153 = vadd.f32 %v1730, %v2119
      %v2157 = vrot.slane %v1011, 7
      %v2158 = vrot.slane %v1012, 7
      %v2159 = vsel %vm1067, %v2157, %v2158
      %v2160 = vrot.slane %v1013, 7
      %v2161 = vsel %vm1067, %v2158, %v2160
      %v2162 = vsel %vm375, %v2159, 0
      %v2164 = vsel %vm375, %v2161, 0
      %v2167 = vsel %vm1212, %v349, 0
      %2169 = vmatprep.subr.mxu0 0.0
      %2170 = vmatpush1.msra.mxu0 %v2167
      %2171 = vmatprep.subr.mxu0 0.0
      %2172 = vmatpush1.msra.mxu0 0.0
      %2173 = vmatprep.subr.mxu0 0.0
      %2174 = vmatpush1.msra.mxu0 0.0
      %2175 = vmatprep.subr.mxu0 0.0
      %2176 = vmatpush1.msra.mxu0 0.0
      %2177 = vmatprep.subr.mxu0 0.0
      %2178 = vmatpush1.msra.mxu0 0.0
      %2179 = vmatprep.subr.mxu0 0.0
      %2180 = vmatpush1.msra.mxu0 0.0
      %2181 = vmatprep.subr.mxu0 0.0
      %2182 = vmatpush1.msra.mxu0 0.0
      %2183 = vmatprep.subr.mxu0 0.0
      %2184 = vmatpush1.msra.mxu0 0.0
      %2185 = vmatprep.subr.mxu0 0.0
      %2186 = vmatpush1.msra.mxu0 0.0
      %2187 = vmatprep.subr.mxu0 0.0
      %2188 = vmatpush1.msra.mxu0 0.0
      %2189 = vmatprep.subr.mxu0 0.0
      %2190 = vmatpush1.msra.mxu0 0.0
      %2191 = vmatprep.subr.mxu0 0.0
      %2192 = vmatpush1.msra.mxu0 0.0
      %2193 = vmatprep.subr.mxu0 0.0
      %2194 = vmatpush1.msra.mxu0 0.0
      %2195 = vmatprep.subr.mxu0 0.0
      %2196 = vmatpush1.msra.mxu0 0.0
      %2197 = vmatprep.subr.mxu0 0.0
      %2198 = vmatpush1.msra.mxu0 0.0
      %2199 = vmatprep.subr.mxu0 0.0
      %2200 = vmatpush1.msra.mxu0 0.0
      %2201 = vmatprep.subr.mxu0 0.0
      %2202 = vmatpush1.msra.mxu0 0.0
      %2203 = vmatprep.subr.mxu0 0.0
      %2204 = vmatpush1.msra.mxu0 0.0
      %2205 = vmatprep.subr.mxu0 0.0
      %2206 = vmatpush1.msra.mxu0 0.0
      %2207 = vmatprep.subr.mxu0 0.0
      %2208 = vmatpush1.msra.mxu0 0.0
      %2209 = vmatprep.subr.mxu0 0.0
      %2210 = vmatpush1.msra.mxu0 0.0
      %2211 = vmatprep.subr.mxu0 0.0
      %2212 = vmatpush1.msra.mxu0 0.0
      %2213 = vmatprep.subr.mxu0 0.0
      %2214 = vmatpush1.msra.mxu0 0.0
      %2215 = vmatprep.subr.mxu0 0.0
      %2216 = vmatpush1.msra.mxu0 0.0
      %2217 = vmatprep.subr.mxu0 0.0
      %2218 = vmatpush1.msra.mxu0 0.0
      %2219 = vmatprep.subr.mxu0 0.0
      %2220 = vmatpush1.msra.mxu0 0.0
      %2221 = vmatprep.subr.mxu0 0.0
      %2222 = vmatpush1.msra.mxu0 0.0
      %2223 = vmatprep.subr.mxu0 0.0
      %2224 = vmatpush1.msra.mxu0 0.0
      %2225 = vmatprep.subr.mxu0 0.0
      %2226 = vmatpush1.msra.mxu0 0.0
      %2227 = vmatprep.subr.mxu0 0.0
      %2228 = vmatpush1.msra.mxu0 0.0
      %2229 = vmatprep.subr.mxu0 0.0
      %2230 = vmatpush1.msra.mxu0 0.0
      %2231 = vmatprep.subr.mxu0 0.0
      %2232 = vmatpush1.msra.mxu0 0.0
      %2233 = vmatprep.mubr.f32.mxu0 0.0
      %2234 = vmatmul.mubr.f32.gmra.mrb[0].mxu0 %v1445
      %v2235 = vpop.f32.mrb[0].mxu0
      %v2236 = vadd.f32 0.0, %v2235
      %v2237 = vpop.f32.mrb[0].mxu0
      %2238 = vmatprep.mubr.f32.mxu0 0.0
      %2239 = vmatmul.mubr.f32.gmra.mrb[0].mxu0 %v1447
      %v2240 = vpop.f32.mrb[0].mxu0
      %v2241 = vadd.f32 0.0, %v2240
      %v2242 = vpop.f32.mrb[0].mxu0
      %2243 = vmatprep.mubr.f32.mxu0 0.0
      %2244 = vmatmul.mubr.f32.gmra.mrb[0].mxu0 %v1449
      %v2245 = vpop.f32.mrb[0].mxu0
      %v2246 = vadd.f32 0.0, %v2245
      %v2247 = vpop.f32.mrb[0].mxu0
      %2248 = vmatprep.mubr.f32.mxu0 0.0
      %2249 = vmatmul.mubr.f32.gmra.mrb[0].mxu0 %v1451
      %v2250 = vpop.f32.mrb[0].mxu0
      %v2251 = vadd.f32 0.0, %v2250
      %v2252 = vpop.f32.mrb[0].mxu0
      %2253 = vmatprep.mubr.f32.mxu0 0.0
      %2254 = vmatmul.mubr.f32.gmra.mrb[0].mxu0 %v1453
      %v2255 = vpop.f32.mrb[0].mxu0
      %v2256 = vadd.f32 0.0, %v2255
      %v2257 = vpop.f32.mrb[0].mxu0
      %2258 = vmatprep.mubr.f32.mxu0 0.0
      %2259 = vmatmul.mubr.f32.gmra.mrb[0].mxu0 %v1455
      %v2260 = vpop.f32.mrb[0].mxu0
      %v2261 = vadd.f32 0.0, %v2260
      %v2262 = vpop.f32.mrb[0].mxu0
      %2263 = vmatprep.mubr.f32.mxu0 0.0
      %2264 = vmatmul.mubr.f32.gmra.mrb[0].mxu0 %v1457
      %v2265 = vpop.f32.mrb[0].mxu0
      %v2266 = vadd.f32 0.0, %v2265
      %v2267 = vpop.f32.mrb[0].mxu0
      %2268 = vmatprep.mubr.f32.mxu0 0.0
      %2269 = vmatmul.mubr.f32.gmra.mrb[0].mxu0 %v1459
      %v2270 = vpop.f32.mrb[0].mxu0
      %v2271 = vadd.f32 0.0, %v2270
      %v2272 = vpop.f32.mrb[0].mxu0
      %2273 = vmatprep.mubr.f32.mxu0 0.0
      %2274 = vmatmul.mubr.f32.gmra.mrb[0].mxu0 %v1461
      %v2275 = vpop.f32.mrb[0].mxu0
      %v2276 = vadd.f32 0.0, %v2275
      %v2277 = vpop.f32.mrb[0].mxu0
      %2278 = vmatprep.mubr.f32.mxu0 0.0
      %2279 = vmatmul.mubr.f32.gmra.mrb[0].mxu0 %v1463
      %v2280 = vpop.f32.mrb[0].mxu0
      %v2281 = vadd.f32 0.0, %v2280
      %v2282 = vpop.f32.mrb[0].mxu0
      %2283 = vmatprep.mubr.f32.mxu0 0.0
      %2284 = vmatmul.mubr.f32.gmra.mrb[0].mxu0 %v1465
      %v2285 = vpop.f32.mrb[0].mxu0
      %v2286 = vadd.f32 0.0, %v2285
      %v2287 = vpop.f32.mrb[0].mxu0
      %2288 = vmatprep.mubr.f32.mxu0 0.0
      %2289 = vmatmul.mubr.f32.gmra.mrb[0].mxu0 %v1467
      %v2290 = vpop.f32.mrb[0].mxu0
      %v2291 = vadd.f32 0.0, %v2290
      %v2292 = vpop.f32.mrb[0].mxu0
      %2293 = vmatprep.mubr.f32.mxu0 0.0
      %2294 = vmatmul.mubr.f32.gmra.mrb[0].mxu0 %v1469
      %v2295 = vpop.f32.mrb[0].mxu0
      %v2296 = vadd.f32 0.0, %v2295
      %v2297 = vpop.f32.mrb[0].mxu0
      %2298 = vmatprep.mubr.f32.mxu0 0.0
      %2299 = vmatmul.mubr.f32.gmra.mrb[0].mxu0 %v1471
      %v2300 = vpop.f32.mrb[0].mxu0
      %v2301 = vadd.f32 0.0, %v2300
      %v2302 = vpop.f32.mrb[0].mxu0
      %2303 = vmatprep.mubr.f32.mxu0 0.0
      %2304 = vmatmul.mubr.f32.gmra.mrb[0].mxu0 %v1473
      %v2305 = vpop.f32.mrb[0].mxu0
      %v2306 = vadd.f32 0.0, %v2305
      %v2307 = vpop.f32.mrb[0].mxu0
      %2308 = vmatprep.mubr.f32.mxu0 0.0
      %2309 = vmatmul.mubr.f32.gmra.mrb[0].mxu0 %v1475
      %v2310 = vpop.f32.mrb[0].mxu0
      %v2311 = vadd.f32 0.0, %v2310
      %v2312 = vpop.f32.mrb[0].mxu0
      %2313 = vmatprep.mubr.f32.mxu0 0.0
      %2314 = vmatmul.mubr.f32.gmra.mrb[0].mxu0 %v1477
      %v2315 = vpop.f32.mrb[0].mxu0
      %v2316 = vadd.f32 0.0, %v2315
      %v2317 = vpop.f32.mrb[0].mxu0
      %2318 = vmatprep.mubr.f32.mxu0 0.0
      %2319 = vmatmul.mubr.f32.gmra.mrb[0].mxu0 %v1479
      %v2320 = vpop.f32.mrb[0].mxu0
      %v2321 = vadd.f32 0.0, %v2320
      %v2322 = vpop.f32.mrb[0].mxu0
      %2323 = vmatprep.mubr.f32.mxu0 0.0
      %2324 = vmatmul.mubr.f32.gmra.mrb[0].mxu0 %v1481
      %v2325 = vpop.f32.mrb[0].mxu0
      %v2326 = vadd.f32 0.0, %v2325
      %v2327 = vpop.f32.mrb[0].mxu0
      %2328 = vmatprep.mubr.f32.mxu0 0.0
      %2329 = vmatmul.mubr.f32.gmra.mrb[0].mxu0 %v1483
      %v2330 = vpop.f32.mrb[0].mxu0
      %v2331 = vadd.f32 0.0, %v2330
      %v2332 = vpop.f32.mrb[0].mxu0
      %2333 = vmatprep.mubr.f32.mxu0 0.0
      %2334 = vmatmul.mubr.f32.gmra.mrb[0].mxu0 %v1485
      %v2335 = vpop.f32.mrb[0].mxu0
      %v2336 = vadd.f32 0.0, %v2335
      %v2337 = vpop.f32.mrb[0].mxu0
      %2338 = vmatprep.mubr.f32.mxu0 0.0
      %2339 = vmatmul.mubr.f32.gmra.mrb[0].mxu0 %v1487
      %v2340 = vpop.f32.mrb[0].mxu0
      %v2341 = vadd.f32 0.0, %v2340
      %v2342 = vpop.f32.mrb[0].mxu0
      %2343 = vmatprep.mubr.f32.mxu0 0.0
      %2344 = vmatmul.mubr.f32.gmra.mrb[0].mxu0 %v1489
      %v2345 = vpop.f32.mrb[0].mxu0
      %v2346 = vadd.f32 0.0, %v2345
      %v2347 = vpop.f32.mrb[0].mxu0
      %2348 = vmatprep.mubr.f32.mxu0 0.0
      %2349 = vmatmul.mubr.f32.gmra.mrb[0].mxu0 %v1491
      %v2350 = vpop.f32.mrb[0].mxu0
      %v2351 = vadd.f32 0.0, %v2350
      %v2352 = vpop.f32.mrb[0].mxu0
      %2353 = vmatprep.mubr.f32.mxu0 0.0
      %2354 = vmatmul.mubr.f32.gmra.mrb[0].mxu0 %v1493
      %v2355 = vpop.f32.mrb[0].mxu0
      %v2356 = vadd.f32 0.0, %v2355
      %v2357 = vpop.f32.mrb[0].mxu0
      %2358 = vmatprep.mubr.f32.mxu0 0.0
      %2359 = vmatmul.mubr.f32.gmra.mrb[0].mxu0 %v1495
      %v2360 = vpop.f32.mrb[0].mxu0
      %v2361 = vadd.f32 0.0, %v2360
      %v2362 = vpop.f32.mrb[0].mxu0
      %2363 = vmatprep.mubr.f32.mxu0 0.0
      %2364 = vmatmul.mubr.f32.gmra.mrb[0].mxu0 %v1497
      %v2365 = vpop.f32.mrb[0].mxu0
      %v2366 = vadd.f32 0.0, %v2365
      %v2367 = vpop.f32.mrb[0].mxu0
      %2368 = vmatprep.mubr.f32.mxu0 0.0
      %2369 = vmatmul.mubr.f32.gmra.mrb[0].mxu0 %v1499
      %v2370 = vpop.f32.mrb[0].mxu0
      %v2371 = vadd.f32 0.0, %v2370
      %v2372 = vpop.f32.mrb[0].mxu0
      %2373 = vmatprep.mubr.f32.mxu0 0.0
      %2374 = vmatmul.mubr.f32.gmra.mrb[0].mxu0 %v1501
      %v2375 = vpop.f32.mrb[0].mxu0
      %v2376 = vadd.f32 0.0, %v2375
      %v2377 = vpop.f32.mrb[0].mxu0
      %2378 = vmatprep.mubr.f32.mxu0 0.0
      %2379 = vmatmul.mubr.f32.gmra.mrb[0].mxu0 %v1503
      %v2380 = vpop.f32.mrb[0].mxu0
      %v2381 = vadd.f32 0.0, %v2380
      %v2382 = vpop.f32.mrb[0].mxu0
      %2383 = vmatprep.mubr.f32.mxu0 0.0
      %2384 = vmatmul.mubr.f32.gmra.mrb[0].mxu0 %v2162
      %v2385 = vpop.f32.mrb[0].mxu0
      %v2386 = vadd.f32 0.0, %v2385
      %v2387 = vpop.f32.mrb[0].mxu0
      %2388 = vmatprep.mubr.f32.mxu0 0.0
      %2389 = vmatmul.mubr.f32.gmra.mrb[0].mxu0 %v2164
      %v2390 = vpop.f32.mrb[0].mxu0
      %v2391 = vadd.f32 0.0, %v2390
      %v2392 = vpop.f32.mrb[0].mxu0
      %2393 = vdwg.mxu0
      %v2394 = vadd.f32 %v2122, %v2236
      %v2395 = vadd.f32 %v2123, %v2241
      %v2396 = vadd.f32 %v2124, %v2246
      %v2397 = vadd.f32 %v2125, %v2251
      %v2398 = vadd.f32 %v2126, %v2256
      %v2399 = vadd.f32 %v2127, %v2261
      %v2400 = vadd.f32 %v2128, %v2266
      %v2401 = vadd.f32 %v2129, %v2271
      %v2402 = vadd.f32 %v2130, %v2276
      %v2403 = vadd.f32 %v2131, %v2281
      %v2404 = vadd.f32 %v2132, %v2286
      %v2405 = vadd.f32 %v2133, %v2291
      %v2406 = vadd.f32 %v2134, %v2296
      %v2407 = vadd.f32 %v2135, %v2301
      %v2408 = vadd.f32 %v2136, %v2306
      %v2409 = vadd.f32 %v2137, %v2311
      %v2410 = vadd.f32 %v2138, %v2316
      %v2411 = vadd.f32 %v2139, %v2321
      %v2412 = vadd.f32 %v2140, %v2326
      %v2413 = vadd.f32 %v2141, %v2331
      %v2414 = vadd.f32 %v2142, %v2336
      %v2415 = vadd.f32 %v2143, %v2341
      %v2416 = vadd.f32 %v2144, %v2346
      %v2417 = vadd.f32 %v2145, %v2351
      %v2418 = vadd.f32 %v2146, %v2356
      %v2419 = vadd.f32 %v2147, %v2361
      %v2420 = vadd.f32 %v2148, %v2366
      %v2421 = vadd.f32 %v2149, %v2371
      %v2422 = vadd.f32 %v2150, %v2376
      %v2423 = vadd.f32 %v2151, %v2381
      %v2424 = vadd.f32 %v2152, %v2386
      %v2425 = vadd.f32 %v2153, %v2391
      %v2426 = vsel %vm375, %v1012, 0
      %v2428 = vsel %vm375, %v1013, 0
      %v2431 = vsel %vm1212, %v350, 0
      %2433 = vmatprep.subr.mxu0 0.0
      %2434 = vmatpush1.msra.mxu0 %v2431
      %2435 = vmatprep.subr.mxu0 0.0
      %2436 = vmatpush1.msra.mxu0 0.0
      %2437 = vmatprep.subr.mxu0 0.0
      %2438 = vmatpush1.msra.mxu0 0.0
      %2439 = vmatprep.subr.mxu0 0.0
      %2440 = vmatpush1.msra.mxu0 0.0
      %2441 = vmatprep.subr.mxu0 0.0
      %2442 = vmatpush1.msra.mxu0 0.0
      %2443 = vmatprep.subr.mxu0 0.0
      %2444 = vmatpush1.msra.mxu0 0.0
      %2445 = vmatprep.subr.mxu0 0.0
      %2446 = vmatpush1.msra.mxu0 0.0
      %2447 = vmatprep.subr.mxu0 0.0
      %2448 = vmatpush1.msra.mxu0 0.0
      %2449 = vmatprep.subr.mxu0 0.0
      %2450 = vmatpush1.msra.mxu0 0.0
      %2451 = vmatprep.subr.mxu0 0.0
      %2452 = vmatpush1.msra.mxu0 0.0
      %2453 = vmatprep.subr.mxu0 0.0
      %2454 = vmatpush1.msra.mxu0 0.0
      %2455 = vmatprep.subr.mxu0 0.0
      %2456 = vmatpush1.msra.mxu0 0.0
      %2457 = vmatprep.subr.mxu0 0.0
      %2458 = vmatpush1.msra.mxu0 0.0
      %2459 = vmatprep.subr.mxu0 0.0
      %2460 = vmatpush1.msra.mxu0 0.0
      %2461 = vmatprep.subr.mxu0 0.0
      %2462 = vmatpush1.msra.mxu0 0.0
      %2463 = vmatprep.subr.mxu0 0.0
      %2464 = vmatpush1.msra.mxu0 0.0
      %2465 = vmatprep.subr.mxu0 0.0
      %2466 = vmatpush1.msra.mxu0 0.0
      %2467 = vmatprep.subr.mxu0 0.0
      %2468 = vmatpush1.msra.mxu0 0.0
      %2469 = vmatprep.subr.mxu0 0.0
      %2470 = vmatpush1.msra.mxu0 0.0
      %2471 = vmatprep.subr.mxu0 0.0
      %2472 = vmatpush1.msra.mxu0 0.0
      %2473 = vmatprep.subr.mxu0 0.0
      %2474 = vmatpush1.msra.mxu0 0.0
      %2475 = vmatprep.subr.mxu0 0.0
      %2476 = vmatpush1.msra.mxu0 0.0
      %2477 = vmatprep.subr.mxu0 0.0
      %2478 = vmatpush1.msra.mxu0 0.0
      %2479 = vmatprep.subr.mxu0 0.0
      %2480 = vmatpush1.msra.mxu0 0.0
      %2481 = vmatprep.subr.mxu0 0.0
      %2482 = vmatpush1.msra.mxu0 0.0
      %2483 = vmatprep.subr.mxu0 0.0
      %2484 = vmatpush1.msra.mxu0 0.0
      %2485 = vmatprep.subr.mxu0 0.0
      %2486 = vmatpush1.msra.mxu0 0.0
      %2487 = vmatprep.subr.mxu0 0.0
      %2488 = vmatpush1.msra.mxu0 0.0
      %2489 = vmatprep.subr.mxu0 0.0
      %2490 = vmatpush1.msra.mxu0 0.0
      %2491 = vmatprep.subr.mxu0 0.0
      %2492 = vmatpush1.msra.mxu0 0.0
      %2493 = vmatprep.subr.mxu0 0.0
      %2494 = vmatpush1.msra.mxu0 0.0
      %2495 = vmatprep.subr.mxu0 0.0
      %2496 = vmatpush1.msra.mxu0 0.0
      %2497 = vmatprep.mubr.f32.mxu0 0.0
      %2498 = vmatmul.mubr.f32.gmra.mrb[0].mxu0 %v1152
      %v2499 = vpop.f32.mrb[0].mxu0
      %v2500 = vadd.f32 0.0, %v2499
      %v2501 = vpop.f32.mrb[0].mxu0
      %2502 = vmatprep.mubr.f32.mxu0 0.0
      %2503 = vmatmul.mubr.f32.gmra.mrb[0].mxu0 %v1154
      %v2504 = vpop.f32.mrb[0].mxu0
      %v2505 = vadd.f32 0.0, %v2504
      %v2506 = vpop.f32.mrb[0].mxu0
      %2507 = vmatprep.mubr.f32.mxu0 0.0
      %2508 = vmatmul.mubr.f32.gmra.mrb[0].mxu0 %v1156
      %v2509 = vpop.f32.mrb[0].mxu0
      %v2510 = vadd.f32 0.0, %v2509
      %v2511 = vpop.f32.mrb[0].mxu0
      %2512 = vmatprep.mubr.f32.mxu0 0.0
      %2513 = vmatmul.mubr.f32.gmra.mrb[0].mxu0 %v1158
      %v2514 = vpop.f32.mrb[0].mxu0
      %v2515 = vadd.f32 0.0, %v2514
      %v2516 = vpop.f32.mrb[0].mxu0
      %2517 = vmatprep.mubr.f32.mxu0 0.0
      %2518 = vmatmul.mubr.f32.gmra.mrb[0].mxu0 %v1160
      %v2519 = vpop.f32.mrb[0].mxu0
      %v2520 = vadd.f32 0.0, %v2519
      %v2521 = vpop.f32.mrb[0].mxu0
      %2522 = vmatprep.mubr.f32.mxu0 0.0
      %2523 = vmatmul.mubr.f32.gmra.mrb[0].mxu0 %v1162
      %v2524 = vpop.f32.mrb[0].mxu0
      %v2525 = vadd.f32 0.0, %v2524
      %v2526 = vpop.f32.mrb[0].mxu0
      %2527 = vmatprep.mubr.f32.mxu0 0.0
      %2528 = vmatmul.mubr.f32.gmra.mrb[0].mxu0 %v1164
      %v2529 = vpop.f32.mrb[0].mxu0
      %v2530 = vadd.f32 0.0, %v2529
      %v2531 = vpop.f32.mrb[0].mxu0
      %2532 = vmatprep.mubr.f32.mxu0 0.0
      %2533 = vmatmul.mubr.f32.gmra.mrb[0].mxu0 %v1166
      %v2534 = vpop.f32.mrb[0].mxu0
      %v2535 = vadd.f32 0.0, %v2534
      %v2536 = vpop.f32.mrb[0].mxu0
      %2537 = vmatprep.mubr.f32.mxu0 0.0
      %2538 = vmatmul.mubr.f32.gmra.mrb[0].mxu0 %v1168
      %v2539 = vpop.f32.mrb[0].mxu0
      %v2540 = vadd.f32 0.0, %v2539
      %v2541 = vpop.f32.mrb[0].mxu0
      %2542 = vmatprep.mubr.f32.mxu0 0.0
      %2543 = vmatmul.mubr.f32.gmra.mrb[0].mxu0 %v1170
      %v2544 = vpop.f32.mrb[0].mxu0
      %v2545 = vadd.f32 0.0, %v2544
      %v2546 = vpop.f32.mrb[0].mxu0
      %2547 = vmatprep.mubr.f32.mxu0 0.0
      %2548 = vmatmul.mubr.f32.gmra.mrb[0].mxu0 %v1172
      %v2549 = vpop.f32.mrb[0].mxu0
      %v2550 = vadd.f32 0.0, %v2549
      %v2551 = vpop.f32.mrb[0].mxu0
      %2552 = vmatprep.mubr.f32.mxu0 0.0
      %2553 = vmatmul.mubr.f32.gmra.mrb[0].mxu0 %v1174
      %v2554 = vpop.f32.mrb[0].mxu0
      %v2555 = vadd.f32 0.0, %v2554
      %v2556 = vpop.f32.mrb[0].mxu0
      %2557 = vmatprep.mubr.f32.mxu0 0.0
      %2558 = vmatmul.mubr.f32.gmra.mrb[0].mxu0 %v1176
      %v2559 = vpop.f32.mrb[0].mxu0
      %v2560 = vadd.f32 0.0, %v2559
      %v2561 = vpop.f32.mrb[0].mxu0
      %2562 = vmatprep.mubr.f32.mxu0 0.0
      %2563 = vmatmul.mubr.f32.gmra.mrb[0].mxu0 %v1178
      %v2564 = vpop.f32.mrb[0].mxu0
      %v2565 = vadd.f32 0.0, %v2564
      %v2566 = vpop.f32.mrb[0].mxu0
      %2567 = vmatprep.mubr.f32.mxu0 0.0
      %2568 = vmatmul.mubr.f32.gmra.mrb[0].mxu0 %v1180
      %v2569 = vpop.f32.mrb[0].mxu0
      %v2570 = vadd.f32 0.0, %v2569
      %v2571 = vpop.f32.mrb[0].mxu0
      %2572 = vmatprep.mubr.f32.mxu0 0.0
      %2573 = vmatmul.mubr.f32.gmra.mrb[0].mxu0 %v1182
      %v2574 = vpop.f32.mrb[0].mxu0
      %v2575 = vadd.f32 0.0, %v2574
      %v2576 = vpop.f32.mrb[0].mxu0
      %2577 = vmatprep.mubr.f32.mxu0 0.0
      %2578 = vmatmul.mubr.f32.gmra.mrb[0].mxu0 %v1184
      %v2579 = vpop.f32.mrb[0].mxu0
      %v2580 = vadd.f32 0.0, %v2579
      %v2581 = vpop.f32.mrb[0].mxu0
      %2582 = vmatprep.mubr.f32.mxu0 0.0
      %2583 = vmatmul.mubr.f32.gmra.mrb[0].mxu0 %v1186
      %v2584 = vpop.f32.mrb[0].mxu0
      %v2585 = vadd.f32 0.0, %v2584
      %v2586 = vpop.f32.mrb[0].mxu0
      %2587 = vmatprep.mubr.f32.mxu0 0.0
      %2588 = vmatmul.mubr.f32.gmra.mrb[0].mxu0 %v1188
      %v2589 = vpop.f32.mrb[0].mxu0
      %v2590 = vadd.f32 0.0, %v2589
      %v2591 = vpop.f32.mrb[0].mxu0
      %2592 = vmatprep.mubr.f32.mxu0 0.0
      %2593 = vmatmul.mubr.f32.gmra.mrb[0].mxu0 %v1190
      %v2594 = vpop.f32.mrb[0].mxu0
      %v2595 = vadd.f32 0.0, %v2594
      %v2596 = vpop.f32.mrb[0].mxu0
      %2597 = vmatprep.mubr.f32.mxu0 0.0
      %2598 = vmatmul.mubr.f32.gmra.mrb[0].mxu0 %v1192
      %v2599 = vpop.f32.mrb[0].mxu0
      %v2600 = vadd.f32 0.0, %v2599
      %v2601 = vpop.f32.mrb[0].mxu0
      %2602 = vmatprep.mubr.f32.mxu0 0.0
      %2603 = vmatmul.mubr.f32.gmra.mrb[0].mxu0 %v1194
      %v2604 = vpop.f32.mrb[0].mxu0
      %v2605 = vadd.f32 0.0, %v2604
      %v2606 = vpop.f32.mrb[0].mxu0
      %2607 = vmatprep.mubr.f32.mxu0 0.0
      %2608 = vmatmul.mubr.f32.gmra.mrb[0].mxu0 %v1196
      %v2609 = vpop.f32.mrb[0].mxu0
      %v2610 = vadd.f32 0.0, %v2609
      %v2611 = vpop.f32.mrb[0].mxu0
      %2612 = vmatprep.mubr.f32.mxu0 0.0
      %2613 = vmatmul.mubr.f32.gmra.mrb[0].mxu0 %v1198
      %v2614 = vpop.f32.mrb[0].mxu0
      %v2615 = vadd.f32 0.0, %v2614
      %v2616 = vpop.f32.mrb[0].mxu0
      %2617 = vmatprep.mubr.f32.mxu0 0.0
      %2618 = vmatmul.mubr.f32.gmra.mrb[0].mxu0 %v1200
      %v2619 = vpop.f32.mrb[0].mxu0
      %v2620 = vadd.f32 0.0, %v2619
      %v2621 = vpop.f32.mrb[0].mxu0
      %2622 = vmatprep.mubr.f32.mxu0 0.0
      %2623 = vmatmul.mubr.f32.gmra.mrb[0].mxu0 %v1202
      %v2624 = vpop.f32.mrb[0].mxu0
      %v2625 = vadd.f32 0.0, %v2624
      %v2626 = vpop.f32.mrb[0].mxu0
      %2627 = vmatprep.mubr.f32.mxu0 0.0
      %2628 = vmatmul.mubr.f32.gmra.mrb[0].mxu0 %v1204
      %v2629 = vpop.f32.mrb[0].mxu0
      %v2630 = vadd.f32 0.0, %v2629
      %v2631 = vpop.f32.mrb[0].mxu0
      %2632 = vmatprep.mubr.f32.mxu0 0.0
      %2633 = vmatmul.mubr.f32.gmra.mrb[0].mxu0 %v1206
      %v2634 = vpop.f32.mrb[0].mxu0
      %v2635 = vadd.f32 0.0, %v2634
      %v2636 = vpop.f32.mrb[0].mxu0
      %2637 = vmatprep.mubr.f32.mxu0 0.0
      %2638 = vmatmul.mubr.f32.gmra.mrb[0].mxu0 %v1208
      %v2639 = vpop.f32.mrb[0].mxu0
      %v2640 = vadd.f32 0.0, %v2639
      %v2641 = vpop.f32.mrb[0].mxu0
      %2642 = vmatprep.mubr.f32.mxu0 0.0
      %2643 = vmatmul.mubr.f32.gmra.mrb[0].mxu0 %v1210
      %v2644 = vpop.f32.mrb[0].mxu0
      %v2645 = vadd.f32 0.0, %v2644
      %v2646 = vpop.f32.mrb[0].mxu0
      %2647 = vmatprep.mubr.f32.mxu0 0.0
      %2648 = vmatmul.mubr.f32.gmra.mrb[0].mxu0 %v2426
      %v2649 = vpop.f32.mrb[0].mxu0
      %v2650 = vadd.f32 0.0, %v2649
      %v2651 = vpop.f32.mrb[0].mxu0
      %2652 = vmatprep.mubr.f32.mxu0 0.0
      %2653 = vmatmul.mubr.f32.gmra.mrb[0].mxu0 %v2428
      %v2654 = vpop.f32.mrb[0].mxu0
      %v2655 = vadd.f32 0.0, %v2654
      %v2656 = vpop.f32.mrb[0].mxu0
      %2657 = vdwg.mxu0
      %v2658 = vadd.f32 %v2394, %v2500
      %v2659 = vadd.f32 %v2395, %v2505
      %v2660 = vadd.f32 %v2396, %v2510
      %v2661 = vadd.f32 %v2397, %v2515
      %v2662 = vadd.f32 %v2398, %v2520
      %v2663 = vadd.f32 %v2399, %v2525
      %v2664 = vadd.f32 %v2400, %v2530
      %v2665 = vadd.f32 %v2401, %v2535
      %v2666 = vadd.f32 %v2402, %v2540
      %v2667 = vadd.f32 %v2403, %v2545
      %v2668 = vadd.f32 %v2404, %v2550
      %v2669 = vadd.f32 %v2405, %v2555
      %v2670 = vadd.f32 %v2406, %v2560
      %v2671 = vadd.f32 %v2407, %v2565
      %v2672 = vadd.f32 %v2408, %v2570
      %v2673 = vadd.f32 %v2409, %v2575
      %v2674 = vadd.f32 %v2410, %v2580
      %v2675 = vadd.f32 %v2411, %v2585
      %v2676 = vadd.f32 %v2412, %v2590
      %v2677 = vadd.f32 %v2413, %v2595
      %v2678 = vadd.f32 %v2414, %v2600
      %v2679 = vadd.f32 %v2415, %v2605
      %v2680 = vadd.f32 %v2416, %v2610
      %v2681 = vadd.f32 %v2417, %v2615
      %v2682 = vadd.f32 %v2418, %v2620
      %v2683 = vadd.f32 %v2419, %v2625
      %v2684 = vadd.f32 %v2420, %v2630
      %v2685 = vadd.f32 %v2421, %v2635
      %v2686 = vadd.f32 %v2422, %v2640
      %v2687 = vadd.f32 %v2423, %v2645
      %v2688 = vadd.f32 %v2424, %v2650
      %v2689 = vadd.f32 %v2425, %v2655
      %v2691 = vrot.slane %v1012, 1
      %v2692 = vrot.slane %v1013, 1
      %v2693 = vsel %vm1749, %v2691, %v2692
      %v2694 = vrot.slane %v1014, 1
      %v2695 = vsel %vm1749, %v2692, %v2694
      %v2696 = vsel %vm375, %v2693, 0
      %v2698 = vsel %vm375, %v2695, 0
      %v2701 = vsel %vm1212, %v351, 0
      %2703 = vmatprep.subr.mxu0 0.0
      %2704 = vmatpush1.msra.mxu0 %v2701
      %2705 = vmatprep.subr.mxu0 0.0
      %2706 = vmatpush1.msra.mxu0 0.0
      %2707 = vmatprep.subr.mxu0 0.0
      %2708 = vmatpush1.msra.mxu0 0.0
      %2709 = vmatprep.subr.mxu0 0.0
      %2710 = vmatpush1.msra.mxu0 0.0
      %2711 = vmatprep.subr.mxu0 0.0
      %2712 = vmatpush1.msra.mxu0 0.0
      %2713 = vmatprep.subr.mxu0 0.0
      %2714 = vmatpush1.msra.mxu0 0.0
      %2715 = vmatprep.subr.mxu0 0.0
      %2716 = vmatpush1.msra.mxu0 0.0
      %2717 = vmatprep.subr.mxu0 0.0
      %2718 = vmatpush1.msra.mxu0 0.0
      %2719 = vmatprep.subr.mxu0 0.0
      %2720 = vmatpush1.msra.mxu0 0.0
      %2721 = vmatprep.subr.mxu0 0.0
      %2722 = vmatpush1.msra.mxu0 0.0
      %2723 = vmatprep.subr.mxu0 0.0
      %2724 = vmatpush1.msra.mxu0 0.0
      %2725 = vmatprep.subr.mxu0 0.0
      %2726 = vmatpush1.msra.mxu0 0.0
      %2727 = vmatprep.subr.mxu0 0.0
      %2728 = vmatpush1.msra.mxu0 0.0
      %2729 = vmatprep.subr.mxu0 0.0
      %2730 = vmatpush1.msra.mxu0 0.0
      %2731 = vmatprep.subr.mxu0 0.0
      %2732 = vmatpush1.msra.mxu0 0.0
      %2733 = vmatprep.subr.mxu0 0.0
      %2734 = vmatpush1.msra.mxu0 0.0
      %2735 = vmatprep.subr.mxu0 0.0
      %2736 = vmatpush1.msra.mxu0 0.0
      %2737 = vmatprep.subr.mxu0 0.0
      %2738 = vmatpush1.msra.mxu0 0.0
      %2739 = vmatprep.subr.mxu0 0.0
      %2740 = vmatpush1.msra.mxu0 0.0
      %2741 = vmatprep.subr.mxu0 0.0
      %2742 = vmatpush1.msra.mxu0 0.0
      %2743 = vmatprep.subr.mxu0 0.0
      %2744 = vmatpush1.msra.mxu0 0.0
      %2745 = vmatprep.subr.mxu0 0.0
      %2746 = vmatpush1.msra.mxu0 0.0
      %2747 = vmatprep.subr.mxu0 0.0
      %2748 = vmatpush1.msra.mxu0 0.0
      %2749 = vmatprep.subr.mxu0 0.0
      %2750 = vmatpush1.msra.mxu0 0.0
      %2751 = vmatprep.subr.mxu0 0.0
      %2752 = vmatpush1.msra.mxu0 0.0
      %2753 = vmatprep.subr.mxu0 0.0
      %2754 = vmatpush1.msra.mxu0 0.0
      %2755 = vmatprep.subr.mxu0 0.0
      %2756 = vmatpush1.msra.mxu0 0.0
      %2757 = vmatprep.subr.mxu0 0.0
      %2758 = vmatpush1.msra.mxu0 0.0
      %2759 = vmatprep.subr.mxu0 0.0
      %2760 = vmatpush1.msra.mxu0 0.0
      %2761 = vmatprep.subr.mxu0 0.0
      %2762 = vmatpush1.msra.mxu0 0.0
      %2763 = vmatprep.subr.mxu0 0.0
      %2764 = vmatpush1.msra.mxu0 0.0
      %2765 = vmatprep.subr.mxu0 0.0
      %2766 = vmatpush1.msra.mxu0 0.0
      %2767 = vmatprep.mubr.f32.mxu0 0.0
      %2768 = vmatmul.mubr.f32.gmra.mrb[0].mxu0 %v1834
      %v2769 = vpop.f32.mrb[0].mxu0
      %v2770 = vadd.f32 0.0, %v2769
      %v2771 = vpop.f32.mrb[0].mxu0
      %2772 = vmatprep.mubr.f32.mxu0 0.0
      %2773 = vmatmul.mubr.f32.gmra.mrb[0].mxu0 %v1836
      %v2774 = vpop.f32.mrb[0].mxu0
      %v2775 = vadd.f32 0.0, %v2774
      %v2776 = vpop.f32.mrb[0].mxu0
      %2777 = vmatprep.mubr.f32.mxu0 0.0
      %2778 = vmatmul.mubr.f32.gmra.mrb[0].mxu0 %v1838
      %v2779 = vpop.f32.mrb[0].mxu0
      %v2780 = vadd.f32 0.0, %v2779
      %v2781 = vpop.f32.mrb[0].mxu0
      %2782 = vmatprep.mubr.f32.mxu0 0.0
      %2783 = vmatmul.mubr.f32.gmra.mrb[0].mxu0 %v1840
      %v2784 = vpop.f32.mrb[0].mxu0
      %v2785 = vadd.f32 0.0, %v2784
      %v2786 = vpop.f32.mrb[0].mxu0
      %2787 = vmatprep.mubr.f32.mxu0 0.0
      %2788 = vmatmul.mubr.f32.gmra.mrb[0].mxu0 %v1842
      %v2789 = vpop.f32.mrb[0].mxu0
      %v2790 = vadd.f32 0.0, %v2789
      %v2791 = vpop.f32.mrb[0].mxu0
      %2792 = vmatprep.mubr.f32.mxu0 0.0
      %2793 = vmatmul.mubr.f32.gmra.mrb[0].mxu0 %v1844
      %v2794 = vpop.f32.mrb[0].mxu0
      %v2795 = vadd.f32 0.0, %v2794
      %v2796 = vpop.f32.mrb[0].mxu0
      %2797 = vmatprep.mubr.f32.mxu0 0.0
      %2798 = vmatmul.mubr.f32.gmra.mrb[0].mxu0 %v1846
      %v2799 = vpop.f32.mrb[0].mxu0
      %v2800 = vadd.f32 0.0, %v2799
      %v2801 = vpop.f32.mrb[0].mxu0
      %2802 = vmatprep.mubr.f32.mxu0 0.0
      %2803 = vmatmul.mubr.f32.gmra.mrb[0].mxu0 %v1848
      %v2804 = vpop.f32.mrb[0].mxu0
      %v2805 = vadd.f32 0.0, %v2804
      %v2806 = vpop.f32.mrb[0].mxu0
      %2807 = vmatprep.mubr.f32.mxu0 0.0
      %2808 = vmatmul.mubr.f32.gmra.mrb[0].mxu0 %v1850
      %v2809 = vpop.f32.mrb[0].mxu0
      %v2810 = vadd.f32 0.0, %v2809
      %v2811 = vpop.f32.mrb[0].mxu0
      %2812 = vmatprep.mubr.f32.mxu0 0.0
      %2813 = vmatmul.mubr.f32.gmra.mrb[0].mxu0 %v1852
      %v2814 = vpop.f32.mrb[0].mxu0
      %v2815 = vadd.f32 0.0, %v2814
      %v2816 = vpop.f32.mrb[0].mxu0
      %2817 = vmatprep.mubr.f32.mxu0 0.0
      %2818 = vmatmul.mubr.f32.gmra.mrb[0].mxu0 %v1854
      %v2819 = vpop.f32.mrb[0].mxu0
      %v2820 = vadd.f32 0.0, %v2819
      %v2821 = vpop.f32.mrb[0].mxu0
      %2822 = vmatprep.mubr.f32.mxu0 0.0
      %2823 = vmatmul.mubr.f32.gmra.mrb[0].mxu0 %v1856
      %v2824 = vpop.f32.mrb[0].mxu0
      %v2825 = vadd.f32 0.0, %v2824
      %v2826 = vpop.f32.mrb[0].mxu0
      %2827 = vmatprep.mubr.f32.mxu0 0.0
      %2828 = vmatmul.mubr.f32.gmra.mrb[0].mxu0 %v1858
      %v2829 = vpop.f32.mrb[0].mxu0
      %v2830 = vadd.f32 0.0, %v2829
      %v2831 = vpop.f32.mrb[0].mxu0
      %2832 = vmatprep.mubr.f32.mxu0 0.0
      %2833 = vmatmul.mubr.f32.gmra.mrb[0].mxu0 %v1860
      %v2834 = vpop.f32.mrb[0].mxu0
      %v2835 = vadd.f32 0.0, %v2834
      %v2836 = vpop.f32.mrb[0].mxu0
      %2837 = vmatprep.mubr.f32.mxu0 0.0
      %2838 = vmatmul.mubr.f32.gmra.mrb[0].mxu0 %v1862
      %v2839 = vpop.f32.mrb[0].mxu0
      %v2840 = vadd.f32 0.0, %v2839
      %v2841 = vpop.f32.mrb[0].mxu0
      %2842 = vmatprep.mubr.f32.mxu0 0.0
      %2843 = vmatmul.mubr.f32.gmra.mrb[0].mxu0 %v1864
      %v2844 = vpop.f32.mrb[0].mxu0
      %v2845 = vadd.f32 0.0, %v2844
      %v2846 = vpop.f32.mrb[0].mxu0
      %2847 = vmatprep.mubr.f32.mxu0 0.0
      %2848 = vmatmul.mubr.f32.gmra.mrb[0].mxu0 %v1866
      %v2849 = vpop.f32.mrb[0].mxu0
      %v2850 = vadd.f32 0.0, %v2849
      %v2851 = vpop.f32.mrb[0].mxu0
      %2852 = vmatprep.mubr.f32.mxu0 0.0
      %2853 = vmatmul.mubr.f32.gmra.mrb[0].mxu0 %v1868
      %v2854 = vpop.f32.mrb[0].mxu0
      %v2855 = vadd.f32 0.0, %v2854
      %v2856 = vpop.f32.mrb[0].mxu0
      %2857 = vmatprep.mubr.f32.mxu0 0.0
      %2858 = vmatmul.mubr.f32.gmra.mrb[0].mxu0 %v1870
      %v2859 = vpop.f32.mrb[0].mxu0
      %v2860 = vadd.f32 0.0, %v2859
      %v2861 = vpop.f32.mrb[0].mxu0
      %2862 = vmatprep.mubr.f32.mxu0 0.0
      %2863 = vmatmul.mubr.f32.gmra.mrb[0].mxu0 %v1872
      %v2864 = vpop.f32.mrb[0].mxu0
      %v2865 = vadd.f32 0.0, %v2864
      %v2866 = vpop.f32.mrb[0].mxu0
      %2867 = vmatprep.mubr.f32.mxu0 0.0
      %2868 = vmatmul.mubr.f32.gmra.mrb[0].mxu0 %v1874
      %v2869 = vpop.f32.mrb[0].mxu0
      %v2870 = vadd.f32 0.0, %v2869
      %v2871 = vpop.f32.mrb[0].mxu0
      %2872 = vmatprep.mubr.f32.mxu0 0.0
      %2873 = vmatmul.mubr.f32.gmra.mrb[0].mxu0 %v1876
      %v2874 = vpop.f32.mrb[0].mxu0
      %v2875 = vadd.f32 0.0, %v2874
      %v2876 = vpop.f32.mrb[0].mxu0
      %2877 = vmatprep.mubr.f32.mxu0 0.0
      %2878 = vmatmul.mubr.f32.gmra.mrb[0].mxu0 %v1878
      %v2879 = vpop.f32.mrb[0].mxu0
      %v2880 = vadd.f32 0.0, %v2879
      %v2881 = vpop.f32.mrb[0].mxu0
      %2882 = vmatprep.mubr.f32.mxu0 0.0
      %2883 = vmatmul.mubr.f32.gmra.mrb[0].mxu0 %v1880
      %v2884 = vpop.f32.mrb[0].mxu0
      %v2885 = vadd.f32 0.0, %v2884
      %v2886 = vpop.f32.mrb[0].mxu0
      %2887 = vmatprep.mubr.f32.mxu0 0.0
      %2888 = vmatmul.mubr.f32.gmra.mrb[0].mxu0 %v1882
      %v2889 = vpop.f32.mrb[0].mxu0
      %v2890 = vadd.f32 0.0, %v2889
      %v2891 = vpop.f32.mrb[0].mxu0
      %2892 = vmatprep.mubr.f32.mxu0 0.0
      %2893 = vmatmul.mubr.f32.gmra.mrb[0].mxu0 %v1884
      %v2894 = vpop.f32.mrb[0].mxu0
      %v2895 = vadd.f32 0.0, %v2894
      %v2896 = vpop.f32.mrb[0].mxu0
      %2897 = vmatprep.mubr.f32.mxu0 0.0
      %2898 = vmatmul.mubr.f32.gmra.mrb[0].mxu0 %v1886
      %v2899 = vpop.f32.mrb[0].mxu0
      %v2900 = vadd.f32 0.0, %v2899
      %v2901 = vpop.f32.mrb[0].mxu0
      %2902 = vmatprep.mubr.f32.mxu0 0.0
      %2903 = vmatmul.mubr.f32.gmra.mrb[0].mxu0 %v1888
      %v2904 = vpop.f32.mrb[0].mxu0
      %v2905 = vadd.f32 0.0, %v2904
      %v2906 = vpop.f32.mrb[0].mxu0
      %2907 = vmatprep.mubr.f32.mxu0 0.0
      %2908 = vmatmul.mubr.f32.gmra.mrb[0].mxu0 %v1890
      %v2909 = vpop.f32.mrb[0].mxu0
      %v2910 = vadd.f32 0.0, %v2909
      %v2911 = vpop.f32.mrb[0].mxu0
      %2912 = vmatprep.mubr.f32.mxu0 0.0
      %2913 = vmatmul.mubr.f32.gmra.mrb[0].mxu0 %v1892
      %v2914 = vpop.f32.mrb[0].mxu0
      %v2915 = vadd.f32 0.0, %v2914
      %v2916 = vpop.f32.mrb[0].mxu0
      %2917 = vmatprep.mubr.f32.mxu0 0.0
      %2918 = vmatmul.mubr.f32.gmra.mrb[0].mxu0 %v2696
      %v2919 = vpop.f32.mrb[0].mxu0
      %v2920 = vadd.f32 0.0, %v2919
      %v2921 = vpop.f32.mrb[0].mxu0
      %2922 = vmatprep.mubr.f32.mxu0 0.0
      %2923 = vmatmul.mubr.f32.gmra.mrb[0].mxu0 %v2698
      %v2924 = vpop.f32.mrb[0].mxu0
      %v2925 = vadd.f32 0.0, %v2924
      %v2926 = vpop.f32.mrb[0].mxu0
      %2927 = vdwg.mxu0
      %v2928 = vadd.f32 %v2658, %v2770
      %v2929 = vadd.f32 %v2659, %v2775
      %v2930 = vadd.f32 %v2660, %v2780
      %v2931 = vadd.f32 %v2661, %v2785
      %v2932 = vadd.f32 %v2662, %v2790
      %v2933 = vadd.f32 %v2663, %v2795
      %v2934 = vadd.f32 %v2664, %v2800
      %v2935 = vadd.f32 %v2665, %v2805
      %v2936 = vadd.f32 %v2666, %v2810
      %v2937 = vadd.f32 %v2667, %v2815
      %v2938 = vadd.f32 %v2668, %v2820
      %v2939 = vadd.f32 %v2669, %v2825
      %v2940 = vadd.f32 %v2670, %v2830
      %v2941 = vadd.f32 %v2671, %v2835
      %v2942 = vadd.f32 %v2672, %v2840
      %v2943 = vadd.f32 %v2673, %v2845
      %v2944 = vadd.f32 %v2674, %v2850
      %v2945 = vadd.f32 %v2675, %v2855
      %v2946 = vadd.f32 %v2676, %v2860
      %v2947 = vadd.f32 %v2677, %v2865
      %v2948 = vadd.f32 %v2678, %v2870
      %v2949 = vadd.f32 %v2679, %v2875
      %v2950 = vadd.f32 %v2680, %v2880
      %v2951 = vadd.f32 %v2681, %v2885
      %v2952 = vadd.f32 %v2682, %v2890
      %v2953 = vadd.f32 %v2683, %v2895
      %v2954 = vadd.f32 %v2684, %v2900
      %v2955 = vadd.f32 %v2685, %v2905
      %v2956 = vadd.f32 %v2686, %v2910
      %v2957 = vadd.f32 %v2687, %v2915
      %v2958 = vadd.f32 %v2688, %v2920
      %v2959 = vadd.f32 %v2689, %v2925
      %v2963 = vrot.slane %v1015, 7
      %v2964 = vrot.slane %v1016, 7
      %v2965 = vsel %vm1067, %v2963, %v2964
      %v2966 = vrot.slane %v1017, 7
      %v2967 = vsel %vm1067, %v2964, %v2966
      %v2968 = vsel %vm375, %v2965, 0
      %v2970 = vsel %vm375, %v2967, 0
      %v2973 = vsel %vm1212, %v352, 0
      %2975 = vmatprep.subr.mxu0 0.0
      %2976 = vmatpush1.msra.mxu0 %v2973
      %2977 = vmatprep.subr.mxu0 0.0
      %2978 = vmatpush1.msra.mxu0 0.0
      %2979 = vmatprep.subr.mxu0 0.0
      %2980 = vmatpush1.msra.mxu0 0.0
      %2981 = vmatprep.subr.mxu0 0.0
      %2982 = vmatpush1.msra.mxu0 0.0
      %2983 = vmatprep.subr.mxu0 0.0
      %2984 = vmatpush1.msra.mxu0 0.0
      %2985 = vmatprep.subr.mxu0 0.0
      %2986 = vmatpush1.msra.mxu0 0.0
      %2987 = vmatprep.subr.mxu0 0.0
      %2988 = vmatpush1.msra.mxu0 0.0
      %2989 = vmatprep.subr.mxu0 0.0
      %2990 = vmatpush1.msra.mxu0 0.0
      %2991 = vmatprep.subr.mxu0 0.0
      %2992 = vmatpush1.msra.mxu0 0.0
      %2993 = vmatprep.subr.mxu0 0.0
      %2994 = vmatpush1.msra.mxu0 0.0
      %2995 = vmatprep.subr.mxu0 0.0
      %2996 = vmatpush1.msra.mxu0 0.0
      %2997 = vmatprep.subr.mxu0 0.0
      %2998 = vmatpush1.msra.mxu0 0.0
      %2999 = vmatprep.subr.mxu0 0.0
      %3000 = vmatpush1.msra.mxu0 0.0
      %3001 = vmatprep.subr.mxu0 0.0
      %3002 = vmatpush1.msra.mxu0 0.0
      %3003 = vmatprep.subr.mxu0 0.0
      %3004 = vmatpush1.msra.mxu0 0.0
      %3005 = vmatprep.subr.mxu0 0.0
      %3006 = vmatpush1.msra.mxu0 0.0
      %3007 = vmatprep.subr.mxu0 0.0
      %3008 = vmatpush1.msra.mxu0 0.0
      %3009 = vmatprep.subr.mxu0 0.0
      %3010 = vmatpush1.msra.mxu0 0.0
      %3011 = vmatprep.subr.mxu0 0.0
      %3012 = vmatpush1.msra.mxu0 0.0
      %3013 = vmatprep.subr.mxu0 0.0
      %3014 = vmatpush1.msra.mxu0 0.0
      %3015 = vmatprep.subr.mxu0 0.0
      %3016 = vmatpush1.msra.mxu0 0.0
      %3017 = vmatprep.subr.mxu0 0.0
      %3018 = vmatpush1.msra.mxu0 0.0
      %3019 = vmatprep.subr.mxu0 0.0
      %3020 = vmatpush1.msra.mxu0 0.0
      %3021 = vmatprep.subr.mxu0 0.0
      %3022 = vmatpush1.msra.mxu0 0.0
      %3023 = vmatprep.subr.mxu0 0.0
      %3024 = vmatpush1.msra.mxu0 0.0
      %3025 = vmatprep.subr.mxu0 0.0
      %3026 = vmatpush1.msra.mxu0 0.0
      %3027 = vmatprep.subr.mxu0 0.0
      %3028 = vmatpush1.msra.mxu0 0.0
      %3029 = vmatprep.subr.mxu0 0.0
      %3030 = vmatpush1.msra.mxu0 0.0
      %3031 = vmatprep.subr.mxu0 0.0
      %3032 = vmatpush1.msra.mxu0 0.0
      %3033 = vmatprep.subr.mxu0 0.0
      %3034 = vmatpush1.msra.mxu0 0.0
      %3035 = vmatprep.subr.mxu0 0.0
      %3036 = vmatpush1.msra.mxu0 0.0
      %3037 = vmatprep.subr.mxu0 0.0
      %3038 = vmatpush1.msra.mxu0 0.0
      %3039 = vmatprep.mubr.f32.mxu0 0.0
      %3040 = vmatmul.mubr.f32.gmra.mrb[0].mxu0 %v1449
      %v3041 = vpop.f32.mrb[0].mxu0
      %v3042 = vadd.f32 0.0, %v3041
      %v3043 = vpop.f32.mrb[0].mxu0
      %3044 = vmatprep.mubr.f32.mxu0 0.0
      %3045 = vmatmul.mubr.f32.gmra.mrb[0].mxu0 %v1451
      %v3046 = vpop.f32.mrb[0].mxu0
      %v3047 = vadd.f32 0.0, %v3046
      %v3048 = vpop.f32.mrb[0].mxu0
      %3049 = vmatprep.mubr.f32.mxu0 0.0
      %3050 = vmatmul.mubr.f32.gmra.mrb[0].mxu0 %v1453
      %v3051 = vpop.f32.mrb[0].mxu0
      %v3052 = vadd.f32 0.0, %v3051
      %v3053 = vpop.f32.mrb[0].mxu0
      %3054 = vmatprep.mubr.f32.mxu0 0.0
      %3055 = vmatmul.mubr.f32.gmra.mrb[0].mxu0 %v1455
      %v3056 = vpop.f32.mrb[0].mxu0
      %v3057 = vadd.f32 0.0, %v3056
      %v3058 = vpop.f32.mrb[0].mxu0
      %3059 = vmatprep.mubr.f32.mxu0 0.0
      %3060 = vmatmul.mubr.f32.gmra.mrb[0].mxu0 %v1457
      %v3061 = vpop.f32.mrb[0].mxu0
      %v3062 = vadd.f32 0.0, %v3061
      %v3063 = vpop.f32.mrb[0].mxu0
      %3064 = vmatprep.mubr.f32.mxu0 0.0
      %3065 = vmatmul.mubr.f32.gmra.mrb[0].mxu0 %v1459
      %v3066 = vpop.f32.mrb[0].mxu0
      %v3067 = vadd.f32 0.0, %v3066
      %v3068 = vpop.f32.mrb[0].mxu0
      %3069 = vmatprep.mubr.f32.mxu0 0.0
      %3070 = vmatmul.mubr.f32.gmra.mrb[0].mxu0 %v1461
      %v3071 = vpop.f32.mrb[0].mxu0
      %v3072 = vadd.f32 0.0, %v3071
      %v3073 = vpop.f32.mrb[0].mxu0
      %3074 = vmatprep.mubr.f32.mxu0 0.0
      %3075 = vmatmul.mubr.f32.gmra.mrb[0].mxu0 %v1463
      %v3076 = vpop.f32.mrb[0].mxu0
      %v3077 = vadd.f32 0.0, %v3076
      %v3078 = vpop.f32.mrb[0].mxu0
      %3079 = vmatprep.mubr.f32.mxu0 0.0
      %3080 = vmatmul.mubr.f32.gmra.mrb[0].mxu0 %v1465
      %v3081 = vpop.f32.mrb[0].mxu0
      %v3082 = vadd.f32 0.0, %v3081
      %v3083 = vpop.f32.mrb[0].mxu0
      %3084 = vmatprep.mubr.f32.mxu0 0.0
      %3085 = vmatmul.mubr.f32.gmra.mrb[0].mxu0 %v1467
      %v3086 = vpop.f32.mrb[0].mxu0
      %v3087 = vadd.f32 0.0, %v3086
      %v3088 = vpop.f32.mrb[0].mxu0
      %3089 = vmatprep.mubr.f32.mxu0 0.0
      %3090 = vmatmul.mubr.f32.gmra.mrb[0].mxu0 %v1469
      %v3091 = vpop.f32.mrb[0].mxu0
      %v3092 = vadd.f32 0.0, %v3091
      %v3093 = vpop.f32.mrb[0].mxu0
      %3094 = vmatprep.mubr.f32.mxu0 0.0
      %3095 = vmatmul.mubr.f32.gmra.mrb[0].mxu0 %v1471
      %v3096 = vpop.f32.mrb[0].mxu0
      %v3097 = vadd.f32 0.0, %v3096
      %v3098 = vpop.f32.mrb[0].mxu0
      %3099 = vmatprep.mubr.f32.mxu0 0.0
      %3100 = vmatmul.mubr.f32.gmra.mrb[0].mxu0 %v1473
      %v3101 = vpop.f32.mrb[0].mxu0
      %v3102 = vadd.f32 0.0, %v3101
      %v3103 = vpop.f32.mrb[0].mxu0
      %3104 = vmatprep.mubr.f32.mxu0 0.0
      %3105 = vmatmul.mubr.f32.gmra.mrb[0].mxu0 %v1475
      %v3106 = vpop.f32.mrb[0].mxu0
      %v3107 = vadd.f32 0.0, %v3106
      %v3108 = vpop.f32.mrb[0].mxu0
      %3109 = vmatprep.mubr.f32.mxu0 0.0
      %3110 = vmatmul.mubr.f32.gmra.mrb[0].mxu0 %v1477
      %v3111 = vpop.f32.mrb[0].mxu0
      %v3112 = vadd.f32 0.0, %v3111
      %v3113 = vpop.f32.mrb[0].mxu0
      %3114 = vmatprep.mubr.f32.mxu0 0.0
      %3115 = vmatmul.mubr.f32.gmra.mrb[0].mxu0 %v1479
      %v3116 = vpop.f32.mrb[0].mxu0
      %v3117 = vadd.f32 0.0, %v3116
      %v3118 = vpop.f32.mrb[0].mxu0
      %3119 = vmatprep.mubr.f32.mxu0 0.0
      %3120 = vmatmul.mubr.f32.gmra.mrb[0].mxu0 %v1481
      %v3121 = vpop.f32.mrb[0].mxu0
      %v3122 = vadd.f32 0.0, %v3121
      %v3123 = vpop.f32.mrb[0].mxu0
      %3124 = vmatprep.mubr.f32.mxu0 0.0
      %3125 = vmatmul.mubr.f32.gmra.mrb[0].mxu0 %v1483
      %v3126 = vpop.f32.mrb[0].mxu0
      %v3127 = vadd.f32 0.0, %v3126
      %v3128 = vpop.f32.mrb[0].mxu0
      %3129 = vmatprep.mubr.f32.mxu0 0.0
      %3130 = vmatmul.mubr.f32.gmra.mrb[0].mxu0 %v1485
      %v3131 = vpop.f32.mrb[0].mxu0
      %v3132 = vadd.f32 0.0, %v3131
      %v3133 = vpop.f32.mrb[0].mxu0
      %3134 = vmatprep.mubr.f32.mxu0 0.0
      %3135 = vmatmul.mubr.f32.gmra.mrb[0].mxu0 %v1487
      %v3136 = vpop.f32.mrb[0].mxu0
      %v3137 = vadd.f32 0.0, %v3136
      %v3138 = vpop.f32.mrb[0].mxu0
      %3139 = vmatprep.mubr.f32.mxu0 0.0
      %3140 = vmatmul.mubr.f32.gmra.mrb[0].mxu0 %v1489
      %v3141 = vpop.f32.mrb[0].mxu0
      %v3142 = vadd.f32 0.0, %v3141
      %v3143 = vpop.f32.mrb[0].mxu0
      %3144 = vmatprep.mubr.f32.mxu0 0.0
      %3145 = vmatmul.mubr.f32.gmra.mrb[0].mxu0 %v1491
      %v3146 = vpop.f32.mrb[0].mxu0
      %v3147 = vadd.f32 0.0, %v3146
      %v3148 = vpop.f32.mrb[0].mxu0
      %3149 = vmatprep.mubr.f32.mxu0 0.0
      %3150 = vmatmul.mubr.f32.gmra.mrb[0].mxu0 %v1493
      %v3151 = vpop.f32.mrb[0].mxu0
      %v3152 = vadd.f32 0.0, %v3151
      %v3153 = vpop.f32.mrb[0].mxu0
      %3154 = vmatprep.mubr.f32.mxu0 0.0
      %3155 = vmatmul.mubr.f32.gmra.mrb[0].mxu0 %v1495
      %v3156 = vpop.f32.mrb[0].mxu0
      %v3157 = vadd.f32 0.0, %v3156
      %v3158 = vpop.f32.mrb[0].mxu0
      %3159 = vmatprep.mubr.f32.mxu0 0.0
      %3160 = vmatmul.mubr.f32.gmra.mrb[0].mxu0 %v1497
      %v3161 = vpop.f32.mrb[0].mxu0
      %v3162 = vadd.f32 0.0, %v3161
      %v3163 = vpop.f32.mrb[0].mxu0
      %3164 = vmatprep.mubr.f32.mxu0 0.0
      %3165 = vmatmul.mubr.f32.gmra.mrb[0].mxu0 %v1499
      %v3166 = vpop.f32.mrb[0].mxu0
      %v3167 = vadd.f32 0.0, %v3166
      %v3168 = vpop.f32.mrb[0].mxu0
      %3169 = vmatprep.mubr.f32.mxu0 0.0
      %3170 = vmatmul.mubr.f32.gmra.mrb[0].mxu0 %v1501
      %v3171 = vpop.f32.mrb[0].mxu0
      %v3172 = vadd.f32 0.0, %v3171
      %v3173 = vpop.f32.mrb[0].mxu0
      %3174 = vmatprep.mubr.f32.mxu0 0.0
      %3175 = vmatmul.mubr.f32.gmra.mrb[0].mxu0 %v1503
      %v3176 = vpop.f32.mrb[0].mxu0
      %v3177 = vadd.f32 0.0, %v3176
      %v3178 = vpop.f32.mrb[0].mxu0
      %3179 = vmatprep.mubr.f32.mxu0 0.0
      %3180 = vmatmul.mubr.f32.gmra.mrb[0].mxu0 %v2162
      %v3181 = vpop.f32.mrb[0].mxu0
      %v3182 = vadd.f32 0.0, %v3181
      %v3183 = vpop.f32.mrb[0].mxu0
      %3184 = vmatprep.mubr.f32.mxu0 0.0
      %3185 = vmatmul.mubr.f32.gmra.mrb[0].mxu0 %v2164
      %v3186 = vpop.f32.mrb[0].mxu0
      %v3187 = vadd.f32 0.0, %v3186
      %v3188 = vpop.f32.mrb[0].mxu0
      %3189 = vmatprep.mubr.f32.mxu0 0.0
      %3190 = vmatmul.mubr.f32.gmra.mrb[0].mxu0 %v2968
      %v3191 = vpop.f32.mrb[0].mxu0
      %v3192 = vadd.f32 0.0, %v3191
      %v3193 = vpop.f32.mrb[0].mxu0
      %3194 = vmatprep.mubr.f32.mxu0 0.0
      %3195 = vmatmul.mubr.f32.gmra.mrb[0].mxu0 %v2970
      %v3196 = vpop.f32.mrb[0].mxu0
      %v3197 = vadd.f32 0.0, %v3196
      %v3198 = vpop.f32.mrb[0].mxu0
      %3199 = vdwg.mxu0
      %v3200 = vadd.f32 %v2928, %v3042
      %v3201 = vadd.f32 %v2929, %v3047
      %v3202 = vadd.f32 %v2930, %v3052
      %v3203 = vadd.f32 %v2931, %v3057
      %v3204 = vadd.f32 %v2932, %v3062
      %v3205 = vadd.f32 %v2933, %v3067
      %v3206 = vadd.f32 %v2934, %v3072
      %v3207 = vadd.f32 %v2935, %v3077
      %v3208 = vadd.f32 %v2936, %v3082
      %v3209 = vadd.f32 %v2937, %v3087
      %v3210 = vadd.f32 %v2938, %v3092
      %v3211 = vadd.f32 %v2939, %v3097
      %v3212 = vadd.f32 %v2940, %v3102
      %v3213 = vadd.f32 %v2941, %v3107
      %v3214 = vadd.f32 %v2942, %v3112
      %v3215 = vadd.f32 %v2943, %v3117
      %v3216 = vadd.f32 %v2944, %v3122
      %v3217 = vadd.f32 %v2945, %v3127
      %v3218 = vadd.f32 %v2946, %v3132
      %v3219 = vadd.f32 %v2947, %v3137
      %v3220 = vadd.f32 %v2948, %v3142
      %v3221 = vadd.f32 %v2949, %v3147
      %v3222 = vadd.f32 %v2950, %v3152
      %v3223 = vadd.f32 %v2951, %v3157
      %v3224 = vadd.f32 %v2952, %v3162
      %v3225 = vadd.f32 %v2953, %v3167
      %v3226 = vadd.f32 %v2954, %v3172
      %v3227 = vadd.f32 %v2955, %v3177
      %v3228 = vadd.f32 %v2956, %v3182
      %v3229 = vadd.f32 %v2957, %v3187
      %v3230 = vadd.f32 %v2958, %v3192
      %v3231 = vadd.f32 %v2959, %v3197
      %v3232 = vsel %vm375, %v1016, 0
      %v3234 = vsel %vm375, %v1017, 0
      %v3237 = vsel %vm1212, %v353, 0
      %3239 = vmatprep.subr.mxu0 0.0
      %3240 = vmatpush1.msra.mxu0 %v3237
      %3241 = vmatprep.subr.mxu0 0.0
      %3242 = vmatpush1.msra.mxu0 0.0
      %3243 = vmatprep.subr.mxu0 0.0
      %3244 = vmatpush1.msra.mxu0 0.0
      %3245 = vmatprep.subr.mxu0 0.0
      %3246 = vmatpush1.msra.mxu0 0.0
      %3247 = vmatprep.subr.mxu0 0.0
      %3248 = vmatpush1.msra.mxu0 0.0
      %3249 = vmatprep.subr.mxu0 0.0
      %3250 = vmatpush1.msra.mxu0 0.0
      %3251 = vmatprep.subr.mxu0 0.0
      %3252 = vmatpush1.msra.mxu0 0.0
      %3253 = vmatprep.subr.mxu0 0.0
      %3254 = vmatpush1.msra.mxu0 0.0
      %3255 = vmatprep.subr.mxu0 0.0
      %3256 = vmatpush1.msra.mxu0 0.0
      %3257 = vmatprep.subr.mxu0 0.0
      %3258 = vmatpush1.msra.mxu0 0.0
      %3259 = vmatprep.subr.mxu0 0.0
      %3260 = vmatpush1.msra.mxu0 0.0
      %3261 = vmatprep.subr.mxu0 0.0
      %3262 = vmatpush1.msra.mxu0 0.0
      %3263 = vmatprep.subr.mxu0 0.0
      %3264 = vmatpush1.msra.mxu0 0.0
      %3265 = vmatprep.subr.mxu0 0.0
      %3266 = vmatpush1.msra.mxu0 0.0
      %3267 = vmatprep.subr.mxu0 0.0
      %3268 = vmatpush1.msra.mxu0 0.0
      %3269 = vmatprep.subr.mxu0 0.0
      %3270 = vmatpush1.msra.mxu0 0.0
      %3271 = vmatprep.subr.mxu0 0.0
      %3272 = vmatpush1.msra.mxu0 0.0
      %3273 = vmatprep.subr.mxu0 0.0
      %3274 = vmatpush1.msra.mxu0 0.0
      %3275 = vmatprep.subr.mxu0 0.0
      %3276 = vmatpush1.msra.mxu0 0.0
      %3277 = vmatprep.subr.mxu0 0.0
      %3278 = vmatpush1.msra.mxu0 0.0
      %3279 = vmatprep.subr.mxu0 0.0
      %3280 = vmatpush1.msra.mxu0 0.0
      %3281 = vmatprep.subr.mxu0 0.0
      %3282 = vmatpush1.msra.mxu0 0.0
      %3283 = vmatprep.subr.mxu0 0.0
      %3284 = vmatpush1.msra.mxu0 0.0
      %3285 = vmatprep.subr.mxu0 0.0
      %3286 = vmatpush1.msra.mxu0 0.0
      %3287 = vmatprep.subr.mxu0 0.0
      %3288 = vmatpush1.msra.mxu0 0.0
      %3289 = vmatprep.subr.mxu0 0.0
      %3290 = vmatpush1.msra.mxu0 0.0
      %3291 = vmatprep.subr.mxu0 0.0
      %3292 = vmatpush1.msra.mxu0 0.0
      %3293 = vmatprep.subr.mxu0 0.0
      %3294 = vmatpush1.msra.mxu0 0.0
      %3295 = vmatprep.subr.mxu0 0.0
      %3296 = vmatpush1.msra.mxu0 0.0
      %3297 = vmatprep.subr.mxu0 0.0
      %3298 = vmatpush1.msra.mxu0 0.0
      %3299 = vmatprep.subr.mxu0 0.0
      %3300 = vmatpush1.msra.mxu0 0.0
      %3301 = vmatprep.subr.mxu0 0.0
      %3302 = vmatpush1.msra.mxu0 0.0
      %3303 = vmatprep.mubr.f32.mxu0 0.0
      %3304 = vmatmul.mubr.f32.gmra.mrb[0].mxu0 %v1156
      %v3305 = vpop.f32.mrb[0].mxu0
      %v3306 = vadd.f32 0.0, %v3305
      %v3307 = vpop.f32.mrb[0].mxu0
      %3308 = vmatprep.mubr.f32.mxu0 0.0
      %3309 = vmatmul.mubr.f32.gmra.mrb[0].mxu0 %v1158
      %v3310 = vpop.f32.mrb[0].mxu0
      %v3311 = vadd.f32 0.0, %v3310
      %v3312 = vpop.f32.mrb[0].mxu0
      %3313 = vmatprep.mubr.f32.mxu0 0.0
      %3314 = vmatmul.mubr.f32.gmra.mrb[0].mxu0 %v1160
      %v3315 = vpop.f32.mrb[0].mxu0
      %v3316 = vadd.f32 0.0, %v3315
      %v3317 = vpop.f32.mrb[0].mxu0
      %3318 = vmatprep.mubr.f32.mxu0 0.0
      %3319 = vmatmul.mubr.f32.gmra.mrb[0].mxu0 %v1162
      %v3320 = vpop.f32.mrb[0].mxu0
      %v3321 = vadd.f32 0.0, %v3320
      %v3322 = vpop.f32.mrb[0].mxu0
      %3323 = vmatprep.mubr.f32.mxu0 0.0
      %3324 = vmatmul.mubr.f32.gmra.mrb[0].mxu0 %v1164
      %v3325 = vpop.f32.mrb[0].mxu0
      %v3326 = vadd.f32 0.0, %v3325
      %v3327 = vpop.f32.mrb[0].mxu0
      %3328 = vmatprep.mubr.f32.mxu0 0.0
      %3329 = vmatmul.mubr.f32.gmra.mrb[0].mxu0 %v1166
      %v3330 = vpop.f32.mrb[0].mxu0
      %v3331 = vadd.f32 0.0, %v3330
      %v3332 = vpop.f32.mrb[0].mxu0
      %3333 = vmatprep.mubr.f32.mxu0 0.0
      %3334 = vmatmul.mubr.f32.gmra.mrb[0].mxu0 %v1168
      %v3335 = vpop.f32.mrb[0].mxu0
      %v3336 = vadd.f32 0.0, %v3335
      %v3337 = vpop.f32.mrb[0].mxu0
      %3338 = vmatprep.mubr.f32.mxu0 0.0
      %3339 = vmatmul.mubr.f32.gmra.mrb[0].mxu0 %v1170
      %v3340 = vpop.f32.mrb[0].mxu0
      %v3341 = vadd.f32 0.0, %v3340
      %v3342 = vpop.f32.mrb[0].mxu0
      %3343 = vmatprep.mubr.f32.mxu0 0.0
      %3344 = vmatmul.mubr.f32.gmra.mrb[0].mxu0 %v1172
      %v3345 = vpop.f32.mrb[0].mxu0
      %v3346 = vadd.f32 0.0, %v3345
      %v3347 = vpop.f32.mrb[0].mxu0
      %3348 = vmatprep.mubr.f32.mxu0 0.0
      %3349 = vmatmul.mubr.f32.gmra.mrb[0].mxu0 %v1174
      %v3350 = vpop.f32.mrb[0].mxu0
      %v3351 = vadd.f32 0.0, %v3350
      %v3352 = vpop.f32.mrb[0].mxu0
      %3353 = vmatprep.mubr.f32.mxu0 0.0
      %3354 = vmatmul.mubr.f32.gmra.mrb[0].mxu0 %v1176
      %v3355 = vpop.f32.mrb[0].mxu0
      %v3356 = vadd.f32 0.0, %v3355
      %v3357 = vpop.f32.mrb[0].mxu0
      %3358 = vmatprep.mubr.f32.mxu0 0.0
      %3359 = vmatmul.mubr.f32.gmra.mrb[0].mxu0 %v1178
      %v3360 = vpop.f32.mrb[0].mxu0
      %v3361 = vadd.f32 0.0, %v3360
      %v3362 = vpop.f32.mrb[0].mxu0
      %3363 = vmatprep.mubr.f32.mxu0 0.0
      %3364 = vmatmul.mubr.f32.gmra.mrb[0].mxu0 %v1180
      %v3365 = vpop.f32.mrb[0].mxu0
      %v3366 = vadd.f32 0.0, %v3365
      %v3367 = vpop.f32.mrb[0].mxu0
      %3368 = vmatprep.mubr.f32.mxu0 0.0
      %3369 = vmatmul.mubr.f32.gmra.mrb[0].mxu0 %v1182
      %v3370 = vpop.f32.mrb[0].mxu0
      %v3371 = vadd.f32 0.0, %v3370
      %v3372 = vpop.f32.mrb[0].mxu0
      %3373 = vmatprep.mubr.f32.mxu0 0.0
      %3374 = vmatmul.mubr.f32.gmra.mrb[0].mxu0 %v1184
      %v3375 = vpop.f32.mrb[0].mxu0
      %v3376 = vadd.f32 0.0, %v3375
      %v3377 = vpop.f32.mrb[0].mxu0
      %3378 = vmatprep.mubr.f32.mxu0 0.0
      %3379 = vmatmul.mubr.f32.gmra.mrb[0].mxu0 %v1186
      %v3380 = vpop.f32.mrb[0].mxu0
      %v3381 = vadd.f32 0.0, %v3380
      %v3382 = vpop.f32.mrb[0].mxu0
      %3383 = vmatprep.mubr.f32.mxu0 0.0
      %3384 = vmatmul.mubr.f32.gmra.mrb[0].mxu0 %v1188
      %v3385 = vpop.f32.mrb[0].mxu0
      %v3386 = vadd.f32 0.0, %v3385
      %v3387 = vpop.f32.mrb[0].mxu0
      %3388 = vmatprep.mubr.f32.mxu0 0.0
      %3389 = vmatmul.mubr.f32.gmra.mrb[0].mxu0 %v1190
      %v3390 = vpop.f32.mrb[0].mxu0
      %v3391 = vadd.f32 0.0, %v3390
      %v3392 = vpop.f32.mrb[0].mxu0
      %3393 = vmatprep.mubr.f32.mxu0 0.0
      %3394 = vmatmul.mubr.f32.gmra.mrb[0].mxu0 %v1192
      %v3395 = vpop.f32.mrb[0].mxu0
      %v3396 = vadd.f32 0.0, %v3395
      %v3397 = vpop.f32.mrb[0].mxu0
      %3398 = vmatprep.mubr.f32.mxu0 0.0
      %3399 = vmatmul.mubr.f32.gmra.mrb[0].mxu0 %v1194
      %v3400 = vpop.f32.mrb[0].mxu0
      %v3401 = vadd.f32 0.0, %v3400
      %v3402 = vpop.f32.mrb[0].mxu0
      %3403 = vmatprep.mubr.f32.mxu0 0.0
      %3404 = vmatmul.mubr.f32.gmra.mrb[0].mxu0 %v1196
      %v3405 = vpop.f32.mrb[0].mxu0
      %v3406 = vadd.f32 0.0, %v3405
      %v3407 = vpop.f32.mrb[0].mxu0
      %3408 = vmatprep.mubr.f32.mxu0 0.0
      %3409 = vmatmul.mubr.f32.gmra.mrb[0].mxu0 %v1198
      %v3410 = vpop.f32.mrb[0].mxu0
      %v3411 = vadd.f32 0.0, %v3410
      %v3412 = vpop.f32.mrb[0].mxu0
      %3413 = vmatprep.mubr.f32.mxu0 0.0
      %3414 = vmatmul.mubr.f32.gmra.mrb[0].mxu0 %v1200
      %v3415 = vpop.f32.mrb[0].mxu0
      %v3416 = vadd.f32 0.0, %v3415
      %v3417 = vpop.f32.mrb[0].mxu0
      %3418 = vmatprep.mubr.f32.mxu0 0.0
      %3419 = vmatmul.mubr.f32.gmra.mrb[0].mxu0 %v1202
      %v3420 = vpop.f32.mrb[0].mxu0
      %v3421 = vadd.f32 0.0, %v3420
      %v3422 = vpop.f32.mrb[0].mxu0
      %3423 = vmatprep.mubr.f32.mxu0 0.0
      %3424 = vmatmul.mubr.f32.gmra.mrb[0].mxu0 %v1204
      %v3425 = vpop.f32.mrb[0].mxu0
      %v3426 = vadd.f32 0.0, %v3425
      %v3427 = vpop.f32.mrb[0].mxu0
      %3428 = vmatprep.mubr.f32.mxu0 0.0
      %3429 = vmatmul.mubr.f32.gmra.mrb[0].mxu0 %v1206
      %v3430 = vpop.f32.mrb[0].mxu0
      %v3431 = vadd.f32 0.0, %v3430
      %v3432 = vpop.f32.mrb[0].mxu0
      %3433 = vmatprep.mubr.f32.mxu0 0.0
      %3434 = vmatmul.mubr.f32.gmra.mrb[0].mxu0 %v1208
      %v3435 = vpop.f32.mrb[0].mxu0
      %v3436 = vadd.f32 0.0, %v3435
      %v3437 = vpop.f32.mrb[0].mxu0
      %3438 = vmatprep.mubr.f32.mxu0 0.0
      %3439 = vmatmul.mubr.f32.gmra.mrb[0].mxu0 %v1210
      %v3440 = vpop.f32.mrb[0].mxu0
      %v3441 = vadd.f32 0.0, %v3440
      %v3442 = vpop.f32.mrb[0].mxu0
      %3443 = vmatprep.mubr.f32.mxu0 0.0
      %3444 = vmatmul.mubr.f32.gmra.mrb[0].mxu0 %v2426
      %v3445 = vpop.f32.mrb[0].mxu0
      %v3446 = vadd.f32 0.0, %v3445
      %v3447 = vpop.f32.mrb[0].mxu0
      %3448 = vmatprep.mubr.f32.mxu0 0.0
      %3449 = vmatmul.mubr.f32.gmra.mrb[0].mxu0 %v2428
      %v3450 = vpop.f32.mrb[0].mxu0
      %v3451 = vadd.f32 0.0, %v3450
      %v3452 = vpop.f32.mrb[0].mxu0
      %3453 = vmatprep.mubr.f32.mxu0 0.0
      %3454 = vmatmul.mubr.f32.gmra.mrb[0].mxu0 %v3232
      %v3455 = vpop.f32.mrb[0].mxu0
      %v3456 = vadd.f32 0.0, %v3455
      %v3457 = vpop.f32.mrb[0].mxu0
      %3458 = vmatprep.mubr.f32.mxu0 0.0
      %3459 = vmatmul.mubr.f32.gmra.mrb[0].mxu0 %v3234
      %v3460 = vpop.f32.mrb[0].mxu0
      %v3461 = vadd.f32 0.0, %v3460
      %v3462 = vpop.f32.mrb[0].mxu0
      %3463 = vdwg.mxu0
      %v3464 = vadd.f32 %v3200, %v3306
      %v3465 = vadd.f32 %v3201, %v3311
      %v3466 = vadd.f32 %v3202, %v3316
      %v3467 = vadd.f32 %v3203, %v3321
      %v3468 = vadd.f32 %v3204, %v3326
      %v3469 = vadd.f32 %v3205, %v3331
      %v3470 = vadd.f32 %v3206, %v3336
      %v3471 = vadd.f32 %v3207, %v3341
      %v3472 = vadd.f32 %v3208, %v3346
      %v3473 = vadd.f32 %v3209, %v3351
      %v3474 = vadd.f32 %v3210, %v3356
      %v3475 = vadd.f32 %v3211, %v3361
      %v3476 = vadd.f32 %v3212, %v3366
      %v3477 = vadd.f32 %v3213, %v3371
      %v3478 = vadd.f32 %v3214, %v3376
      %v3479 = vadd.f32 %v3215, %v3381
      %v3480 = vadd.f32 %v3216, %v3386
      %v3481 = vadd.f32 %v3217, %v3391
      %v3482 = vadd.f32 %v3218, %v3396
      %v3483 = vadd.f32 %v3219, %v3401
      %v3484 = vadd.f32 %v3220, %v3406
      %v3485 = vadd.f32 %v3221, %v3411
      %v3486 = vadd.f32 %v3222, %v3416
      %v3487 = vadd.f32 %v3223, %v3421
      %v3488 = vadd.f32 %v3224, %v3426
      %v3489 = vadd.f32 %v3225, %v3431
      %v3490 = vadd.f32 %v3226, %v3436
      %v3491 = vadd.f32 %v3227, %v3441
      %v3492 = vadd.f32 %v3228, %v3446
      %v3493 = vadd.f32 %v3229, %v3451
      %v3494 = vadd.f32 %v3230, %v3456
      %v3495 = vadd.f32 %v3231, %v3461
      %v3497 = vrot.slane %v1016, 1
      %v3498 = vrot.slane %v1017, 1
      %v3499 = vsel %vm1749, %v3497, %v3498
      %v3500 = vrot.slane %v1018, 1
      %v3501 = vsel %vm1749, %v3498, %v3500
      %v3502 = vsel %vm375, %v3499, 0
      %v3504 = vsel %vm375, %v3501, 0
      %v3507 = vsel %vm1212, %v354, 0
      %3509 = vmatprep.subr.mxu0 0.0
      %3510 = vmatpush1.msra.mxu0 %v3507
      %3511 = vmatprep.subr.mxu0 0.0
      %3512 = vmatpush1.msra.mxu0 0.0
      %3513 = vmatprep.subr.mxu0 0.0
      %3514 = vmatpush1.msra.mxu0 0.0
      %3515 = vmatprep.subr.mxu0 0.0
      %3516 = vmatpush1.msra.mxu0 0.0
      %3517 = vmatprep.subr.mxu0 0.0
      %3518 = vmatpush1.msra.mxu0 0.0
      %3519 = vmatprep.subr.mxu0 0.0
      %3520 = vmatpush1.msra.mxu0 0.0
      %3521 = vmatprep.subr.mxu0 0.0
      %3522 = vmatpush1.msra.mxu0 0.0
      %3523 = vmatprep.subr.mxu0 0.0
      %3524 = vmatpush1.msra.mxu0 0.0
      %3525 = vmatprep.subr.mxu0 0.0
      %3526 = vmatpush1.msra.mxu0 0.0
      %3527 = vmatprep.subr.mxu0 0.0
      %3528 = vmatpush1.msra.mxu0 0.0
      %3529 = vmatprep.subr.mxu0 0.0
      %3530 = vmatpush1.msra.mxu0 0.0
      %3531 = vmatprep.subr.mxu0 0.0
      %3532 = vmatpush1.msra.mxu0 0.0
      %3533 = vmatprep.subr.mxu0 0.0
      %3534 = vmatpush1.msra.mxu0 0.0
      %3535 = vmatprep.subr.mxu0 0.0
      %3536 = vmatpush1.msra.mxu0 0.0
      %3537 = vmatprep.subr.mxu0 0.0
      %3538 = vmatpush1.msra.mxu0 0.0
      %3539 = vmatprep.subr.mxu0 0.0
      %3540 = vmatpush1.msra.mxu0 0.0
      %3541 = vmatprep.subr.mxu0 0.0
      %3542 = vmatpush1.msra.mxu0 0.0
      %3543 = vmatprep.subr.mxu0 0.0
      %3544 = vmatpush1.msra.mxu0 0.0
      %3545 = vmatprep.subr.mxu0 0.0
      %3546 = vmatpush1.msra.mxu0 0.0
      %3547 = vmatprep.subr.mxu0 0.0
      %3548 = vmatpush1.msra.mxu0 0.0
      %3549 = vmatprep.subr.mxu0 0.0
      %3550 = vmatpush1.msra.mxu0 0.0
      %3551 = vmatprep.subr.mxu0 0.0
      %3552 = vmatpush1.msra.mxu0 0.0
      %3553 = vmatprep.subr.mxu0 0.0
      %3554 = vmatpush1.msra.mxu0 0.0
      %3555 = vmatprep.subr.mxu0 0.0
      %3556 = vmatpush1.msra.mxu0 0.0
      %3557 = vmatprep.subr.mxu0 0.0
      %3558 = vmatpush1.msra.mxu0 0.0
      %3559 = vmatprep.subr.mxu0 0.0
      %3560 = vmatpush1.msra.mxu0 0.0
      %3561 = vmatprep.subr.mxu0 0.0
      %3562 = vmatpush1.msra.mxu0 0.0
      %3563 = vmatprep.subr.mxu0 0.0
      %3564 = vmatpush1.msra.mxu0 0.0
      %3565 = vmatprep.subr.mxu0 0.0
      %3566 = vmatpush1.msra.mxu0 0.0
      %3567 = vmatprep.subr.mxu0 0.0
      %3568 = vmatpush1.msra.mxu0 0.0
      %3569 = vmatprep.subr.mxu0 0.0
      %3570 = vmatpush1.msra.mxu0 0.0
      %3571 = vmatprep.subr.mxu0 0.0
      %3572 = vmatpush1.msra.mxu0 0.0
      %3573 = vmatprep.mubr.f32.mxu0 0.0
      %3574 = vmatmul.mubr.f32.gmra.mrb[0].mxu0 %v1838
      %v3575 = vpop.f32.mrb[0].mxu0
      %v3576 = vadd.f32 0.0, %v3575
      %v3577 = vpop.f32.mrb[0].mxu0
      %3578 = vmatprep.mubr.f32.mxu0 0.0
      %3579 = vmatmul.mubr.f32.gmra.mrb[0].mxu0 %v1840
      %v3580 = vpop.f32.mrb[0].mxu0
      %v3581 = vadd.f32 0.0, %v3580
      %v3582 = vpop.f32.mrb[0].mxu0
      %3583 = vmatprep.mubr.f32.mxu0 0.0
      %3584 = vmatmul.mubr.f32.gmra.mrb[0].mxu0 %v1842
      %v3585 = vpop.f32.mrb[0].mxu0
      %v3586 = vadd.f32 0.0, %v3585
      %v3587 = vpop.f32.mrb[0].mxu0
      %3588 = vmatprep.mubr.f32.mxu0 0.0
      %3589 = vmatmul.mubr.f32.gmra.mrb[0].mxu0 %v1844
      %v3590 = vpop.f32.mrb[0].mxu0
      %v3591 = vadd.f32 0.0, %v3590
      %v3592 = vpop.f32.mrb[0].mxu0
      %3593 = vmatprep.mubr.f32.mxu0 0.0
      %3594 = vmatmul.mubr.f32.gmra.mrb[0].mxu0 %v1846
      %v3595 = vpop.f32.mrb[0].mxu0
      %v3596 = vadd.f32 0.0, %v3595
      %v3597 = vpop.f32.mrb[0].mxu0
      %3598 = vmatprep.mubr.f32.mxu0 0.0
      %3599 = vmatmul.mubr.f32.gmra.mrb[0].mxu0 %v1848
      %v3600 = vpop.f32.mrb[0].mxu0
      %v3601 = vadd.f32 0.0, %v3600
      %v3602 = vpop.f32.mrb[0].mxu0
      %3603 = vmatprep.mubr.f32.mxu0 0.0
      %3604 = vmatmul.mubr.f32.gmra.mrb[0].mxu0 %v1850
      %v3605 = vpop.f32.mrb[0].mxu0
      %v3606 = vadd.f32 0.0, %v3605
      %v3607 = vpop.f32.mrb[0].mxu0
      %3608 = vmatprep.mubr.f32.mxu0 0.0
      %3609 = vmatmul.mubr.f32.gmra.mrb[0].mxu0 %v1852
      %v3610 = vpop.f32.mrb[0].mxu0
      %v3611 = vadd.f32 0.0, %v3610
      %v3612 = vpop.f32.mrb[0].mxu0
      %3613 = vmatprep.mubr.f32.mxu0 0.0
      %3614 = vmatmul.mubr.f32.gmra.mrb[0].mxu0 %v1854
      %v3615 = vpop.f32.mrb[0].mxu0
      %v3616 = vadd.f32 0.0, %v3615
      %v3617 = vpop.f32.mrb[0].mxu0
      %3618 = vmatprep.mubr.f32.mxu0 0.0
      %3619 = vmatmul.mubr.f32.gmra.mrb[0].mxu0 %v1856
      %v3620 = vpop.f32.mrb[0].mxu0
      %v3621 = vadd.f32 0.0, %v3620
      %v3622 = vpop.f32.mrb[0].mxu0
      %3623 = vmatprep.mubr.f32.mxu0 0.0
      %3624 = vmatmul.mubr.f32.gmra.mrb[0].mxu0 %v1858
      %v3625 = vpop.f32.mrb[0].mxu0
      %v3626 = vadd.f32 0.0, %v3625
      %v3627 = vpop.f32.mrb[0].mxu0
      %3628 = vmatprep.mubr.f32.mxu0 0.0
      %3629 = vmatmul.mubr.f32.gmra.mrb[0].mxu0 %v1860
      %v3630 = vpop.f32.mrb[0].mxu0
      %v3631 = vadd.f32 0.0, %v3630
      %v3632 = vpop.f32.mrb[0].mxu0
      %3633 = vmatprep.mubr.f32.mxu0 0.0
      %3634 = vmatmul.mubr.f32.gmra.mrb[0].mxu0 %v1862
      %v3635 = vpop.f32.mrb[0].mxu0
      %v3636 = vadd.f32 0.0, %v3635
      %v3637 = vpop.f32.mrb[0].mxu0
      %3638 = vmatprep.mubr.f32.mxu0 0.0
      %3639 = vmatmul.mubr.f32.gmra.mrb[0].mxu0 %v1864
      %v3640 = vpop.f32.mrb[0].mxu0
      %v3641 = vadd.f32 0.0, %v3640
      %v3642 = vpop.f32.mrb[0].mxu0
      %3643 = vmatprep.mubr.f32.mxu0 0.0
      %3644 = vmatmul.mubr.f32.gmra.mrb[0].mxu0 %v1866
      %v3645 = vpop.f32.mrb[0].mxu0
      %v3646 = vadd.f32 0.0, %v3645
      %v3647 = vpop.f32.mrb[0].mxu0
      %3648 = vmatprep.mubr.f32.mxu0 0.0
      %3649 = vmatmul.mubr.f32.gmra.mrb[0].mxu0 %v1868
      %v3650 = vpop.f32.mrb[0].mxu0
      %v3651 = vadd.f32 0.0, %v3650
      %v3652 = vpop.f32.mrb[0].mxu0
      %3653 = vmatprep.mubr.f32.mxu0 0.0
      %3654 = vmatmul.mubr.f32.gmra.mrb[0].mxu0 %v1870
      %v3655 = vpop.f32.mrb[0].mxu0
      %v3656 = vadd.f32 0.0, %v3655
      %v3657 = vpop.f32.mrb[0].mxu0
      %3658 = vmatprep.mubr.f32.mxu0 0.0
      %3659 = vmatmul.mubr.f32.gmra.mrb[0].mxu0 %v1872
      %v3660 = vpop.f32.mrb[0].mxu0
      %v3661 = vadd.f32 0.0, %v3660
      %v3662 = vpop.f32.mrb[0].mxu0
      %3663 = vmatprep.mubr.f32.mxu0 0.0
      %3664 = vmatmul.mubr.f32.gmra.mrb[0].mxu0 %v1874
      %v3665 = vpop.f32.mrb[0].mxu0
      %v3666 = vadd.f32 0.0, %v3665
      %v3667 = vpop.f32.mrb[0].mxu0
      %3668 = vmatprep.mubr.f32.mxu0 0.0
      %3669 = vmatmul.mubr.f32.gmra.mrb[0].mxu0 %v1876
      %v3670 = vpop.f32.mrb[0].mxu0
      %v3671 = vadd.f32 0.0, %v3670
      %v3672 = vpop.f32.mrb[0].mxu0
      %3673 = vmatprep.mubr.f32.mxu0 0.0
      %3674 = vmatmul.mubr.f32.gmra.mrb[0].mxu0 %v1878
      %v3675 = vpop.f32.mrb[0].mxu0
      %v3676 = vadd.f32 0.0, %v3675
      %v3677 = vpop.f32.mrb[0].mxu0
      %3678 = vmatprep.mubr.f32.mxu0 0.0
      %3679 = vmatmul.mubr.f32.gmra.mrb[0].mxu0 %v1880
      %v3680 = vpop.f32.mrb[0].mxu0
      %v3681 = vadd.f32 0.0, %v3680
      %v3682 = vpop.f32.mrb[0].mxu0
      %3683 = vmatprep.mubr.f32.mxu0 0.0
      %3684 = vmatmul.mubr.f32.gmra.mrb[0].mxu0 %v1882
      %v3685 = vpop.f32.mrb[0].mxu0
      %v3686 = vadd.f32 0.0, %v3685
      %v3687 = vpop.f32.mrb[0].mxu0
      %3688 = vmatprep.mubr.f32.mxu0 0.0
      %3689 = vmatmul.mubr.f32.gmra.mrb[0].mxu0 %v1884
      %v3690 = vpop.f32.mrb[0].mxu0
      %v3691 = vadd.f32 0.0, %v3690
      %v3692 = vpop.f32.mrb[0].mxu0
      %3693 = vmatprep.mubr.f32.mxu0 0.0
      %3694 = vmatmul.mubr.f32.gmra.mrb[0].mxu0 %v1886
      %v3695 = vpop.f32.mrb[0].mxu0
      %v3696 = vadd.f32 0.0, %v3695
      %v3697 = vpop.f32.mrb[0].mxu0
      %3698 = vmatprep.mubr.f32.mxu0 0.0
      %3699 = vmatmul.mubr.f32.gmra.mrb[0].mxu0 %v1888
      %v3700 = vpop.f32.mrb[0].mxu0
      %v3701 = vadd.f32 0.0, %v3700
      %v3702 = vpop.f32.mrb[0].mxu0
      %3703 = vmatprep.mubr.f32.mxu0 0.0
      %3704 = vmatmul.mubr.f32.gmra.mrb[0].mxu0 %v1890
      %v3705 = vpop.f32.mrb[0].mxu0
      %v3706 = vadd.f32 0.0, %v3705
      %v3707 = vpop.f32.mrb[0].mxu0
      %3708 = vmatprep.mubr.f32.mxu0 0.0
      %3709 = vmatmul.mubr.f32.gmra.mrb[0].mxu0 %v1892
      %v3710 = vpop.f32.mrb[0].mxu0
      %v3711 = vadd.f32 0.0, %v3710
      %v3712 = vpop.f32.mrb[0].mxu0
      %3713 = vmatprep.mubr.f32.mxu0 0.0
      %3714 = vmatmul.mubr.f32.gmra.mrb[0].mxu0 %v2696
      %v3715 = vpop.f32.mrb[0].mxu0
      %v3716 = vadd.f32 0.0, %v3715
      %v3717 = vpop.f32.mrb[0].mxu0
      %3718 = vmatprep.mubr.f32.mxu0 0.0
      %3719 = vmatmul.mubr.f32.gmra.mrb[0].mxu0 %v2698
      %v3720 = vpop.f32.mrb[0].mxu0
      %v3721 = vadd.f32 0.0, %v3720
      %v3722 = vpop.f32.mrb[0].mxu0
      %3723 = vmatprep.mubr.f32.mxu0 0.0
      %3724 = vmatmul.mubr.f32.gmra.mrb[0].mxu0 %v3502
      %v3725 = vpop.f32.mrb[0].mxu0
      %v3726 = vadd.f32 0.0, %v3725
      %v3727 = vpop.f32.mrb[0].mxu0
      %3728 = vmatprep.mubr.f32.mxu0 0.0
      %3729 = vmatmul.mubr.f32.gmra.mrb[0].mxu0 %v3504
      %v3730 = vpop.f32.mrb[0].mxu0
      %v3731 = vadd.f32 0.0, %v3730
      %v3732 = vpop.f32.mrb[0].mxu0
      %3733 = vdwg.mxu0
      %v3734 = vadd.f32 %v3464, %v3576
      %v3735 = vadd.f32 %v3465, %v3581
      %v3736 = vadd.f32 %v3466, %v3586
      %v3737 = vadd.f32 %v3467, %v3591
      %v3738 = vadd.f32 %v3468, %v3596
      %v3739 = vadd.f32 %v3469, %v3601
      %v3740 = vadd.f32 %v3470, %v3606
      %v3741 = vadd.f32 %v3471, %v3611
      %v3742 = vadd.f32 %v3472, %v3616
      %v3743 = vadd.f32 %v3473, %v3621
      %v3744 = vadd.f32 %v3474, %v3626
      %v3745 = vadd.f32 %v3475, %v3631
      %v3746 = vadd.f32 %v3476, %v3636
      %v3747 = vadd.f32 %v3477, %v3641
      %v3748 = vadd.f32 %v3478, %v3646
      %v3749 = vadd.f32 %v3479, %v3651
      %v3750 = vadd.f32 %v3480, %v3656
      %v3751 = vadd.f32 %v3481, %v3661
      %v3752 = vadd.f32 %v3482, %v3666
      %v3753 = vadd.f32 %v3483, %v3671
      %v3754 = vadd.f32 %v3484, %v3676
      %v3755 = vadd.f32 %v3485, %v3681
      %v3756 = vadd.f32 %v3486, %v3686
      %v3757 = vadd.f32 %v3487, %v3691
      %v3758 = vadd.f32 %v3488, %v3696
      %v3759 = vadd.f32 %v3489, %v3701
      %v3760 = vadd.f32 %v3490, %v3706
      %v3761 = vadd.f32 %v3491, %v3711
      %v3762 = vadd.f32 %v3492, %v3716
      %v3763 = vadd.f32 %v3493, %v3721
      %v3764 = vadd.f32 %v3494, %v3726
      %v3765 = vadd.f32 %v3495, %v3731
      %v3766 = vld [vmem:[#allocation3] sm:$0xff]
      %v3767 = vld [vmem:[#allocation3 + $0x8] sm:$0xff]
      %v3768 = vld [vmem:[#allocation3 + $0x10] sm:$0xff]
      %v3769 = vld [vmem:[#allocation3 + $0x18] sm:$0xff]
      %v3770 = vld [vmem:[#allocation3 + $0x20] sm:$0xff]
      %v3771 = vld [vmem:[#allocation3 + $0x28] sm:$0xff]
      %v3772 = vld [vmem:[#allocation3 + $0x30] sm:$0xff]
      %v3773 = vld [vmem:[#allocation3 + $0x38] sm:$0xff]
      %v3774 = vld [vmem:[#allocation3 + $0x40] sm:$0xff]
      %v3775 = vld [vmem:[#allocation3 + $0x48] sm:$0xff]
      %v3776 = vld [vmem:[#allocation3 + $0x50] sm:$0xff]
      %v3777 = vld [vmem:[#allocation3 + $0x58] sm:$0xff]
      %v3778 = vld [vmem:[#allocation3 + $0x60] sm:$0xff]
      %v3779 = vld [vmem:[#allocation3 + $0x68] sm:$0xff]
      %v3780 = vld [vmem:[#allocation3 + $0x70] sm:$0xff]
      %v3781 = vld [vmem:[#allocation3 + $0x78] sm:$0xff]
      %v3782 = vld [vmem:[#allocation3 + $0x80] sm:$0xff]
      %v3783 = vld [vmem:[#allocation3 + $0x88] sm:$0xff]
      %v3784 = vld [vmem:[#allocation3 + $0x90] sm:$0xff]
      %v3785 = vld [vmem:[#allocation3 + $0x98] sm:$0xff]
      %v3786 = vld [vmem:[#allocation3 + $0xa0] sm:$0xff]
      %v3787 = vld [vmem:[#allocation3 + $0xa8] sm:$0xff]
      %v3788 = vld [vmem:[#allocation3 + $0xb0] sm:$0xff]
      %v3789 = vld [vmem:[#allocation3 + $0xb8] sm:$0xff]
      %v3790 = vld [vmem:[#allocation3 + $0xc0] sm:$0xff]
      %v3791 = vld [vmem:[#allocation3 + $0xc8] sm:$0xff]
      %v3792 = vld [vmem:[#allocation3 + $0xd0] sm:$0xff]
      %v3793 = vld [vmem:[#allocation3 + $0xd8] sm:$0xff]
      %v3794 = vld [vmem:[#allocation3 + $0xe0] sm:$0xff]
      %v3795 = vld [vmem:[#allocation3 + $0xe8] sm:$0xff]
      %v3796 = vld [vmem:[#allocation3 + $0xf0] sm:$0xff]
      %v3797 = vld [vmem:[#allocation3 + $0xf8] sm:$0xff]
      %v3798 = vld [vmem:[#allocation3 + $0x100] sm:$0xff]
      %v3799 = vld [vmem:[#allocation3 + $0x108] sm:$0xff]
      %v3800 = vld [vmem:[#allocation3 + $0x110] sm:$0xff]
      %v3801 = vld [vmem:[#allocation3 + $0x118] sm:$0xff]
      %v3802 = vld [vmem:[#allocation3 + $0x120] sm:$0xff]
      %v3803 = vld [vmem:[#allocation3 + $0x128] sm:$0xff]
      %v3804 = vld [vmem:[#allocation3 + $0x130] sm:$0xff]
      %v3805 = vld [vmem:[#allocation3 + $0x138] sm:$0xff]
      %v3806 = vld [vmem:[#allocation3 + $0x140] sm:$0xff]
      %v3807 = vld [vmem:[#allocation3 + $0x148] sm:$0xff]
      %v3808 = vld [vmem:[#allocation3 + $0x150] sm:$0xff]
      %v3809 = vld [vmem:[#allocation3 + $0x158] sm:$0xff]
      %v3810 = vld [vmem:[#allocation3 + $0x160] sm:$0xff]
      %v3811 = vld [vmem:[#allocation3 + $0x168] sm:$0xff]
      %v3812 = vld [vmem:[#allocation3 + $0x170] sm:$0xff]
      %v3813 = vld [vmem:[#allocation3 + $0x178] sm:$0xff]
      %v3814 = vld [vmem:[#allocation3 + $0x180] sm:$0xff]
      %v3815 = vld [vmem:[#allocation3 + $0x188] sm:$0xff]
      %v3816 = vld [vmem:[#allocation3 + $0x190] sm:$0xff]
      %v3817 = vld [vmem:[#allocation3 + $0x198] sm:$0xff]
      %v3818 = vld [vmem:[#allocation3 + $0x1a0] sm:$0xff]
      %v3819 = vld [vmem:[#allocation3 + $0x1a8] sm:$0xff]
      %v3820 = vld [vmem:[#allocation3 + $0x1b0] sm:$0xff]
      %v3821 = vld [vmem:[#allocation3 + $0x1b8] sm:$0xff]
      %v3822 = vld [vmem:[#allocation3 + $0x1c0] sm:$0xff]
      %v3823 = vld [vmem:[#allocation3 + $0x1c8] sm:$0xff]
      %v3824 = vld [vmem:[#allocation3 + $0x1d0] sm:$0xff]
      %v3825 = vld [vmem:[#allocation3 + $0x1d8] sm:$0xff]
      %v3826 = vld [vmem:[#allocation3 + $0x1e0] sm:$0xff]
      %v3827 = vld [vmem:[#allocation3 + $0x1e8] sm:$0xff]
      %v3828 = vld [vmem:[#allocation3 + $0x1f0] sm:$0xff]
      %v3829 = vld [vmem:[#allocation3 + $0x1f8] sm:$0xff]
      %v3830 = vld [vmem:[#allocation3 + $0x200] sm:$0xff]
      %v3831 = vld [vmem:[#allocation3 + $0x208] sm:$0xff]
      %v3832 = vld [vmem:[#allocation3 + $0x210] sm:$0xff]
      %v3833 = vld [vmem:[#allocation3 + $0x218] sm:$0xff]
      %v3834 = vld [vmem:[#allocation3 + $0x220] sm:$0xff]
      %v3835 = vld [vmem:[#allocation3 + $0x228] sm:$0xff]
      %v3836 = vld [vmem:[#allocation3 + $0x230] sm:$0xff]
      %v3837 = vld [vmem:[#allocation3 + $0x238] sm:$0xff]
      %v3886 = vrot.slane %v3766, 7
      %v3887 = vrot.slane %v3767, 7
      %v3888 = vsel %vm1067, %v3886, %v3887
      %v3889 = vrot.slane %v3768, 7
      %v3890 = vsel %vm1067, %v3887, %v3889
      %v3891 = vrot.slane %v3770, 7
      %v3892 = vrot.slane %v3771, 7
      %v3893 = vsel %vm1067, %v3891, %v3892
      %v3894 = vrot.slane %v3772, 7
      %v3895 = vsel %vm1067, %v3892, %v3894
      %v3896 = vrot.slane %v3774, 7
      %v3897 = vrot.slane %v3775, 7
      %v3898 = vsel %vm1067, %v3896, %v3897
      %v3899 = vrot.slane %v3776, 7
      %v3900 = vsel %vm1067, %v3897, %v3899
      %v3901 = vrot.slane %v3778, 7
      %v3902 = vrot.slane %v3779, 7
      %v3903 = vsel %vm1067, %v3901, %v3902
      %v3904 = vrot.slane %v3780, 7
      %v3905 = vsel %vm1067, %v3902, %v3904
      %v3906 = vrot.slane %v3782, 7
      %v3907 = vrot.slane %v3783, 7
      %v3908 = vsel %vm1067, %v3906, %v3907
      %v3909 = vrot.slane %v3784, 7
      %v3910 = vsel %vm1067, %v3907, %v3909
      %v3911 = vrot.slane %v3786, 7
      %v3912 = vrot.slane %v3787, 7
      %v3913 = vsel %vm1067, %v3911, %v3912
      %v3914 = vrot.slane %v3788, 7
      %v3915 = vsel %vm1067, %v3912, %v3914
      %v3916 = vrot.slane %v3790, 7
      %v3917 = vrot.slane %v3791, 7
      %v3918 = vsel %vm1067, %v3916, %v3917
      %v3919 = vrot.slane %v3792, 7
      %v3920 = vsel %vm1067, %v3917, %v3919
      %v3921 = vrot.slane %v3794, 7
      %v3922 = vrot.slane %v3795, 7
      %v3923 = vsel %vm1067, %v3921, %v3922
      %v3924 = vrot.slane %v3796, 7
      %v3925 = vsel %vm1067, %v3922, %v3924
      %v3926 = vrot.slane %v3798, 7
      %v3927 = vrot.slane %v3799, 7
      %v3928 = vsel %vm1067, %v3926, %v3927
      %v3929 = vrot.slane %v3800, 7
      %v3930 = vsel %vm1067, %v3927, %v3929
      %v3931 = vrot.slane %v3802, 7
      %v3932 = vrot.slane %v3803, 7
      %v3933 = vsel %vm1067, %v3931, %v3932
      %v3934 = vrot.slane %v3804, 7
      %v3935 = vsel %vm1067, %v3932, %v3934
      %v3936 = vrot.slane %v3806, 7
      %v3937 = vrot.slane %v3807, 7
      %v3938 = vsel %vm1067, %v3936, %v3937
      %v3939 = vrot.slane %v3808, 7
      %v3940 = vsel %vm1067, %v3937, %v3939
      %v3941 = vrot.slane %v3810, 7
      %v3942 = vrot.slane %v3811, 7
      %v3943 = vsel %vm1067, %v3941, %v3942
      %v3944 = vrot.slane %v3812, 7
      %v3945 = vsel %vm1067, %v3942, %v3944
      %v3946 = vrot.slane %v3814, 7
      %v3947 = vrot.slane %v3815, 7
      %v3948 = vsel %vm1067, %v3946, %v3947
      %v3949 = vrot.slane %v3816, 7
      %v3950 = vsel %vm1067, %v3947, %v3949
      %v3951 = vrot.slane %v3818, 7
      %v3952 = vrot.slane %v3819, 7
      %v3953 = vsel %vm1067, %v3951, %v3952
      %v3954 = vrot.slane %v3820, 7
      %v3955 = vsel %vm1067, %v3952, %v3954
      %v3956 = vrot.slane %v3822, 7
      %v3957 = vrot.slane %v3823, 7
      %v3958 = vsel %vm1067, %v3956, %v3957
      %v3959 = vrot.slane %v3824, 7
      %v3960 = vsel %vm1067, %v3957, %v3959
      %v3961 = vrot.slane %v3826, 7
      %v3962 = vrot.slane %v3827, 7
      %v3963 = vsel %vm1067, %v3961, %v3962
      %v3964 = vrot.slane %v3828, 7
      %v3965 = vsel %vm1067, %v3962, %v3964
      %v3966 = vsel %vm448, %v3888, 0
      %v3968 = vsel %vm448, %v3890, 0
      %v3970 = vsel %vm448, %v3893, 0
      %v3972 = vsel %vm448, %v3895, 0
      %v3974 = vsel %vm448, %v3898, 0
      %v3976 = vsel %vm448, %v3900, 0
      %v3978 = vsel %vm448, %v3903, 0
      %v3980 = vsel %vm448, %v3905, 0
      %v3982 = vsel %vm448, %v3908, 0
      %v3984 = vsel %vm448, %v3910, 0
      %v3986 = vsel %vm448, %v3913, 0
      %v3988 = vsel %vm448, %v3915, 0
      %v3990 = vsel %vm448, %v3918, 0
      %v3992 = vsel %vm448, %v3920, 0
      %v3994 = vsel %vm448, %v3923, 0
      %v3996 = vsel %vm448, %v3925, 0
      %v3998 = vsel %vm448, %v3928, 0
      %v4000 = vsel %vm448, %v3930, 0
      %v4002 = vsel %vm448, %v3933, 0
      %v4004 = vsel %vm448, %v3935, 0
      %v4006 = vsel %vm448, %v3938, 0
      %v4008 = vsel %vm448, %v3940, 0
      %v4010 = vsel %vm448, %v3943, 0
      %v4012 = vsel %vm448, %v3945, 0
      %v4014 = vsel %vm448, %v3948, 0
      %v4016 = vsel %vm448, %v3950, 0
      %v4018 = vsel %vm448, %v3953, 0
      %v4020 = vsel %vm448, %v3955, 0
      %v4022 = vsel %vm448, %v3958, 0
      %v4024 = vsel %vm448, %v3960, 0
      %v4026 = vsel %vm448, %v3963, 0
      %v4028 = vsel %vm448, %v3965, 0
      %4030 = vmatprep.subr.mxu0 0.0
      %4031 = vmatpush1.msra.mxu0 %v355
      %4032 = vmatprep.subr.mxu0 0.0
      %4033 = vmatpush1.msra.mxu0 0.0
      %4034 = vmatprep.subr.mxu0 0.0
      %4035 = vmatpush1.msra.mxu0 0.0
      %4036 = vmatprep.subr.mxu0 0.0
      %4037 = vmatpush1.msra.mxu0 0.0
      %4038 = vmatprep.subr.mxu0 0.0
      %4039 = vmatpush1.msra.mxu0 0.0
      %4040 = vmatprep.subr.mxu0 0.0
      %4041 = vmatpush1.msra.mxu0 0.0
      %4042 = vmatprep.subr.mxu0 0.0
      %4043 = vmatpush1.msra.mxu0 0.0
      %4044 = vmatprep.subr.mxu0 0.0
      %4045 = vmatpush1.msra.mxu0 0.0
      %4046 = vmatprep.subr.mxu0 0.0
      %4047 = vmatpush1.msra.mxu0 0.0
      %4048 = vmatprep.subr.mxu0 0.0
      %4049 = vmatpush1.msra.mxu0 0.0
      %4050 = vmatprep.subr.mxu0 0.0
      %4051 = vmatpush1.msra.mxu0 0.0
      %4052 = vmatprep.subr.mxu0 0.0
      %4053 = vmatpush1.msra.mxu0 0.0
      %4054 = vmatprep.subr.mxu0 0.0
      %4055 = vmatpush1.msra.mxu0 0.0
      %4056 = vmatprep.subr.mxu0 0.0
      %4057 = vmatpush1.msra.mxu0 0.0
      %4058 = vmatprep.subr.mxu0 0.0
      %4059 = vmatpush1.msra.mxu0 0.0
      %4060 = vmatprep.subr.mxu0 0.0
      %4061 = vmatpush1.msra.mxu0 0.0
      %4062 = vmatprep.subr.mxu0 0.0
      %4063 = vmatpush1.msra.mxu0 0.0
      %4064 = vmatprep.subr.mxu0 0.0
      %4065 = vmatpush1.msra.mxu0 0.0
      %4066 = vmatprep.subr.mxu0 0.0
      %4067 = vmatpush1.msra.mxu0 0.0
      %4068 = vmatprep.subr.mxu0 0.0
      %4069 = vmatpush1.msra.mxu0 0.0
      %4070 = vmatprep.subr.mxu0 0.0
      %4071 = vmatpush1.msra.mxu0 0.0
      %4072 = vmatprep.subr.mxu0 0.0
      %4073 = vmatpush1.msra.mxu0 0.0
      %4074 = vmatprep.subr.mxu0 0.0
      %4075 = vmatpush1.msra.mxu0 0.0
      %4076 = vmatprep.subr.mxu0 0.0
      %4077 = vmatpush1.msra.mxu0 0.0
      %4078 = vmatprep.subr.mxu0 0.0
      %4079 = vmatpush1.msra.mxu0 0.0
      %4080 = vmatprep.subr.mxu0 0.0
      %4081 = vmatpush1.msra.mxu0 0.0
      %4082 = vmatprep.subr.mxu0 0.0
      %4083 = vmatpush1.msra.mxu0 0.0
      %4084 = vmatprep.subr.mxu0 0.0
      %4085 = vmatpush1.msra.mxu0 0.0
      %4086 = vmatprep.subr.mxu0 0.0
      %4087 = vmatpush1.msra.mxu0 0.0
      %4088 = vmatprep.subr.mxu0 0.0
      %4089 = vmatpush1.msra.mxu0 0.0
      %4090 = vmatprep.subr.mxu0 0.0
      %4091 = vmatpush1.msra.mxu0 0.0
      %4092 = vmatprep.subr.mxu0 0.0
      %4093 = vmatpush1.msra.mxu0 0.0
      %4094 = vmatprep.mubr.f32.mxu0 0.0
      %4095 = vmatmul.mubr.f32.gmra.mrb[0].mxu0 %v3966
      %v4096 = vpop.f32.mrb[0].mxu0
      %v4097 = vadd.f32 0.0, %v4096
      %v4098 = vpop.f32.mrb[0].mxu0
      %4099 = vmatprep.mubr.f32.mxu0 0.0
      %4100 = vmatmul.mubr.f32.gmra.mrb[0].mxu0 %v3968
      %v4101 = vpop.f32.mrb[0].mxu0
      %v4102 = vadd.f32 0.0, %v4101
      %v4103 = vpop.f32.mrb[0].mxu0
      %4104 = vmatprep.mubr.f32.mxu0 0.0
      %4105 = vmatmul.mubr.f32.gmra.mrb[0].mxu0 %v3970
      %v4106 = vpop.f32.mrb[0].mxu0
      %v4107 = vadd.f32 0.0, %v4106
      %v4108 = vpop.f32.mrb[0].mxu0
      %4109 = vmatprep.mubr.f32.mxu0 0.0
      %4110 = vmatmul.mubr.f32.gmra.mrb[0].mxu0 %v3972
      %v4111 = vpop.f32.mrb[0].mxu0
      %v4112 = vadd.f32 0.0, %v4111
      %v4113 = vpop.f32.mrb[0].mxu0
      %4114 = vmatprep.mubr.f32.mxu0 0.0
      %4115 = vmatmul.mubr.f32.gmra.mrb[0].mxu0 %v3974
      %v4116 = vpop.f32.mrb[0].mxu0
      %v4117 = vadd.f32 0.0, %v4116
      %v4118 = vpop.f32.mrb[0].mxu0
      %4119 = vmatprep.mubr.f32.mxu0 0.0
      %4120 = vmatmul.mubr.f32.gmra.mrb[0].mxu0 %v3976
      %v4121 = vpop.f32.mrb[0].mxu0
      %v4122 = vadd.f32 0.0, %v4121
      %v4123 = vpop.f32.mrb[0].mxu0
      %4124 = vmatprep.mubr.f32.mxu0 0.0
      %4125 = vmatmul.mubr.f32.gmra.mrb[0].mxu0 %v3978
      %v4126 = vpop.f32.mrb[0].mxu0
      %v4127 = vadd.f32 0.0, %v4126
      %v4128 = vpop.f32.mrb[0].mxu0
      %4129 = vmatprep.mubr.f32.mxu0 0.0
      %4130 = vmatmul.mubr.f32.gmra.mrb[0].mxu0 %v3980
      %v4131 = vpop.f32.mrb[0].mxu0
      %v4132 = vadd.f32 0.0, %v4131
      %v4133 = vpop.f32.mrb[0].mxu0
      %4134 = vmatprep.mubr.f32.mxu0 0.0
      %4135 = vmatmul.mubr.f32.gmra.mrb[0].mxu0 %v3982
      %v4136 = vpop.f32.mrb[0].mxu0
      %v4137 = vadd.f32 0.0, %v4136
      %v4138 = vpop.f32.mrb[0].mxu0
      %4139 = vmatprep.mubr.f32.mxu0 0.0
      %4140 = vmatmul.mubr.f32.gmra.mrb[0].mxu0 %v3984
      %v4141 = vpop.f32.mrb[0].mxu0
      %v4142 = vadd.f32 0.0, %v4141
      %v4143 = vpop.f32.mrb[0].mxu0
      %4144 = vmatprep.mubr.f32.mxu0 0.0
      %4145 = vmatmul.mubr.f32.gmra.mrb[0].mxu0 %v3986
      %v4146 = vpop.f32.mrb[0].mxu0
      %v4147 = vadd.f32 0.0, %v4146
      %v4148 = vpop.f32.mrb[0].mxu0
      %4149 = vmatprep.mubr.f32.mxu0 0.0
      %4150 = vmatmul.mubr.f32.gmra.mrb[0].mxu0 %v3988
      %v4151 = vpop.f32.mrb[0].mxu0
      %v4152 = vadd.f32 0.0, %v4151
      %v4153 = vpop.f32.mrb[0].mxu0
      %4154 = vmatprep.mubr.f32.mxu0 0.0
      %4155 = vmatmul.mubr.f32.gmra.mrb[0].mxu0 %v3990
      %v4156 = vpop.f32.mrb[0].mxu0
      %v4157 = vadd.f32 0.0, %v4156
      %v4158 = vpop.f32.mrb[0].mxu0
      %4159 = vmatprep.mubr.f32.mxu0 0.0
      %4160 = vmatmul.mubr.f32.gmra.mrb[0].mxu0 %v3992
      %v4161 = vpop.f32.mrb[0].mxu0
      %v4162 = vadd.f32 0.0, %v4161
      %v4163 = vpop.f32.mrb[0].mxu0
      %4164 = vmatprep.mubr.f32.mxu0 0.0
      %4165 = vmatmul.mubr.f32.gmra.mrb[0].mxu0 %v3994
      %v4166 = vpop.f32.mrb[0].mxu0
      %v4167 = vadd.f32 0.0, %v4166
      %v4168 = vpop.f32.mrb[0].mxu0
      %4169 = vmatprep.mubr.f32.mxu0 0.0
      %4170 = vmatmul.mubr.f32.gmra.mrb[0].mxu0 %v3996
      %v4171 = vpop.f32.mrb[0].mxu0
      %v4172 = vadd.f32 0.0, %v4171
      %v4173 = vpop.f32.mrb[0].mxu0
      %4174 = vmatprep.mubr.f32.mxu0 0.0
      %4175 = vmatmul.mubr.f32.gmra.mrb[0].mxu0 %v3998
      %v4176 = vpop.f32.mrb[0].mxu0
      %v4177 = vadd.f32 0.0, %v4176
      %v4178 = vpop.f32.mrb[0].mxu0
      %4179 = vmatprep.mubr.f32.mxu0 0.0
      %4180 = vmatmul.mubr.f32.gmra.mrb[0].mxu0 %v4000
      %v4181 = vpop.f32.mrb[0].mxu0
      %v4182 = vadd.f32 0.0, %v4181
      %v4183 = vpop.f32.mrb[0].mxu0
      %4184 = vmatprep.mubr.f32.mxu0 0.0
      %4185 = vmatmul.mubr.f32.gmra.mrb[0].mxu0 %v4002
      %v4186 = vpop.f32.mrb[0].mxu0
      %v4187 = vadd.f32 0.0, %v4186
      %v4188 = vpop.f32.mrb[0].mxu0
      %4189 = vmatprep.mubr.f32.mxu0 0.0
      %4190 = vmatmul.mubr.f32.gmra.mrb[0].mxu0 %v4004
      %v4191 = vpop.f32.mrb[0].mxu0
      %v4192 = vadd.f32 0.0, %v4191
      %v4193 = vpop.f32.mrb[0].mxu0
      %4194 = vmatprep.mubr.f32.mxu0 0.0
      %4195 = vmatmul.mubr.f32.gmra.mrb[0].mxu0 %v4006
      %v4196 = vpop.f32.mrb[0].mxu0
      %v4197 = vadd.f32 0.0, %v4196
      %v4198 = vpop.f32.mrb[0].mxu0
      %4199 = vmatprep.mubr.f32.mxu0 0.0
      %4200 = vmatmul.mubr.f32.gmra.mrb[0].mxu0 %v4008
      %v4201 = vpop.f32.mrb[0].mxu0
      %v4202 = vadd.f32 0.0, %v4201
      %v4203 = vpop.f32.mrb[0].mxu0
      %4204 = vmatprep.mubr.f32.mxu0 0.0
      %4205 = vmatmul.mubr.f32.gmra.mrb[0].mxu0 %v4010
      %v4206 = vpop.f32.mrb[0].mxu0
      %v4207 = vadd.f32 0.0, %v4206
      %v4208 = vpop.f32.mrb[0].mxu0
      %4209 = vmatprep.mubr.f32.mxu0 0.0
      %4210 = vmatmul.mubr.f32.gmra.mrb[0].mxu0 %v4012
      %v4211 = vpop.f32.mrb[0].mxu0
      %v4212 = vadd.f32 0.0, %v4211
      %v4213 = vpop.f32.mrb[0].mxu0
      %4214 = vmatprep.mubr.f32.mxu0 0.0
      %4215 = vmatmul.mubr.f32.gmra.mrb[0].mxu0 %v4014
      %v4216 = vpop.f32.mrb[0].mxu0
      %v4217 = vadd.f32 0.0, %v4216
      %v4218 = vpop.f32.mrb[0].mxu0
      %4219 = vmatprep.mubr.f32.mxu0 0.0
      %4220 = vmatmul.mubr.f32.gmra.mrb[0].mxu0 %v4016
      %v4221 = vpop.f32.mrb[0].mxu0
      %v4222 = vadd.f32 0.0, %v4221
      %v4223 = vpop.f32.mrb[0].mxu0
      %4224 = vmatprep.mubr.f32.mxu0 0.0
      %4225 = vmatmul.mubr.f32.gmra.mrb[0].mxu0 %v4018
      %v4226 = vpop.f32.mrb[0].mxu0
      %v4227 = vadd.f32 0.0, %v4226
      %v4228 = vpop.f32.mrb[0].mxu0
      %4229 = vmatprep.mubr.f32.mxu0 0.0
      %4230 = vmatmul.mubr.f32.gmra.mrb[0].mxu0 %v4020
      %v4231 = vpop.f32.mrb[0].mxu0
      %v4232 = vadd.f32 0.0, %v4231
      %v4233 = vpop.f32.mrb[0].mxu0
      %4234 = vmatprep.mubr.f32.mxu0 0.0
      %4235 = vmatmul.mubr.f32.gmra.mrb[0].mxu0 %v4022
      %v4236 = vpop.f32.mrb[0].mxu0
      %v4237 = vadd.f32 0.0, %v4236
      %v4238 = vpop.f32.mrb[0].mxu0
      %4239 = vmatprep.mubr.f32.mxu0 0.0
      %4240 = vmatmul.mubr.f32.gmra.mrb[0].mxu0 %v4024
      %v4241 = vpop.f32.mrb[0].mxu0
      %v4242 = vadd.f32 0.0, %v4241
      %v4243 = vpop.f32.mrb[0].mxu0
      %4244 = vmatprep.mubr.f32.mxu0 0.0
      %4245 = vmatmul.mubr.f32.gmra.mrb[0].mxu0 %v4026
      %v4246 = vpop.f32.mrb[0].mxu0
      %v4247 = vadd.f32 0.0, %v4246
      %v4248 = vpop.f32.mrb[0].mxu0
      %4249 = vmatprep.mubr.f32.mxu0 0.0
      %4250 = vmatmul.mubr.f32.gmra.mrb[0].mxu0 %v4028
      %v4251 = vpop.f32.mrb[0].mxu0
      %v4252 = vadd.f32 0.0, %v4251
      %v4253 = vpop.f32.mrb[0].mxu0
      %4254 = vdwg.mxu0
      %v4255 = vadd.f32 %v3734, %v4097
      %v4256 = vadd.f32 %v3735, %v4102
      %v4257 = vadd.f32 %v3736, %v4107
      %v4258 = vadd.f32 %v3737, %v4112
      %v4259 = vadd.f32 %v3738, %v4117
      %v4260 = vadd.f32 %v3739, %v4122
      %v4261 = vadd.f32 %v3740, %v4127
      %v4262 = vadd.f32 %v3741, %v4132
      %v4263 = vadd.f32 %v3742, %v4137
      %v4264 = vadd.f32 %v3743, %v4142
      %v4265 = vadd.f32 %v3744, %v4147
      %v4266 = vadd.f32 %v3745, %v4152
      %v4267 = vadd.f32 %v3746, %v4157
      %v4268 = vadd.f32 %v3747, %v4162
      %v4269 = vadd.f32 %v3748, %v4167
      %v4270 = vadd.f32 %v3749, %v4172
      %v4271 = vadd.f32 %v3750, %v4177
      %v4272 = vadd.f32 %v3751, %v4182
      %v4273 = vadd.f32 %v3752, %v4187
      %v4274 = vadd.f32 %v3753, %v4192
      %v4275 = vadd.f32 %v3754, %v4197
      %v4276 = vadd.f32 %v3755, %v4202
      %v4277 = vadd.f32 %v3756, %v4207
      %v4278 = vadd.f32 %v3757, %v4212
      %v4279 = vadd.f32 %v3758, %v4217
      %v4280 = vadd.f32 %v3759, %v4222
      %v4281 = vadd.f32 %v3760, %v4227
      %v4282 = vadd.f32 %v3761, %v4232
      %v4283 = vadd.f32 %v3762, %v4237
      %v4284 = vadd.f32 %v3763, %v4242
      %v4285 = vadd.f32 %v3764, %v4247
      %v4286 = vadd.f32 %v3765, %v4252
      %v4287 = vsel %vm448, %v3767, 0
      %v4289 = vsel %vm448, %v3768, 0
      %v4291 = vsel %vm448, %v3771, 0
      %v4293 = vsel %vm448, %v3772, 0
      %v4295 = vsel %vm448, %v3775, 0
      %v4297 = vsel %vm448, %v3776, 0
      %v4299 = vsel %vm448, %v3779, 0
      %v4301 = vsel %vm448, %v3780, 0
      %v4303 = vsel %vm448, %v3783, 0
      %v4305 = vsel %vm448, %v3784, 0
      %v4307 = vsel %vm448, %v3787, 0
      %v4309 = vsel %vm448, %v3788, 0
      %v4311 = vsel %vm448, %v3791, 0
      %v4313 = vsel %vm448, %v3792, 0
      %v4315 = vsel %vm448, %v3795, 0
      %v4317 = vsel %vm448, %v3796, 0
      %v4319 = vsel %vm448, %v3799, 0
      %v4321 = vsel %vm448, %v3800, 0
      %v4323 = vsel %vm448, %v3803, 0
      %v4325 = vsel %vm448, %v3804, 0
      %v4327 = vsel %vm448, %v3807, 0
      %v4329 = vsel %vm448, %v3808, 0
      %v4331 = vsel %vm448, %v3811, 0
      %v4333 = vsel %vm448, %v3812, 0
      %v4335 = vsel %vm448, %v3815, 0
      %v4337 = vsel %vm448, %v3816, 0
      %v4339 = vsel %vm448, %v3819, 0
      %v4341 = vsel %vm448, %v3820, 0
      %v4343 = vsel %vm448, %v3823, 0
      %v4345 = vsel %vm448, %v3824, 0
      %v4347 = vsel %vm448, %v3827, 0
      %v4349 = vsel %vm448, %v3828, 0
      %4351 = vmatprep.subr.mxu0 0.0
      %4352 = vmatpush1.msra.mxu0 %v356
      %4353 = vmatprep.subr.mxu0 0.0
      %4354 = vmatpush1.msra.mxu0 0.0
      %4355 = vmatprep.subr.mxu0 0.0
      %4356 = vmatpush1.msra.mxu0 0.0
      %4357 = vmatprep.subr.mxu0 0.0
      %4358 = vmatpush1.msra.mxu0 0.0
      %4359 = vmatprep.subr.mxu0 0.0
      %4360 = vmatpush1.msra.mxu0 0.0
      %4361 = vmatprep.subr.mxu0 0.0
      %4362 = vmatpush1.msra.mxu0 0.0
      %4363 = vmatprep.subr.mxu0 0.0
      %4364 = vmatpush1.msra.mxu0 0.0
      %4365 = vmatprep.subr.mxu0 0.0
      %4366 = vmatpush1.msra.mxu0 0.0
      %4367 = vmatprep.subr.mxu0 0.0
      %4368 = vmatpush1.msra.mxu0 0.0
      %4369 = vmatprep.subr.mxu0 0.0
      %4370 = vmatpush1.msra.mxu0 0.0
      %4371 = vmatprep.subr.mxu0 0.0
      %4372 = vmatpush1.msra.mxu0 0.0
      %4373 = vmatprep.subr.mxu0 0.0
      %4374 = vmatpush1.msra.mxu0 0.0
      %4375 = vmatprep.subr.mxu0 0.0
      %4376 = vmatpush1.msra.mxu0 0.0
      %4377 = vmatprep.subr.mxu0 0.0
      %4378 = vmatpush1.msra.mxu0 0.0
      %4379 = vmatprep.subr.mxu0 0.0
      %4380 = vmatpush1.msra.mxu0 0.0
      %4381 = vmatprep.subr.mxu0 0.0
      %4382 = vmatpush1.msra.mxu0 0.0
      %4383 = vmatprep.subr.mxu0 0.0
      %4384 = vmatpush1.msra.mxu0 0.0
      %4385 = vmatprep.subr.mxu0 0.0
      %4386 = vmatpush1.msra.mxu0 0.0
      %4387 = vmatprep.subr.mxu0 0.0
      %4388 = vmatpush1.msra.mxu0 0.0
      %4389 = vmatprep.subr.mxu0 0.0
      %4390 = vmatpush1.msra.mxu0 0.0
      %4391 = vmatprep.subr.mxu0 0.0
      %4392 = vmatpush1.msra.mxu0 0.0
      %4393 = vmatprep.subr.mxu0 0.0
      %4394 = vmatpush1.msra.mxu0 0.0
      %4395 = vmatprep.subr.mxu0 0.0
      %4396 = vmatpush1.msra.mxu0 0.0
      %4397 = vmatprep.subr.mxu0 0.0
      %4398 = vmatpush1.msra.mxu0 0.0
      %4399 = vmatprep.subr.mxu0 0.0
      %4400 = vmatpush1.msra.mxu0 0.0
      %4401 = vmatprep.subr.mxu0 0.0
      %4402 = vmatpush1.msra.mxu0 0.0
      %4403 = vmatprep.subr.mxu0 0.0
      %4404 = vmatpush1.msra.mxu0 0.0
      %4405 = vmatprep.subr.mxu0 0.0
      %4406 = vmatpush1.msra.mxu0 0.0
      %4407 = vmatprep.subr.mxu0 0.0
      %4408 = vmatpush1.msra.mxu0 0.0
      %4409 = vmatprep.subr.mxu0 0.0
      %4410 = vmatpush1.msra.mxu0 0.0
      %4411 = vmatprep.subr.mxu0 0.0
      %4412 = vmatpush1.msra.mxu0 0.0
      %4413 = vmatprep.subr.mxu0 0.0
      %4414 = vmatpush1.msra.mxu0 0.0
      %4415 = vmatprep.mubr.f32.mxu0 0.0
      %4416 = vmatmul.mubr.f32.gmra.mrb[0].mxu0 %v4287
      %v4417 = vpop.f32.mrb[0].mxu0
      %v4418 = vadd.f32 0.0, %v4417
      %v4419 = vpop.f32.mrb[0].mxu0
      %4420 = vmatprep.mubr.f32.mxu0 0.0
      %4421 = vmatmul.mubr.f32.gmra.mrb[0].mxu0 %v4289
      %v4422 = vpop.f32.mrb[0].mxu0
      %v4423 = vadd.f32 0.0, %v4422
      %v4424 = vpop.f32.mrb[0].mxu0
      %4425 = vmatprep.mubr.f32.mxu0 0.0
      %4426 = vmatmul.mubr.f32.gmra.mrb[0].mxu0 %v4291
      %v4427 = vpop.f32.mrb[0].mxu0
      %v4428 = vadd.f32 0.0, %v4427
      %v4429 = vpop.f32.mrb[0].mxu0
      %4430 = vmatprep.mubr.f32.mxu0 0.0
      %4431 = vmatmul.mubr.f32.gmra.mrb[0].mxu0 %v4293
      %v4432 = vpop.f32.mrb[0].mxu0
      %v4433 = vadd.f32 0.0, %v4432
      %v4434 = vpop.f32.mrb[0].mxu0
      %4435 = vmatprep.mubr.f32.mxu0 0.0
      %4436 = vmatmul.mubr.f32.gmra.mrb[0].mxu0 %v4295
      %v4437 = vpop.f32.mrb[0].mxu0
      %v4438 = vadd.f32 0.0, %v4437
      %v4439 = vpop.f32.mrb[0].mxu0
      %4440 = vmatprep.mubr.f32.mxu0 0.0
      %4441 = vmatmul.mubr.f32.gmra.mrb[0].mxu0 %v4297
      %v4442 = vpop.f32.mrb[0].mxu0
      %v4443 = vadd.f32 0.0, %v4442
      %v4444 = vpop.f32.mrb[0].mxu0
      %4445 = vmatprep.mubr.f32.mxu0 0.0
      %4446 = vmatmul.mubr.f32.gmra.mrb[0].mxu0 %v4299
      %v4447 = vpop.f32.mrb[0].mxu0
      %v4448 = vadd.f32 0.0, %v4447
      %v4449 = vpop.f32.mrb[0].mxu0
      %4450 = vmatprep.mubr.f32.mxu0 0.0
      %4451 = vmatmul.mubr.f32.gmra.mrb[0].mxu0 %v4301
      %v4452 = vpop.f32.mrb[0].mxu0
      %v4453 = vadd.f32 0.0, %v4452
      %v4454 = vpop.f32.mrb[0].mxu0
      %4455 = vmatprep.mubr.f32.mxu0 0.0
      %4456 = vmatmul.mubr.f32.gmra.mrb[0].mxu0 %v4303
      %v4457 = vpop.f32.mrb[0].mxu0
      %v4458 = vadd.f32 0.0, %v4457
      %v4459 = vpop.f32.mrb[0].mxu0
      %4460 = vmatprep.mubr.f32.mxu0 0.0
      %4461 = vmatmul.mubr.f32.gmra.mrb[0].mxu0 %v4305
      %v4462 = vpop.f32.mrb[0].mxu0
      %v4463 = vadd.f32 0.0, %v4462
      %v4464 = vpop.f32.mrb[0].mxu0
      %4465 = vmatprep.mubr.f32.mxu0 0.0
      %4466 = vmatmul.mubr.f32.gmra.mrb[0].mxu0 %v4307
      %v4467 = vpop.f32.mrb[0].mxu0
      %v4468 = vadd.f32 0.0, %v4467
      %v4469 = vpop.f32.mrb[0].mxu0
      %4470 = vmatprep.mubr.f32.mxu0 0.0
      %4471 = vmatmul.mubr.f32.gmra.mrb[0].mxu0 %v4309
      %v4472 = vpop.f32.mrb[0].mxu0
      %v4473 = vadd.f32 0.0, %v4472
      %v4474 = vpop.f32.mrb[0].mxu0
      %4475 = vmatprep.mubr.f32.mxu0 0.0
      %4476 = vmatmul.mubr.f32.gmra.mrb[0].mxu0 %v4311
      %v4477 = vpop.f32.mrb[0].mxu0
      %v4478 = vadd.f32 0.0, %v4477
      %v4479 = vpop.f32.mrb[0].mxu0
      %4480 = vmatprep.mubr.f32.mxu0 0.0
      %4481 = vmatmul.mubr.f32.gmra.mrb[0].mxu0 %v4313
      %v4482 = vpop.f32.mrb[0].mxu0
      %v4483 = vadd.f32 0.0, %v4482
      %v4484 = vpop.f32.mrb[0].mxu0
      %4485 = vmatprep.mubr.f32.mxu0 0.0
      %4486 = vmatmul.mubr.f32.gmra.mrb[0].mxu0 %v4315
      %v4487 = vpop.f32.mrb[0].mxu0
      %v4488 = vadd.f32 0.0, %v4487
      %v4489 = vpop.f32.mrb[0].mxu0
      %4490 = vmatprep.mubr.f32.mxu0 0.0
      %4491 = vmatmul.mubr.f32.gmra.mrb[0].mxu0 %v4317
      %v4492 = vpop.f32.mrb[0].mxu0
      %v4493 = vadd.f32 0.0, %v4492
      %v4494 = vpop.f32.mrb[0].mxu0
      %4495 = vmatprep.mubr.f32.mxu0 0.0
      %4496 = vmatmul.mubr.f32.gmra.mrb[0].mxu0 %v4319
      %v4497 = vpop.f32.mrb[0].mxu0
      %v4498 = vadd.f32 0.0, %v4497
      %v4499 = vpop.f32.mrb[0].mxu0
      %4500 = vmatprep.mubr.f32.mxu0 0.0
      %4501 = vmatmul.mubr.f32.gmra.mrb[0].mxu0 %v4321
      %v4502 = vpop.f32.mrb[0].mxu0
      %v4503 = vadd.f32 0.0, %v4502
      %v4504 = vpop.f32.mrb[0].mxu0
      %4505 = vmatprep.mubr.f32.mxu0 0.0
      %4506 = vmatmul.mubr.f32.gmra.mrb[0].mxu0 %v4323
      %v4507 = vpop.f32.mrb[0].mxu0
      %v4508 = vadd.f32 0.0, %v4507
      %v4509 = vpop.f32.mrb[0].mxu0
      %4510 = vmatprep.mubr.f32.mxu0 0.0
      %4511 = vmatmul.mubr.f32.gmra.mrb[0].mxu0 %v4325
      %v4512 = vpop.f32.mrb[0].mxu0
      %v4513 = vadd.f32 0.0, %v4512
      %v4514 = vpop.f32.mrb[0].mxu0
      %4515 = vmatprep.mubr.f32.mxu0 0.0
      %4516 = vmatmul.mubr.f32.gmra.mrb[0].mxu0 %v4327
      %v4517 = vpop.f32.mrb[0].mxu0
      %v4518 = vadd.f32 0.0, %v4517
      %v4519 = vpop.f32.mrb[0].mxu0
      %4520 = vmatprep.mubr.f32.mxu0 0.0
      %4521 = vmatmul.mubr.f32.gmra.mrb[0].mxu0 %v4329
      %v4522 = vpop.f32.mrb[0].mxu0
      %v4523 = vadd.f32 0.0, %v4522
      %v4524 = vpop.f32.mrb[0].mxu0
      %4525 = vmatprep.mubr.f32.mxu0 0.0
      %4526 = vmatmul.mubr.f32.gmra.mrb[0].mxu0 %v4331
      %v4527 = vpop.f32.mrb[0].mxu0
      %v4528 = vadd.f32 0.0, %v4527
      %v4529 = vpop.f32.mrb[0].mxu0
      %4530 = vmatprep.mubr.f32.mxu0 0.0
      %4531 = vmatmul.mubr.f32.gmra.mrb[0].mxu0 %v4333
      %v4532 = vpop.f32.mrb[0].mxu0
      %v4533 = vadd.f32 0.0, %v4532
      %v4534 = vpop.f32.mrb[0].mxu0
      %4535 = vmatprep.mubr.f32.mxu0 0.0
      %4536 = vmatmul.mubr.f32.gmra.mrb[0].mxu0 %v4335
      %v4537 = vpop.f32.mrb[0].mxu0
      %v4538 = vadd.f32 0.0, %v4537
      %v4539 = vpop.f32.mrb[0].mxu0
      %4540 = vmatprep.mubr.f32.mxu0 0.0
      %4541 = vmatmul.mubr.f32.gmra.mrb[0].mxu0 %v4337
      %v4542 = vpop.f32.mrb[0].mxu0
      %v4543 = vadd.f32 0.0, %v4542
      %v4544 = vpop.f32.mrb[0].mxu0
      %4545 = vmatprep.mubr.f32.mxu0 0.0
      %4546 = vmatmul.mubr.f32.gmra.mrb[0].mxu0 %v4339
      %v4547 = vpop.f32.mrb[0].mxu0
      %v4548 = vadd.f32 0.0, %v4547
      %v4549 = vpop.f32.mrb[0].mxu0
      %4550 = vmatprep.mubr.f32.mxu0 0.0
      %4551 = vmatmul.mubr.f32.gmra.mrb[0].mxu0 %v4341
      %v4552 = vpop.f32.mrb[0].mxu0
      %v4553 = vadd.f32 0.0, %v4552
      %v4554 = vpop.f32.mrb[0].mxu0
      %4555 = vmatprep.mubr.f32.mxu0 0.0
      %4556 = vmatmul.mubr.f32.gmra.mrb[0].mxu0 %v4343
      %v4557 = vpop.f32.mrb[0].mxu0
      %v4558 = vadd.f32 0.0, %v4557
      %v4559 = vpop.f32.mrb[0].mxu0
      %4560 = vmatprep.mubr.f32.mxu0 0.0
      %4561 = vmatmul.mubr.f32.gmra.mrb[0].mxu0 %v4345
      %v4562 = vpop.f32.mrb[0].mxu0
      %v4563 = vadd.f32 0.0, %v4562
      %v4564 = vpop.f32.mrb[0].mxu0
      %4565 = vmatprep.mubr.f32.mxu0 0.0
      %4566 = vmatmul.mubr.f32.gmra.mrb[0].mxu0 %v4347
      %v4567 = vpop.f32.mrb[0].mxu0
      %v4568 = vadd.f32 0.0, %v4567
      %v4569 = vpop.f32.mrb[0].mxu0
      %4570 = vmatprep.mubr.f32.mxu0 0.0
      %4571 = vmatmul.mubr.f32.gmra.mrb[0].mxu0 %v4349
      %v4572 = vpop.f32.mrb[0].mxu0
      %v4573 = vadd.f32 0.0, %v4572
      %v4574 = vpop.f32.mrb[0].mxu0
      %4575 = vdwg.mxu0
      %v4576 = vadd.f32 %v4255, %v4418
      %v4577 = vadd.f32 %v4256, %v4423
      %v4578 = vadd.f32 %v4257, %v4428
      %v4579 = vadd.f32 %v4258, %v4433
      %v4580 = vadd.f32 %v4259, %v4438
      %v4581 = vadd.f32 %v4260, %v4443
      %v4582 = vadd.f32 %v4261, %v4448
      %v4583 = vadd.f32 %v4262, %v4453
      %v4584 = vadd.f32 %v4263, %v4458
      %v4585 = vadd.f32 %v4264, %v4463
      %v4586 = vadd.f32 %v4265, %v4468
      %v4587 = vadd.f32 %v4266, %v4473
      %v4588 = vadd.f32 %v4267, %v4478
      %v4589 = vadd.f32 %v4268, %v4483
      %v4590 = vadd.f32 %v4269, %v4488
      %v4591 = vadd.f32 %v4270, %v4493
      %v4592 = vadd.f32 %v4271, %v4498
      %v4593 = vadd.f32 %v4272, %v4503
      %v4594 = vadd.f32 %v4273, %v4508
      %v4595 = vadd.f32 %v4274, %v4513
      %v4596 = vadd.f32 %v4275, %v4518
      %v4597 = vadd.f32 %v4276, %v4523
      %v4598 = vadd.f32 %v4277, %v4528
      %v4599 = vadd.f32 %v4278, %v4533
      %v4600 = vadd.f32 %v4279, %v4538
      %v4601 = vadd.f32 %v4280, %v4543
      %v4602 = vadd.f32 %v4281, %v4548
      %v4603 = vadd.f32 %v4282, %v4553
      %v4604 = vadd.f32 %v4283, %v4558
      %v4605 = vadd.f32 %v4284, %v4563
      %v4606 = vadd.f32 %v4285, %v4568
      %v4607 = vadd.f32 %v4286, %v4573
      %v4624 = vrot.slane %v3767, 1
      %v4625 = vrot.slane %v3768, 1
      %v4626 = vsel %vm1749, %v4624, %v4625
      %v4627 = vrot.slane %v3769, 1
      %v4628 = vsel %vm1749, %v4625, %v4627
      %v4629 = vrot.slane %v3771, 1
      %v4630 = vrot.slane %v3772, 1
      %v4631 = vsel %vm1749, %v4629, %v4630
      %v4632 = vrot.slane %v3773, 1
      %v4633 = vsel %vm1749, %v4630, %v4632
      %v4634 = vrot.slane %v3775, 1
      %v4635 = vrot.slane %v3776, 1
      %v4636 = vsel %vm1749, %v4634, %v4635
      %v4637 = vrot.slane %v3777, 1
      %v4638 = vsel %vm1749, %v4635, %v4637
      %v4639 = vrot.slane %v3779, 1
      %v4640 = vrot.slane %v3780, 1
      %v4641 = vsel %vm1749, %v4639, %v4640
      %v4642 = vrot.slane %v3781, 1
      %v4643 = vsel %vm1749, %v4640, %v4642
      %v4644 = vrot.slane %v3783, 1
      %v4645 = vrot.slane %v3784, 1
      %v4646 = vsel %vm1749, %v4644, %v4645
      %v4647 = vrot.slane %v3785, 1
      %v4648 = vsel %vm1749, %v4645, %v4647
      %v4649 = vrot.slane %v3787, 1
      %v4650 = vrot.slane %v3788, 1
      %v4651 = vsel %vm1749, %v4649, %v4650
      %v4652 = vrot.slane %v3789, 1
      %v4653 = vsel %vm1749, %v4650, %v4652
      %v4654 = vrot.slane %v3791, 1
      %v4655 = vrot.slane %v3792, 1
      %v4656 = vsel %vm1749, %v4654, %v4655
      %v4657 = vrot.slane %v3793, 1
      %v4658 = vsel %vm1749, %v4655, %v4657
      %v4659 = vrot.slane %v3795, 1
      %v4660 = vrot.slane %v3796, 1
      %v4661 = vsel %vm1749, %v4659, %v4660
      %v4662 = vrot.slane %v3797, 1
      %v4663 = vsel %vm1749, %v4660, %v4662
      %v4664 = vrot.slane %v3799, 1
      %v4665 = vrot.slane %v3800, 1
      %v4666 = vsel %vm1749, %v4664, %v4665
      %v4667 = vrot.slane %v3801, 1
      %v4668 = vsel %vm1749, %v4665, %v4667
      %v4669 = vrot.slane %v3803, 1
      %v4670 = vrot.slane %v3804, 1
      %v4671 = vsel %vm1749, %v4669, %v4670
      %v4672 = vrot.slane %v3805, 1
      %v4673 = vsel %vm1749, %v4670, %v4672
      %v4674 = vrot.slane %v3807, 1
      %v4675 = vrot.slane %v3808, 1
      %v4676 = vsel %vm1749, %v4674, %v4675
      %v4677 = vrot.slane %v3809, 1
      %v4678 = vsel %vm1749, %v4675, %v4677
      %v4679 = vrot.slane %v3811, 1
      %v4680 = vrot.slane %v3812, 1
      %v4681 = vsel %vm1749, %v4679, %v4680
      %v4682 = vrot.slane %v3813, 1
      %v4683 = vsel %vm1749, %v4680, %v4682
      %v4684 = vrot.slane %v3815, 1
      %v4685 = vrot.slane %v3816, 1
      %v4686 = vsel %vm1749, %v4684, %v4685
      %v4687 = vrot.slane %v3817, 1
      %v4688 = vsel %vm1749, %v4685, %v4687
      %v4689 = vrot.slane %v3819, 1
      %v4690 = vrot.slane %v3820, 1
      %v4691 = vsel %vm1749, %v4689, %v4690
      %v4692 = vrot.slane %v3821, 1
      %v4693 = vsel %vm1749, %v4690, %v4692
      %v4694 = vrot.slane %v3823, 1
      %v4695 = vrot.slane %v3824, 1
      %v4696 = vsel %vm1749, %v4694, %v4695
      %v4697 = vrot.slane %v3825, 1
      %v4698 = vsel %vm1749, %v4695, %v4697
      %v4699 = vrot.slane %v3827, 1
      %v4700 = vrot.slane %v3828, 1
      %v4701 = vsel %vm1749, %v4699, %v4700
      %v4702 = vrot.slane %v3829, 1
      %v4703 = vsel %vm1749, %v4700, %v4702
      %v4704 = vsel %vm448, %v4626, 0
      %v4706 = vsel %vm448, %v4628, 0
      %v4708 = vsel %vm448, %v4631, 0
      %v4710 = vsel %vm448, %v4633, 0
      %v4712 = vsel %vm448, %v4636, 0
      %v4714 = vsel %vm448, %v4638, 0
      %v4716 = vsel %vm448, %v4641, 0
      %v4718 = vsel %vm448, %v4643, 0
      %v4720 = vsel %vm448, %v4646, 0
      %v4722 = vsel %vm448, %v4648, 0
      %v4724 = vsel %vm448, %v4651, 0
      %v4726 = vsel %vm448, %v4653, 0
      %v4728 = vsel %vm448, %v4656, 0
      %v4730 = vsel %vm448, %v4658, 0
      %v4732 = vsel %vm448, %v4661, 0
      %v4734 = vsel %vm448, %v4663, 0
      %v4736 = vsel %vm448, %v4666, 0
      %v4738 = vsel %vm448, %v4668, 0
      %v4740 = vsel %vm448, %v4671, 0
      %v4742 = vsel %vm448, %v4673, 0
      %v4744 = vsel %vm448, %v4676, 0
      %v4746 = vsel %vm448, %v4678, 0
      %v4748 = vsel %vm448, %v4681, 0
      %v4750 = vsel %vm448, %v4683, 0
      %v4752 = vsel %vm448, %v4686, 0
      %v4754 = vsel %vm448, %v4688, 0
      %v4756 = vsel %vm448, %v4691, 0
      %v4758 = vsel %vm448, %v4693, 0
      %v4760 = vsel %vm448, %v4696, 0
      %v4762 = vsel %vm448, %v4698, 0
      %v4764 = vsel %vm448, %v4701, 0
      %v4766 = vsel %vm448, %v4703, 0
      %4768 = vmatprep.subr.mxu0 0.0
      %4769 = vmatpush1.msra.mxu0 %v357
      %4770 = vmatprep.subr.mxu0 0.0
      %4771 = vmatpush1.msra.mxu0 0.0
      %4772 = vmatprep.subr.mxu0 0.0
      %4773 = vmatpush1.msra.mxu0 0.0
      %4774 = vmatprep.subr.mxu0 0.0
      %4775 = vmatpush1.msra.mxu0 0.0
      %4776 = vmatprep.subr.mxu0 0.0
      %4777 = vmatpush1.msra.mxu0 0.0
      %4778 = vmatprep.subr.mxu0 0.0
      %4779 = vmatpush1.msra.mxu0 0.0
      %4780 = vmatprep.subr.mxu0 0.0
      %4781 = vmatpush1.msra.mxu0 0.0
      %4782 = vmatprep.subr.mxu0 0.0
      %4783 = vmatpush1.msra.mxu0 0.0
      %4784 = vmatprep.subr.mxu0 0.0
      %4785 = vmatpush1.msra.mxu0 0.0
      %4786 = vmatprep.subr.mxu0 0.0
      %4787 = vmatpush1.msra.mxu0 0.0
      %4788 = vmatprep.subr.mxu0 0.0
      %4789 = vmatpush1.msra.mxu0 0.0
      %4790 = vmatprep.subr.mxu0 0.0
      %4791 = vmatpush1.msra.mxu0 0.0
      %4792 = vmatprep.subr.mxu0 0.0
      %4793 = vmatpush1.msra.mxu0 0.0
      %4794 = vmatprep.subr.mxu0 0.0
      %4795 = vmatpush1.msra.mxu0 0.0
      %4796 = vmatprep.subr.mxu0 0.0
      %4797 = vmatpush1.msra.mxu0 0.0
      %4798 = vmatprep.subr.mxu0 0.0
      %4799 = vmatpush1.msra.mxu0 0.0
      %4800 = vmatprep.subr.mxu0 0.0
      %4801 = vmatpush1.msra.mxu0 0.0
      %4802 = vmatprep.subr.mxu0 0.0
      %4803 = vmatpush1.msra.mxu0 0.0
      %4804 = vmatprep.subr.mxu0 0.0
      %4805 = vmatpush1.msra.mxu0 0.0
      %4806 = vmatprep.subr.mxu0 0.0
      %4807 = vmatpush1.msra.mxu0 0.0
      %4808 = vmatprep.subr.mxu0 0.0
      %4809 = vmatpush1.msra.mxu0 0.0
      %4810 = vmatprep.subr.mxu0 0.0
      %4811 = vmatpush1.msra.mxu0 0.0
      %4812 = vmatprep.subr.mxu0 0.0
      %4813 = vmatpush1.msra.mxu0 0.0
      %4814 = vmatprep.subr.mxu0 0.0
      %4815 = vmatpush1.msra.mxu0 0.0
      %4816 = vmatprep.subr.mxu0 0.0
      %4817 = vmatpush1.msra.mxu0 0.0
      %4818 = vmatprep.subr.mxu0 0.0
      %4819 = vmatpush1.msra.mxu0 0.0
      %4820 = vmatprep.subr.mxu0 0.0
      %4821 = vmatpush1.msra.mxu0 0.0
      %4822 = vmatprep.subr.mxu0 0.0
      %4823 = vmatpush1.msra.mxu0 0.0
      %4824 = vmatprep.subr.mxu0 0.0
      %4825 = vmatpush1.msra.mxu0 0.0
      %4826 = vmatprep.subr.mxu0 0.0
      %4827 = vmatpush1.msra.mxu0 0.0
      %4828 = vmatprep.subr.mxu0 0.0
      %4829 = vmatpush1.msra.mxu0 0.0
      %4830 = vmatprep.subr.mxu0 0.0
      %4831 = vmatpush1.msra.mxu0 0.0
      %4832 = vmatprep.mubr.f32.mxu0 0.0
      %4833 = vmatmul.mubr.f32.gmra.mrb[0].mxu0 %v4704
      %v4834 = vpop.f32.mrb[0].mxu0
      %v4835 = vadd.f32 0.0, %v4834
      %v4836 = vpop.f32.mrb[0].mxu0
      %4837 = vmatprep.mubr.f32.mxu0 0.0
      %4838 = vmatmul.mubr.f32.gmra.mrb[0].mxu0 %v4706
      %v4839 = vpop.f32.mrb[0].mxu0
      %v4840 = vadd.f32 0.0, %v4839
      %v4841 = vpop.f32.mrb[0].mxu0
      %4842 = vmatprep.mubr.f32.mxu0 0.0
      %4843 = vmatmul.mubr.f32.gmra.mrb[0].mxu0 %v4708
      %v4844 = vpop.f32.mrb[0].mxu0
      %v4845 = vadd.f32 0.0, %v4844
      %v4846 = vpop.f32.mrb[0].mxu0
      %4847 = vmatprep.mubr.f32.mxu0 0.0
      %4848 = vmatmul.mubr.f32.gmra.mrb[0].mxu0 %v4710
      %v4849 = vpop.f32.mrb[0].mxu0
      %v4850 = vadd.f32 0.0, %v4849
      %v4851 = vpop.f32.mrb[0].mxu0
      %4852 = vmatprep.mubr.f32.mxu0 0.0
      %4853 = vmatmul.mubr.f32.gmra.mrb[0].mxu0 %v4712
      %v4854 = vpop.f32.mrb[0].mxu0
      %v4855 = vadd.f32 0.0, %v4854
      %v4856 = vpop.f32.mrb[0].mxu0
      %4857 = vmatprep.mubr.f32.mxu0 0.0
      %4858 = vmatmul.mubr.f32.gmra.mrb[0].mxu0 %v4714
      %v4859 = vpop.f32.mrb[0].mxu0
      %v4860 = vadd.f32 0.0, %v4859
      %v4861 = vpop.f32.mrb[0].mxu0
      %4862 = vmatprep.mubr.f32.mxu0 0.0
      %4863 = vmatmul.mubr.f32.gmra.mrb[0].mxu0 %v4716
      %v4864 = vpop.f32.mrb[0].mxu0
      %v4865 = vadd.f32 0.0, %v4864
      %v4866 = vpop.f32.mrb[0].mxu0
      %4867 = vmatprep.mubr.f32.mxu0 0.0
      %4868 = vmatmul.mubr.f32.gmra.mrb[0].mxu0 %v4718
      %v4869 = vpop.f32.mrb[0].mxu0
      %v4870 = vadd.f32 0.0, %v4869
      %v4871 = vpop.f32.mrb[0].mxu0
      %4872 = vmatprep.mubr.f32.mxu0 0.0
      %4873 = vmatmul.mubr.f32.gmra.mrb[0].mxu0 %v4720
      %v4874 = vpop.f32.mrb[0].mxu0
      %v4875 = vadd.f32 0.0, %v4874
      %v4876 = vpop.f32.mrb[0].mxu0
      %4877 = vmatprep.mubr.f32.mxu0 0.0
      %4878 = vmatmul.mubr.f32.gmra.mrb[0].mxu0 %v4722
      %v4879 = vpop.f32.mrb[0].mxu0
      %v4880 = vadd.f32 0.0, %v4879
      %v4881 = vpop.f32.mrb[0].mxu0
      %4882 = vmatprep.mubr.f32.mxu0 0.0
      %4883 = vmatmul.mubr.f32.gmra.mrb[0].mxu0 %v4724
      %v4884 = vpop.f32.mrb[0].mxu0
      %v4885 = vadd.f32 0.0, %v4884
      %v4886 = vpop.f32.mrb[0].mxu0
      %4887 = vmatprep.mubr.f32.mxu0 0.0
      %4888 = vmatmul.mubr.f32.gmra.mrb[0].mxu0 %v4726
      %v4889 = vpop.f32.mrb[0].mxu0
      %v4890 = vadd.f32 0.0, %v4889
      %v4891 = vpop.f32.mrb[0].mxu0
      %4892 = vmatprep.mubr.f32.mxu0 0.0
      %4893 = vmatmul.mubr.f32.gmra.mrb[0].mxu0 %v4728
      %v4894 = vpop.f32.mrb[0].mxu0
      %v4895 = vadd.f32 0.0, %v4894
      %v4896 = vpop.f32.mrb[0].mxu0
      %4897 = vmatprep.mubr.f32.mxu0 0.0
      %4898 = vmatmul.mubr.f32.gmra.mrb[0].mxu0 %v4730
      %v4899 = vpop.f32.mrb[0].mxu0
      %v4900 = vadd.f32 0.0, %v4899
      %v4901 = vpop.f32.mrb[0].mxu0
      %4902 = vmatprep.mubr.f32.mxu0 0.0
      %4903 = vmatmul.mubr.f32.gmra.mrb[0].mxu0 %v4732
      %v4904 = vpop.f32.mrb[0].mxu0
      %v4905 = vadd.f32 0.0, %v4904
      %v4906 = vpop.f32.mrb[0].mxu0
      %4907 = vmatprep.mubr.f32.mxu0 0.0
      %4908 = vmatmul.mubr.f32.gmra.mrb[0].mxu0 %v4734
      %v4909 = vpop.f32.mrb[0].mxu0
      %v4910 = vadd.f32 0.0, %v4909
      %v4911 = vpop.f32.mrb[0].mxu0
      %4912 = vmatprep.mubr.f32.mxu0 0.0
      %4913 = vmatmul.mubr.f32.gmra.mrb[0].mxu0 %v4736
      %v4914 = vpop.f32.mrb[0].mxu0
      %v4915 = vadd.f32 0.0, %v4914
      %v4916 = vpop.f32.mrb[0].mxu0
      %4917 = vmatprep.mubr.f32.mxu0 0.0
      %4918 = vmatmul.mubr.f32.gmra.mrb[0].mxu0 %v4738
      %v4919 = vpop.f32.mrb[0].mxu0
      %v4920 = vadd.f32 0.0, %v4919
      %v4921 = vpop.f32.mrb[0].mxu0
      %4922 = vmatprep.mubr.f32.mxu0 0.0
      %4923 = vmatmul.mubr.f32.gmra.mrb[0].mxu0 %v4740
      %v4924 = vpop.f32.mrb[0].mxu0
      %v4925 = vadd.f32 0.0, %v4924
      %v4926 = vpop.f32.mrb[0].mxu0
      %4927 = vmatprep.mubr.f32.mxu0 0.0
      %4928 = vmatmul.mubr.f32.gmra.mrb[0].mxu0 %v4742
      %v4929 = vpop.f32.mrb[0].mxu0
      %v4930 = vadd.f32 0.0, %v4929
      %v4931 = vpop.f32.mrb[0].mxu0
      %4932 = vmatprep.mubr.f32.mxu0 0.0
      %4933 = vmatmul.mubr.f32.gmra.mrb[0].mxu0 %v4744
      %v4934 = vpop.f32.mrb[0].mxu0
      %v4935 = vadd.f32 0.0, %v4934
      %v4936 = vpop.f32.mrb[0].mxu0
      %4937 = vmatprep.mubr.f32.mxu0 0.0
      %4938 = vmatmul.mubr.f32.gmra.mrb[0].mxu0 %v4746
      %v4939 = vpop.f32.mrb[0].mxu0
      %v4940 = vadd.f32 0.0, %v4939
      %v4941 = vpop.f32.mrb[0].mxu0
      %4942 = vmatprep.mubr.f32.mxu0 0.0
      %4943 = vmatmul.mubr.f32.gmra.mrb[0].mxu0 %v4748
      %v4944 = vpop.f32.mrb[0].mxu0
      %v4945 = vadd.f32 0.0, %v4944
      %v4946 = vpop.f32.mrb[0].mxu0
      %4947 = vmatprep.mubr.f32.mxu0 0.0
      %4948 = vmatmul.mubr.f32.gmra.mrb[0].mxu0 %v4750
      %v4949 = vpop.f32.mrb[0].mxu0
      %v4950 = vadd.f32 0.0, %v4949
      %v4951 = vpop.f32.mrb[0].mxu0
      %4952 = vmatprep.mubr.f32.mxu0 0.0
      %4953 = vmatmul.mubr.f32.gmra.mrb[0].mxu0 %v4752
      %v4954 = vpop.f32.mrb[0].mxu0
      %v4955 = vadd.f32 0.0, %v4954
      %v4956 = vpop.f32.mrb[0].mxu0
      %4957 = vmatprep.mubr.f32.mxu0 0.0
      %4958 = vmatmul.mubr.f32.gmra.mrb[0].mxu0 %v4754
      %v4959 = vpop.f32.mrb[0].mxu0
      %v4960 = vadd.f32 0.0, %v4959
      %v4961 = vpop.f32.mrb[0].mxu0
      %4962 = vmatprep.mubr.f32.mxu0 0.0
      %4963 = vmatmul.mubr.f32.gmra.mrb[0].mxu0 %v4756
      %v4964 = vpop.f32.mrb[0].mxu0
      %v4965 = vadd.f32 0.0, %v4964
      %v4966 = vpop.f32.mrb[0].mxu0
      %4967 = vmatprep.mubr.f32.mxu0 0.0
      %4968 = vmatmul.mubr.f32.gmra.mrb[0].mxu0 %v4758
      %v4969 = vpop.f32.mrb[0].mxu0
      %v4970 = vadd.f32 0.0, %v4969
      %v4971 = vpop.f32.mrb[0].mxu0
      %4972 = vmatprep.mubr.f32.mxu0 0.0
      %4973 = vmatmul.mubr.f32.gmra.mrb[0].mxu0 %v4760
      %v4974 = vpop.f32.mrb[0].mxu0
      %v4975 = vadd.f32 0.0, %v4974
      %v4976 = vpop.f32.mrb[0].mxu0
      %4977 = vmatprep.mubr.f32.mxu0 0.0
      %4978 = vmatmul.mubr.f32.gmra.mrb[0].mxu0 %v4762
      %v4979 = vpop.f32.mrb[0].mxu0
      %v4980 = vadd.f32 0.0, %v4979
      %v4981 = vpop.f32.mrb[0].mxu0
      %4982 = vmatprep.mubr.f32.mxu0 0.0
      %4983 = vmatmul.mubr.f32.gmra.mrb[0].mxu0 %v4764
      %v4984 = vpop.f32.mrb[0].mxu0
      %v4985 = vadd.f32 0.0, %v4984
      %v4986 = vpop.f32.mrb[0].mxu0
      %4987 = vmatprep.mubr.f32.mxu0 0.0
      %4988 = vmatmul.mubr.f32.gmra.mrb[0].mxu0 %v4766
      %v4989 = vpop.f32.mrb[0].mxu0
      %v4990 = vadd.f32 0.0, %v4989
      %v4991 = vpop.f32.mrb[0].mxu0
      %4992 = vdwg.mxu0
      %v4993 = vadd.f32 %v4576, %v4835
      %v4994 = vadd.f32 %v4577, %v4840
      %v4995 = vadd.f32 %v4578, %v4845
      %v4996 = vadd.f32 %v4579, %v4850
      %v4997 = vadd.f32 %v4580, %v4855
      %v4998 = vadd.f32 %v4581, %v4860
      %v4999 = vadd.f32 %v4582, %v4865
      %v5000 = vadd.f32 %v4583, %v4870
      %v5001 = vadd.f32 %v4584, %v4875
      %v5002 = vadd.f32 %v4585, %v4880
      %v5003 = vadd.f32 %v4586, %v4885
      %v5004 = vadd.f32 %v4587, %v4890
      %v5005 = vadd.f32 %v4588, %v4895
      %v5006 = vadd.f32 %v4589, %v4900
      %v5007 = vadd.f32 %v4590, %v4905
      %v5008 = vadd.f32 %v4591, %v4910
      %v5009 = vadd.f32 %v4592, %v4915
      %v5010 = vadd.f32 %v4593, %v4920
      %v5011 = vadd.f32 %v4594, %v4925
      %v5012 = vadd.f32 %v4595, %v4930
      %v5013 = vadd.f32 %v4596, %v4935
      %v5014 = vadd.f32 %v4597, %v4940
      %v5015 = vadd.f32 %v4598, %v4945
      %v5016 = vadd.f32 %v4599, %v4950
      %v5017 = vadd.f32 %v4600, %v4955
      %v5018 = vadd.f32 %v4601, %v4960
      %v5019 = vadd.f32 %v4602, %v4965
      %v5020 = vadd.f32 %v4603, %v4970
      %v5021 = vadd.f32 %v4604, %v4975
      %v5022 = vadd.f32 %v4605, %v4980
      %v5023 = vadd.f32 %v4606, %v4985
      %v5024 = vadd.f32 %v4607, %v4990
      %v5028 = vrot.slane %v3830, 7
      %v5029 = vrot.slane %v3831, 7
      %v5030 = vsel %vm1067, %v5028, %v5029
      %v5031 = vrot.slane %v3832, 7
      %v5032 = vsel %vm1067, %v5029, %v5031
      %v5033 = vsel %vm448, %v5030, 0
      %v5035 = vsel %vm448, %v5032, 0
      %5037 = vmatprep.subr.mxu0 0.0
      %5038 = vmatpush1.msra.mxu0 %v358
      %5039 = vmatprep.subr.mxu0 0.0
      %5040 = vmatpush1.msra.mxu0 0.0
      %5041 = vmatprep.subr.mxu0 0.0
      %5042 = vmatpush1.msra.mxu0 0.0
      %5043 = vmatprep.subr.mxu0 0.0
      %5044 = vmatpush1.msra.mxu0 0.0
      %5045 = vmatprep.subr.mxu0 0.0
      %5046 = vmatpush1.msra.mxu0 0.0
      %5047 = vmatprep.subr.mxu0 0.0
      %5048 = vmatpush1.msra.mxu0 0.0
      %5049 = vmatprep.subr.mxu0 0.0
      %5050 = vmatpush1.msra.mxu0 0.0
      %5051 = vmatprep.subr.mxu0 0.0
      %5052 = vmatpush1.msra.mxu0 0.0
      %5053 = vmatprep.subr.mxu0 0.0
      %5054 = vmatpush1.msra.mxu0 0.0
      %5055 = vmatprep.subr.mxu0 0.0
      %5056 = vmatpush1.msra.mxu0 0.0
      %5057 = vmatprep.subr.mxu0 0.0
      %5058 = vmatpush1.msra.mxu0 0.0
      %5059 = vmatprep.subr.mxu0 0.0
      %5060 = vmatpush1.msra.mxu0 0.0
      %5061 = vmatprep.subr.mxu0 0.0
      %5062 = vmatpush1.msra.mxu0 0.0
      %5063 = vmatprep.subr.mxu0 0.0
      %5064 = vmatpush1.msra.mxu0 0.0
      %5065 = vmatprep.subr.mxu0 0.0
      %5066 = vmatpush1.msra.mxu0 0.0
      %5067 = vmatprep.subr.mxu0 0.0
      %5068 = vmatpush1.msra.mxu0 0.0
      %5069 = vmatprep.subr.mxu0 0.0
      %5070 = vmatpush1.msra.mxu0 0.0
      %5071 = vmatprep.subr.mxu0 0.0
      %5072 = vmatpush1.msra.mxu0 0.0
      %5073 = vmatprep.subr.mxu0 0.0
      %5074 = vmatpush1.msra.mxu0 0.0
      %5075 = vmatprep.subr.mxu0 0.0
      %5076 = vmatpush1.msra.mxu0 0.0
      %5077 = vmatprep.subr.mxu0 0.0
      %5078 = vmatpush1.msra.mxu0 0.0
      %5079 = vmatprep.subr.mxu0 0.0
      %5080 = vmatpush1.msra.mxu0 0.0
      %5081 = vmatprep.subr.mxu0 0.0
      %5082 = vmatpush1.msra.mxu0 0.0
      %5083 = vmatprep.subr.mxu0 0.0
      %5084 = vmatpush1.msra.mxu0 0.0
      %5085 = vmatprep.subr.mxu0 0.0
      %5086 = vmatpush1.msra.mxu0 0.0
      %5087 = vmatprep.subr.mxu0 0.0
      %5088 = vmatpush1.msra.mxu0 0.0
      %5089 = vmatprep.subr.mxu0 0.0
      %5090 = vmatpush1.msra.mxu0 0.0
      %5091 = vmatprep.subr.mxu0 0.0
      %5092 = vmatpush1.msra.mxu0 0.0
      %5093 = vmatprep.subr.mxu0 0.0
      %5094 = vmatpush1.msra.mxu0 0.0
      %5095 = vmatprep.subr.mxu0 0.0
      %5096 = vmatpush1.msra.mxu0 0.0
      %5097 = vmatprep.subr.mxu0 0.0
      %5098 = vmatpush1.msra.mxu0 0.0
      %5099 = vmatprep.subr.mxu0 0.0
      %5100 = vmatpush1.msra.mxu0 0.0
      %5101 = vmatprep.mubr.f32.mxu0 0.0
      %5102 = vmatmul.mubr.f32.gmra.mrb[0].mxu0 %v3970
      %v5103 = vpop.f32.mrb[0].mxu0
      %v5104 = vadd.f32 0.0, %v5103
      %v5105 = vpop.f32.mrb[0].mxu0
      %5106 = vmatprep.mubr.f32.mxu0 0.0
      %5107 = vmatmul.mubr.f32.gmra.mrb[0].mxu0 %v3972
      %v5108 = vpop.f32.mrb[0].mxu0
      %v5109 = vadd.f32 0.0, %v5108
      %v5110 = vpop.f32.mrb[0].mxu0
      %5111 = vmatprep.mubr.f32.mxu0 0.0
      %5112 = vmatmul.mubr.f32.gmra.mrb[0].mxu0 %v3974
      %v5113 = vpop.f32.mrb[0].mxu0
      %v5114 = vadd.f32 0.0, %v5113
      %v5115 = vpop.f32.mrb[0].mxu0
      %5116 = vmatprep.mubr.f32.mxu0 0.0
      %5117 = vmatmul.mubr.f32.gmra.mrb[0].mxu0 %v3976
      %v5118 = vpop.f32.mrb[0].mxu0
      %v5119 = vadd.f32 0.0, %v5118
      %v5120 = vpop.f32.mrb[0].mxu0
      %5121 = vmatprep.mubr.f32.mxu0 0.0
      %5122 = vmatmul.mubr.f32.gmra.mrb[0].mxu0 %v3978
      %v5123 = vpop.f32.mrb[0].mxu0
      %v5124 = vadd.f32 0.0, %v5123
      %v5125 = vpop.f32.mrb[0].mxu0
      %5126 = vmatprep.mubr.f32.mxu0 0.0
      %5127 = vmatmul.mubr.f32.gmra.mrb[0].mxu0 %v3980
      %v5128 = vpop.f32.mrb[0].mxu0
      %v5129 = vadd.f32 0.0, %v5128
      %v5130 = vpop.f32.mrb[0].mxu0
      %5131 = vmatprep.mubr.f32.mxu0 0.0
      %5132 = vmatmul.mubr.f32.gmra.mrb[0].mxu0 %v3982
      %v5133 = vpop.f32.mrb[0].mxu0
      %v5134 = vadd.f32 0.0, %v5133
      %v5135 = vpop.f32.mrb[0].mxu0
      %5136 = vmatprep.mubr.f32.mxu0 0.0
      %5137 = vmatmul.mubr.f32.gmra.mrb[0].mxu0 %v3984
      %v5138 = vpop.f32.mrb[0].mxu0
      %v5139 = vadd.f32 0.0, %v5138
      %v5140 = vpop.f32.mrb[0].mxu0
      %5141 = vmatprep.mubr.f32.mxu0 0.0
      %5142 = vmatmul.mubr.f32.gmra.mrb[0].mxu0 %v3986
      %v5143 = vpop.f32.mrb[0].mxu0
      %v5144 = vadd.f32 0.0, %v5143
      %v5145 = vpop.f32.mrb[0].mxu0
      %5146 = vmatprep.mubr.f32.mxu0 0.0
      %5147 = vmatmul.mubr.f32.gmra.mrb[0].mxu0 %v3988
      %v5148 = vpop.f32.mrb[0].mxu0
      %v5149 = vadd.f32 0.0, %v5148
      %v5150 = vpop.f32.mrb[0].mxu0
      %5151 = vmatprep.mubr.f32.mxu0 0.0
      %5152 = vmatmul.mubr.f32.gmra.mrb[0].mxu0 %v3990
      %v5153 = vpop.f32.mrb[0].mxu0
      %v5154 = vadd.f32 0.0, %v5153
      %v5155 = vpop.f32.mrb[0].mxu0
      %5156 = vmatprep.mubr.f32.mxu0 0.0
      %5157 = vmatmul.mubr.f32.gmra.mrb[0].mxu0 %v3992
      %v5158 = vpop.f32.mrb[0].mxu0
      %v5159 = vadd.f32 0.0, %v5158
      %v5160 = vpop.f32.mrb[0].mxu0
      %5161 = vmatprep.mubr.f32.mxu0 0.0
      %5162 = vmatmul.mubr.f32.gmra.mrb[0].mxu0 %v3994
      %v5163 = vpop.f32.mrb[0].mxu0
      %v5164 = vadd.f32 0.0, %v5163
      %v5165 = vpop.f32.mrb[0].mxu0
      %5166 = vmatprep.mubr.f32.mxu0 0.0
      %5167 = vmatmul.mubr.f32.gmra.mrb[0].mxu0 %v3996
      %v5168 = vpop.f32.mrb[0].mxu0
      %v5169 = vadd.f32 0.0, %v5168
      %v5170 = vpop.f32.mrb[0].mxu0
      %5171 = vmatprep.mubr.f32.mxu0 0.0
      %5172 = vmatmul.mubr.f32.gmra.mrb[0].mxu0 %v3998
      %v5173 = vpop.f32.mrb[0].mxu0
      %v5174 = vadd.f32 0.0, %v5173
      %v5175 = vpop.f32.mrb[0].mxu0
      %5176 = vmatprep.mubr.f32.mxu0 0.0
      %5177 = vmatmul.mubr.f32.gmra.mrb[0].mxu0 %v4000
      %v5178 = vpop.f32.mrb[0].mxu0
      %v5179 = vadd.f32 0.0, %v5178
      %v5180 = vpop.f32.mrb[0].mxu0
      %5181 = vmatprep.mubr.f32.mxu0 0.0
      %5182 = vmatmul.mubr.f32.gmra.mrb[0].mxu0 %v4002
      %v5183 = vpop.f32.mrb[0].mxu0
      %v5184 = vadd.f32 0.0, %v5183
      %v5185 = vpop.f32.mrb[0].mxu0
      %5186 = vmatprep.mubr.f32.mxu0 0.0
      %5187 = vmatmul.mubr.f32.gmra.mrb[0].mxu0 %v4004
      %v5188 = vpop.f32.mrb[0].mxu0
      %v5189 = vadd.f32 0.0, %v5188
      %v5190 = vpop.f32.mrb[0].mxu0
      %5191 = vmatprep.mubr.f32.mxu0 0.0
      %5192 = vmatmul.mubr.f32.gmra.mrb[0].mxu0 %v4006
      %v5193 = vpop.f32.mrb[0].mxu0
      %v5194 = vadd.f32 0.0, %v5193
      %v5195 = vpop.f32.mrb[0].mxu0
      %5196 = vmatprep.mubr.f32.mxu0 0.0
      %5197 = vmatmul.mubr.f32.gmra.mrb[0].mxu0 %v4008
      %v5198 = vpop.f32.mrb[0].mxu0
      %v5199 = vadd.f32 0.0, %v5198
      %v5200 = vpop.f32.mrb[0].mxu0
      %5201 = vmatprep.mubr.f32.mxu0 0.0
      %5202 = vmatmul.mubr.f32.gmra.mrb[0].mxu0 %v4010
      %v5203 = vpop.f32.mrb[0].mxu0
      %v5204 = vadd.f32 0.0, %v5203
      %v5205 = vpop.f32.mrb[0].mxu0
      %5206 = vmatprep.mubr.f32.mxu0 0.0
      %5207 = vmatmul.mubr.f32.gmra.mrb[0].mxu0 %v4012
      %v5208 = vpop.f32.mrb[0].mxu0
      %v5209 = vadd.f32 0.0, %v5208
      %v5210 = vpop.f32.mrb[0].mxu0
      %5211 = vmatprep.mubr.f32.mxu0 0.0
      %5212 = vmatmul.mubr.f32.gmra.mrb[0].mxu0 %v4014
      %v5213 = vpop.f32.mrb[0].mxu0
      %v5214 = vadd.f32 0.0, %v5213
      %v5215 = vpop.f32.mrb[0].mxu0
      %5216 = vmatprep.mubr.f32.mxu0 0.0
      %5217 = vmatmul.mubr.f32.gmra.mrb[0].mxu0 %v4016
      %v5218 = vpop.f32.mrb[0].mxu0
      %v5219 = vadd.f32 0.0, %v5218
      %v5220 = vpop.f32.mrb[0].mxu0
      %5221 = vmatprep.mubr.f32.mxu0 0.0
      %5222 = vmatmul.mubr.f32.gmra.mrb[0].mxu0 %v4018
      %v5223 = vpop.f32.mrb[0].mxu0
      %v5224 = vadd.f32 0.0, %v5223
      %v5225 = vpop.f32.mrb[0].mxu0
      %5226 = vmatprep.mubr.f32.mxu0 0.0
      %5227 = vmatmul.mubr.f32.gmra.mrb[0].mxu0 %v4020
      %v5228 = vpop.f32.mrb[0].mxu0
      %v5229 = vadd.f32 0.0, %v5228
      %v5230 = vpop.f32.mrb[0].mxu0
      %5231 = vmatprep.mubr.f32.mxu0 0.0
      %5232 = vmatmul.mubr.f32.gmra.mrb[0].mxu0 %v4022
      %v5233 = vpop.f32.mrb[0].mxu0
      %v5234 = vadd.f32 0.0, %v5233
      %v5235 = vpop.f32.mrb[0].mxu0
      %5236 = vmatprep.mubr.f32.mxu0 0.0
      %5237 = vmatmul.mubr.f32.gmra.mrb[0].mxu0 %v4024
      %v5238 = vpop.f32.mrb[0].mxu0
      %v5239 = vadd.f32 0.0, %v5238
      %v5240 = vpop.f32.mrb[0].mxu0
      %5241 = vmatprep.mubr.f32.mxu0 0.0
      %5242 = vmatmul.mubr.f32.gmra.mrb[0].mxu0 %v4026
      %v5243 = vpop.f32.mrb[0].mxu0
      %v5244 = vadd.f32 0.0, %v5243
      %v5245 = vpop.f32.mrb[0].mxu0
      %5246 = vmatprep.mubr.f32.mxu0 0.0
      %5247 = vmatmul.mubr.f32.gmra.mrb[0].mxu0 %v4028
      %v5248 = vpop.f32.mrb[0].mxu0
      %v5249 = vadd.f32 0.0, %v5248
      %v5250 = vpop.f32.mrb[0].mxu0
      %5251 = vmatprep.mubr.f32.mxu0 0.0
      %5252 = vmatmul.mubr.f32.gmra.mrb[0].mxu0 %v5033
      %v5253 = vpop.f32.mrb[0].mxu0
      %v5254 = vadd.f32 0.0, %v5253
      %v5255 = vpop.f32.mrb[0].mxu0
      %5256 = vmatprep.mubr.f32.mxu0 0.0
      %5257 = vmatmul.mubr.f32.gmra.mrb[0].mxu0 %v5035
      %v5258 = vpop.f32.mrb[0].mxu0
      %v5259 = vadd.f32 0.0, %v5258
      %v5260 = vpop.f32.mrb[0].mxu0
      %5261 = vdwg.mxu0
      %v5262 = vadd.f32 %v4993, %v5104
      %v5263 = vadd.f32 %v4994, %v5109
      %v5264 = vadd.f32 %v4995, %v5114
      %v5265 = vadd.f32 %v4996, %v5119
      %v5266 = vadd.f32 %v4997, %v5124
      %v5267 = vadd.f32 %v4998, %v5129
      %v5268 = vadd.f32 %v4999, %v5134
      %v5269 = vadd.f32 %v5000, %v5139
      %v5270 = vadd.f32 %v5001, %v5144
      %v5271 = vadd.f32 %v5002, %v5149
      %v5272 = vadd.f32 %v5003, %v5154
      %v5273 = vadd.f32 %v5004, %v5159
      %v5274 = vadd.f32 %v5005, %v5164
      %v5275 = vadd.f32 %v5006, %v5169
      %v5276 = vadd.f32 %v5007, %v5174
      %v5277 = vadd.f32 %v5008, %v5179
      %v5278 = vadd.f32 %v5009, %v5184
      %v5279 = vadd.f32 %v5010, %v5189
      %v5280 = vadd.f32 %v5011, %v5194
      %v5281 = vadd.f32 %v5012, %v5199
      %v5282 = vadd.f32 %v5013, %v5204
      %v5283 = vadd.f32 %v5014, %v5209
      %v5284 = vadd.f32 %v5015, %v5214
      %v5285 = vadd.f32 %v5016, %v5219
      %v5286 = vadd.f32 %v5017, %v5224
      %v5287 = vadd.f32 %v5018, %v5229
      %v5288 = vadd.f32 %v5019, %v5234
      %v5289 = vadd.f32 %v5020, %v5239
      %v5290 = vadd.f32 %v5021, %v5244
      %v5291 = vadd.f32 %v5022, %v5249
      %v5292 = vadd.f32 %v5023, %v5254
      %v5293 = vadd.f32 %v5024, %v5259
      %v5294 = vsel %vm448, %v3831, 0
      %v5296 = vsel %vm448, %v3832, 0
      %5298 = vmatprep.subr.mxu0 0.0
      %5299 = vmatpush1.msra.mxu0 %v359
      %5300 = vmatprep.subr.mxu0 0.0
      %5301 = vmatpush1.msra.mxu0 0.0
      %5302 = vmatprep.subr.mxu0 0.0
      %5303 = vmatpush1.msra.mxu0 0.0
      %5304 = vmatprep.subr.mxu0 0.0
      %5305 = vmatpush1.msra.mxu0 0.0
      %5306 = vmatprep.subr.mxu0 0.0
      %5307 = vmatpush1.msra.mxu0 0.0
      %5308 = vmatprep.subr.mxu0 0.0
      %5309 = vmatpush1.msra.mxu0 0.0
      %5310 = vmatprep.subr.mxu0 0.0
      %5311 = vmatpush1.msra.mxu0 0.0
      %5312 = vmatprep.subr.mxu0 0.0
      %5313 = vmatpush1.msra.mxu0 0.0
      %5314 = vmatprep.subr.mxu0 0.0
      %5315 = vmatpush1.msra.mxu0 0.0
      %5316 = vmatprep.subr.mxu0 0.0
      %5317 = vmatpush1.msra.mxu0 0.0
      %5318 = vmatprep.subr.mxu0 0.0
      %5319 = vmatpush1.msra.mxu0 0.0
      %5320 = vmatprep.subr.mxu0 0.0
      %5321 = vmatpush1.msra.mxu0 0.0
      %5322 = vmatprep.subr.mxu0 0.0
      %5323 = vmatpush1.msra.mxu0 0.0
      %5324 = vmatprep.subr.mxu0 0.0
      %5325 = vmatpush1.msra.mxu0 0.0
      %5326 = vmatprep.subr.mxu0 0.0
      %5327 = vmatpush1.msra.mxu0 0.0
      %5328 = vmatprep.subr.mxu0 0.0
      %5329 = vmatpush1.msra.mxu0 0.0
      %5330 = vmatprep.subr.mxu0 0.0
      %5331 = vmatpush1.msra.mxu0 0.0
      %5332 = vmatprep.subr.mxu0 0.0
      %5333 = vmatpush1.msra.mxu0 0.0
      %5334 = vmatprep.subr.mxu0 0.0
      %5335 = vmatpush1.msra.mxu0 0.0
      %5336 = vmatprep.subr.mxu0 0.0
      %5337 = vmatpush1.msra.mxu0 0.0
      %5338 = vmatprep.subr.mxu0 0.0
      %5339 = vmatpush1.msra.mxu0 0.0
      %5340 = vmatprep.subr.mxu0 0.0
      %5341 = vmatpush1.msra.mxu0 0.0
      %5342 = vmatprep.subr.mxu0 0.0
      %5343 = vmatpush1.msra.mxu0 0.0
      %5344 = vmatprep.subr.mxu0 0.0
      %5345 = vmatpush1.msra.mxu0 0.0
      %5346 = vmatprep.subr.mxu0 0.0
      %5347 = vmatpush1.msra.mxu0 0.0
      %5348 = vmatprep.subr.mxu0 0.0
      %5349 = vmatpush1.msra.mxu0 0.0
      %5350 = vmatprep.subr.mxu0 0.0
      %5351 = vmatpush1.msra.mxu0 0.0
      %5352 = vmatprep.subr.mxu0 0.0
      %5353 = vmatpush1.msra.mxu0 0.0
      %5354 = vmatprep.subr.mxu0 0.0
      %5355 = vmatpush1.msra.mxu0 0.0
      %5356 = vmatprep.subr.mxu0 0.0
      %5357 = vmatpush1.msra.mxu0 0.0
      %5358 = vmatprep.subr.mxu0 0.0
      %5359 = vmatpush1.msra.mxu0 0.0
      %5360 = vmatprep.subr.mxu0 0.0
      %5361 = vmatpush1.msra.mxu0 0.0
      %5362 = vmatprep.mubr.f32.mxu0 0.0
      %5363 = vmatmul.mubr.f32.gmra.mrb[0].mxu0 %v4291
      %v5364 = vpop.f32.mrb[0].mxu0
      %v5365 = vadd.f32 0.0, %v5364
      %v5366 = vpop.f32.mrb[0].mxu0
      %5367 = vmatprep.mubr.f32.mxu0 0.0
      %5368 = vmatmul.mubr.f32.gmra.mrb[0].mxu0 %v4293
      %v5369 = vpop.f32.mrb[0].mxu0
      %v5370 = vadd.f32 0.0, %v5369
      %v5371 = vpop.f32.mrb[0].mxu0
      %5372 = vmatprep.mubr.f32.mxu0 0.0
      %5373 = vmatmul.mubr.f32.gmra.mrb[0].mxu0 %v4295
      %v5374 = vpop.f32.mrb[0].mxu0
      %v5375 = vadd.f32 0.0, %v5374
      %v5376 = vpop.f32.mrb[0].mxu0
      %5377 = vmatprep.mubr.f32.mxu0 0.0
      %5378 = vmatmul.mubr.f32.gmra.mrb[0].mxu0 %v4297
      %v5379 = vpop.f32.mrb[0].mxu0
      %v5380 = vadd.f32 0.0, %v5379
      %v5381 = vpop.f32.mrb[0].mxu0
      %5382 = vmatprep.mubr.f32.mxu0 0.0
      %5383 = vmatmul.mubr.f32.gmra.mrb[0].mxu0 %v4299
      %v5384 = vpop.f32.mrb[0].mxu0
      %v5385 = vadd.f32 0.0, %v5384
      %v5386 = vpop.f32.mrb[0].mxu0
      %5387 = vmatprep.mubr.f32.mxu0 0.0
      %5388 = vmatmul.mubr.f32.gmra.mrb[0].mxu0 %v4301
      %v5389 = vpop.f32.mrb[0].mxu0
      %v5390 = vadd.f32 0.0, %v5389
      %v5391 = vpop.f32.mrb[0].mxu0
      %5392 = vmatprep.mubr.f32.mxu0 0.0
      %5393 = vmatmul.mubr.f32.gmra.mrb[0].mxu0 %v4303
      %v5394 = vpop.f32.mrb[0].mxu0
      %v5395 = vadd.f32 0.0, %v5394
      %v5396 = vpop.f32.mrb[0].mxu0
      %5397 = vmatprep.mubr.f32.mxu0 0.0
      %5398 = vmatmul.mubr.f32.gmra.mrb[0].mxu0 %v4305
      %v5399 = vpop.f32.mrb[0].mxu0
      %v5400 = vadd.f32 0.0, %v5399
      %v5401 = vpop.f32.mrb[0].mxu0
      %5402 = vmatprep.mubr.f32.mxu0 0.0
      %5403 = vmatmul.mubr.f32.gmra.mrb[0].mxu0 %v4307
      %v5404 = vpop.f32.mrb[0].mxu0
      %v5405 = vadd.f32 0.0, %v5404
      %v5406 = vpop.f32.mrb[0].mxu0
      %5407 = vmatprep.mubr.f32.mxu0 0.0
      %5408 = vmatmul.mubr.f32.gmra.mrb[0].mxu0 %v4309
      %v5409 = vpop.f32.mrb[0].mxu0
      %v5410 = vadd.f32 0.0, %v5409
      %v5411 = vpop.f32.mrb[0].mxu0
      %5412 = vmatprep.mubr.f32.mxu0 0.0
      %5413 = vmatmul.mubr.f32.gmra.mrb[0].mxu0 %v4311
      %v5414 = vpop.f32.mrb[0].mxu0
      %v5415 = vadd.f32 0.0, %v5414
      %v5416 = vpop.f32.mrb[0].mxu0
      %5417 = vmatprep.mubr.f32.mxu0 0.0
      %5418 = vmatmul.mubr.f32.gmra.mrb[0].mxu0 %v4313
      %v5419 = vpop.f32.mrb[0].mxu0
      %v5420 = vadd.f32 0.0, %v5419
      %v5421 = vpop.f32.mrb[0].mxu0
      %5422 = vmatprep.mubr.f32.mxu0 0.0
      %5423 = vmatmul.mubr.f32.gmra.mrb[0].mxu0 %v4315
      %v5424 = vpop.f32.mrb[0].mxu0
      %v5425 = vadd.f32 0.0, %v5424
      %v5426 = vpop.f32.mrb[0].mxu0
      %5427 = vmatprep.mubr.f32.mxu0 0.0
      %5428 = vmatmul.mubr.f32.gmra.mrb[0].mxu0 %v4317
      %v5429 = vpop.f32.mrb[0].mxu0
      %v5430 = vadd.f32 0.0, %v5429
      %v5431 = vpop.f32.mrb[0].mxu0
      %5432 = vmatprep.mubr.f32.mxu0 0.0
      %5433 = vmatmul.mubr.f32.gmra.mrb[0].mxu0 %v4319
      %v5434 = vpop.f32.mrb[0].mxu0
      %v5435 = vadd.f32 0.0, %v5434
      %v5436 = vpop.f32.mrb[0].mxu0
      %5437 = vmatprep.mubr.f32.mxu0 0.0
      %5438 = vmatmul.mubr.f32.gmra.mrb[0].mxu0 %v4321
      %v5439 = vpop.f32.mrb[0].mxu0
      %v5440 = vadd.f32 0.0, %v5439
      %v5441 = vpop.f32.mrb[0].mxu0
      %5442 = vmatprep.mubr.f32.mxu0 0.0
      %5443 = vmatmul.mubr.f32.gmra.mrb[0].mxu0 %v4323
      %v5444 = vpop.f32.mrb[0].mxu0
      %v5445 = vadd.f32 0.0, %v5444
      %v5446 = vpop.f32.mrb[0].mxu0
      %5447 = vmatprep.mubr.f32.mxu0 0.0
      %5448 = vmatmul.mubr.f32.gmra.mrb[0].mxu0 %v4325
      %v5449 = vpop.f32.mrb[0].mxu0
      %v5450 = vadd.f32 0.0, %v5449
      %v5451 = vpop.f32.mrb[0].mxu0
      %5452 = vmatprep.mubr.f32.mxu0 0.0
      %5453 = vmatmul.mubr.f32.gmra.mrb[0].mxu0 %v4327
      %v5454 = vpop.f32.mrb[0].mxu0
      %v5455 = vadd.f32 0.0, %v5454
      %v5456 = vpop.f32.mrb[0].mxu0
      %5457 = vmatprep.mubr.f32.mxu0 0.0
      %5458 = vmatmul.mubr.f32.gmra.mrb[0].mxu0 %v4329
      %v5459 = vpop.f32.mrb[0].mxu0
      %v5460 = vadd.f32 0.0, %v5459
      %v5461 = vpop.f32.mrb[0].mxu0
      %5462 = vmatprep.mubr.f32.mxu0 0.0
      %5463 = vmatmul.mubr.f32.gmra.mrb[0].mxu0 %v4331
      %v5464 = vpop.f32.mrb[0].mxu0
      %v5465 = vadd.f32 0.0, %v5464
      %v5466 = vpop.f32.mrb[0].mxu0
      %5467 = vmatprep.mubr.f32.mxu0 0.0
      %5468 = vmatmul.mubr.f32.gmra.mrb[0].mxu0 %v4333
      %v5469 = vpop.f32.mrb[0].mxu0
      %v5470 = vadd.f32 0.0, %v5469
      %v5471 = vpop.f32.mrb[0].mxu0
      %5472 = vmatprep.mubr.f32.mxu0 0.0
      %5473 = vmatmul.mubr.f32.gmra.mrb[0].mxu0 %v4335
      %v5474 = vpop.f32.mrb[0].mxu0
      %v5475 = vadd.f32 0.0, %v5474
      %v5476 = vpop.f32.mrb[0].mxu0
      %5477 = vmatprep.mubr.f32.mxu0 0.0
      %5478 = vmatmul.mubr.f32.gmra.mrb[0].mxu0 %v4337
      %v5479 = vpop.f32.mrb[0].mxu0
      %v5480 = vadd.f32 0.0, %v5479
      %v5481 = vpop.f32.mrb[0].mxu0
      %5482 = vmatprep.mubr.f32.mxu0 0.0
      %5483 = vmatmul.mubr.f32.gmra.mrb[0].mxu0 %v4339
      %v5484 = vpop.f32.mrb[0].mxu0
      %v5485 = vadd.f32 0.0, %v5484
      %v5486 = vpop.f32.mrb[0].mxu0
      %5487 = vmatprep.mubr.f32.mxu0 0.0
      %5488 = vmatmul.mubr.f32.gmra.mrb[0].mxu0 %v4341
      %v5489 = vpop.f32.mrb[0].mxu0
      %v5490 = vadd.f32 0.0, %v5489
      %v5491 = vpop.f32.mrb[0].mxu0
      %5492 = vmatprep.mubr.f32.mxu0 0.0
      %5493 = vmatmul.mubr.f32.gmra.mrb[0].mxu0 %v4343
      %v5494 = vpop.f32.mrb[0].mxu0
      %v5495 = vadd.f32 0.0, %v5494
      %v5496 = vpop.f32.mrb[0].mxu0
      %5497 = vmatprep.mubr.f32.mxu0 0.0
      %5498 = vmatmul.mubr.f32.gmra.mrb[0].mxu0 %v4345
      %v5499 = vpop.f32.mrb[0].mxu0
      %v5500 = vadd.f32 0.0, %v5499
      %v5501 = vpop.f32.mrb[0].mxu0
      %5502 = vmatprep.mubr.f32.mxu0 0.0
      %5503 = vmatmul.mubr.f32.gmra.mrb[0].mxu0 %v4347
      %v5504 = vpop.f32.mrb[0].mxu0
      %v5505 = vadd.f32 0.0, %v5504
      %v5506 = vpop.f32.mrb[0].mxu0
      %5507 = vmatprep.mubr.f32.mxu0 0.0
      %5508 = vmatmul.mubr.f32.gmra.mrb[0].mxu0 %v4349
      %v5509 = vpop.f32.mrb[0].mxu0
      %v5510 = vadd.f32 0.0, %v5509
      %v5511 = vpop.f32.mrb[0].mxu0
      %5512 = vmatprep.mubr.f32.mxu0 0.0
      %5513 = vmatmul.mubr.f32.gmra.mrb[0].mxu0 %v5294
      %v5514 = vpop.f32.mrb[0].mxu0
      %v5515 = vadd.f32 0.0, %v5514
      %v5516 = vpop.f32.mrb[0].mxu0
      %5517 = vmatprep.mubr.f32.mxu0 0.0
      %5518 = vmatmul.mubr.f32.gmra.mrb[0].mxu0 %v5296
      %v5519 = vpop.f32.mrb[0].mxu0
      %v5520 = vadd.f32 0.0, %v5519
      %v5521 = vpop.f32.mrb[0].mxu0
      %5522 = vdwg.mxu0
      %v5523 = vadd.f32 %v5262, %v5365
      %v5524 = vadd.f32 %v5263, %v5370
      %v5525 = vadd.f32 %v5264, %v5375
      %v5526 = vadd.f32 %v5265, %v5380
      %v5527 = vadd.f32 %v5266, %v5385
      %v5528 = vadd.f32 %v5267, %v5390
      %v5529 = vadd.f32 %v5268, %v5395
      %v5530 = vadd.f32 %v5269, %v5400
      %v5531 = vadd.f32 %v5270, %v5405
      %v5532 = vadd.f32 %v5271, %v5410
      %v5533 = vadd.f32 %v5272, %v5415
      %v5534 = vadd.f32 %v5273, %v5420
      %v5535 = vadd.f32 %v5274, %v5425
      %v5536 = vadd.f32 %v5275, %v5430
      %v5537 = vadd.f32 %v5276, %v5435
      %v5538 = vadd.f32 %v5277, %v5440
      %v5539 = vadd.f32 %v5278, %v5445
      %v5540 = vadd.f32 %v5279, %v5450
      %v5541 = vadd.f32 %v5280, %v5455
      %v5542 = vadd.f32 %v5281, %v5460
      %v5543 = vadd.f32 %v5282, %v5465
      %v5544 = vadd.f32 %v5283, %v5470
      %v5545 = vadd.f32 %v5284, %v5475
      %v5546 = vadd.f32 %v5285, %v5480
      %v5547 = vadd.f32 %v5286, %v5485
      %v5548 = vadd.f32 %v5287, %v5490
      %v5549 = vadd.f32 %v5288, %v5495
      %v5550 = vadd.f32 %v5289, %v5500
      %v5551 = vadd.f32 %v5290, %v5505
      %v5552 = vadd.f32 %v5291, %v5510
      %v5553 = vadd.f32 %v5292, %v5515
      %v5554 = vadd.f32 %v5293, %v5520
      %v5556 = vrot.slane %v3831, 1
      %v5557 = vrot.slane %v3832, 1
      %v5558 = vsel %vm1749, %v5556, %v5557
      %v5559 = vrot.slane %v3833, 1
      %v5560 = vsel %vm1749, %v5557, %v5559
      %v5561 = vsel %vm448, %v5558, 0
      %v5563 = vsel %vm448, %v5560, 0
      %5565 = vmatprep.subr.mxu0 0.0
      %5566 = vmatpush1.msra.mxu0 %v360
      %5567 = vmatprep.subr.mxu0 0.0
      %5568 = vmatpush1.msra.mxu0 0.0
      %5569 = vmatprep.subr.mxu0 0.0
      %5570 = vmatpush1.msra.mxu0 0.0
      %5571 = vmatprep.subr.mxu0 0.0
      %5572 = vmatpush1.msra.mxu0 0.0
      %5573 = vmatprep.subr.mxu0 0.0
      %5574 = vmatpush1.msra.mxu0 0.0
      %5575 = vmatprep.subr.mxu0 0.0
      %5576 = vmatpush1.msra.mxu0 0.0
      %5577 = vmatprep.subr.mxu0 0.0
      %5578 = vmatpush1.msra.mxu0 0.0
      %5579 = vmatprep.subr.mxu0 0.0
      %5580 = vmatpush1.msra.mxu0 0.0
      %5581 = vmatprep.subr.mxu0 0.0
      %5582 = vmatpush1.msra.mxu0 0.0
      %5583 = vmatprep.subr.mxu0 0.0
      %5584 = vmatpush1.msra.mxu0 0.0
      %5585 = vmatprep.subr.mxu0 0.0
      %5586 = vmatpush1.msra.mxu0 0.0
      %5587 = vmatprep.subr.mxu0 0.0
      %5588 = vmatpush1.msra.mxu0 0.0
      %5589 = vmatprep.subr.mxu0 0.0
      %5590 = vmatpush1.msra.mxu0 0.0
      %5591 = vmatprep.subr.mxu0 0.0
      %5592 = vmatpush1.msra.mxu0 0.0
      %5593 = vmatprep.subr.mxu0 0.0
      %5594 = vmatpush1.msra.mxu0 0.0
      %5595 = vmatprep.subr.mxu0 0.0
      %5596 = vmatpush1.msra.mxu0 0.0
      %5597 = vmatprep.subr.mxu0 0.0
      %5598 = vmatpush1.msra.mxu0 0.0
      %5599 = vmatprep.subr.mxu0 0.0
      %5600 = vmatpush1.msra.mxu0 0.0
      %5601 = vmatprep.subr.mxu0 0.0
      %5602 = vmatpush1.msra.mxu0 0.0
      %5603 = vmatprep.subr.mxu0 0.0
      %5604 = vmatpush1.msra.mxu0 0.0
      %5605 = vmatprep.subr.mxu0 0.0
      %5606 = vmatpush1.msra.mxu0 0.0
      %5607 = vmatprep.subr.mxu0 0.0
      %5608 = vmatpush1.msra.mxu0 0.0
      %5609 = vmatprep.subr.mxu0 0.0
      %5610 = vmatpush1.msra.mxu0 0.0
      %5611 = vmatprep.subr.mxu0 0.0
      %5612 = vmatpush1.msra.mxu0 0.0
      %5613 = vmatprep.subr.mxu0 0.0
      %5614 = vmatpush1.msra.mxu0 0.0
      %5615 = vmatprep.subr.mxu0 0.0
      %5616 = vmatpush1.msra.mxu0 0.0
      %5617 = vmatprep.subr.mxu0 0.0
      %5618 = vmatpush1.msra.mxu0 0.0
      %5619 = vmatprep.subr.mxu0 0.0
      %5620 = vmatpush1.msra.mxu0 0.0
      %5621 = vmatprep.subr.mxu0 0.0
      %5622 = vmatpush1.msra.mxu0 0.0
      %5623 = vmatprep.subr.mxu0 0.0
      %5624 = vmatpush1.msra.mxu0 0.0
      %5625 = vmatprep.subr.mxu0 0.0
      %5626 = vmatpush1.msra.mxu0 0.0
      %5627 = vmatprep.subr.mxu0 0.0
      %5628 = vmatpush1.msra.mxu0 0.0
      %5629 = vmatprep.mubr.f32.mxu0 0.0
      %5630 = vmatmul.mubr.f32.gmra.mrb[0].mxu0 %v4708
      %v5631 = vpop.f32.mrb[0].mxu0
      %v5632 = vadd.f32 0.0, %v5631
      %v5633 = vpop.f32.mrb[0].mxu0
      %5634 = vmatprep.mubr.f32.mxu0 0.0
      %5635 = vmatmul.mubr.f32.gmra.mrb[0].mxu0 %v4710
      %v5636 = vpop.f32.mrb[0].mxu0
      %v5637 = vadd.f32 0.0, %v5636
      %v5638 = vpop.f32.mrb[0].mxu0
      %5639 = vmatprep.mubr.f32.mxu0 0.0
      %5640 = vmatmul.mubr.f32.gmra.mrb[0].mxu0 %v4712
      %v5641 = vpop.f32.mrb[0].mxu0
      %v5642 = vadd.f32 0.0, %v5641
      %v5643 = vpop.f32.mrb[0].mxu0
      %5644 = vmatprep.mubr.f32.mxu0 0.0
      %5645 = vmatmul.mubr.f32.gmra.mrb[0].mxu0 %v4714
      %v5646 = vpop.f32.mrb[0].mxu0
      %v5647 = vadd.f32 0.0, %v5646
      %v5648 = vpop.f32.mrb[0].mxu0
      %5649 = vmatprep.mubr.f32.mxu0 0.0
      %5650 = vmatmul.mubr.f32.gmra.mrb[0].mxu0 %v4716
      %v5651 = vpop.f32.mrb[0].mxu0
      %v5652 = vadd.f32 0.0, %v5651
      %v5653 = vpop.f32.mrb[0].mxu0
      %5654 = vmatprep.mubr.f32.mxu0 0.0
      %5655 = vmatmul.mubr.f32.gmra.mrb[0].mxu0 %v4718
      %v5656 = vpop.f32.mrb[0].mxu0
      %v5657 = vadd.f32 0.0, %v5656
      %v5658 = vpop.f32.mrb[0].mxu0
      %5659 = vmatprep.mubr.f32.mxu0 0.0
      %5660 = vmatmul.mubr.f32.gmra.mrb[0].mxu0 %v4720
      %v5661 = vpop.f32.mrb[0].mxu0
      %v5662 = vadd.f32 0.0, %v5661
      %v5663 = vpop.f32.mrb[0].mxu0
      %5664 = vmatprep.mubr.f32.mxu0 0.0
      %5665 = vmatmul.mubr.f32.gmra.mrb[0].mxu0 %v4722
      %v5666 = vpop.f32.mrb[0].mxu0
      %v5667 = vadd.f32 0.0, %v5666
      %v5668 = vpop.f32.mrb[0].mxu0
      %5669 = vmatprep.mubr.f32.mxu0 0.0
      %5670 = vmatmul.mubr.f32.gmra.mrb[0].mxu0 %v4724
      %v5671 = vpop.f32.mrb[0].mxu0
      %v5672 = vadd.f32 0.0, %v5671
      %v5673 = vpop.f32.mrb[0].mxu0
      %5674 = vmatprep.mubr.f32.mxu0 0.0
      %5675 = vmatmul.mubr.f32.gmra.mrb[0].mxu0 %v4726
      %v5676 = vpop.f32.mrb[0].mxu0
      %v5677 = vadd.f32 0.0, %v5676
      %v5678 = vpop.f32.mrb[0].mxu0
      %5679 = vmatprep.mubr.f32.mxu0 0.0
      %5680 = vmatmul.mubr.f32.gmra.mrb[0].mxu0 %v4728
      %v5681 = vpop.f32.mrb[0].mxu0
      %v5682 = vadd.f32 0.0, %v5681
      %v5683 = vpop.f32.mrb[0].mxu0
      %5684 = vmatprep.mubr.f32.mxu0 0.0
      %5685 = vmatmul.mubr.f32.gmra.mrb[0].mxu0 %v4730
      %v5686 = vpop.f32.mrb[0].mxu0
      %v5687 = vadd.f32 0.0, %v5686
      %v5688 = vpop.f32.mrb[0].mxu0
      %5689 = vmatprep.mubr.f32.mxu0 0.0
      %5690 = vmatmul.mubr.f32.gmra.mrb[0].mxu0 %v4732
      %v5691 = vpop.f32.mrb[0].mxu0
      %v5692 = vadd.f32 0.0, %v5691
      %v5693 = vpop.f32.mrb[0].mxu0
      %5694 = vmatprep.mubr.f32.mxu0 0.0
      %5695 = vmatmul.mubr.f32.gmra.mrb[0].mxu0 %v4734
      %v5696 = vpop.f32.mrb[0].mxu0
      %v5697 = vadd.f32 0.0, %v5696
      %v5698 = vpop.f32.mrb[0].mxu0
      %5699 = vmatprep.mubr.f32.mxu0 0.0
      %5700 = vmatmul.mubr.f32.gmra.mrb[0].mxu0 %v4736
      %v5701 = vpop.f32.mrb[0].mxu0
      %v5702 = vadd.f32 0.0, %v5701
      %v5703 = vpop.f32.mrb[0].mxu0
      %5704 = vmatprep.mubr.f32.mxu0 0.0
      %5705 = vmatmul.mubr.f32.gmra.mrb[0].mxu0 %v4738
      %v5706 = vpop.f32.mrb[0].mxu0
      %v5707 = vadd.f32 0.0, %v5706
      %v5708 = vpop.f32.mrb[0].mxu0
      %5709 = vmatprep.mubr.f32.mxu0 0.0
      %5710 = vmatmul.mubr.f32.gmra.mrb[0].mxu0 %v4740
      %v5711 = vpop.f32.mrb[0].mxu0
      %v5712 = vadd.f32 0.0, %v5711
      %v5713 = vpop.f32.mrb[0].mxu0
      %5714 = vmatprep.mubr.f32.mxu0 0.0
      %5715 = vmatmul.mubr.f32.gmra.mrb[0].mxu0 %v4742
      %v5716 = vpop.f32.mrb[0].mxu0
      %v5717 = vadd.f32 0.0, %v5716
      %v5718 = vpop.f32.mrb[0].mxu0
      %5719 = vmatprep.mubr.f32.mxu0 0.0
      %5720 = vmatmul.mubr.f32.gmra.mrb[0].mxu0 %v4744
      %v5721 = vpop.f32.mrb[0].mxu0
      %v5722 = vadd.f32 0.0, %v5721
      %v5723 = vpop.f32.mrb[0].mxu0
      %5724 = vmatprep.mubr.f32.mxu0 0.0
      %5725 = vmatmul.mubr.f32.gmra.mrb[0].mxu0 %v4746
      %v5726 = vpop.f32.mrb[0].mxu0
      %v5727 = vadd.f32 0.0, %v5726
      %v5728 = vpop.f32.mrb[0].mxu0
      %5729 = vmatprep.mubr.f32.mxu0 0.0
      %5730 = vmatmul.mubr.f32.gmra.mrb[0].mxu0 %v4748
      %v5731 = vpop.f32.mrb[0].mxu0
      %v5732 = vadd.f32 0.0, %v5731
      %v5733 = vpop.f32.mrb[0].mxu0
      %5734 = vmatprep.mubr.f32.mxu0 0.0
      %5735 = vmatmul.mubr.f32.gmra.mrb[0].mxu0 %v4750
      %v5736 = vpop.f32.mrb[0].mxu0
      %v5737 = vadd.f32 0.0, %v5736
      %v5738 = vpop.f32.mrb[0].mxu0
      %5739 = vmatprep.mubr.f32.mxu0 0.0
      %5740 = vmatmul.mubr.f32.gmra.mrb[0].mxu0 %v4752
      %v5741 = vpop.f32.mrb[0].mxu0
      %v5742 = vadd.f32 0.0, %v5741
      %v5743 = vpop.f32.mrb[0].mxu0
      %5744 = vmatprep.mubr.f32.mxu0 0.0
      %5745 = vmatmul.mubr.f32.gmra.mrb[0].mxu0 %v4754
      %v5746 = vpop.f32.mrb[0].mxu0
      %v5747 = vadd.f32 0.0, %v5746
      %v5748 = vpop.f32.mrb[0].mxu0
      %5749 = vmatprep.mubr.f32.mxu0 0.0
      %5750 = vmatmul.mubr.f32.gmra.mrb[0].mxu0 %v4756
      %v5751 = vpop.f32.mrb[0].mxu0
      %v5752 = vadd.f32 0.0, %v5751
      %v5753 = vpop.f32.mrb[0].mxu0
      %5754 = vmatprep.mubr.f32.mxu0 0.0
      %5755 = vmatmul.mubr.f32.gmra.mrb[0].mxu0 %v4758
      %v5756 = vpop.f32.mrb[0].mxu0
      %v5757 = vadd.f32 0.0, %v5756
      %v5758 = vpop.f32.mrb[0].mxu0
      %5759 = vmatprep.mubr.f32.mxu0 0.0
      %5760 = vmatmul.mubr.f32.gmra.mrb[0].mxu0 %v4760
      %v5761 = vpop.f32.mrb[0].mxu0
      %v5762 = vadd.f32 0.0, %v5761
      %v5763 = vpop.f32.mrb[0].mxu0
      %5764 = vmatprep.mubr.f32.mxu0 0.0
      %5765 = vmatmul.mubr.f32.gmra.mrb[0].mxu0 %v4762
      %v5766 = vpop.f32.mrb[0].mxu0
      %v5767 = vadd.f32 0.0, %v5766
      %v5768 = vpop.f32.mrb[0].mxu0
      %5769 = vmatprep.mubr.f32.mxu0 0.0
      %5770 = vmatmul.mubr.f32.gmra.mrb[0].mxu0 %v4764
      %v5771 = vpop.f32.mrb[0].mxu0
      %v5772 = vadd.f32 0.0, %v5771
      %v5773 = vpop.f32.mrb[0].mxu0
      %5774 = vmatprep.mubr.f32.mxu0 0.0
      %5775 = vmatmul.mubr.f32.gmra.mrb[0].mxu0 %v4766
      %v5776 = vpop.f32.mrb[0].mxu0
      %v5777 = vadd.f32 0.0, %v5776
      %v5778 = vpop.f32.mrb[0].mxu0
      %5779 = vmatprep.mubr.f32.mxu0 0.0
      %5780 = vmatmul.mubr.f32.gmra.mrb[0].mxu0 %v5561
      %v5781 = vpop.f32.mrb[0].mxu0
      %v5782 = vadd.f32 0.0, %v5781
      %v5783 = vpop.f32.mrb[0].mxu0
      %5784 = vmatprep.mubr.f32.mxu0 0.0
      %5785 = vmatmul.mubr.f32.gmra.mrb[0].mxu0 %v5563
      %v5786 = vpop.f32.mrb[0].mxu0
      %v5787 = vadd.f32 0.0, %v5786
      %v5788 = vpop.f32.mrb[0].mxu0
      %5789 = vdwg.mxu0
      %v5790 = vadd.f32 %v5523, %v5632
      %v5791 = vadd.f32 %v5524, %v5637
      %v5792 = vadd.f32 %v5525, %v5642
      %v5793 = vadd.f32 %v5526, %v5647
      %v5794 = vadd.f32 %v5527, %v5652
      %v5795 = vadd.f32 %v5528, %v5657
      %v5796 = vadd.f32 %v5529, %v5662
      %v5797 = vadd.f32 %v5530, %v5667
      %v5798 = vadd.f32 %v5531, %v5672
      %v5799 = vadd.f32 %v5532, %v5677
      %v5800 = vadd.f32 %v5533, %v5682
      %v5801 = vadd.f32 %v5534, %v5687
      %v5802 = vadd.f32 %v5535, %v5692
      %v5803 = vadd.f32 %v5536, %v5697
      %v5804 = vadd.f32 %v5537, %v5702
      %v5805 = vadd.f32 %v5538, %v5707
      %v5806 = vadd.f32 %v5539, %v5712
      %v5807 = vadd.f32 %v5540, %v5717
      %v5808 = vadd.f32 %v5541, %v5722
      %v5809 = vadd.f32 %v5542, %v5727
      %v5810 = vadd.f32 %v5543, %v5732
      %v5811 = vadd.f32 %v5544, %v5737
      %v5812 = vadd.f32 %v5545, %v5742
      %v5813 = vadd.f32 %v5546, %v5747
      %v5814 = vadd.f32 %v5547, %v5752
      %v5815 = vadd.f32 %v5548, %v5757
      %v5816 = vadd.f32 %v5549, %v5762
      %v5817 = vadd.f32 %v5550, %v5767
      %v5818 = vadd.f32 %v5551, %v5772
      %v5819 = vadd.f32 %v5552, %v5777
      %v5820 = vadd.f32 %v5553, %v5782
      %v5821 = vadd.f32 %v5554, %v5787
      %v5825 = vrot.slane %v3834, 7
      %v5826 = vrot.slane %v3835, 7
      %v5827 = vsel %vm1067, %v5825, %v5826
      %v5828 = vrot.slane %v3836, 7
      %v5829 = vsel %vm1067, %v5826, %v5828
      %v5830 = vsel %vm448, %v5827, 0
      %v5832 = vsel %vm448, %v5829, 0
      %5834 = vmatprep.subr.mxu0 0.0
      %5835 = vmatpush1.msra.mxu0 %v361
      %5836 = vmatprep.subr.mxu0 0.0
      %5837 = vmatpush1.msra.mxu0 0.0
      %5838 = vmatprep.subr.mxu0 0.0
      %5839 = vmatpush1.msra.mxu0 0.0
      %5840 = vmatprep.subr.mxu0 0.0
      %5841 = vmatpush1.msra.mxu0 0.0
      %5842 = vmatprep.subr.mxu0 0.0
      %5843 = vmatpush1.msra.mxu0 0.0
      %5844 = vmatprep.subr.mxu0 0.0
      %5845 = vmatpush1.msra.mxu0 0.0
      %5846 = vmatprep.subr.mxu0 0.0
      %5847 = vmatpush1.msra.mxu0 0.0
      %5848 = vmatprep.subr.mxu0 0.0
      %5849 = vmatpush1.msra.mxu0 0.0
      %5850 = vmatprep.subr.mxu0 0.0
      %5851 = vmatpush1.msra.mxu0 0.0
      %5852 = vmatprep.subr.mxu0 0.0
      %5853 = vmatpush1.msra.mxu0 0.0
      %5854 = vmatprep.subr.mxu0 0.0
      %5855 = vmatpush1.msra.mxu0 0.0
      %5856 = vmatprep.subr.mxu0 0.0
      %5857 = vmatpush1.msra.mxu0 0.0
      %5858 = vmatprep.subr.mxu0 0.0
      %5859 = vmatpush1.msra.mxu0 0.0
      %5860 = vmatprep.subr.mxu0 0.0
      %5861 = vmatpush1.msra.mxu0 0.0
      %5862 = vmatprep.subr.mxu0 0.0
      %5863 = vmatpush1.msra.mxu0 0.0
      %5864 = vmatprep.subr.mxu0 0.0
      %5865 = vmatpush1.msra.mxu0 0.0
      %5866 = vmatprep.subr.mxu0 0.0
      %5867 = vmatpush1.msra.mxu0 0.0
      %5868 = vmatprep.subr.mxu0 0.0
      %5869 = vmatpush1.msra.mxu0 0.0
      %5870 = vmatprep.subr.mxu0 0.0
      %5871 = vmatpush1.msra.mxu0 0.0
      %5872 = vmatprep.subr.mxu0 0.0
      %5873 = vmatpush1.msra.mxu0 0.0
      %5874 = vmatprep.subr.mxu0 0.0
      %5875 = vmatpush1.msra.mxu0 0.0
      %5876 = vmatprep.subr.mxu0 0.0
      %5877 = vmatpush1.msra.mxu0 0.0
      %5878 = vmatprep.subr.mxu0 0.0
      %5879 = vmatpush1.msra.mxu0 0.0
      %5880 = vmatprep.subr.mxu0 0.0
      %5881 = vmatpush1.msra.mxu0 0.0
      %5882 = vmatprep.subr.mxu0 0.0
      %5883 = vmatpush1.msra.mxu0 0.0
      %5884 = vmatprep.subr.mxu0 0.0
      %5885 = vmatpush1.msra.mxu0 0.0
      %5886 = vmatprep.subr.mxu0 0.0
      %5887 = vmatpush1.msra.mxu0 0.0
      %5888 = vmatprep.subr.mxu0 0.0
      %5889 = vmatpush1.msra.mxu0 0.0
      %5890 = vmatprep.subr.mxu0 0.0
      %5891 = vmatpush1.msra.mxu0 0.0
      %5892 = vmatprep.subr.mxu0 0.0
      %5893 = vmatpush1.msra.mxu0 0.0
      %5894 = vmatprep.subr.mxu0 0.0
      %5895 = vmatpush1.msra.mxu0 0.0
      %5896 = vmatprep.subr.mxu0 0.0
      %5897 = vmatpush1.msra.mxu0 0.0
      %5898 = vmatprep.mubr.f32.mxu0 0.0
      %5899 = vmatmul.mubr.f32.gmra.mrb[0].mxu0 %v3974
      %v5900 = vpop.f32.mrb[0].mxu0
      %v5901 = vadd.f32 0.0, %v5900
      %v5902 = vpop.f32.mrb[0].mxu0
      %5903 = vmatprep.mubr.f32.mxu0 0.0
      %5904 = vmatmul.mubr.f32.gmra.mrb[0].mxu0 %v3976
      %v5905 = vpop.f32.mrb[0].mxu0
      %v5906 = vadd.f32 0.0, %v5905
      %v5907 = vpop.f32.mrb[0].mxu0
      %5908 = vmatprep.mubr.f32.mxu0 0.0
      %5909 = vmatmul.mubr.f32.gmra.mrb[0].mxu0 %v3978
      %v5910 = vpop.f32.mrb[0].mxu0
      %v5911 = vadd.f32 0.0, %v5910
      %v5912 = vpop.f32.mrb[0].mxu0
      %5913 = vmatprep.mubr.f32.mxu0 0.0
      %5914 = vmatmul.mubr.f32.gmra.mrb[0].mxu0 %v3980
      %v5915 = vpop.f32.mrb[0].mxu0
      %v5916 = vadd.f32 0.0, %v5915
      %v5917 = vpop.f32.mrb[0].mxu0
      %5918 = vmatprep.mubr.f32.mxu0 0.0
      %5919 = vmatmul.mubr.f32.gmra.mrb[0].mxu0 %v3982
      %v5920 = vpop.f32.mrb[0].mxu0
      %v5921 = vadd.f32 0.0, %v5920
      %v5922 = vpop.f32.mrb[0].mxu0
      %5923 = vmatprep.mubr.f32.mxu0 0.0
      %5924 = vmatmul.mubr.f32.gmra.mrb[0].mxu0 %v3984
      %v5925 = vpop.f32.mrb[0].mxu0
      %v5926 = vadd.f32 0.0, %v5925
      %v5927 = vpop.f32.mrb[0].mxu0
      %5928 = vmatprep.mubr.f32.mxu0 0.0
      %5929 = vmatmul.mubr.f32.gmra.mrb[0].mxu0 %v3986
      %v5930 = vpop.f32.mrb[0].mxu0
      %v5931 = vadd.f32 0.0, %v5930
      %v5932 = vpop.f32.mrb[0].mxu0
      %5933 = vmatprep.mubr.f32.mxu0 0.0
      %5934 = vmatmul.mubr.f32.gmra.mrb[0].mxu0 %v3988
      %v5935 = vpop.f32.mrb[0].mxu0
      %v5936 = vadd.f32 0.0, %v5935
      %v5937 = vpop.f32.mrb[0].mxu0
      %5938 = vmatprep.mubr.f32.mxu0 0.0
      %5939 = vmatmul.mubr.f32.gmra.mrb[0].mxu0 %v3990
      %v5940 = vpop.f32.mrb[0].mxu0
      %v5941 = vadd.f32 0.0, %v5940
      %v5942 = vpop.f32.mrb[0].mxu0
      %5943 = vmatprep.mubr.f32.mxu0 0.0
      %5944 = vmatmul.mubr.f32.gmra.mrb[0].mxu0 %v3992
      %v5945 = vpop.f32.mrb[0].mxu0
      %v5946 = vadd.f32 0.0, %v5945
      %v5947 = vpop.f32.mrb[0].mxu0
      %5948 = vmatprep.mubr.f32.mxu0 0.0
      %5949 = vmatmul.mubr.f32.gmra.mrb[0].mxu0 %v3994
      %v5950 = vpop.f32.mrb[0].mxu0
      %v5951 = vadd.f32 0.0, %v5950
      %v5952 = vpop.f32.mrb[0].mxu0
      %5953 = vmatprep.mubr.f32.mxu0 0.0
      %5954 = vmatmul.mubr.f32.gmra.mrb[0].mxu0 %v3996
      %v5955 = vpop.f32.mrb[0].mxu0
      %v5956 = vadd.f32 0.0, %v5955
      %v5957 = vpop.f32.mrb[0].mxu0
      %5958 = vmatprep.mubr.f32.mxu0 0.0
      %5959 = vmatmul.mubr.f32.gmra.mrb[0].mxu0 %v3998
      %v5960 = vpop.f32.mrb[0].mxu0
      %v5961 = vadd.f32 0.0, %v5960
      %v5962 = vpop.f32.mrb[0].mxu0
      %5963 = vmatprep.mubr.f32.mxu0 0.0
      %5964 = vmatmul.mubr.f32.gmra.mrb[0].mxu0 %v4000
      %v5965 = vpop.f32.mrb[0].mxu0
      %v5966 = vadd.f32 0.0, %v5965
      %v5967 = vpop.f32.mrb[0].mxu0
      %5968 = vmatprep.mubr.f32.mxu0 0.0
      %5969 = vmatmul.mubr.f32.gmra.mrb[0].mxu0 %v4002
      %v5970 = vpop.f32.mrb[0].mxu0
      %v5971 = vadd.f32 0.0, %v5970
      %v5972 = vpop.f32.mrb[0].mxu0
      %5973 = vmatprep.mubr.f32.mxu0 0.0
      %5974 = vmatmul.mubr.f32.gmra.mrb[0].mxu0 %v4004
      %v5975 = vpop.f32.mrb[0].mxu0
      %v5976 = vadd.f32 0.0, %v5975
      %v5977 = vpop.f32.mrb[0].mxu0
      %5978 = vmatprep.mubr.f32.mxu0 0.0
      %5979 = vmatmul.mubr.f32.gmra.mrb[0].mxu0 %v4006
      %v5980 = vpop.f32.mrb[0].mxu0
      %v5981 = vadd.f32 0.0, %v5980
      %v5982 = vpop.f32.mrb[0].mxu0
      %5983 = vmatprep.mubr.f32.mxu0 0.0
      %5984 = vmatmul.mubr.f32.gmra.mrb[0].mxu0 %v4008
      %v5985 = vpop.f32.mrb[0].mxu0
      %v5986 = vadd.f32 0.0, %v5985
      %v5987 = vpop.f32.mrb[0].mxu0
      %5988 = vmatprep.mubr.f32.mxu0 0.0
      %5989 = vmatmul.mubr.f32.gmra.mrb[0].mxu0 %v4010
      %v5990 = vpop.f32.mrb[0].mxu0
      %v5991 = vadd.f32 0.0, %v5990
      %v5992 = vpop.f32.mrb[0].mxu0
      %5993 = vmatprep.mubr.f32.mxu0 0.0
      %5994 = vmatmul.mubr.f32.gmra.mrb[0].mxu0 %v4012
      %v5995 = vpop.f32.mrb[0].mxu0
      %v5996 = vadd.f32 0.0, %v5995
      %v5997 = vpop.f32.mrb[0].mxu0
      %5998 = vmatprep.mubr.f32.mxu0 0.0
      %5999 = vmatmul.mubr.f32.gmra.mrb[0].mxu0 %v4014
      %v6000 = vpop.f32.mrb[0].mxu0
      %v6001 = vadd.f32 0.0, %v6000
      %v6002 = vpop.f32.mrb[0].mxu0
      %6003 = vmatprep.mubr.f32.mxu0 0.0
      %6004 = vmatmul.mubr.f32.gmra.mrb[0].mxu0 %v4016
      %v6005 = vpop.f32.mrb[0].mxu0
      %v6006 = vadd.f32 0.0, %v6005
      %v6007 = vpop.f32.mrb[0].mxu0
      %6008 = vmatprep.mubr.f32.mxu0 0.0
      %6009 = vmatmul.mubr.f32.gmra.mrb[0].mxu0 %v4018
      %v6010 = vpop.f32.mrb[0].mxu0
      %v6011 = vadd.f32 0.0, %v6010
      %v6012 = vpop.f32.mrb[0].mxu0
      %6013 = vmatprep.mubr.f32.mxu0 0.0
      %6014 = vmatmul.mubr.f32.gmra.mrb[0].mxu0 %v4020
      %v6015 = vpop.f32.mrb[0].mxu0
      %v6016 = vadd.f32 0.0, %v6015
      %v6017 = vpop.f32.mrb[0].mxu0
      %6018 = vmatprep.mubr.f32.mxu0 0.0
      %6019 = vmatmul.mubr.f32.gmra.mrb[0].mxu0 %v4022
      %v6020 = vpop.f32.mrb[0].mxu0
      %v6021 = vadd.f32 0.0, %v6020
      %v6022 = vpop.f32.mrb[0].mxu0
      %6023 = vmatprep.mubr.f32.mxu0 0.0
      %6024 = vmatmul.mubr.f32.gmra.mrb[0].mxu0 %v4024
      %v6025 = vpop.f32.mrb[0].mxu0
      %v6026 = vadd.f32 0.0, %v6025
      %v6027 = vpop.f32.mrb[0].mxu0
      %6028 = vmatprep.mubr.f32.mxu0 0.0
      %6029 = vmatmul.mubr.f32.gmra.mrb[0].mxu0 %v4026
      %v6030 = vpop.f32.mrb[0].mxu0
      %v6031 = vadd.f32 0.0, %v6030
      %v6032 = vpop.f32.mrb[0].mxu0
      %6033 = vmatprep.mubr.f32.mxu0 0.0
      %6034 = vmatmul.mubr.f32.gmra.mrb[0].mxu0 %v4028
      %v6035 = vpop.f32.mrb[0].mxu0
      %v6036 = vadd.f32 0.0, %v6035
      %v6037 = vpop.f32.mrb[0].mxu0
      %6038 = vmatprep.mubr.f32.mxu0 0.0
      %6039 = vmatmul.mubr.f32.gmra.mrb[0].mxu0 %v5033
      %v6040 = vpop.f32.mrb[0].mxu0
      %v6041 = vadd.f32 0.0, %v6040
      %v6042 = vpop.f32.mrb[0].mxu0
      %6043 = vmatprep.mubr.f32.mxu0 0.0
      %6044 = vmatmul.mubr.f32.gmra.mrb[0].mxu0 %v5035
      %v6045 = vpop.f32.mrb[0].mxu0
      %v6046 = vadd.f32 0.0, %v6045
      %v6047 = vpop.f32.mrb[0].mxu0
      %6048 = vmatprep.mubr.f32.mxu0 0.0
      %6049 = vmatmul.mubr.f32.gmra.mrb[0].mxu0 %v5830
      %v6050 = vpop.f32.mrb[0].mxu0
      %v6051 = vadd.f32 0.0, %v6050
      %v6052 = vpop.f32.mrb[0].mxu0
      %6053 = vmatprep.mubr.f32.mxu0 0.0
      %6054 = vmatmul.mubr.f32.gmra.mrb[0].mxu0 %v5832
      %v6055 = vpop.f32.mrb[0].mxu0
      %v6056 = vadd.f32 0.0, %v6055
      %v6057 = vpop.f32.mrb[0].mxu0
      %6058 = vdwg.mxu0
      %v6059 = vadd.f32 %v5790, %v5901
      %v6060 = vadd.f32 %v5791, %v5906
      %v6061 = vadd.f32 %v5792, %v5911
      %v6062 = vadd.f32 %v5793, %v5916
      %v6063 = vadd.f32 %v5794, %v5921
      %v6064 = vadd.f32 %v5795, %v5926
      %v6065 = vadd.f32 %v5796, %v5931
      %v6066 = vadd.f32 %v5797, %v5936
      %v6067 = vadd.f32 %v5798, %v5941
      %v6068 = vadd.f32 %v5799, %v5946
      %v6069 = vadd.f32 %v5800, %v5951
      %v6070 = vadd.f32 %v5801, %v5956
      %v6071 = vadd.f32 %v5802, %v5961
      %v6072 = vadd.f32 %v5803, %v5966
      %v6073 = vadd.f32 %v5804, %v5971
      %v6074 = vadd.f32 %v5805, %v5976
      %v6075 = vadd.f32 %v5806, %v5981
      %v6076 = vadd.f32 %v5807, %v5986
      %v6077 = vadd.f32 %v5808, %v5991
      %v6078 = vadd.f32 %v5809, %v5996
      %v6079 = vadd.f32 %v5810, %v6001
      %v6080 = vadd.f32 %v5811, %v6006
      %v6081 = vadd.f32 %v5812, %v6011
      %v6082 = vadd.f32 %v5813, %v6016
      %v6083 = vadd.f32 %v5814, %v6021
      %v6084 = vadd.f32 %v5815, %v6026
      %v6085 = vadd.f32 %v5816, %v6031
      %v6086 = vadd.f32 %v5817, %v6036
      %v6087 = vadd.f32 %v5818, %v6041
      %v6088 = vadd.f32 %v5819, %v6046
      %v6089 = vadd.f32 %v5820, %v6051
      %v6090 = vadd.f32 %v5821, %v6056
      %v6091 = vsel %vm448, %v3835, 0
      %v6093 = vsel %vm448, %v3836, 0
      %6095 = vmatprep.subr.mxu0 0.0
      %6096 = vmatpush1.msra.mxu0 %v362
      %6097 = vmatprep.subr.mxu0 0.0
      %6098 = vmatpush1.msra.mxu0 0.0
      %6099 = vmatprep.subr.mxu0 0.0
      %6100 = vmatpush1.msra.mxu0 0.0
      %6101 = vmatprep.subr.mxu0 0.0
      %6102 = vmatpush1.msra.mxu0 0.0
      %6103 = vmatprep.subr.mxu0 0.0
      %6104 = vmatpush1.msra.mxu0 0.0
      %6105 = vmatprep.subr.mxu0 0.0
      %6106 = vmatpush1.msra.mxu0 0.0
      %6107 = vmatprep.subr.mxu0 0.0
      %6108 = vmatpush1.msra.mxu0 0.0
      %6109 = vmatprep.subr.mxu0 0.0
      %6110 = vmatpush1.msra.mxu0 0.0
      %6111 = vmatprep.subr.mxu0 0.0
      %6112 = vmatpush1.msra.mxu0 0.0
      %6113 = vmatprep.subr.mxu0 0.0
      %6114 = vmatpush1.msra.mxu0 0.0
      %6115 = vmatprep.subr.mxu0 0.0
      %6116 = vmatpush1.msra.mxu0 0.0
      %6117 = vmatprep.subr.mxu0 0.0
      %6118 = vmatpush1.msra.mxu0 0.0
      %6119 = vmatprep.subr.mxu0 0.0
      %6120 = vmatpush1.msra.mxu0 0.0
      %6121 = vmatprep.subr.mxu0 0.0
      %6122 = vmatpush1.msra.mxu0 0.0
      %6123 = vmatprep.subr.mxu0 0.0
      %6124 = vmatpush1.msra.mxu0 0.0
      %6125 = vmatprep.subr.mxu0 0.0
      %6126 = vmatpush1.msra.mxu0 0.0
      %6127 = vmatprep.subr.mxu0 0.0
      %6128 = vmatpush1.msra.mxu0 0.0
      %6129 = vmatprep.subr.mxu0 0.0
      %6130 = vmatpush1.msra.mxu0 0.0
      %6131 = vmatprep.subr.mxu0 0.0
      %6132 = vmatpush1.msra.mxu0 0.0
      %6133 = vmatprep.subr.mxu0 0.0
      %6134 = vmatpush1.msra.mxu0 0.0
      %6135 = vmatprep.subr.mxu0 0.0
      %6136 = vmatpush1.msra.mxu0 0.0
      %6137 = vmatprep.subr.mxu0 0.0
      %6138 = vmatpush1.msra.mxu0 0.0
      %6139 = vmatprep.subr.mxu0 0.0
      %6140 = vmatpush1.msra.mxu0 0.0
      %6141 = vmatprep.subr.mxu0 0.0
      %6142 = vmatpush1.msra.mxu0 0.0
      %6143 = vmatprep.subr.mxu0 0.0
      %6144 = vmatpush1.msra.mxu0 0.0
      %6145 = vmatprep.subr.mxu0 0.0
      %6146 = vmatpush1.msra.mxu0 0.0
      %6147 = vmatprep.subr.mxu0 0.0
      %6148 = vmatpush1.msra.mxu0 0.0
      %6149 = vmatprep.subr.mxu0 0.0
      %6150 = vmatpush1.msra.mxu0 0.0
      %6151 = vmatprep.subr.mxu0 0.0
      %6152 = vmatpush1.msra.mxu0 0.0
      %6153 = vmatprep.subr.mxu0 0.0
      %6154 = vmatpush1.msra.mxu0 0.0
      %6155 = vmatprep.subr.mxu0 0.0
      %6156 = vmatpush1.msra.mxu0 0.0
      %6157 = vmatprep.subr.mxu0 0.0
      %6158 = vmatpush1.msra.mxu0 0.0
      %6159 = vmatprep.mubr.f32.mxu0 0.0
      %6160 = vmatmul.mubr.f32.gmra.mrb[0].mxu0 %v4295
      %v6161 = vpop.f32.mrb[0].mxu0
      %v6162 = vadd.f32 0.0, %v6161
      %v6163 = vpop.f32.mrb[0].mxu0
      %6164 = vmatprep.mubr.f32.mxu0 0.0
      %6165 = vmatmul.mubr.f32.gmra.mrb[0].mxu0 %v4297
      %v6166 = vpop.f32.mrb[0].mxu0
      %v6167 = vadd.f32 0.0, %v6166
      %v6168 = vpop.f32.mrb[0].mxu0
      %6169 = vmatprep.mubr.f32.mxu0 0.0
      %6170 = vmatmul.mubr.f32.gmra.mrb[0].mxu0 %v4299
      %v6171 = vpop.f32.mrb[0].mxu0
      %v6172 = vadd.f32 0.0, %v6171
      %v6173 = vpop.f32.mrb[0].mxu0
      %6174 = vmatprep.mubr.f32.mxu0 0.0
      %6175 = vmatmul.mubr.f32.gmra.mrb[0].mxu0 %v4301
      %v6176 = vpop.f32.mrb[0].mxu0
      %v6177 = vadd.f32 0.0, %v6176
      %v6178 = vpop.f32.mrb[0].mxu0
      %6179 = vmatprep.mubr.f32.mxu0 0.0
      %6180 = vmatmul.mubr.f32.gmra.mrb[0].mxu0 %v4303
      %v6181 = vpop.f32.mrb[0].mxu0
      %v6182 = vadd.f32 0.0, %v6181
      %v6183 = vpop.f32.mrb[0].mxu0
      %6184 = vmatprep.mubr.f32.mxu0 0.0
      %6185 = vmatmul.mubr.f32.gmra.mrb[0].mxu0 %v4305
      %v6186 = vpop.f32.mrb[0].mxu0
      %v6187 = vadd.f32 0.0, %v6186
      %v6188 = vpop.f32.mrb[0].mxu0
      %6189 = vmatprep.mubr.f32.mxu0 0.0
      %6190 = vmatmul.mubr.f32.gmra.mrb[0].mxu0 %v4307
      %v6191 = vpop.f32.mrb[0].mxu0
      %v6192 = vadd.f32 0.0, %v6191
      %v6193 = vpop.f32.mrb[0].mxu0
      %6194 = vmatprep.mubr.f32.mxu0 0.0
      %6195 = vmatmul.mubr.f32.gmra.mrb[0].mxu0 %v4309
      %v6196 = vpop.f32.mrb[0].mxu0
      %v6197 = vadd.f32 0.0, %v6196
      %v6198 = vpop.f32.mrb[0].mxu0
      %6199 = vmatprep.mubr.f32.mxu0 0.0
      %6200 = vmatmul.mubr.f32.gmra.mrb[0].mxu0 %v4311
      %v6201 = vpop.f32.mrb[0].mxu0
      %v6202 = vadd.f32 0.0, %v6201
      %v6203 = vpop.f32.mrb[0].mxu0
      %6204 = vmatprep.mubr.f32.mxu0 0.0
      %6205 = vmatmul.mubr.f32.gmra.mrb[0].mxu0 %v4313
      %v6206 = vpop.f32.mrb[0].mxu0
      %v6207 = vadd.f32 0.0, %v6206
      %v6208 = vpop.f32.mrb[0].mxu0
      %6209 = vmatprep.mubr.f32.mxu0 0.0
      %6210 = vmatmul.mubr.f32.gmra.mrb[0].mxu0 %v4315
      %v6211 = vpop.f32.mrb[0].mxu0
      %v6212 = vadd.f32 0.0, %v6211
      %v6213 = vpop.f32.mrb[0].mxu0
      %6214 = vmatprep.mubr.f32.mxu0 0.0
      %6215 = vmatmul.mubr.f32.gmra.mrb[0].mxu0 %v4317
      %v6216 = vpop.f32.mrb[0].mxu0
      %v6217 = vadd.f32 0.0, %v6216
      %v6218 = vpop.f32.mrb[0].mxu0
      %6219 = vmatprep.mubr.f32.mxu0 0.0
      %6220 = vmatmul.mubr.f32.gmra.mrb[0].mxu0 %v4319
      %v6221 = vpop.f32.mrb[0].mxu0
      %v6222 = vadd.f32 0.0, %v6221
      %v6223 = vpop.f32.mrb[0].mxu0
      %6224 = vmatprep.mubr.f32.mxu0 0.0
      %6225 = vmatmul.mubr.f32.gmra.mrb[0].mxu0 %v4321
      %v6226 = vpop.f32.mrb[0].mxu0
      %v6227 = vadd.f32 0.0, %v6226
      %v6228 = vpop.f32.mrb[0].mxu0
      %6229 = vmatprep.mubr.f32.mxu0 0.0
      %6230 = vmatmul.mubr.f32.gmra.mrb[0].mxu0 %v4323
      %v6231 = vpop.f32.mrb[0].mxu0
      %v6232 = vadd.f32 0.0, %v6231
      %v6233 = vpop.f32.mrb[0].mxu0
      %6234 = vmatprep.mubr.f32.mxu0 0.0
      %6235 = vmatmul.mubr.f32.gmra.mrb[0].mxu0 %v4325
      %v6236 = vpop.f32.mrb[0].mxu0
      %v6237 = vadd.f32 0.0, %v6236
      %v6238 = vpop.f32.mrb[0].mxu0
      %6239 = vmatprep.mubr.f32.mxu0 0.0
      %6240 = vmatmul.mubr.f32.gmra.mrb[0].mxu0 %v4327
      %v6241 = vpop.f32.mrb[0].mxu0
      %v6242 = vadd.f32 0.0, %v6241
      %v6243 = vpop.f32.mrb[0].mxu0
      %6244 = vmatprep.mubr.f32.mxu0 0.0
      %6245 = vmatmul.mubr.f32.gmra.mrb[0].mxu0 %v4329
      %v6246 = vpop.f32.mrb[0].mxu0
      %v6247 = vadd.f32 0.0, %v6246
      %v6248 = vpop.f32.mrb[0].mxu0
      %6249 = vmatprep.mubr.f32.mxu0 0.0
      %6250 = vmatmul.mubr.f32.gmra.mrb[0].mxu0 %v4331
      %v6251 = vpop.f32.mrb[0].mxu0
      %v6252 = vadd.f32 0.0, %v6251
      %v6253 = vpop.f32.mrb[0].mxu0
      %6254 = vmatprep.mubr.f32.mxu0 0.0
      %6255 = vmatmul.mubr.f32.gmra.mrb[0].mxu0 %v4333
      %v6256 = vpop.f32.mrb[0].mxu0
      %v6257 = vadd.f32 0.0, %v6256
      %v6258 = vpop.f32.mrb[0].mxu0
      %6259 = vmatprep.mubr.f32.mxu0 0.0
      %6260 = vmatmul.mubr.f32.gmra.mrb[0].mxu0 %v4335
      %v6261 = vpop.f32.mrb[0].mxu0
      %v6262 = vadd.f32 0.0, %v6261
      %v6263 = vpop.f32.mrb[0].mxu0
      %6264 = vmatprep.mubr.f32.mxu0 0.0
      %6265 = vmatmul.mubr.f32.gmra.mrb[0].mxu0 %v4337
      %v6266 = vpop.f32.mrb[0].mxu0
      %v6267 = vadd.f32 0.0, %v6266
      %v6268 = vpop.f32.mrb[0].mxu0
      %6269 = vmatprep.mubr.f32.mxu0 0.0
      %6270 = vmatmul.mubr.f32.gmra.mrb[0].mxu0 %v4339
      %v6271 = vpop.f32.mrb[0].mxu0
      %v6272 = vadd.f32 0.0, %v6271
      %v6273 = vpop.f32.mrb[0].mxu0
      %6274 = vmatprep.mubr.f32.mxu0 0.0
      %6275 = vmatmul.mubr.f32.gmra.mrb[0].mxu0 %v4341
      %v6276 = vpop.f32.mrb[0].mxu0
      %v6277 = vadd.f32 0.0, %v6276
      %v6278 = vpop.f32.mrb[0].mxu0
      %6279 = vmatprep.mubr.f32.mxu0 0.0
      %6280 = vmatmul.mubr.f32.gmra.mrb[0].mxu0 %v4343
      %v6281 = vpop.f32.mrb[0].mxu0
      %v6282 = vadd.f32 0.0, %v6281
      %v6283 = vpop.f32.mrb[0].mxu0
      %6284 = vmatprep.mubr.f32.mxu0 0.0
      %6285 = vmatmul.mubr.f32.gmra.mrb[0].mxu0 %v4345
      %v6286 = vpop.f32.mrb[0].mxu0
      %v6287 = vadd.f32 0.0, %v6286
      %v6288 = vpop.f32.mrb[0].mxu0
      %6289 = vmatprep.mubr.f32.mxu0 0.0
      %6290 = vmatmul.mubr.f32.gmra.mrb[0].mxu0 %v4347
      %v6291 = vpop.f32.mrb[0].mxu0
      %v6292 = vadd.f32 0.0, %v6291
      %v6293 = vpop.f32.mrb[0].mxu0
      %6294 = vmatprep.mubr.f32.mxu0 0.0
      %6295 = vmatmul.mubr.f32.gmra.mrb[0].mxu0 %v4349
      %v6296 = vpop.f32.mrb[0].mxu0
      %v6297 = vadd.f32 0.0, %v6296
      %v6298 = vpop.f32.mrb[0].mxu0
      %6299 = vmatprep.mubr.f32.mxu0 0.0
      %6300 = vmatmul.mubr.f32.gmra.mrb[0].mxu0 %v5294
      %v6301 = vpop.f32.mrb[0].mxu0
      %v6302 = vadd.f32 0.0, %v6301
      %v6303 = vpop.f32.mrb[0].mxu0
      %6304 = vmatprep.mubr.f32.mxu0 0.0
      %6305 = vmatmul.mubr.f32.gmra.mrb[0].mxu0 %v5296
      %v6306 = vpop.f32.mrb[0].mxu0
      %v6307 = vadd.f32 0.0, %v6306
      %v6308 = vpop.f32.mrb[0].mxu0
      %6309 = vmatprep.mubr.f32.mxu0 0.0
      %6310 = vmatmul.mubr.f32.gmra.mrb[0].mxu0 %v6091
      %v6311 = vpop.f32.mrb[0].mxu0
      %v6312 = vadd.f32 0.0, %v6311
      %v6313 = vpop.f32.mrb[0].mxu0
      %6314 = vmatprep.mubr.f32.mxu0 0.0
      %6315 = vmatmul.mubr.f32.gmra.mrb[0].mxu0 %v6093
      %v6316 = vpop.f32.mrb[0].mxu0
      %v6317 = vadd.f32 0.0, %v6316
      %v6318 = vpop.f32.mrb[0].mxu0
      %6319 = vdwg.mxu0
      %v6320 = vadd.f32 %v6059, %v6162
      %v6321 = vadd.f32 %v6060, %v6167
      %v6322 = vadd.f32 %v6061, %v6172
      %v6323 = vadd.f32 %v6062, %v6177
      %v6324 = vadd.f32 %v6063, %v6182
      %v6325 = vadd.f32 %v6064, %v6187
      %v6326 = vadd.f32 %v6065, %v6192
      %v6327 = vadd.f32 %v6066, %v6197
      %v6328 = vadd.f32 %v6067, %v6202
      %v6329 = vadd.f32 %v6068, %v6207
      %v6330 = vadd.f32 %v6069, %v6212
      %v6331 = vadd.f32 %v6070, %v6217
      %v6332 = vadd.f32 %v6071, %v6222
      %v6333 = vadd.f32 %v6072, %v6227
      %v6334 = vadd.f32 %v6073, %v6232
      %v6335 = vadd.f32 %v6074, %v6237
      %v6336 = vadd.f32 %v6075, %v6242
      %v6337 = vadd.f32 %v6076, %v6247
      %v6338 = vadd.f32 %v6077, %v6252
      %v6339 = vadd.f32 %v6078, %v6257
      %v6340 = vadd.f32 %v6079, %v6262
      %v6341 = vadd.f32 %v6080, %v6267
      %v6342 = vadd.f32 %v6081, %v6272
      %v6343 = vadd.f32 %v6082, %v6277
      %v6344 = vadd.f32 %v6083, %v6282
      %v6345 = vadd.f32 %v6084, %v6287
      %v6346 = vadd.f32 %v6085, %v6292
      %v6347 = vadd.f32 %v6086, %v6297
      %v6348 = vadd.f32 %v6087, %v6302
      %v6349 = vadd.f32 %v6088, %v6307
      %v6350 = vadd.f32 %v6089, %v6312
      %v6351 = vadd.f32 %v6090, %v6317
      %v6353 = vrot.slane %v3835, 1
      %v6354 = vrot.slane %v3836, 1
      %v6355 = vsel %vm1749, %v6353, %v6354
      %v6356 = vrot.slane %v3837, 1
      %v6357 = vsel %vm1749, %v6354, %v6356
      %v6358 = vsel %vm448, %v6355, 0
      %v6360 = vsel %vm448, %v6357, 0
      %6362 = vmatprep.subr.mxu0 0.0
      %6363 = vmatpush1.msra.mxu0 %v363
      %6364 = vmatprep.subr.mxu0 0.0
      %6365 = vmatpush1.msra.mxu0 0.0
      %6366 = vmatprep.subr.mxu0 0.0
      %6367 = vmatpush1.msra.mxu0 0.0
      %6368 = vmatprep.subr.mxu0 0.0
      %6369 = vmatpush1.msra.mxu0 0.0
      %6370 = vmatprep.subr.mxu0 0.0
      %6371 = vmatpush1.msra.mxu0 0.0
      %6372 = vmatprep.subr.mxu0 0.0
      %6373 = vmatpush1.msra.mxu0 0.0
      %6374 = vmatprep.subr.mxu0 0.0
      %6375 = vmatpush1.msra.mxu0 0.0
      %6376 = vmatprep.subr.mxu0 0.0
      %6377 = vmatpush1.msra.mxu0 0.0
      %6378 = vmatprep.subr.mxu0 0.0
      %6379 = vmatpush1.msra.mxu0 0.0
      %6380 = vmatprep.subr.mxu0 0.0
      %6381 = vmatpush1.msra.mxu0 0.0
      %6382 = vmatprep.subr.mxu0 0.0
      %6383 = vmatpush1.msra.mxu0 0.0
      %6384 = vmatprep.subr.mxu0 0.0
      %6385 = vmatpush1.msra.mxu0 0.0
      %6386 = vmatprep.subr.mxu0 0.0
      %6387 = vmatpush1.msra.mxu0 0.0
      %6388 = vmatprep.subr.mxu0 0.0
      %6389 = vmatpush1.msra.mxu0 0.0
      %6390 = vmatprep.subr.mxu0 0.0
      %6391 = vmatpush1.msra.mxu0 0.0
      %6392 = vmatprep.subr.mxu0 0.0
      %6393 = vmatpush1.msra.mxu0 0.0
      %6394 = vmatprep.subr.mxu0 0.0
      %6395 = vmatpush1.msra.mxu0 0.0
      %6396 = vmatprep.subr.mxu0 0.0
      %6397 = vmatpush1.msra.mxu0 0.0
      %6398 = vmatprep.subr.mxu0 0.0
      %6399 = vmatpush1.msra.mxu0 0.0
      %6400 = vmatprep.subr.mxu0 0.0
      %6401 = vmatpush1.msra.mxu0 0.0
      %6402 = vmatprep.subr.mxu0 0.0
      %6403 = vmatpush1.msra.mxu0 0.0
      %6404 = vmatprep.subr.mxu0 0.0
      %6405 = vmatpush1.msra.mxu0 0.0
      %6406 = vmatprep.subr.mxu0 0.0
      %6407 = vmatpush1.msra.mxu0 0.0
      %6408 = vmatprep.subr.mxu0 0.0
      %6409 = vmatpush1.msra.mxu0 0.0
      %6410 = vmatprep.subr.mxu0 0.0
      %6411 = vmatpush1.msra.mxu0 0.0
      %6412 = vmatprep.subr.mxu0 0.0
      %6413 = vmatpush1.msra.mxu0 0.0
      %6414 = vmatprep.subr.mxu0 0.0
      %6415 = vmatpush1.msra.mxu0 0.0
      %6416 = vmatprep.subr.mxu0 0.0
      %6417 = vmatpush1.msra.mxu0 0.0
      %6418 = vmatprep.subr.mxu0 0.0
      %6419 = vmatpush1.msra.mxu0 0.0
      %6420 = vmatprep.subr.mxu0 0.0
      %6421 = vmatpush1.msra.mxu0 0.0
      %6422 = vmatprep.subr.mxu0 0.0
      %6423 = vmatpush1.msra.mxu0 0.0
      %6424 = vmatprep.subr.mxu0 0.0
      %6425 = vmatpush1.msra.mxu0 0.0
      %6426 = vmatprep.mubr.f32.mxu0 0.0
      %6427 = vmatmul.mubr.f32.gmra.mrb[0].mxu0 %v4712
      %v6428 = vpop.f32.mrb[0].mxu0
      %v6429 = vadd.f32 0.0, %v6428
      %v6430 = vpop.f32.mrb[0].mxu0
      %6431 = vmatprep.mubr.f32.mxu0 0.0
      %6432 = vmatmul.mubr.f32.gmra.mrb[0].mxu0 %v4714
      %v6433 = vpop.f32.mrb[0].mxu0
      %v6434 = vadd.f32 0.0, %v6433
      %v6435 = vpop.f32.mrb[0].mxu0
      %6436 = vmatprep.mubr.f32.mxu0 0.0
      %6437 = vmatmul.mubr.f32.gmra.mrb[0].mxu0 %v4716
      %v6438 = vpop.f32.mrb[0].mxu0
      %v6439 = vadd.f32 0.0, %v6438
      %v6440 = vpop.f32.mrb[0].mxu0
      %6441 = vmatprep.mubr.f32.mxu0 0.0
      %6442 = vmatmul.mubr.f32.gmra.mrb[0].mxu0 %v4718
      %v6443 = vpop.f32.mrb[0].mxu0
      %v6444 = vadd.f32 0.0, %v6443
      %v6445 = vpop.f32.mrb[0].mxu0
      %6446 = vmatprep.mubr.f32.mxu0 0.0
      %6447 = vmatmul.mubr.f32.gmra.mrb[0].mxu0 %v4720
      %v6448 = vpop.f32.mrb[0].mxu0
      %v6449 = vadd.f32 0.0, %v6448
      %v6450 = vpop.f32.mrb[0].mxu0
      %6451 = vmatprep.mubr.f32.mxu0 0.0
      %6452 = vmatmul.mubr.f32.gmra.mrb[0].mxu0 %v4722
      %v6453 = vpop.f32.mrb[0].mxu0
      %v6454 = vadd.f32 0.0, %v6453
      %v6455 = vpop.f32.mrb[0].mxu0
      %6456 = vmatprep.mubr.f32.mxu0 0.0
      %6457 = vmatmul.mubr.f32.gmra.mrb[0].mxu0 %v4724
      %v6458 = vpop.f32.mrb[0].mxu0
      %v6459 = vadd.f32 0.0, %v6458
      %v6460 = vpop.f32.mrb[0].mxu0
      %6461 = vmatprep.mubr.f32.mxu0 0.0
      %6462 = vmatmul.mubr.f32.gmra.mrb[0].mxu0 %v4726
      %v6463 = vpop.f32.mrb[0].mxu0
      %v6464 = vadd.f32 0.0, %v6463
      %v6465 = vpop.f32.mrb[0].mxu0
      %6466 = vmatprep.mubr.f32.mxu0 0.0
      %6467 = vmatmul.mubr.f32.gmra.mrb[0].mxu0 %v4728
      %v6468 = vpop.f32.mrb[0].mxu0
      %v6469 = vadd.f32 0.0, %v6468
      %v6470 = vpop.f32.mrb[0].mxu0
      %6471 = vmatprep.mubr.f32.mxu0 0.0
      %6472 = vmatmul.mubr.f32.gmra.mrb[0].mxu0 %v4730
      %v6473 = vpop.f32.mrb[0].mxu0
      %v6474 = vadd.f32 0.0, %v6473
      %v6475 = vpop.f32.mrb[0].mxu0
      %6476 = vmatprep.mubr.f32.mxu0 0.0
      %6477 = vmatmul.mubr.f32.gmra.mrb[0].mxu0 %v4732
      %v6478 = vpop.f32.mrb[0].mxu0
      %v6479 = vadd.f32 0.0, %v6478
      %v6480 = vpop.f32.mrb[0].mxu0
      %6481 = vmatprep.mubr.f32.mxu0 0.0
      %6482 = vmatmul.mubr.f32.gmra.mrb[0].mxu0 %v4734
      %v6483 = vpop.f32.mrb[0].mxu0
      %v6484 = vadd.f32 0.0, %v6483
      %v6485 = vpop.f32.mrb[0].mxu0
      %6486 = vmatprep.mubr.f32.mxu0 0.0
      %6487 = vmatmul.mubr.f32.gmra.mrb[0].mxu0 %v4736
      %v6488 = vpop.f32.mrb[0].mxu0
      %v6489 = vadd.f32 0.0, %v6488
      %v6490 = vpop.f32.mrb[0].mxu0
      %6491 = vmatprep.mubr.f32.mxu0 0.0
      %6492 = vmatmul.mubr.f32.gmra.mrb[0].mxu0 %v4738
      %v6493 = vpop.f32.mrb[0].mxu0
      %v6494 = vadd.f32 0.0, %v6493
      %v6495 = vpop.f32.mrb[0].mxu0
      %6496 = vmatprep.mubr.f32.mxu0 0.0
      %6497 = vmatmul.mubr.f32.gmra.mrb[0].mxu0 %v4740
      %v6498 = vpop.f32.mrb[0].mxu0
      %v6499 = vadd.f32 0.0, %v6498
      %v6500 = vpop.f32.mrb[0].mxu0
      %6501 = vmatprep.mubr.f32.mxu0 0.0
      %6502 = vmatmul.mubr.f32.gmra.mrb[0].mxu0 %v4742
      %v6503 = vpop.f32.mrb[0].mxu0
      %v6504 = vadd.f32 0.0, %v6503
      %v6505 = vpop.f32.mrb[0].mxu0
      %6506 = vmatprep.mubr.f32.mxu0 0.0
      %6507 = vmatmul.mubr.f32.gmra.mrb[0].mxu0 %v4744
      %v6508 = vpop.f32.mrb[0].mxu0
      %v6509 = vadd.f32 0.0, %v6508
      %v6510 = vpop.f32.mrb[0].mxu0
      %6511 = vmatprep.mubr.f32.mxu0 0.0
      %6512 = vmatmul.mubr.f32.gmra.mrb[0].mxu0 %v4746
      %v6513 = vpop.f32.mrb[0].mxu0
      %v6514 = vadd.f32 0.0, %v6513
      %v6515 = vpop.f32.mrb[0].mxu0
      %6516 = vmatprep.mubr.f32.mxu0 0.0
      %6517 = vmatmul.mubr.f32.gmra.mrb[0].mxu0 %v4748
      %v6518 = vpop.f32.mrb[0].mxu0
      %v6519 = vadd.f32 0.0, %v6518
      %v6520 = vpop.f32.mrb[0].mxu0
      %6521 = vmatprep.mubr.f32.mxu0 0.0
      %6522 = vmatmul.mubr.f32.gmra.mrb[0].mxu0 %v4750
      %v6523 = vpop.f32.mrb[0].mxu0
      %v6524 = vadd.f32 0.0, %v6523
      %v6525 = vpop.f32.mrb[0].mxu0
      %6526 = vmatprep.mubr.f32.mxu0 0.0
      %6527 = vmatmul.mubr.f32.gmra.mrb[0].mxu0 %v4752
      %v6528 = vpop.f32.mrb[0].mxu0
      %v6529 = vadd.f32 0.0, %v6528
      %v6530 = vpop.f32.mrb[0].mxu0
      %6531 = vmatprep.mubr.f32.mxu0 0.0
      %6532 = vmatmul.mubr.f32.gmra.mrb[0].mxu0 %v4754
      %v6533 = vpop.f32.mrb[0].mxu0
      %v6534 = vadd.f32 0.0, %v6533
      %v6535 = vpop.f32.mrb[0].mxu0
      %6536 = vmatprep.mubr.f32.mxu0 0.0
      %6537 = vmatmul.mubr.f32.gmra.mrb[0].mxu0 %v4756
      %v6538 = vpop.f32.mrb[0].mxu0
      %v6539 = vadd.f32 0.0, %v6538
      %v6540 = vpop.f32.mrb[0].mxu0
      %6541 = vmatprep.mubr.f32.mxu0 0.0
      %6542 = vmatmul.mubr.f32.gmra.mrb[0].mxu0 %v4758
      %v6543 = vpop.f32.mrb[0].mxu0
      %v6544 = vadd.f32 0.0, %v6543
      %v6545 = vpop.f32.mrb[0].mxu0
      %6546 = vmatprep.mubr.f32.mxu0 0.0
      %6547 = vmatmul.mubr.f32.gmra.mrb[0].mxu0 %v4760
      %v6548 = vpop.f32.mrb[0].mxu0
      %v6549 = vadd.f32 0.0, %v6548
      %v6550 = vpop.f32.mrb[0].mxu0
      %6551 = vmatprep.mubr.f32.mxu0 0.0
      %6552 = vmatmul.mubr.f32.gmra.mrb[0].mxu0 %v4762
      %v6553 = vpop.f32.mrb[0].mxu0
      %v6554 = vadd.f32 0.0, %v6553
      %v6555 = vpop.f32.mrb[0].mxu0
      %6556 = vmatprep.mubr.f32.mxu0 0.0
      %6557 = vmatmul.mubr.f32.gmra.mrb[0].mxu0 %v4764
      %v6558 = vpop.f32.mrb[0].mxu0
      %v6559 = vadd.f32 0.0, %v6558
      %v6560 = vpop.f32.mrb[0].mxu0
      %6561 = vmatprep.mubr.f32.mxu0 0.0
      %6562 = vmatmul.mubr.f32.gmra.mrb[0].mxu0 %v4766
      %v6563 = vpop.f32.mrb[0].mxu0
      %v6564 = vadd.f32 0.0, %v6563
      %v6565 = vpop.f32.mrb[0].mxu0
      %6566 = vmatprep.mubr.f32.mxu0 0.0
      %6567 = vmatmul.mubr.f32.gmra.mrb[0].mxu0 %v5561
      %v6568 = vpop.f32.mrb[0].mxu0
      %v6569 = vadd.f32 0.0, %v6568
      %v6570 = vpop.f32.mrb[0].mxu0
      %6571 = vmatprep.mubr.f32.mxu0 0.0
      %6572 = vmatmul.mubr.f32.gmra.mrb[0].mxu0 %v5563
      %v6573 = vpop.f32.mrb[0].mxu0
      %v6574 = vadd.f32 0.0, %v6573
      %v6575 = vpop.f32.mrb[0].mxu0
      %6576 = vmatprep.mubr.f32.mxu0 0.0
      %6577 = vmatmul.mubr.f32.gmra.mrb[0].mxu0 %v6358
      %v6578 = vpop.f32.mrb[0].mxu0
      %v6579 = vadd.f32 0.0, %v6578
      %v6580 = vpop.f32.mrb[0].mxu0
      %6581 = vmatprep.mubr.f32.mxu0 0.0
      %6582 = vmatmul.mubr.f32.gmra.mrb[0].mxu0 %v6360
      %v6583 = vpop.f32.mrb[0].mxu0
      %v6584 = vadd.f32 0.0, %v6583
      %v6585 = vpop.f32.mrb[0].mxu0
      %6586 = vdwg.mxu0
      %v6587 = vadd.f32 %v6320, %v6429
      %v6588 = vadd.f32 %v6321, %v6434
      %v6589 = vadd.f32 %v6322, %v6439
      %v6590 = vadd.f32 %v6323, %v6444
      %v6591 = vadd.f32 %v6324, %v6449
      %v6592 = vadd.f32 %v6325, %v6454
      %v6593 = vadd.f32 %v6326, %v6459
      %v6594 = vadd.f32 %v6327, %v6464
      %v6595 = vadd.f32 %v6328, %v6469
      %v6596 = vadd.f32 %v6329, %v6474
      %v6597 = vadd.f32 %v6330, %v6479
      %v6598 = vadd.f32 %v6331, %v6484
      %v6599 = vadd.f32 %v6332, %v6489
      %v6600 = vadd.f32 %v6333, %v6494
      %v6601 = vadd.f32 %v6334, %v6499
      %v6602 = vadd.f32 %v6335, %v6504
      %v6603 = vadd.f32 %v6336, %v6509
      %v6604 = vadd.f32 %v6337, %v6514
      %v6605 = vadd.f32 %v6338, %v6519
      %v6606 = vadd.f32 %v6339, %v6524
      %v6607 = vadd.f32 %v6340, %v6529
      %v6608 = vadd.f32 %v6341, %v6534
      %v6609 = vadd.f32 %v6342, %v6539
      %v6610 = vadd.f32 %v6343, %v6544
      %v6611 = vadd.f32 %v6344, %v6549
      %v6612 = vadd.f32 %v6345, %v6554
      %v6613 = vadd.f32 %v6346, %v6559
      %v6614 = vadd.f32 %v6347, %v6564
      %v6615 = vadd.f32 %v6348, %v6569
      %v6616 = vadd.f32 %v6349, %v6574
      %v6617 = vadd.f32 %v6350, %v6579
      %v6618 = vadd.f32 %v6351, %v6584
      %v6620 = vlaneseq
      %v6621 = vshrl.u32 %v6620, 7
      %v6622 = vsub.s32 0, %v6621
      %v6623 = vrot.slane %v373, %v6622
      %v6625 = vadd.f32 %v6587, %v6623
      %v6626 = vadd.f32 %v6588, %v6623
      %v6627 = vadd.f32 %v6589, %v6623
      %v6628 = vadd.f32 %v6590, %v6623
      %v6629 = vadd.f32 %v6591, %v6623
      %v6630 = vadd.f32 %v6592, %v6623
      %v6631 = vadd.f32 %v6593, %v6623
      %v6632 = vadd.f32 %v6594, %v6623
      %v6633 = vadd.f32 %v6595, %v6623
      %v6634 = vadd.f32 %v6596, %v6623
      %v6635 = vadd.f32 %v6597, %v6623
      %v6636 = vadd.f32 %v6598, %v6623
      %v6637 = vadd.f32 %v6599, %v6623
      %v6638 = vadd.f32 %v6600, %v6623
      %v6639 = vadd.f32 %v6601, %v6623
      %v6640 = vadd.f32 %v6602, %v6623
      %v6641 = vadd.f32 %v6603, %v6623
      %v6642 = vadd.f32 %v6604, %v6623
      %v6643 = vadd.f32 %v6605, %v6623
      %v6644 = vadd.f32 %v6606, %v6623
      %v6645 = vadd.f32 %v6607, %v6623
      %v6646 = vadd.f32 %v6608, %v6623
      %v6647 = vadd.f32 %v6609, %v6623
      %v6648 = vadd.f32 %v6610, %v6623
      %v6649 = vadd.f32 %v6611, %v6623
      %v6650 = vadd.f32 %v6612, %v6623
      %v6651 = vadd.f32 %v6613, %v6623
      %v6652 = vadd.f32 %v6614, %v6623
      %v6653 = vadd.f32 %v6615, %v6623
      %v6654 = vadd.f32 %v6616, %v6623
      %v6655 = vadd.f32 %v6617, %v6623
      %v6656 = vadd.f32 %v6618, %v6623
      %s6657 = scalar_lea.vmem [#allocation4], 32
      %6658 = vst.msk [vmem:[%s6657 + $0x8] sm:$0xff] %vm448, %v6625
      %6659 = vst.msk [vmem:[%s6657 + $0x10] sm:$0xff] %vm448, %v6626
      %6660 = vst.msk [vmem:[%s6657 + $0x28] sm:$0xff] %vm448, %v6627
      %6661 = vst.msk [vmem:[%s6657 + $0x30] sm:$0xff] %vm448, %v6628
      %6662 = vst.msk [vmem:[%s6657 + $0x48] sm:$0xff] %vm448, %v6629
      %6663 = vst.msk [vmem:[%s6657 + $0x50] sm:$0xff] %vm448, %v6630
      %6664 = vst.msk [vmem:[%s6657 + $0x68] sm:$0xff] %vm448, %v6631
      %6665 = vst.msk [vmem:[%s6657 + $0x70] sm:$0xff] %vm448, %v6632
      %6666 = vst.msk [vmem:[%s6657 + $0x88] sm:$0xff] %vm448, %v6633
      %6667 = vst.msk [vmem:[%s6657 + $0x90] sm:$0xff] %vm448, %v6634
      %6668 = vst.msk [vmem:[%s6657 + $0xa8] sm:$0xff] %vm448, %v6635
      %6669 = vst.msk [vmem:[%s6657 + $0xb0] sm:$0xff] %vm448, %v6636
      %6670 = vst.msk [vmem:[%s6657 + $0xc8] sm:$0xff] %vm448, %v6637
      %6671 = vst.msk [vmem:[%s6657 + $0xd0] sm:$0xff] %vm448, %v6638
      %6672 = vst.msk [vmem:[%s6657 + $0xe8] sm:$0xff] %vm448, %v6639
      %6673 = vst.msk [vmem:[%s6657 + $0xf0] sm:$0xff] %vm448, %v6640
      %6674 = vst.msk [vmem:[%s6657 + $0x108] sm:$0xff] %vm448, %v6641
      %6675 = vst.msk [vmem:[%s6657 + $0x110] sm:$0xff] %vm448, %v6642
      %6676 = vst.msk [vmem:[%s6657 + $0x128] sm:$0xff] %vm448, %v6643
      %6677 = vst.msk [vmem:[%s6657 + $0x130] sm:$0xff] %vm448, %v6644
      %6678 = vst.msk [vmem:[%s6657 + $0x148] sm:$0xff] %vm448, %v6645
      %6679 = vst.msk [vmem:[%s6657 + $0x150] sm:$0xff] %vm448, %v6646
      %6680 = vst.msk [vmem:[%s6657 + $0x168] sm:$0xff] %vm448, %v6647
      %6681 = vst.msk [vmem:[%s6657 + $0x170] sm:$0xff] %vm448, %v6648
      %6682 = vst.msk [vmem:[%s6657 + $0x188] sm:$0xff] %vm448, %v6649
      %6683 = vst.msk [vmem:[%s6657 + $0x190] sm:$0xff] %vm448, %v6650
      %6684 = vst.msk [vmem:[%s6657 + $0x1a8] sm:$0xff] %vm448, %v6651
      %6685 = vst.msk [vmem:[%s6657 + $0x1b0] sm:$0xff] %vm448, %v6652
      %6686 = vst.msk [vmem:[%s6657 + $0x1c8] sm:$0xff] %vm448, %v6653
      %6687 = vst.msk [vmem:[%s6657 + $0x1d0] sm:$0xff] %vm448, %v6654
      %6688 = vst.msk [vmem:[%s6657 + $0x1e8] sm:$0xff] %vm448, %v6655
      %6689 = vst.msk [vmem:[%s6657 + $0x1f0] sm:$0xff] %vm448, %v6656
      %v6690 = vld [vmem:[#allocation4] sm:$0xff]
      %v6691 = vld [vmem:[#allocation4 + $0x8] sm:$0xff]
      %v6692 = vld [vmem:[#allocation4 + $0x10] sm:$0xff]
      %v6693 = vld [vmem:[#allocation4 + $0x18] sm:$0xff]
      %v6694 = vld [vmem:[#allocation4 + $0x20] sm:$0xff]
      %v6695 = vld [vmem:[#allocation4 + $0x28] sm:$0xff]
      %v6696 = vld [vmem:[#allocation4 + $0x30] sm:$0xff]
      %v6697 = vld [vmem:[#allocation4 + $0x38] sm:$0xff]
      %v6698 = vld [vmem:[#allocation4 + $0x40] sm:$0xff]
      %v6699 = vld [vmem:[#allocation4 + $0x48] sm:$0xff]
      %v6700 = vld [vmem:[#allocation4 + $0x50] sm:$0xff]
      %v6701 = vld [vmem:[#allocation4 + $0x58] sm:$0xff]
      %v6702 = vld [vmem:[#allocation4 + $0x60] sm:$0xff]
      %v6703 = vld [vmem:[#allocation4 + $0x68] sm:$0xff]
      %v6704 = vld [vmem:[#allocation4 + $0x70] sm:$0xff]
      %v6705 = vld [vmem:[#allocation4 + $0x78] sm:$0xff]
      %v6706 = vld [vmem:[#allocation4 + $0x80] sm:$0xff]
      %v6707 = vld [vmem:[#allocation4 + $0x88] sm:$0xff]
      %v6708 = vld [vmem:[#allocation4 + $0x90] sm:$0xff]
      %v6709 = vld [vmem:[#allocation4 + $0x98] sm:$0xff]
      %v6710 = vld [vmem:[#allocation4 + $0xa0] sm:$0xff]
      %v6711 = vld [vmem:[#allocation4 + $0xa8] sm:$0xff]
      %v6712 = vld [vmem:[#allocation4 + $0xb0] sm:$0xff]
      %v6713 = vld [vmem:[#allocation4 + $0xb8] sm:$0xff]
      %v6714 = vld [vmem:[#allocation4 + $0xc0] sm:$0xff]
      %v6715 = vld [vmem:[#allocation4 + $0xc8] sm:$0xff]
      %v6716 = vld [vmem:[#allocation4 + $0xd0] sm:$0xff]
      %v6717 = vld [vmem:[#allocation4 + $0xd8] sm:$0xff]
      %v6718 = vld [vmem:[#allocation4 + $0xe0] sm:$0xff]
      %v6719 = vld [vmem:[#allocation4 + $0xe8] sm:$0xff]
      %v6720 = vld [vmem:[#allocation4 + $0xf0] sm:$0xff]
      %v6721 = vld [vmem:[#allocation4 + $0xf8] sm:$0xff]
      %v6722 = vld [vmem:[#allocation4 + $0x100] sm:$0xff]
      %v6723 = vld [vmem:[#allocation4 + $0x108] sm:$0xff]
      %v6724 = vld [vmem:[#allocation4 + $0x110] sm:$0xff]
      %v6725 = vld [vmem:[#allocation4 + $0x118] sm:$0xff]
      %v6726 = vld [vmem:[#allocation4 + $0x120] sm:$0xff]
      %v6727 = vld [vmem:[#allocation4 + $0x128] sm:$0xff]
      %v6728 = vld [vmem:[#allocation4 + $0x130] sm:$0xff]
      %v6729 = vld [vmem:[#allocation4 + $0x138] sm:$0xff]
      %v6730 = vld [vmem:[#allocation4 + $0x140] sm:$0xff]
      %v6731 = vld [vmem:[#allocation4 + $0x148] sm:$0xff]
      %v6732 = vld [vmem:[#allocation4 + $0x150] sm:$0xff]
      %v6733 = vld [vmem:[#allocation4 + $0x158] sm:$0xff]
      %v6734 = vld [vmem:[#allocation4 + $0x160] sm:$0xff]
      %v6735 = vld [vmem:[#allocation4 + $0x168] sm:$0xff]
      %v6736 = vld [vmem:[#allocation4 + $0x170] sm:$0xff]
      %v6737 = vld [vmem:[#allocation4 + $0x178] sm:$0xff]
      %v6738 = vld [vmem:[#allocation4 + $0x180] sm:$0xff]
      %v6739 = vld [vmem:[#allocation4 + $0x188] sm:$0xff]
      %v6740 = vld [vmem:[#allocation4 + $0x190] sm:$0xff]
      %v6741 = vld [vmem:[#allocation4 + $0x198] sm:$0xff]
      %v6742 = vld [vmem:[#allocation4 + $0x1a0] sm:$0xff]
      %v6743 = vld [vmem:[#allocation4 + $0x1a8] sm:$0xff]
      %v6744 = vld [vmem:[#allocation4 + $0x1b0] sm:$0xff]
      %v6745 = vld [vmem:[#allocation4 + $0x1b8] sm:$0xff]
      %v6746 = vld [vmem:[#allocation4 + $0x1c0] sm:$0xff]
      %v6747 = vld [vmem:[#allocation4 + $0x1c8] sm:$0xff]
      %v6748 = vld [vmem:[#allocation4 + $0x1d0] sm:$0xff]
      %v6749 = vld [vmem:[#allocation4 + $0x1d8] sm:$0xff]
      %v6750 = vld [vmem:[#allocation4 + $0x1e0] sm:$0xff]
      %v6751 = vld [vmem:[#allocation4 + $0x1e8] sm:$0xff]
      %v6752 = vld [vmem:[#allocation4 + $0x1f0] sm:$0xff]
      %v6753 = vld [vmem:[#allocation4 + $0x1f8] sm:$0xff]
      %v6754 = vld [vmem:[#allocation4 + $0x200] sm:$0xff]
      %v6755 = vld [vmem:[#allocation4 + $0x208] sm:$0xff]
      %v6756 = vld [vmem:[#allocation4 + $0x210] sm:$0xff]
      %v6757 = vld [vmem:[#allocation4 + $0x218] sm:$0xff]
      %v6758 = vld [vmem:[#allocation4 + $0x220] sm:$0xff]
      %v6759 = vld [vmem:[#allocation4 + $0x228] sm:$0xff]
      %v6760 = vld [vmem:[#allocation4 + $0x230] sm:$0xff]
      %v6761 = vld [vmem:[#allocation4 + $0x238] sm:$0xff]
      %v6810 = vrot.slane %v6690, 7
      %v6811 = vrot.slane %v6691, 7
      %v6812 = vsel %vm1067, %v6810, %v6811
      %v6813 = vrot.slane %v6692, 7
      %v6814 = vsel %vm1067, %v6811, %v6813
      %v6815 = vrot.slane %v6694, 7
      %v6816 = vrot.slane %v6695, 7
      %v6817 = vsel %vm1067, %v6815, %v6816
      %v6818 = vrot.slane %v6696, 7
      %v6819 = vsel %vm1067, %v6816, %v6818
      %v6820 = vrot.slane %v6698, 7
      %v6821 = vrot.slane %v6699, 7
      %v6822 = vsel %vm1067, %v6820, %v6821
      %v6823 = vrot.slane %v6700, 7
      %v6824 = vsel %vm1067, %v6821, %v6823
      %v6825 = vrot.slane %v6702, 7
      %v6826 = vrot.slane %v6703, 7
      %v6827 = vsel %vm1067, %v6825, %v6826
      %v6828 = vrot.slane %v6704, 7
      %v6829 = vsel %vm1067, %v6826, %v6828
      %v6830 = vrot.slane %v6706, 7
      %v6831 = vrot.slane %v6707, 7
      %v6832 = vsel %vm1067, %v6830, %v6831
      %v6833 = vrot.slane %v6708, 7
      %v6834 = vsel %vm1067, %v6831, %v6833
      %v6835 = vrot.slane %v6710, 7
      %v6836 = vrot.slane %v6711, 7
      %v6837 = vsel %vm1067, %v6835, %v6836
      %v6838 = vrot.slane %v6712, 7
      %v6839 = vsel %vm1067, %v6836, %v6838
      %v6840 = vrot.slane %v6714, 7
      %v6841 = vrot.slane %v6715, 7
      %v6842 = vsel %vm1067, %v6840, %v6841
      %v6843 = vrot.slane %v6716, 7
      %v6844 = vsel %vm1067, %v6841, %v6843
      %v6845 = vrot.slane %v6718, 7
      %v6846 = vrot.slane %v6719, 7
      %v6847 = vsel %vm1067, %v6845, %v6846
      %v6848 = vrot.slane %v6720, 7
      %v6849 = vsel %vm1067, %v6846, %v6848
      %v6850 = vrot.slane %v6722, 7
      %v6851 = vrot.slane %v6723, 7
      %v6852 = vsel %vm1067, %v6850, %v6851
      %v6853 = vrot.slane %v6724, 7
      %v6854 = vsel %vm1067, %v6851, %v6853
      %v6855 = vrot.slane %v6726, 7
      %v6856 = vrot.slane %v6727, 7
      %v6857 = vsel %vm1067, %v6855, %v6856
      %v6858 = vrot.slane %v6728, 7
      %v6859 = vsel %vm1067, %v6856, %v6858
      %v6860 = vrot.slane %v6730, 7
      %v6861 = vrot.slane %v6731, 7
      %v6862 = vsel %vm1067, %v6860, %v6861
      %v6863 = vrot.slane %v6732, 7
      %v6864 = vsel %vm1067, %v6861, %v6863
      %v6865 = vrot.slane %v6734, 7
      %v6866 = vrot.slane %v6735, 7
      %v6867 = vsel %vm1067, %v6865, %v6866
      %v6868 = vrot.slane %v6736, 7
      %v6869 = vsel %vm1067, %v6866, %v6868
      %v6870 = vrot.slane %v6738, 7
      %v6871 = vrot.slane %v6739, 7
      %v6872 = vsel %vm1067, %v6870, %v6871
      %v6873 = vrot.slane %v6740, 7
      %v6874 = vsel %vm1067, %v6871, %v6873
      %v6875 = vrot.slane %v6742, 7
      %v6876 = vrot.slane %v6743, 7
      %v6877 = vsel %vm1067, %v6875, %v6876
      %v6878 = vrot.slane %v6744, 7
      %v6879 = vsel %vm1067, %v6876, %v6878
      %v6880 = vrot.slane %v6746, 7
      %v6881 = vrot.slane %v6747, 7
      %v6882 = vsel %vm1067, %v6880, %v6881
      %v6883 = vrot.slane %v6748, 7
      %v6884 = vsel %vm1067, %v6881, %v6883
      %v6885 = vrot.slane %v6750, 7
      %v6886 = vrot.slane %v6751, 7
      %v6887 = vsel %vm1067, %v6885, %v6886
      %v6888 = vrot.slane %v6752, 7
      %v6889 = vsel %vm1067, %v6886, %v6888
      %v6890 = vsel %vm448, %v6691, 0
      %v6892 = vsel %vm448, %v6692, 0
      %v6894 = vsel %vm448, %v6695, 0
      %v6896 = vsel %vm448, %v6696, 0
      %v6898 = vsel %vm448, %v6699, 0
      %v6900 = vsel %vm448, %v6700, 0
      %v6902 = vsel %vm448, %v6703, 0
      %v6904 = vsel %vm448, %v6704, 0
      %v6906 = vsel %vm448, %v6707, 0
      %v6908 = vsel %vm448, %v6708, 0
      %v6910 = vsel %vm448, %v6711, 0
      %v6912 = vsel %vm448, %v6712, 0
      %v6914 = vsel %vm448, %v6715, 0
      %v6916 = vsel %vm448, %v6716, 0
      %v6918 = vsel %vm448, %v6719, 0
      %v6920 = vsel %vm448, %v6720, 0
      %v6922 = vsel %vm448, %v6723, 0
      %v6924 = vsel %vm448, %v6724, 0
      %v6926 = vsel %vm448, %v6727, 0
      %v6928 = vsel %vm448, %v6728, 0
      %v6930 = vsel %vm448, %v6731, 0
      %v6932 = vsel %vm448, %v6732, 0
      %v6934 = vsel %vm448, %v6735, 0
      %v6936 = vsel %vm448, %v6736, 0
      %v6938 = vsel %vm448, %v6739, 0
      %v6940 = vsel %vm448, %v6740, 0
      %v6942 = vsel %vm448, %v6743, 0
      %v6944 = vsel %vm448, %v6744, 0
      %v6946 = vsel %vm448, %v6747, 0
      %v6948 = vsel %vm448, %v6748, 0
      %v6950 = vsel %vm448, %v6751, 0
      %v6952 = vsel %vm448, %v6752, 0
      %6954 = vmatprep.subr.mxu0 0.0
      %6955 = vmatpush1.msra.mxu0 %v365
      %6956 = vmatprep.subr.mxu0 0.0
      %6957 = vmatpush1.msra.mxu0 0.0
      %6958 = vmatprep.subr.mxu0 0.0
      %6959 = vmatpush1.msra.mxu0 0.0
      %6960 = vmatprep.subr.mxu0 0.0
      %6961 = vmatpush1.msra.mxu0 0.0
      %6962 = vmatprep.subr.mxu0 0.0
      %6963 = vmatpush1.msra.mxu0 0.0
      %6964 = vmatprep.subr.mxu0 0.0
      %6965 = vmatpush1.msra.mxu0 0.0
      %6966 = vmatprep.subr.mxu0 0.0
      %6967 = vmatpush1.msra.mxu0 0.0
      %6968 = vmatprep.subr.mxu0 0.0
      %6969 = vmatpush1.msra.mxu0 0.0
      %6970 = vmatprep.subr.mxu0 0.0
      %6971 = vmatpush1.msra.mxu0 0.0
      %6972 = vmatprep.subr.mxu0 0.0
      %6973 = vmatpush1.msra.mxu0 0.0
      %6974 = vmatprep.subr.mxu0 0.0
      %6975 = vmatpush1.msra.mxu0 0.0
      %6976 = vmatprep.subr.mxu0 0.0
      %6977 = vmatpush1.msra.mxu0 0.0
      %6978 = vmatprep.subr.mxu0 0.0
      %6979 = vmatpush1.msra.mxu0 0.0
      %6980 = vmatprep.subr.mxu0 0.0
      %6981 = vmatpush1.msra.mxu0 0.0
      %6982 = vmatprep.subr.mxu0 0.0
      %6983 = vmatpush1.msra.mxu0 0.0
      %6984 = vmatprep.subr.mxu0 0.0
      %6985 = vmatpush1.msra.mxu0 0.0
      %6986 = vmatprep.subr.mxu0 0.0
      %6987 = vmatpush1.msra.mxu0 0.0
      %6988 = vmatprep.subr.mxu0 0.0
      %6989 = vmatpush1.msra.mxu0 0.0
      %6990 = vmatprep.subr.mxu0 0.0
      %6991 = vmatpush1.msra.mxu0 0.0
      %6992 = vmatprep.subr.mxu0 0.0
      %6993 = vmatpush1.msra.mxu0 0.0
      %6994 = vmatprep.subr.mxu0 0.0
      %6995 = vmatpush1.msra.mxu0 0.0
      %6996 = vmatprep.subr.mxu0 0.0
      %6997 = vmatpush1.msra.mxu0 0.0
      %6998 = vmatprep.subr.mxu0 0.0
      %6999 = vmatpush1.msra.mxu0 0.0
      %7000 = vmatprep.subr.mxu0 0.0
      %7001 = vmatpush1.msra.mxu0 0.0
      %7002 = vmatprep.subr.mxu0 0.0
      %7003 = vmatpush1.msra.mxu0 0.0
      %7004 = vmatprep.subr.mxu0 0.0
      %7005 = vmatpush1.msra.mxu0 0.0
      %7006 = vmatprep.subr.mxu0 0.0
      %7007 = vmatpush1.msra.mxu0 0.0
      %7008 = vmatprep.subr.mxu0 0.0
      %7009 = vmatpush1.msra.mxu0 0.0
      %7010 = vmatprep.subr.mxu0 0.0
      %7011 = vmatpush1.msra.mxu0 0.0
      %7012 = vmatprep.subr.mxu0 0.0
      %7013 = vmatpush1.msra.mxu0 0.0
      %7014 = vmatprep.subr.mxu0 0.0
      %7015 = vmatpush1.msra.mxu0 0.0
      %7016 = vmatprep.subr.mxu0 0.0
      %7017 = vmatpush1.msra.mxu0 0.0
      %7018 = vmatprep.mubr.f32.mxu0 0.0
      %7019 = vmatmul.mubr.f32.gmra.mrb[0].mxu0 %v6890
      %v7020 = vpop.f32.mrb[0].mxu0
      %v7021 = vadd.f32 0.0, %v7020
      %v7022 = vpop.f32.mrb[0].mxu0
      %7023 = vmatprep.mubr.f32.mxu0 0.0
      %7024 = vmatmul.mubr.f32.gmra.mrb[0].mxu0 %v6892
      %v7025 = vpop.f32.mrb[0].mxu0
      %v7026 = vadd.f32 0.0, %v7025
      %v7027 = vpop.f32.mrb[0].mxu0
      %7028 = vmatprep.mubr.f32.mxu0 0.0
      %7029 = vmatmul.mubr.f32.gmra.mrb[0].mxu0 %v6894
      %v7030 = vpop.f32.mrb[0].mxu0
      %v7031 = vadd.f32 0.0, %v7030
      %v7032 = vpop.f32.mrb[0].mxu0
      %7033 = vmatprep.mubr.f32.mxu0 0.0
      %7034 = vmatmul.mubr.f32.gmra.mrb[0].mxu0 %v6896
      %v7035 = vpop.f32.mrb[0].mxu0
      %v7036 = vadd.f32 0.0, %v7035
      %v7037 = vpop.f32.mrb[0].mxu0
      %7038 = vmatprep.mubr.f32.mxu0 0.0
      %7039 = vmatmul.mubr.f32.gmra.mrb[0].mxu0 %v6898
      %v7040 = vpop.f32.mrb[0].mxu0
      %v7041 = vadd.f32 0.0, %v7040
      %v7042 = vpop.f32.mrb[0].mxu0
      %7043 = vmatprep.mubr.f32.mxu0 0.0
      %7044 = vmatmul.mubr.f32.gmra.mrb[0].mxu0 %v6900
      %v7045 = vpop.f32.mrb[0].mxu0
      %v7046 = vadd.f32 0.0, %v7045
      %v7047 = vpop.f32.mrb[0].mxu0
      %7048 = vmatprep.mubr.f32.mxu0 0.0
      %7049 = vmatmul.mubr.f32.gmra.mrb[0].mxu0 %v6902
      %v7050 = vpop.f32.mrb[0].mxu0
      %v7051 = vadd.f32 0.0, %v7050
      %v7052 = vpop.f32.mrb[0].mxu0
      %7053 = vmatprep.mubr.f32.mxu0 0.0
      %7054 = vmatmul.mubr.f32.gmra.mrb[0].mxu0 %v6904
      %v7055 = vpop.f32.mrb[0].mxu0
      %v7056 = vadd.f32 0.0, %v7055
      %v7057 = vpop.f32.mrb[0].mxu0
      %7058 = vmatprep.mubr.f32.mxu0 0.0
      %7059 = vmatmul.mubr.f32.gmra.mrb[0].mxu0 %v6906
      %v7060 = vpop.f32.mrb[0].mxu0
      %v7061 = vadd.f32 0.0, %v7060
      %v7062 = vpop.f32.mrb[0].mxu0
      %7063 = vmatprep.mubr.f32.mxu0 0.0
      %7064 = vmatmul.mubr.f32.gmra.mrb[0].mxu0 %v6908
      %v7065 = vpop.f32.mrb[0].mxu0
      %v7066 = vadd.f32 0.0, %v7065
      %v7067 = vpop.f32.mrb[0].mxu0
      %7068 = vmatprep.mubr.f32.mxu0 0.0
      %7069 = vmatmul.mubr.f32.gmra.mrb[0].mxu0 %v6910
      %v7070 = vpop.f32.mrb[0].mxu0
      %v7071 = vadd.f32 0.0, %v7070
      %v7072 = vpop.f32.mrb[0].mxu0
      %7073 = vmatprep.mubr.f32.mxu0 0.0
      %7074 = vmatmul.mubr.f32.gmra.mrb[0].mxu0 %v6912
      %v7075 = vpop.f32.mrb[0].mxu0
      %v7076 = vadd.f32 0.0, %v7075
      %v7077 = vpop.f32.mrb[0].mxu0
      %7078 = vmatprep.mubr.f32.mxu0 0.0
      %7079 = vmatmul.mubr.f32.gmra.mrb[0].mxu0 %v6914
      %v7080 = vpop.f32.mrb[0].mxu0
      %v7081 = vadd.f32 0.0, %v7080
      %v7082 = vpop.f32.mrb[0].mxu0
      %7083 = vmatprep.mubr.f32.mxu0 0.0
      %7084 = vmatmul.mubr.f32.gmra.mrb[0].mxu0 %v6916
      %v7085 = vpop.f32.mrb[0].mxu0
      %v7086 = vadd.f32 0.0, %v7085
      %v7087 = vpop.f32.mrb[0].mxu0
      %7088 = vmatprep.mubr.f32.mxu0 0.0
      %7089 = vmatmul.mubr.f32.gmra.mrb[0].mxu0 %v6918
      %v7090 = vpop.f32.mrb[0].mxu0
      %v7091 = vadd.f32 0.0, %v7090
      %v7092 = vpop.f32.mrb[0].mxu0
      %7093 = vmatprep.mubr.f32.mxu0 0.0
      %7094 = vmatmul.mubr.f32.gmra.mrb[0].mxu0 %v6920
      %v7095 = vpop.f32.mrb[0].mxu0
      %v7096 = vadd.f32 0.0, %v7095
      %v7097 = vpop.f32.mrb[0].mxu0
      %7098 = vmatprep.mubr.f32.mxu0 0.0
      %7099 = vmatmul.mubr.f32.gmra.mrb[0].mxu0 %v6922
      %v7100 = vpop.f32.mrb[0].mxu0
      %v7101 = vadd.f32 0.0, %v7100
      %v7102 = vpop.f32.mrb[0].mxu0
      %7103 = vmatprep.mubr.f32.mxu0 0.0
      %7104 = vmatmul.mubr.f32.gmra.mrb[0].mxu0 %v6924
      %v7105 = vpop.f32.mrb[0].mxu0
      %v7106 = vadd.f32 0.0, %v7105
      %v7107 = vpop.f32.mrb[0].mxu0
      %7108 = vmatprep.mubr.f32.mxu0 0.0
      %7109 = vmatmul.mubr.f32.gmra.mrb[0].mxu0 %v6926
      %v7110 = vpop.f32.mrb[0].mxu0
      %v7111 = vadd.f32 0.0, %v7110
      %v7112 = vpop.f32.mrb[0].mxu0
      %7113 = vmatprep.mubr.f32.mxu0 0.0
      %7114 = vmatmul.mubr.f32.gmra.mrb[0].mxu0 %v6928
      %v7115 = vpop.f32.mrb[0].mxu0
      %v7116 = vadd.f32 0.0, %v7115
      %v7117 = vpop.f32.mrb[0].mxu0
      %7118 = vmatprep.mubr.f32.mxu0 0.0
      %7119 = vmatmul.mubr.f32.gmra.mrb[0].mxu0 %v6930
      %v7120 = vpop.f32.mrb[0].mxu0
      %v7121 = vadd.f32 0.0, %v7120
      %v7122 = vpop.f32.mrb[0].mxu0
      %7123 = vmatprep.mubr.f32.mxu0 0.0
      %7124 = vmatmul.mubr.f32.gmra.mrb[0].mxu0 %v6932
      %v7125 = vpop.f32.mrb[0].mxu0
      %v7126 = vadd.f32 0.0, %v7125
      %v7127 = vpop.f32.mrb[0].mxu0
      %7128 = vmatprep.mubr.f32.mxu0 0.0
      %7129 = vmatmul.mubr.f32.gmra.mrb[0].mxu0 %v6934
      %v7130 = vpop.f32.mrb[0].mxu0
      %v7131 = vadd.f32 0.0, %v7130
      %v7132 = vpop.f32.mrb[0].mxu0
      %7133 = vmatprep.mubr.f32.mxu0 0.0
      %7134 = vmatmul.mubr.f32.gmra.mrb[0].mxu0 %v6936
      %v7135 = vpop.f32.mrb[0].mxu0
      %v7136 = vadd.f32 0.0, %v7135
      %v7137 = vpop.f32.mrb[0].mxu0
      %7138 = vmatprep.mubr.f32.mxu0 0.0
      %7139 = vmatmul.mubr.f32.gmra.mrb[0].mxu0 %v6938
      %v7140 = vpop.f32.mrb[0].mxu0
      %v7141 = vadd.f32 0.0, %v7140
      %v7142 = vpop.f32.mrb[0].mxu0
      %7143 = vmatprep.mubr.f32.mxu0 0.0
      %7144 = vmatmul.mubr.f32.gmra.mrb[0].mxu0 %v6940
      %v7145 = vpop.f32.mrb[0].mxu0
      %v7146 = vadd.f32 0.0, %v7145
      %v7147 = vpop.f32.mrb[0].mxu0
      %7148 = vmatprep.mubr.f32.mxu0 0.0
      %7149 = vmatmul.mubr.f32.gmra.mrb[0].mxu0 %v6942
      %v7150 = vpop.f32.mrb[0].mxu0
      %v7151 = vadd.f32 0.0, %v7150
      %v7152 = vpop.f32.mrb[0].mxu0
      %7153 = vmatprep.mubr.f32.mxu0 0.0
      %7154 = vmatmul.mubr.f32.gmra.mrb[0].mxu0 %v6944
      %v7155 = vpop.f32.mrb[0].mxu0
      %v7156 = vadd.f32 0.0, %v7155
      %v7157 = vpop.f32.mrb[0].mxu0
      %7158 = vmatprep.mubr.f32.mxu0 0.0
      %7159 = vmatmul.mubr.f32.gmra.mrb[0].mxu0 %v6946
      %v7160 = vpop.f32.mrb[0].mxu0
      %v7161 = vadd.f32 0.0, %v7160
      %v7162 = vpop.f32.mrb[0].mxu0
      %7163 = vmatprep.mubr.f32.mxu0 0.0
      %7164 = vmatmul.mubr.f32.gmra.mrb[0].mxu0 %v6948
      %v7165 = vpop.f32.mrb[0].mxu0
      %v7166 = vadd.f32 0.0, %v7165
      %v7167 = vpop.f32.mrb[0].mxu0
      %7168 = vmatprep.mubr.f32.mxu0 0.0
      %7169 = vmatmul.mubr.f32.gmra.mrb[0].mxu0 %v6950
      %v7170 = vpop.f32.mrb[0].mxu0
      %v7171 = vadd.f32 0.0, %v7170
      %v7172 = vpop.f32.mrb[0].mxu0
      %7173 = vmatprep.mubr.f32.mxu0 0.0
      %7174 = vmatmul.mubr.f32.gmra.mrb[0].mxu0 %v6952
      %v7175 = vpop.f32.mrb[0].mxu0
      %v7176 = vadd.f32 0.0, %v7175
      %v7177 = vpop.f32.mrb[0].mxu0
      %7178 = vdwg.mxu0
      %v7179 = vsel %vm448, %v6812, 0
      %v7181 = vsel %vm448, %v6814, 0
      %v7183 = vsel %vm448, %v6817, 0
      %v7185 = vsel %vm448, %v6819, 0
      %v7187 = vsel %vm448, %v6822, 0
      %v7189 = vsel %vm448, %v6824, 0
      %v7191 = vsel %vm448, %v6827, 0
      %v7193 = vsel %vm448, %v6829, 0
      %v7195 = vsel %vm448, %v6832, 0
      %v7197 = vsel %vm448, %v6834, 0
      %v7199 = vsel %vm448, %v6837, 0
      %v7201 = vsel %vm448, %v6839, 0
      %v7203 = vsel %vm448, %v6842, 0
      %v7205 = vsel %vm448, %v6844, 0
      %v7207 = vsel %vm448, %v6847, 0
      %v7209 = vsel %vm448, %v6849, 0
      %v7211 = vsel %vm448, %v6852, 0
      %v7213 = vsel %vm448, %v6854, 0
      %v7215 = vsel %vm448, %v6857, 0
      %v7217 = vsel %vm448, %v6859, 0
      %v7219 = vsel %vm448, %v6862, 0
      %v7221 = vsel %vm448, %v6864, 0
      %v7223 = vsel %vm448, %v6867, 0
      %v7225 = vsel %vm448, %v6869, 0
      %v7227 = vsel %vm448, %v6872, 0
      %v7229 = vsel %vm448, %v6874, 0
      %v7231 = vsel %vm448, %v6877, 0
      %v7233 = vsel %vm448, %v6879, 0
      %v7235 = vsel %vm448, %v6882, 0
      %v7237 = vsel %vm448, %v6884, 0
      %v7239 = vsel %vm448, %v6887, 0
      %v7241 = vsel %vm448, %v6889, 0
      %7243 = vmatprep.subr.mxu0 0.0
      %7244 = vmatpush1.msra.mxu0 %v364
      %7245 = vmatprep.subr.mxu0 0.0
      %7246 = vmatpush1.msra.mxu0 0.0
      %7247 = vmatprep.subr.mxu0 0.0
      %7248 = vmatpush1.msra.mxu0 0.0
      %7249 = vmatprep.subr.mxu0 0.0
      %7250 = vmatpush1.msra.mxu0 0.0
      %7251 = vmatprep.subr.mxu0 0.0
      %7252 = vmatpush1.msra.mxu0 0.0
      %7253 = vmatprep.subr.mxu0 0.0
      %7254 = vmatpush1.msra.mxu0 0.0
      %7255 = vmatprep.subr.mxu0 0.0
      %7256 = vmatpush1.msra.mxu0 0.0
      %7257 = vmatprep.subr.mxu0 0.0
      %7258 = vmatpush1.msra.mxu0 0.0
      %7259 = vmatprep.subr.mxu0 0.0
      %7260 = vmatpush1.msra.mxu0 0.0
      %7261 = vmatprep.subr.mxu0 0.0
      %7262 = vmatpush1.msra.mxu0 0.0
      %7263 = vmatprep.subr.mxu0 0.0
      %7264 = vmatpush1.msra.mxu0 0.0
      %7265 = vmatprep.subr.mxu0 0.0
      %7266 = vmatpush1.msra.mxu0 0.0
      %7267 = vmatprep.subr.mxu0 0.0
      %7268 = vmatpush1.msra.mxu0 0.0
      %7269 = vmatprep.subr.mxu0 0.0
      %7270 = vmatpush1.msra.mxu0 0.0
      %7271 = vmatprep.subr.mxu0 0.0
      %7272 = vmatpush1.msra.mxu0 0.0
      %7273 = vmatprep.subr.mxu0 0.0
      %7274 = vmatpush1.msra.mxu0 0.0
      %7275 = vmatprep.subr.mxu0 0.0
      %7276 = vmatpush1.msra.mxu0 0.0
      %7277 = vmatprep.subr.mxu0 0.0
      %7278 = vmatpush1.msra.mxu0 0.0
      %7279 = vmatprep.subr.mxu0 0.0
      %7280 = vmatpush1.msra.mxu0 0.0
      %7281 = vmatprep.subr.mxu0 0.0
      %7282 = vmatpush1.msra.mxu0 0.0
      %7283 = vmatprep.subr.mxu0 0.0
      %7284 = vmatpush1.msra.mxu0 0.0
      %7285 = vmatprep.subr.mxu0 0.0
      %7286 = vmatpush1.msra.mxu0 0.0
      %7287 = vmatprep.subr.mxu0 0.0
      %7288 = vmatpush1.msra.mxu0 0.0
      %7289 = vmatprep.subr.mxu0 0.0
      %7290 = vmatpush1.msra.mxu0 0.0
      %7291 = vmatprep.subr.mxu0 0.0
      %7292 = vmatpush1.msra.mxu0 0.0
      %7293 = vmatprep.subr.mxu0 0.0
      %7294 = vmatpush1.msra.mxu0 0.0
      %7295 = vmatprep.subr.mxu0 0.0
      %7296 = vmatpush1.msra.mxu0 0.0
      %7297 = vmatprep.subr.mxu0 0.0
      %7298 = vmatpush1.msra.mxu0 0.0
      %7299 = vmatprep.subr.mxu0 0.0
      %7300 = vmatpush1.msra.mxu0 0.0
      %7301 = vmatprep.subr.mxu0 0.0
      %7302 = vmatpush1.msra.mxu0 0.0
      %7303 = vmatprep.subr.mxu0 0.0
      %7304 = vmatpush1.msra.mxu0 0.0
      %7305 = vmatprep.subr.mxu0 0.0
      %7306 = vmatpush1.msra.mxu0 0.0
      %7307 = vmatprep.mubr.f32.mxu0 0.0
      %7308 = vmatmul.mubr.f32.gmra.mrb[0].mxu0 %v7179
      %v7309 = vpop.f32.mrb[0].mxu0
      %v7310 = vadd.f32 %v7021, %v7309
      %v7311 = vpop.f32.mrb[0].mxu0
      %7312 = vmatprep.mubr.f32.mxu0 0.0
      %7313 = vmatmul.mubr.f32.gmra.mrb[0].mxu0 %v7181
      %v7314 = vpop.f32.mrb[0].mxu0
      %v7315 = vadd.f32 %v7026, %v7314
      %v7316 = vpop.f32.mrb[0].mxu0
      %7317 = vmatprep.mubr.f32.mxu0 0.0
      %7318 = vmatmul.mubr.f32.gmra.mrb[0].mxu0 %v7183
      %v7319 = vpop.f32.mrb[0].mxu0
      %v7320 = vadd.f32 %v7031, %v7319
      %v7321 = vpop.f32.mrb[0].mxu0
      %7322 = vmatprep.mubr.f32.mxu0 0.0
      %7323 = vmatmul.mubr.f32.gmra.mrb[0].mxu0 %v7185
      %v7324 = vpop.f32.mrb[0].mxu0
      %v7325 = vadd.f32 %v7036, %v7324
      %v7326 = vpop.f32.mrb[0].mxu0
      %7327 = vmatprep.mubr.f32.mxu0 0.0
      %7328 = vmatmul.mubr.f32.gmra.mrb[0].mxu0 %v7187
      %v7329 = vpop.f32.mrb[0].mxu0
      %v7330 = vadd.f32 %v7041, %v7329
      %v7331 = vpop.f32.mrb[0].mxu0
      %7332 = vmatprep.mubr.f32.mxu0 0.0
      %7333 = vmatmul.mubr.f32.gmra.mrb[0].mxu0 %v7189
      %v7334 = vpop.f32.mrb[0].mxu0
      %v7335 = vadd.f32 %v7046, %v7334
      %v7336 = vpop.f32.mrb[0].mxu0
      %7337 = vmatprep.mubr.f32.mxu0 0.0
      %7338 = vmatmul.mubr.f32.gmra.mrb[0].mxu0 %v7191
      %v7339 = vpop.f32.mrb[0].mxu0
      %v7340 = vadd.f32 %v7051, %v7339
      %v7341 = vpop.f32.mrb[0].mxu0
      %7342 = vmatprep.mubr.f32.mxu0 0.0
      %7343 = vmatmul.mubr.f32.gmra.mrb[0].mxu0 %v7193
      %v7344 = vpop.f32.mrb[0].mxu0
      %v7345 = vadd.f32 %v7056, %v7344
      %v7346 = vpop.f32.mrb[0].mxu0
      %7347 = vmatprep.mubr.f32.mxu0 0.0
      %7348 = vmatmul.mubr.f32.gmra.mrb[0].mxu0 %v7195
      %v7349 = vpop.f32.mrb[0].mxu0
      %v7350 = vadd.f32 %v7061, %v7349
      %v7351 = vpop.f32.mrb[0].mxu0
      %7352 = vmatprep.mubr.f32.mxu0 0.0
      %7353 = vmatmul.mubr.f32.gmra.mrb[0].mxu0 %v7197
      %v7354 = vpop.f32.mrb[0].mxu0
      %v7355 = vadd.f32 %v7066, %v7354
      %v7356 = vpop.f32.mrb[0].mxu0
      %7357 = vmatprep.mubr.f32.mxu0 0.0
      %7358 = vmatmul.mubr.f32.gmra.mrb[0].mxu0 %v7199
      %v7359 = vpop.f32.mrb[0].mxu0
      %v7360 = vadd.f32 %v7071, %v7359
      %v7361 = vpop.f32.mrb[0].mxu0
      %7362 = vmatprep.mubr.f32.mxu0 0.0
      %7363 = vmatmul.mubr.f32.gmra.mrb[0].mxu0 %v7201
      %v7364 = vpop.f32.mrb[0].mxu0
      %v7365 = vadd.f32 %v7076, %v7364
      %v7366 = vpop.f32.mrb[0].mxu0
      %7367 = vmatprep.mubr.f32.mxu0 0.0
      %7368 = vmatmul.mubr.f32.gmra.mrb[0].mxu0 %v7203
      %v7369 = vpop.f32.mrb[0].mxu0
      %v7370 = vadd.f32 %v7081, %v7369
      %v7371 = vpop.f32.mrb[0].mxu0
      %7372 = vmatprep.mubr.f32.mxu0 0.0
      %7373 = vmatmul.mubr.f32.gmra.mrb[0].mxu0 %v7205
      %v7374 = vpop.f32.mrb[0].mxu0
      %v7375 = vadd.f32 %v7086, %v7374
      %v7376 = vpop.f32.mrb[0].mxu0
      %7377 = vmatprep.mubr.f32.mxu0 0.0
      %7378 = vmatmul.mubr.f32.gmra.mrb[0].mxu0 %v7207
      %v7379 = vpop.f32.mrb[0].mxu0
      %v7380 = vadd.f32 %v7091, %v7379
      %v7381 = vpop.f32.mrb[0].mxu0
      %7382 = vmatprep.mubr.f32.mxu0 0.0
      %7383 = vmatmul.mubr.f32.gmra.mrb[0].mxu0 %v7209
      %v7384 = vpop.f32.mrb[0].mxu0
      %v7385 = vadd.f32 %v7096, %v7384
      %v7386 = vpop.f32.mrb[0].mxu0
      %7387 = vmatprep.mubr.f32.mxu0 0.0
      %7388 = vmatmul.mubr.f32.gmra.mrb[0].mxu0 %v7211
      %v7389 = vpop.f32.mrb[0].mxu0
      %v7390 = vadd.f32 %v7101, %v7389
      %v7391 = vpop.f32.mrb[0].mxu0
      %7392 = vmatprep.mubr.f32.mxu0 0.0
      %7393 = vmatmul.mubr.f32.gmra.mrb[0].mxu0 %v7213
      %v7394 = vpop.f32.mrb[0].mxu0
      %v7395 = vadd.f32 %v7106, %v7394
      %v7396 = vpop.f32.mrb[0].mxu0
      %7397 = vmatprep.mubr.f32.mxu0 0.0
      %7398 = vmatmul.mubr.f32.gmra.mrb[0].mxu0 %v7215
      %v7399 = vpop.f32.mrb[0].mxu0
      %v7400 = vadd.f32 %v7111, %v7399
      %v7401 = vpop.f32.mrb[0].mxu0
      %7402 = vmatprep.mubr.f32.mxu0 0.0
      %7403 = vmatmul.mubr.f32.gmra.mrb[0].mxu0 %v7217
      %v7404 = vpop.f32.mrb[0].mxu0
      %v7405 = vadd.f32 %v7116, %v7404
      %v7406 = vpop.f32.mrb[0].mxu0
      %7407 = vmatprep.mubr.f32.mxu0 0.0
      %7408 = vmatmul.mubr.f32.gmra.mrb[0].mxu0 %v7219
      %v7409 = vpop.f32.mrb[0].mxu0
      %v7410 = vadd.f32 %v7121, %v7409
      %v7411 = vpop.f32.mrb[0].mxu0
      %7412 = vmatprep.mubr.f32.mxu0 0.0
      %7413 = vmatmul.mubr.f32.gmra.mrb[0].mxu0 %v7221
      %v7414 = vpop.f32.mrb[0].mxu0
      %v7415 = vadd.f32 %v7126, %v7414
      %v7416 = vpop.f32.mrb[0].mxu0
      %7417 = vmatprep.mubr.f32.mxu0 0.0
      %7418 = vmatmul.mubr.f32.gmra.mrb[0].mxu0 %v7223
      %v7419 = vpop.f32.mrb[0].mxu0
      %v7420 = vadd.f32 %v7131, %v7419
      %v7421 = vpop.f32.mrb[0].mxu0
      %7422 = vmatprep.mubr.f32.mxu0 0.0
      %7423 = vmatmul.mubr.f32.gmra.mrb[0].mxu0 %v7225
      %v7424 = vpop.f32.mrb[0].mxu0
      %v7425 = vadd.f32 %v7136, %v7424
      %v7426 = vpop.f32.mrb[0].mxu0
      %7427 = vmatprep.mubr.f32.mxu0 0.0
      %7428 = vmatmul.mubr.f32.gmra.mrb[0].mxu0 %v7227
      %v7429 = vpop.f32.mrb[0].mxu0
      %v7430 = vadd.f32 %v7141, %v7429
      %v7431 = vpop.f32.mrb[0].mxu0
      %7432 = vmatprep.mubr.f32.mxu0 0.0
      %7433 = vmatmul.mubr.f32.gmra.mrb[0].mxu0 %v7229
      %v7434 = vpop.f32.mrb[0].mxu0
      %v7435 = vadd.f32 %v7146, %v7434
      %v7436 = vpop.f32.mrb[0].mxu0
      %7437 = vmatprep.mubr.f32.mxu0 0.0
      %7438 = vmatmul.mubr.f32.gmra.mrb[0].mxu0 %v7231
      %v7439 = vpop.f32.mrb[0].mxu0
      %v7440 = vadd.f32 %v7151, %v7439
      %v7441 = vpop.f32.mrb[0].mxu0
      %7442 = vmatprep.mubr.f32.mxu0 0.0
      %7443 = vmatmul.mubr.f32.gmra.mrb[0].mxu0 %v7233
      %v7444 = vpop.f32.mrb[0].mxu0
      %v7445 = vadd.f32 %v7156, %v7444
      %v7446 = vpop.f32.mrb[0].mxu0
      %7447 = vmatprep.mubr.f32.mxu0 0.0
      %7448 = vmatmul.mubr.f32.gmra.mrb[0].mxu0 %v7235
      %v7449 = vpop.f32.mrb[0].mxu0
      %v7450 = vadd.f32 %v7161, %v7449
      %v7451 = vpop.f32.mrb[0].mxu0
      %7452 = vmatprep.mubr.f32.mxu0 0.0
      %7453 = vmatmul.mubr.f32.gmra.mrb[0].mxu0 %v7237
      %v7454 = vpop.f32.mrb[0].mxu0
      %v7455 = vadd.f32 %v7166, %v7454
      %v7456 = vpop.f32.mrb[0].mxu0
      %7457 = vmatprep.mubr.f32.mxu0 0.0
      %7458 = vmatmul.mubr.f32.gmra.mrb[0].mxu0 %v7239
      %v7459 = vpop.f32.mrb[0].mxu0
      %v7460 = vadd.f32 %v7171, %v7459
      %v7461 = vpop.f32.mrb[0].mxu0
      %7462 = vmatprep.mubr.f32.mxu0 0.0
      %7463 = vmatmul.mubr.f32.gmra.mrb[0].mxu0 %v7241
      %v7464 = vpop.f32.mrb[0].mxu0
      %v7465 = vadd.f32 %v7176, %v7464
      %v7466 = vpop.f32.mrb[0].mxu0
      %7467 = vdwg.mxu0
      %v7484 = vrot.slane %v6691, 1
      %v7485 = vrot.slane %v6692, 1
      %v7486 = vsel %vm1749, %v7484, %v7485
      %v7487 = vrot.slane %v6693, 1
      %v7488 = vsel %vm1749, %v7485, %v7487
      %v7489 = vrot.slane %v6695, 1
      %v7490 = vrot.slane %v6696, 1
      %v7491 = vsel %vm1749, %v7489, %v7490
      %v7492 = vrot.slane %v6697, 1
      %v7493 = vsel %vm1749, %v7490, %v7492
      %v7494 = vrot.slane %v6699, 1
      %v7495 = vrot.slane %v6700, 1
      %v7496 = vsel %vm1749, %v7494, %v7495
      %v7497 = vrot.slane %v6701, 1
      %v7498 = vsel %vm1749, %v7495, %v7497
      %v7499 = vrot.slane %v6703, 1
      %v7500 = vrot.slane %v6704, 1
      %v7501 = vsel %vm1749, %v7499, %v7500
      %v7502 = vrot.slane %v6705, 1
      %v7503 = vsel %vm1749, %v7500, %v7502
      %v7504 = vrot.slane %v6707, 1
      %v7505 = vrot.slane %v6708, 1
      %v7506 = vsel %vm1749, %v7504, %v7505
      %v7507 = vrot.slane %v6709, 1
      %v7508 = vsel %vm1749, %v7505, %v7507
      %v7509 = vrot.slane %v6711, 1
      %v7510 = vrot.slane %v6712, 1
      %v7511 = vsel %vm1749, %v7509, %v7510
      %v7512 = vrot.slane %v6713, 1
      %v7513 = vsel %vm1749, %v7510, %v7512
      %v7514 = vrot.slane %v6715, 1
      %v7515 = vrot.slane %v6716, 1
      %v7516 = vsel %vm1749, %v7514, %v7515
      %v7517 = vrot.slane %v6717, 1
      %v7518 = vsel %vm1749, %v7515, %v7517
      %v7519 = vrot.slane %v6719, 1
      %v7520 = vrot.slane %v6720, 1
      %v7521 = vsel %vm1749, %v7519, %v7520
      %v7522 = vrot.slane %v6721, 1
      %v7523 = vsel %vm1749, %v7520, %v7522
      %v7524 = vrot.slane %v6723, 1
      %v7525 = vrot.slane %v6724, 1
      %v7526 = vsel %vm1749, %v7524, %v7525
      %v7527 = vrot.slane %v6725, 1
      %v7528 = vsel %vm1749, %v7525, %v7527
      %v7529 = vrot.slane %v6727, 1
      %v7530 = vrot.slane %v6728, 1
      %v7531 = vsel %vm1749, %v7529, %v7530
      %v7532 = vrot.slane %v6729, 1
      %v7533 = vsel %vm1749, %v7530, %v7532
      %v7534 = vrot.slane %v6731, 1
      %v7535 = vrot.slane %v6732, 1
      %v7536 = vsel %vm1749, %v7534, %v7535
      %v7537 = vrot.slane %v6733, 1
      %v7538 = vsel %vm1749, %v7535, %v7537
      %v7539 = vrot.slane %v6735, 1
      %v7540 = vrot.slane %v6736, 1
      %v7541 = vsel %vm1749, %v7539, %v7540
      %v7542 = vrot.slane %v6737, 1
      %v7543 = vsel %vm1749, %v7540, %v7542
      %v7544 = vrot.slane %v6739, 1
      %v7545 = vrot.slane %v6740, 1
      %v7546 = vsel %vm1749, %v7544, %v7545
      %v7547 = vrot.slane %v6741, 1
      %v7548 = vsel %vm1749, %v7545, %v7547
      %v7549 = vrot.slane %v6743, 1
      %v7550 = vrot.slane %v6744, 1
      %v7551 = vsel %vm1749, %v7549, %v7550
      %v7552 = vrot.slane %v6745, 1
      %v7553 = vsel %vm1749, %v7550, %v7552
      %v7554 = vrot.slane %v6747, 1
      %v7555 = vrot.slane %v6748, 1
      %v7556 = vsel %vm1749, %v7554, %v7555
      %v7557 = vrot.slane %v6749, 1
      %v7558 = vsel %vm1749, %v7555, %v7557
      %v7559 = vrot.slane %v6751, 1
      %v7560 = vrot.slane %v6752, 1
      %v7561 = vsel %vm1749, %v7559, %v7560
      %v7562 = vrot.slane %v6753, 1
      %v7563 = vsel %vm1749, %v7560, %v7562
      %v7564 = vsel %vm448, %v7486, 0
      %v7566 = vsel %vm448, %v7488, 0
      %v7568 = vsel %vm448, %v7491, 0
      %v7570 = vsel %vm448, %v7493, 0
      %v7572 = vsel %vm448, %v7496, 0
      %v7574 = vsel %vm448, %v7498, 0
      %v7576 = vsel %vm448, %v7501, 0
      %v7578 = vsel %vm448, %v7503, 0
      %v7580 = vsel %vm448, %v7506, 0
      %v7582 = vsel %vm448, %v7508, 0
      %v7584 = vsel %vm448, %v7511, 0
      %v7586 = vsel %vm448, %v7513, 0
      %v7588 = vsel %vm448, %v7516, 0
      %v7590 = vsel %vm448, %v7518, 0
      %v7592 = vsel %vm448, %v7521, 0
      %v7594 = vsel %vm448, %v7523, 0
      %v7596 = vsel %vm448, %v7526, 0
      %v7598 = vsel %vm448, %v7528, 0
      %v7600 = vsel %vm448, %v7531, 0
      %v7602 = vsel %vm448, %v7533, 0
      %v7604 = vsel %vm448, %v7536, 0
      %v7606 = vsel %vm448, %v7538, 0
      %v7608 = vsel %vm448, %v7541, 0
      %v7610 = vsel %vm448, %v7543, 0
      %v7612 = vsel %vm448, %v7546, 0
      %v7614 = vsel %vm448, %v7548, 0
      %v7616 = vsel %vm448, %v7551, 0
      %v7618 = vsel %vm448, %v7553, 0
      %v7620 = vsel %vm448, %v7556, 0
      %v7622 = vsel %vm448, %v7558, 0
      %v7624 = vsel %vm448, %v7561, 0
      %v7626 = vsel %vm448, %v7563, 0
      %7628 = vmatprep.subr.mxu0 0.0
      %7629 = vmatpush1.msra.mxu0 %v366
      %7630 = vmatprep.subr.mxu0 0.0
      %7631 = vmatpush1.msra.mxu0 0.0
      %7632 = vmatprep.subr.mxu0 0.0
      %7633 = vmatpush1.msra.mxu0 0.0
      %7634 = vmatprep.subr.mxu0 0.0
      %7635 = vmatpush1.msra.mxu0 0.0
      %7636 = vmatprep.subr.mxu0 0.0
      %7637 = vmatpush1.msra.mxu0 0.0
      %7638 = vmatprep.subr.mxu0 0.0
      %7639 = vmatpush1.msra.mxu0 0.0
      %7640 = vmatprep.subr.mxu0 0.0
      %7641 = vmatpush1.msra.mxu0 0.0
      %7642 = vmatprep.subr.mxu0 0.0
      %7643 = vmatpush1.msra.mxu0 0.0
      %7644 = vmatprep.subr.mxu0 0.0
      %7645 = vmatpush1.msra.mxu0 0.0
      %7646 = vmatprep.subr.mxu0 0.0
      %7647 = vmatpush1.msra.mxu0 0.0
      %7648 = vmatprep.subr.mxu0 0.0
      %7649 = vmatpush1.msra.mxu0 0.0
      %7650 = vmatprep.subr.mxu0 0.0
      %7651 = vmatpush1.msra.mxu0 0.0
      %7652 = vmatprep.subr.mxu0 0.0
      %7653 = vmatpush1.msra.mxu0 0.0
      %7654 = vmatprep.subr.mxu0 0.0
      %7655 = vmatpush1.msra.mxu0 0.0
      %7656 = vmatprep.subr.mxu0 0.0
      %7657 = vmatpush1.msra.mxu0 0.0
      %7658 = vmatprep.subr.mxu0 0.0
      %7659 = vmatpush1.msra.mxu0 0.0
      %7660 = vmatprep.subr.mxu0 0.0
      %7661 = vmatpush1.msra.mxu0 0.0
      %7662 = vmatprep.subr.mxu0 0.0
      %7663 = vmatpush1.msra.mxu0 0.0
      %7664 = vmatprep.subr.mxu0 0.0
      %7665 = vmatpush1.msra.mxu0 0.0
      %7666 = vmatprep.subr.mxu0 0.0
      %7667 = vmatpush1.msra.mxu0 0.0
      %7668 = vmatprep.subr.mxu0 0.0
      %7669 = vmatpush1.msra.mxu0 0.0
      %7670 = vmatprep.subr.mxu0 0.0
      %7671 = vmatpush1.msra.mxu0 0.0
      %7672 = vmatprep.subr.mxu0 0.0
      %7673 = vmatpush1.msra.mxu0 0.0
      %7674 = vmatprep.subr.mxu0 0.0
      %7675 = vmatpush1.msra.mxu0 0.0
      %7676 = vmatprep.subr.mxu0 0.0
      %7677 = vmatpush1.msra.mxu0 0.0
      %7678 = vmatprep.subr.mxu0 0.0
      %7679 = vmatpush1.msra.mxu0 0.0
      %7680 = vmatprep.subr.mxu0 0.0
      %7681 = vmatpush1.msra.mxu0 0.0
      %7682 = vmatprep.subr.mxu0 0.0
      %7683 = vmatpush1.msra.mxu0 0.0
      %7684 = vmatprep.subr.mxu0 0.0
      %7685 = vmatpush1.msra.mxu0 0.0
      %7686 = vmatprep.subr.mxu0 0.0
      %7687 = vmatpush1.msra.mxu0 0.0
      %7688 = vmatprep.subr.mxu0 0.0
      %7689 = vmatpush1.msra.mxu0 0.0
      %7690 = vmatprep.subr.mxu0 0.0
      %7691 = vmatpush1.msra.mxu0 0.0
      %7692 = vmatprep.mubr.f32.mxu0 0.0
      %7693 = vmatmul.mubr.f32.gmra.mrb[0].mxu0 %v7564
      %v7694 = vpop.f32.mrb[0].mxu0
      %v7695 = vadd.f32 0.0, %v7694
      %v7696 = vpop.f32.mrb[0].mxu0
      %7697 = vmatprep.mubr.f32.mxu0 0.0
      %7698 = vmatmul.mubr.f32.gmra.mrb[0].mxu0 %v7566
      %v7699 = vpop.f32.mrb[0].mxu0
      %v7700 = vadd.f32 0.0, %v7699
      %v7701 = vpop.f32.mrb[0].mxu0
      %7702 = vmatprep.mubr.f32.mxu0 0.0
      %7703 = vmatmul.mubr.f32.gmra.mrb[0].mxu0 %v7568
      %v7704 = vpop.f32.mrb[0].mxu0
      %v7705 = vadd.f32 0.0, %v7704
      %v7706 = vpop.f32.mrb[0].mxu0
      %7707 = vmatprep.mubr.f32.mxu0 0.0
      %7708 = vmatmul.mubr.f32.gmra.mrb[0].mxu0 %v7570
      %v7709 = vpop.f32.mrb[0].mxu0
      %v7710 = vadd.f32 0.0, %v7709
      %v7711 = vpop.f32.mrb[0].mxu0
      %7712 = vmatprep.mubr.f32.mxu0 0.0
      %7713 = vmatmul.mubr.f32.gmra.mrb[0].mxu0 %v7572
      %v7714 = vpop.f32.mrb[0].mxu0
      %v7715 = vadd.f32 0.0, %v7714
      %v7716 = vpop.f32.mrb[0].mxu0
      %7717 = vmatprep.mubr.f32.mxu0 0.0
      %7718 = vmatmul.mubr.f32.gmra.mrb[0].mxu0 %v7574
      %v7719 = vpop.f32.mrb[0].mxu0
      %v7720 = vadd.f32 0.0, %v7719
      %v7721 = vpop.f32.mrb[0].mxu0
      %7722 = vmatprep.mubr.f32.mxu0 0.0
      %7723 = vmatmul.mubr.f32.gmra.mrb[0].mxu0 %v7576
      %v7724 = vpop.f32.mrb[0].mxu0
      %v7725 = vadd.f32 0.0, %v7724
      %v7726 = vpop.f32.mrb[0].mxu0
      %7727 = vmatprep.mubr.f32.mxu0 0.0
      %7728 = vmatmul.mubr.f32.gmra.mrb[0].mxu0 %v7578
      %v7729 = vpop.f32.mrb[0].mxu0
      %v7730 = vadd.f32 0.0, %v7729
      %v7731 = vpop.f32.mrb[0].mxu0
      %7732 = vmatprep.mubr.f32.mxu0 0.0
      %7733 = vmatmul.mubr.f32.gmra.mrb[0].mxu0 %v7580
      %v7734 = vpop.f32.mrb[0].mxu0
      %v7735 = vadd.f32 0.0, %v7734
      %v7736 = vpop.f32.mrb[0].mxu0
      %7737 = vmatprep.mubr.f32.mxu0 0.0
      %7738 = vmatmul.mubr.f32.gmra.mrb[0].mxu0 %v7582
      %v7739 = vpop.f32.mrb[0].mxu0
      %v7740 = vadd.f32 0.0, %v7739
      %v7741 = vpop.f32.mrb[0].mxu0
      %7742 = vmatprep.mubr.f32.mxu0 0.0
      %7743 = vmatmul.mubr.f32.gmra.mrb[0].mxu0 %v7584
      %v7744 = vpop.f32.mrb[0].mxu0
      %v7745 = vadd.f32 0.0, %v7744
      %v7746 = vpop.f32.mrb[0].mxu0
      %7747 = vmatprep.mubr.f32.mxu0 0.0
      %7748 = vmatmul.mubr.f32.gmra.mrb[0].mxu0 %v7586
      %v7749 = vpop.f32.mrb[0].mxu0
      %v7750 = vadd.f32 0.0, %v7749
      %v7751 = vpop.f32.mrb[0].mxu0
      %7752 = vmatprep.mubr.f32.mxu0 0.0
      %7753 = vmatmul.mubr.f32.gmra.mrb[0].mxu0 %v7588
      %v7754 = vpop.f32.mrb[0].mxu0
      %v7755 = vadd.f32 0.0, %v7754
      %v7756 = vpop.f32.mrb[0].mxu0
      %7757 = vmatprep.mubr.f32.mxu0 0.0
      %7758 = vmatmul.mubr.f32.gmra.mrb[0].mxu0 %v7590
      %v7759 = vpop.f32.mrb[0].mxu0
      %v7760 = vadd.f32 0.0, %v7759
      %v7761 = vpop.f32.mrb[0].mxu0
      %7762 = vmatprep.mubr.f32.mxu0 0.0
      %7763 = vmatmul.mubr.f32.gmra.mrb[0].mxu0 %v7592
      %v7764 = vpop.f32.mrb[0].mxu0
      %v7765 = vadd.f32 0.0, %v7764
      %v7766 = vpop.f32.mrb[0].mxu0
      %7767 = vmatprep.mubr.f32.mxu0 0.0
      %7768 = vmatmul.mubr.f32.gmra.mrb[0].mxu0 %v7594
      %v7769 = vpop.f32.mrb[0].mxu0
      %v7770 = vadd.f32 0.0, %v7769
      %v7771 = vpop.f32.mrb[0].mxu0
      %7772 = vmatprep.mubr.f32.mxu0 0.0
      %7773 = vmatmul.mubr.f32.gmra.mrb[0].mxu0 %v7596
      %v7774 = vpop.f32.mrb[0].mxu0
      %v7775 = vadd.f32 0.0, %v7774
      %v7776 = vpop.f32.mrb[0].mxu0
      %7777 = vmatprep.mubr.f32.mxu0 0.0
      %7778 = vmatmul.mubr.f32.gmra.mrb[0].mxu0 %v7598
      %v7779 = vpop.f32.mrb[0].mxu0
      %v7780 = vadd.f32 0.0, %v7779
      %v7781 = vpop.f32.mrb[0].mxu0
      %7782 = vmatprep.mubr.f32.mxu0 0.0
      %7783 = vmatmul.mubr.f32.gmra.mrb[0].mxu0 %v7600
      %v7784 = vpop.f32.mrb[0].mxu0
      %v7785 = vadd.f32 0.0, %v7784
      %v7786 = vpop.f32.mrb[0].mxu0
      %7787 = vmatprep.mubr.f32.mxu0 0.0
      %7788 = vmatmul.mubr.f32.gmra.mrb[0].mxu0 %v7602
      %v7789 = vpop.f32.mrb[0].mxu0
      %v7790 = vadd.f32 0.0, %v7789
      %v7791 = vpop.f32.mrb[0].mxu0
      %7792 = vmatprep.mubr.f32.mxu0 0.0
      %7793 = vmatmul.mubr.f32.gmra.mrb[0].mxu0 %v7604
      %v7794 = vpop.f32.mrb[0].mxu0
      %v7795 = vadd.f32 0.0, %v7794
      %v7796 = vpop.f32.mrb[0].mxu0
      %7797 = vmatprep.mubr.f32.mxu0 0.0
      %7798 = vmatmul.mubr.f32.gmra.mrb[0].mxu0 %v7606
      %v7799 = vpop.f32.mrb[0].mxu0
      %v7800 = vadd.f32 0.0, %v7799
      %v7801 = vpop.f32.mrb[0].mxu0
      %7802 = vmatprep.mubr.f32.mxu0 0.0
      %7803 = vmatmul.mubr.f32.gmra.mrb[0].mxu0 %v7608
      %v7804 = vpop.f32.mrb[0].mxu0
      %v7805 = vadd.f32 0.0, %v7804
      %v7806 = vpop.f32.mrb[0].mxu0
      %7807 = vmatprep.mubr.f32.mxu0 0.0
      %7808 = vmatmul.mubr.f32.gmra.mrb[0].mxu0 %v7610
      %v7809 = vpop.f32.mrb[0].mxu0
      %v7810 = vadd.f32 0.0, %v7809
      %v7811 = vpop.f32.mrb[0].mxu0
      %7812 = vmatprep.mubr.f32.mxu0 0.0
      %7813 = vmatmul.mubr.f32.gmra.mrb[0].mxu0 %v7612
      %v7814 = vpop.f32.mrb[0].mxu0
      %v7815 = vadd.f32 0.0, %v7814
      %v7816 = vpop.f32.mrb[0].mxu0
      %7817 = vmatprep.mubr.f32.mxu0 0.0
      %7818 = vmatmul.mubr.f32.gmra.mrb[0].mxu0 %v7614
      %v7819 = vpop.f32.mrb[0].mxu0
      %v7820 = vadd.f32 0.0, %v7819
      %v7821 = vpop.f32.mrb[0].mxu0
      %7822 = vmatprep.mubr.f32.mxu0 0.0
      %7823 = vmatmul.mubr.f32.gmra.mrb[0].mxu0 %v7616
      %v7824 = vpop.f32.mrb[0].mxu0
      %v7825 = vadd.f32 0.0, %v7824
      %v7826 = vpop.f32.mrb[0].mxu0
      %7827 = vmatprep.mubr.f32.mxu0 0.0
      %7828 = vmatmul.mubr.f32.gmra.mrb[0].mxu0 %v7618
      %v7829 = vpop.f32.mrb[0].mxu0
      %v7830 = vadd.f32 0.0, %v7829
      %v7831 = vpop.f32.mrb[0].mxu0
      %7832 = vmatprep.mubr.f32.mxu0 0.0
      %7833 = vmatmul.mubr.f32.gmra.mrb[0].mxu0 %v7620
      %v7834 = vpop.f32.mrb[0].mxu0
      %v7835 = vadd.f32 0.0, %v7834
      %v7836 = vpop.f32.mrb[0].mxu0
      %7837 = vmatprep.mubr.f32.mxu0 0.0
      %7838 = vmatmul.mubr.f32.gmra.mrb[0].mxu0 %v7622
      %v7839 = vpop.f32.mrb[0].mxu0
      %v7840 = vadd.f32 0.0, %v7839
      %v7841 = vpop.f32.mrb[0].mxu0
      %7842 = vmatprep.mubr.f32.mxu0 0.0
      %7843 = vmatmul.mubr.f32.gmra.mrb[0].mxu0 %v7624
      %v7844 = vpop.f32.mrb[0].mxu0
      %v7845 = vadd.f32 0.0, %v7844
      %v7846 = vpop.f32.mrb[0].mxu0
      %7847 = vmatprep.mubr.f32.mxu0 0.0
      %7848 = vmatmul.mubr.f32.gmra.mrb[0].mxu0 %v7626
      %v7849 = vpop.f32.mrb[0].mxu0
      %v7850 = vadd.f32 0.0, %v7849
      %v7851 = vpop.f32.mrb[0].mxu0
      %7852 = vdwg.mxu0
      %v7853 = vadd.f32 %v7310, %v7695
      %v7854 = vadd.f32 %v7315, %v7700
      %v7855 = vadd.f32 %v7320, %v7705
      %v7856 = vadd.f32 %v7325, %v7710
      %v7857 = vadd.f32 %v7330, %v7715
      %v7858 = vadd.f32 %v7335, %v7720
      %v7859 = vadd.f32 %v7340, %v7725
      %v7860 = vadd.f32 %v7345, %v7730
      %v7861 = vadd.f32 %v7350, %v7735
      %v7862 = vadd.f32 %v7355, %v7740
      %v7863 = vadd.f32 %v7360, %v7745
      %v7864 = vadd.f32 %v7365, %v7750
      %v7865 = vadd.f32 %v7370, %v7755
      %v7866 = vadd.f32 %v7375, %v7760
      %v7867 = vadd.f32 %v7380, %v7765
      %v7868 = vadd.f32 %v7385, %v7770
      %v7869 = vadd.f32 %v7390, %v7775
      %v7870 = vadd.f32 %v7395, %v7780
      %v7871 = vadd.f32 %v7400, %v7785
      %v7872 = vadd.f32 %v7405, %v7790
      %v7873 = vadd.f32 %v7410, %v7795
      %v7874 = vadd.f32 %v7415, %v7800
      %v7875 = vadd.f32 %v7420, %v7805
      %v7876 = vadd.f32 %v7425, %v7810
      %v7877 = vadd.f32 %v7430, %v7815
      %v7878 = vadd.f32 %v7435, %v7820
      %v7879 = vadd.f32 %v7440, %v7825
      %v7880 = vadd.f32 %v7445, %v7830
      %v7881 = vadd.f32 %v7450, %v7835
      %v7882 = vadd.f32 %v7455, %v7840
      %v7883 = vadd.f32 %v7460, %v7845
      %v7884 = vadd.f32 %v7465, %v7850
      %v7888 = vrot.slane %v6754, 7
      %v7889 = vrot.slane %v6755, 7
      %v7890 = vsel %vm1067, %v7888, %v7889
      %v7891 = vrot.slane %v6756, 7
      %v7892 = vsel %vm1067, %v7889, %v7891
      %v7893 = vsel %vm448, %v7890, 0
      %v7895 = vsel %vm448, %v7892, 0
      %7897 = vmatprep.subr.mxu0 0.0
      %7898 = vmatpush1.msra.mxu0 %v367
      %7899 = vmatprep.subr.mxu0 0.0
      %7900 = vmatpush1.msra.mxu0 0.0
      %7901 = vmatprep.subr.mxu0 0.0
      %7902 = vmatpush1.msra.mxu0 0.0
      %7903 = vmatprep.subr.mxu0 0.0
      %7904 = vmatpush1.msra.mxu0 0.0
      %7905 = vmatprep.subr.mxu0 0.0
      %7906 = vmatpush1.msra.mxu0 0.0
      %7907 = vmatprep.subr.mxu0 0.0
      %7908 = vmatpush1.msra.mxu0 0.0
      %7909 = vmatprep.subr.mxu0 0.0
      %7910 = vmatpush1.msra.mxu0 0.0
      %7911 = vmatprep.subr.mxu0 0.0
      %7912 = vmatpush1.msra.mxu0 0.0
      %7913 = vmatprep.subr.mxu0 0.0
      %7914 = vmatpush1.msra.mxu0 0.0
      %7915 = vmatprep.subr.mxu0 0.0
      %7916 = vmatpush1.msra.mxu0 0.0
      %7917 = vmatprep.subr.mxu0 0.0
      %7918 = vmatpush1.msra.mxu0 0.0
      %7919 = vmatprep.subr.mxu0 0.0
      %7920 = vmatpush1.msra.mxu0 0.0
      %7921 = vmatprep.subr.mxu0 0.0
      %7922 = vmatpush1.msra.mxu0 0.0
      %7923 = vmatprep.subr.mxu0 0.0
      %7924 = vmatpush1.msra.mxu0 0.0
      %7925 = vmatprep.subr.mxu0 0.0
      %7926 = vmatpush1.msra.mxu0 0.0
      %7927 = vmatprep.subr.mxu0 0.0
      %7928 = vmatpush1.msra.mxu0 0.0
      %7929 = vmatprep.subr.mxu0 0.0
      %7930 = vmatpush1.msra.mxu0 0.0
      %7931 = vmatprep.subr.mxu0 0.0
      %7932 = vmatpush1.msra.mxu0 0.0
      %7933 = vmatprep.subr.mxu0 0.0
      %7934 = vmatpush1.msra.mxu0 0.0
      %7935 = vmatprep.subr.mxu0 0.0
      %7936 = vmatpush1.msra.mxu0 0.0
      %7937 = vmatprep.subr.mxu0 0.0
      %7938 = vmatpush1.msra.mxu0 0.0
      %7939 = vmatprep.subr.mxu0 0.0
      %7940 = vmatpush1.msra.mxu0 0.0
      %7941 = vmatprep.subr.mxu0 0.0
      %7942 = vmatpush1.msra.mxu0 0.0
      %7943 = vmatprep.subr.mxu0 0.0
      %7944 = vmatpush1.msra.mxu0 0.0
      %7945 = vmatprep.subr.mxu0 0.0
      %7946 = vmatpush1.msra.mxu0 0.0
      %7947 = vmatprep.subr.mxu0 0.0
      %7948 = vmatpush1.msra.mxu0 0.0
      %7949 = vmatprep.subr.mxu0 0.0
      %7950 = vmatpush1.msra.mxu0 0.0
      %7951 = vmatprep.subr.mxu0 0.0
      %7952 = vmatpush1.msra.mxu0 0.0
      %7953 = vmatprep.subr.mxu0 0.0
      %7954 = vmatpush1.msra.mxu0 0.0
      %7955 = vmatprep.subr.mxu0 0.0
      %7956 = vmatpush1.msra.mxu0 0.0
      %7957 = vmatprep.subr.mxu0 0.0
      %7958 = vmatpush1.msra.mxu0 0.0
      %7959 = vmatprep.subr.mxu0 0.0
      %7960 = vmatpush1.msra.mxu0 0.0
      %7961 = vmatprep.mubr.f32.mxu0 0.0
      %7962 = vmatmul.mubr.f32.gmra.mrb[0].mxu0 %v7183
      %v7963 = vpop.f32.mrb[0].mxu0
      %v7964 = vadd.f32 0.0, %v7963
      %v7965 = vpop.f32.mrb[0].mxu0
      %7966 = vmatprep.mubr.f32.mxu0 0.0
      %7967 = vmatmul.mubr.f32.gmra.mrb[0].mxu0 %v7185
      %v7968 = vpop.f32.mrb[0].mxu0
      %v7969 = vadd.f32 0.0, %v7968
      %v7970 = vpop.f32.mrb[0].mxu0
      %7971 = vmatprep.mubr.f32.mxu0 0.0
      %7972 = vmatmul.mubr.f32.gmra.mrb[0].mxu0 %v7187
      %v7973 = vpop.f32.mrb[0].mxu0
      %v7974 = vadd.f32 0.0, %v7973
      %v7975 = vpop.f32.mrb[0].mxu0
      %7976 = vmatprep.mubr.f32.mxu0 0.0
      %7977 = vmatmul.mubr.f32.gmra.mrb[0].mxu0 %v7189
      %v7978 = vpop.f32.mrb[0].mxu0
      %v7979 = vadd.f32 0.0, %v7978
      %v7980 = vpop.f32.mrb[0].mxu0
      %7981 = vmatprep.mubr.f32.mxu0 0.0
      %7982 = vmatmul.mubr.f32.gmra.mrb[0].mxu0 %v7191
      %v7983 = vpop.f32.mrb[0].mxu0
      %v7984 = vadd.f32 0.0, %v7983
      %v7985 = vpop.f32.mrb[0].mxu0
      %7986 = vmatprep.mubr.f32.mxu0 0.0
      %7987 = vmatmul.mubr.f32.gmra.mrb[0].mxu0 %v7193
      %v7988 = vpop.f32.mrb[0].mxu0
      %v7989 = vadd.f32 0.0, %v7988
      %v7990 = vpop.f32.mrb[0].mxu0
      %7991 = vmatprep.mubr.f32.mxu0 0.0
      %7992 = vmatmul.mubr.f32.gmra.mrb[0].mxu0 %v7195
      %v7993 = vpop.f32.mrb[0].mxu0
      %v7994 = vadd.f32 0.0, %v7993
      %v7995 = vpop.f32.mrb[0].mxu0
      %7996 = vmatprep.mubr.f32.mxu0 0.0
      %7997 = vmatmul.mubr.f32.gmra.mrb[0].mxu0 %v7197
      %v7998 = vpop.f32.mrb[0].mxu0
      %v7999 = vadd.f32 0.0, %v7998
      %v8000 = vpop.f32.mrb[0].mxu0
      %8001 = vmatprep.mubr.f32.mxu0 0.0
      %8002 = vmatmul.mubr.f32.gmra.mrb[0].mxu0 %v7199
      %v8003 = vpop.f32.mrb[0].mxu0
      %v8004 = vadd.f32 0.0, %v8003
      %v8005 = vpop.f32.mrb[0].mxu0
      %8006 = vmatprep.mubr.f32.mxu0 0.0
      %8007 = vmatmul.mubr.f32.gmra.mrb[0].mxu0 %v7201
      %v8008 = vpop.f32.mrb[0].mxu0
      %v8009 = vadd.f32 0.0, %v8008
      %v8010 = vpop.f32.mrb[0].mxu0
      %8011 = vmatprep.mubr.f32.mxu0 0.0
      %8012 = vmatmul.mubr.f32.gmra.mrb[0].mxu0 %v7203
      %v8013 = vpop.f32.mrb[0].mxu0
      %v8014 = vadd.f32 0.0, %v8013
      %v8015 = vpop.f32.mrb[0].mxu0
      %8016 = vmatprep.mubr.f32.mxu0 0.0
      %8017 = vmatmul.mubr.f32.gmra.mrb[0].mxu0 %v7205
      %v8018 = vpop.f32.mrb[0].mxu0
      %v8019 = vadd.f32 0.0, %v8018
      %v8020 = vpop.f32.mrb[0].mxu0
      %8021 = vmatprep.mubr.f32.mxu0 0.0
      %8022 = vmatmul.mubr.f32.gmra.mrb[0].mxu0 %v7207
      %v8023 = vpop.f32.mrb[0].mxu0
      %v8024 = vadd.f32 0.0, %v8023
      %v8025 = vpop.f32.mrb[0].mxu0
      %8026 = vmatprep.mubr.f32.mxu0 0.0
      %8027 = vmatmul.mubr.f32.gmra.mrb[0].mxu0 %v7209
      %v8028 = vpop.f32.mrb[0].mxu0
      %v8029 = vadd.f32 0.0, %v8028
      %v8030 = vpop.f32.mrb[0].mxu0
      %8031 = vmatprep.mubr.f32.mxu0 0.0
      %8032 = vmatmul.mubr.f32.gmra.mrb[0].mxu0 %v7211
      %v8033 = vpop.f32.mrb[0].mxu0
      %v8034 = vadd.f32 0.0, %v8033
      %v8035 = vpop.f32.mrb[0].mxu0
      %8036 = vmatprep.mubr.f32.mxu0 0.0
      %8037 = vmatmul.mubr.f32.gmra.mrb[0].mxu0 %v7213
      %v8038 = vpop.f32.mrb[0].mxu0
      %v8039 = vadd.f32 0.0, %v8038
      %v8040 = vpop.f32.mrb[0].mxu0
      %8041 = vmatprep.mubr.f32.mxu0 0.0
      %8042 = vmatmul.mubr.f32.gmra.mrb[0].mxu0 %v7215
      %v8043 = vpop.f32.mrb[0].mxu0
      %v8044 = vadd.f32 0.0, %v8043
      %v8045 = vpop.f32.mrb[0].mxu0
      %8046 = vmatprep.mubr.f32.mxu0 0.0
      %8047 = vmatmul.mubr.f32.gmra.mrb[0].mxu0 %v7217
      %v8048 = vpop.f32.mrb[0].mxu0
      %v8049 = vadd.f32 0.0, %v8048
      %v8050 = vpop.f32.mrb[0].mxu0
      %8051 = vmatprep.mubr.f32.mxu0 0.0
      %8052 = vmatmul.mubr.f32.gmra.mrb[0].mxu0 %v7219
      %v8053 = vpop.f32.mrb[0].mxu0
      %v8054 = vadd.f32 0.0, %v8053
      %v8055 = vpop.f32.mrb[0].mxu0
      %8056 = vmatprep.mubr.f32.mxu0 0.0
      %8057 = vmatmul.mubr.f32.gmra.mrb[0].mxu0 %v7221
      %v8058 = vpop.f32.mrb[0].mxu0
      %v8059 = vadd.f32 0.0, %v8058
      %v8060 = vpop.f32.mrb[0].mxu0
      %8061 = vmatprep.mubr.f32.mxu0 0.0
      %8062 = vmatmul.mubr.f32.gmra.mrb[0].mxu0 %v7223
      %v8063 = vpop.f32.mrb[0].mxu0
      %v8064 = vadd.f32 0.0, %v8063
      %v8065 = vpop.f32.mrb[0].mxu0
      %8066 = vmatprep.mubr.f32.mxu0 0.0
      %8067 = vmatmul.mubr.f32.gmra.mrb[0].mxu0 %v7225
      %v8068 = vpop.f32.mrb[0].mxu0
      %v8069 = vadd.f32 0.0, %v8068
      %v8070 = vpop.f32.mrb[0].mxu0
      %8071 = vmatprep.mubr.f32.mxu0 0.0
      %8072 = vmatmul.mubr.f32.gmra.mrb[0].mxu0 %v7227
      %v8073 = vpop.f32.mrb[0].mxu0
      %v8074 = vadd.f32 0.0, %v8073
      %v8075 = vpop.f32.mrb[0].mxu0
      %8076 = vmatprep.mubr.f32.mxu0 0.0
      %8077 = vmatmul.mubr.f32.gmra.mrb[0].mxu0 %v7229
      %v8078 = vpop.f32.mrb[0].mxu0
      %v8079 = vadd.f32 0.0, %v8078
      %v8080 = vpop.f32.mrb[0].mxu0
      %8081 = vmatprep.mubr.f32.mxu0 0.0
      %8082 = vmatmul.mubr.f32.gmra.mrb[0].mxu0 %v7231
      %v8083 = vpop.f32.mrb[0].mxu0
      %v8084 = vadd.f32 0.0, %v8083
      %v8085 = vpop.f32.mrb[0].mxu0
      %8086 = vmatprep.mubr.f32.mxu0 0.0
      %8087 = vmatmul.mubr.f32.gmra.mrb[0].mxu0 %v7233
      %v8088 = vpop.f32.mrb[0].mxu0
      %v8089 = vadd.f32 0.0, %v8088
      %v8090 = vpop.f32.mrb[0].mxu0
      %8091 = vmatprep.mubr.f32.mxu0 0.0
      %8092 = vmatmul.mubr.f32.gmra.mrb[0].mxu0 %v7235
      %v8093 = vpop.f32.mrb[0].mxu0
      %v8094 = vadd.f32 0.0, %v8093
      %v8095 = vpop.f32.mrb[0].mxu0
      %8096 = vmatprep.mubr.f32.mxu0 0.0
      %8097 = vmatmul.mubr.f32.gmra.mrb[0].mxu0 %v7237
      %v8098 = vpop.f32.mrb[0].mxu0
      %v8099 = vadd.f32 0.0, %v8098
      %v8100 = vpop.f32.mrb[0].mxu0
      %8101 = vmatprep.mubr.f32.mxu0 0.0
      %8102 = vmatmul.mubr.f32.gmra.mrb[0].mxu0 %v7239
      %v8103 = vpop.f32.mrb[0].mxu0
      %v8104 = vadd.f32 0.0, %v8103
      %v8105 = vpop.f32.mrb[0].mxu0
      %8106 = vmatprep.mubr.f32.mxu0 0.0
      %8107 = vmatmul.mubr.f32.gmra.mrb[0].mxu0 %v7241
      %v8108 = vpop.f32.mrb[0].mxu0
      %v8109 = vadd.f32 0.0, %v8108
      %v8110 = vpop.f32.mrb[0].mxu0
      %8111 = vmatprep.mubr.f32.mxu0 0.0
      %8112 = vmatmul.mubr.f32.gmra.mrb[0].mxu0 %v7893
      %v8113 = vpop.f32.mrb[0].mxu0
      %v8114 = vadd.f32 0.0, %v8113
      %v8115 = vpop.f32.mrb[0].mxu0
      %8116 = vmatprep.mubr.f32.mxu0 0.0
      %8117 = vmatmul.mubr.f32.gmra.mrb[0].mxu0 %v7895
      %v8118 = vpop.f32.mrb[0].mxu0
      %v8119 = vadd.f32 0.0, %v8118
      %v8120 = vpop.f32.mrb[0].mxu0
      %8121 = vdwg.mxu0
      %v8122 = vadd.f32 %v7853, %v7964
      %v8123 = vadd.f32 %v7854, %v7969
      %v8124 = vadd.f32 %v7855, %v7974
      %v8125 = vadd.f32 %v7856, %v7979
      %v8126 = vadd.f32 %v7857, %v7984
      %v8127 = vadd.f32 %v7858, %v7989
      %v8128 = vadd.f32 %v7859, %v7994
      %v8129 = vadd.f32 %v7860, %v7999
      %v8130 = vadd.f32 %v7861, %v8004
      %v8131 = vadd.f32 %v7862, %v8009
      %v8132 = vadd.f32 %v7863, %v8014
      %v8133 = vadd.f32 %v7864, %v8019
      %v8134 = vadd.f32 %v7865, %v8024
      %v8135 = vadd.f32 %v7866, %v8029
      %v8136 = vadd.f32 %v7867, %v8034
      %v8137 = vadd.f32 %v7868, %v8039
      %v8138 = vadd.f32 %v7869, %v8044
      %v8139 = vadd.f32 %v7870, %v8049
      %v8140 = vadd.f32 %v7871, %v8054
      %v8141 = vadd.f32 %v7872, %v8059
      %v8142 = vadd.f32 %v7873, %v8064
      %v8143 = vadd.f32 %v7874, %v8069
      %v8144 = vadd.f32 %v7875, %v8074
      %v8145 = vadd.f32 %v7876, %v8079
      %v8146 = vadd.f32 %v7877, %v8084
      %v8147 = vadd.f32 %v7878, %v8089
      %v8148 = vadd.f32 %v7879, %v8094
      %v8149 = vadd.f32 %v7880, %v8099
      %v8150 = vadd.f32 %v7881, %v8104
      %v8151 = vadd.f32 %v7882, %v8109
      %v8152 = vadd.f32 %v7883, %v8114
      %v8153 = vadd.f32 %v7884, %v8119
      %v8154 = vsel %vm448, %v6755, 0
      %v8156 = vsel %vm448, %v6756, 0
      %8158 = vmatprep.subr.mxu0 0.0
      %8159 = vmatpush1.msra.mxu0 %v368
      %8160 = vmatprep.subr.mxu0 0.0
      %8161 = vmatpush1.msra.mxu0 0.0
      %8162 = vmatprep.subr.mxu0 0.0
      %8163 = vmatpush1.msra.mxu0 0.0
      %8164 = vmatprep.subr.mxu0 0.0
      %8165 = vmatpush1.msra.mxu0 0.0
      %8166 = vmatprep.subr.mxu0 0.0
      %8167 = vmatpush1.msra.mxu0 0.0
      %8168 = vmatprep.subr.mxu0 0.0
      %8169 = vmatpush1.msra.mxu0 0.0
      %8170 = vmatprep.subr.mxu0 0.0
      %8171 = vmatpush1.msra.mxu0 0.0
      %8172 = vmatprep.subr.mxu0 0.0
      %8173 = vmatpush1.msra.mxu0 0.0
      %8174 = vmatprep.subr.mxu0 0.0
      %8175 = vmatpush1.msra.mxu0 0.0
      %8176 = vmatprep.subr.mxu0 0.0
      %8177 = vmatpush1.msra.mxu0 0.0
      %8178 = vmatprep.subr.mxu0 0.0
      %8179 = vmatpush1.msra.mxu0 0.0
      %8180 = vmatprep.subr.mxu0 0.0
      %8181 = vmatpush1.msra.mxu0 0.0
      %8182 = vmatprep.subr.mxu0 0.0
      %8183 = vmatpush1.msra.mxu0 0.0
      %8184 = vmatprep.subr.mxu0 0.0
      %8185 = vmatpush1.msra.mxu0 0.0
      %8186 = vmatprep.subr.mxu0 0.0
      %8187 = vmatpush1.msra.mxu0 0.0
      %8188 = vmatprep.subr.mxu0 0.0
      %8189 = vmatpush1.msra.mxu0 0.0
      %8190 = vmatprep.subr.mxu0 0.0
      %8191 = vmatpush1.msra.mxu0 0.0
      %8192 = vmatprep.subr.mxu0 0.0
      %8193 = vmatpush1.msra.mxu0 0.0
      %8194 = vmatprep.subr.mxu0 0.0
      %8195 = vmatpush1.msra.mxu0 0.0
      %8196 = vmatprep.subr.mxu0 0.0
      %8197 = vmatpush1.msra.mxu0 0.0
      %8198 = vmatprep.subr.mxu0 0.0
      %8199 = vmatpush1.msra.mxu0 0.0
      %8200 = vmatprep.subr.mxu0 0.0
      %8201 = vmatpush1.msra.mxu0 0.0
      %8202 = vmatprep.subr.mxu0 0.0
      %8203 = vmatpush1.msra.mxu0 0.0
      %8204 = vmatprep.subr.mxu0 0.0
      %8205 = vmatpush1.msra.mxu0 0.0
      %8206 = vmatprep.subr.mxu0 0.0
      %8207 = vmatpush1.msra.mxu0 0.0
      %8208 = vmatprep.subr.mxu0 0.0
      %8209 = vmatpush1.msra.mxu0 0.0
      %8210 = vmatprep.subr.mxu0 0.0
      %8211 = vmatpush1.msra.mxu0 0.0
      %8212 = vmatprep.subr.mxu0 0.0
      %8213 = vmatpush1.msra.mxu0 0.0
      %8214 = vmatprep.subr.mxu0 0.0
      %8215 = vmatpush1.msra.mxu0 0.0
      %8216 = vmatprep.subr.mxu0 0.0
      %8217 = vmatpush1.msra.mxu0 0.0
      %8218 = vmatprep.subr.mxu0 0.0
      %8219 = vmatpush1.msra.mxu0 0.0
      %8220 = vmatprep.subr.mxu0 0.0
      %8221 = vmatpush1.msra.mxu0 0.0
      %8222 = vmatprep.mubr.f32.mxu0 0.0
      %8223 = vmatmul.mubr.f32.gmra.mrb[0].mxu0 %v6894
      %v8224 = vpop.f32.mrb[0].mxu0
      %v8225 = vadd.f32 0.0, %v8224
      %v8226 = vpop.f32.mrb[0].mxu0
      %8227 = vmatprep.mubr.f32.mxu0 0.0
      %8228 = vmatmul.mubr.f32.gmra.mrb[0].mxu0 %v6896
      %v8229 = vpop.f32.mrb[0].mxu0
      %v8230 = vadd.f32 0.0, %v8229
      %v8231 = vpop.f32.mrb[0].mxu0
      %8232 = vmatprep.mubr.f32.mxu0 0.0
      %8233 = vmatmul.mubr.f32.gmra.mrb[0].mxu0 %v6898
      %v8234 = vpop.f32.mrb[0].mxu0
      %v8235 = vadd.f32 0.0, %v8234
      %v8236 = vpop.f32.mrb[0].mxu0
      %8237 = vmatprep.mubr.f32.mxu0 0.0
      %8238 = vmatmul.mubr.f32.gmra.mrb[0].mxu0 %v6900
      %v8239 = vpop.f32.mrb[0].mxu0
      %v8240 = vadd.f32 0.0, %v8239
      %v8241 = vpop.f32.mrb[0].mxu0
      %8242 = vmatprep.mubr.f32.mxu0 0.0
      %8243 = vmatmul.mubr.f32.gmra.mrb[0].mxu0 %v6902
      %v8244 = vpop.f32.mrb[0].mxu0
      %v8245 = vadd.f32 0.0, %v8244
      %v8246 = vpop.f32.mrb[0].mxu0
      %8247 = vmatprep.mubr.f32.mxu0 0.0
      %8248 = vmatmul.mubr.f32.gmra.mrb[0].mxu0 %v6904
      %v8249 = vpop.f32.mrb[0].mxu0
      %v8250 = vadd.f32 0.0, %v8249
      %v8251 = vpop.f32.mrb[0].mxu0
      %8252 = vmatprep.mubr.f32.mxu0 0.0
      %8253 = vmatmul.mubr.f32.gmra.mrb[0].mxu0 %v6906
      %v8254 = vpop.f32.mrb[0].mxu0
      %v8255 = vadd.f32 0.0, %v8254
      %v8256 = vpop.f32.mrb[0].mxu0
      %8257 = vmatprep.mubr.f32.mxu0 0.0
      %8258 = vmatmul.mubr.f32.gmra.mrb[0].mxu0 %v6908
      %v8259 = vpop.f32.mrb[0].mxu0
      %v8260 = vadd.f32 0.0, %v8259
      %v8261 = vpop.f32.mrb[0].mxu0
      %8262 = vmatprep.mubr.f32.mxu0 0.0
      %8263 = vmatmul.mubr.f32.gmra.mrb[0].mxu0 %v6910
      %v8264 = vpop.f32.mrb[0].mxu0
      %v8265 = vadd.f32 0.0, %v8264
      %v8266 = vpop.f32.mrb[0].mxu0
      %8267 = vmatprep.mubr.f32.mxu0 0.0
      %8268 = vmatmul.mubr.f32.gmra.mrb[0].mxu0 %v6912
      %v8269 = vpop.f32.mrb[0].mxu0
      %v8270 = vadd.f32 0.0, %v8269
      %v8271 = vpop.f32.mrb[0].mxu0
      %8272 = vmatprep.mubr.f32.mxu0 0.0
      %8273 = vmatmul.mubr.f32.gmra.mrb[0].mxu0 %v6914
      %v8274 = vpop.f32.mrb[0].mxu0
      %v8275 = vadd.f32 0.0, %v8274
      %v8276 = vpop.f32.mrb[0].mxu0
      %8277 = vmatprep.mubr.f32.mxu0 0.0
      %8278 = vmatmul.mubr.f32.gmra.mrb[0].mxu0 %v6916
      %v8279 = vpop.f32.mrb[0].mxu0
      %v8280 = vadd.f32 0.0, %v8279
      %v8281 = vpop.f32.mrb[0].mxu0
      %8282 = vmatprep.mubr.f32.mxu0 0.0
      %8283 = vmatmul.mubr.f32.gmra.mrb[0].mxu0 %v6918
      %v8284 = vpop.f32.mrb[0].mxu0
      %v8285 = vadd.f32 0.0, %v8284
      %v8286 = vpop.f32.mrb[0].mxu0
      %8287 = vmatprep.mubr.f32.mxu0 0.0
      %8288 = vmatmul.mubr.f32.gmra.mrb[0].mxu0 %v6920
      %v8289 = vpop.f32.mrb[0].mxu0
      %v8290 = vadd.f32 0.0, %v8289
      %v8291 = vpop.f32.mrb[0].mxu0
      %8292 = vmatprep.mubr.f32.mxu0 0.0
      %8293 = vmatmul.mubr.f32.gmra.mrb[0].mxu0 %v6922
      %v8294 = vpop.f32.mrb[0].mxu0
      %v8295 = vadd.f32 0.0, %v8294
      %v8296 = vpop.f32.mrb[0].mxu0
      %8297 = vmatprep.mubr.f32.mxu0 0.0
      %8298 = vmatmul.mubr.f32.gmra.mrb[0].mxu0 %v6924
      %v8299 = vpop.f32.mrb[0].mxu0
      %v8300 = vadd.f32 0.0, %v8299
      %v8301 = vpop.f32.mrb[0].mxu0
      %8302 = vmatprep.mubr.f32.mxu0 0.0
      %8303 = vmatmul.mubr.f32.gmra.mrb[0].mxu0 %v6926
      %v8304 = vpop.f32.mrb[0].mxu0
      %v8305 = vadd.f32 0.0, %v8304
      %v8306 = vpop.f32.mrb[0].mxu0
      %8307 = vmatprep.mubr.f32.mxu0 0.0
      %8308 = vmatmul.mubr.f32.gmra.mrb[0].mxu0 %v6928
      %v8309 = vpop.f32.mrb[0].mxu0
      %v8310 = vadd.f32 0.0, %v8309
      %v8311 = vpop.f32.mrb[0].mxu0
      %8312 = vmatprep.mubr.f32.mxu0 0.0
      %8313 = vmatmul.mubr.f32.gmra.mrb[0].mxu0 %v6930
      %v8314 = vpop.f32.mrb[0].mxu0
      %v8315 = vadd.f32 0.0, %v8314
      %v8316 = vpop.f32.mrb[0].mxu0
      %8317 = vmatprep.mubr.f32.mxu0 0.0
      %8318 = vmatmul.mubr.f32.gmra.mrb[0].mxu0 %v6932
      %v8319 = vpop.f32.mrb[0].mxu0
      %v8320 = vadd.f32 0.0, %v8319
      %v8321 = vpop.f32.mrb[0].mxu0
      %8322 = vmatprep.mubr.f32.mxu0 0.0
      %8323 = vmatmul.mubr.f32.gmra.mrb[0].mxu0 %v6934
      %v8324 = vpop.f32.mrb[0].mxu0
      %v8325 = vadd.f32 0.0, %v8324
      %v8326 = vpop.f32.mrb[0].mxu0
      %8327 = vmatprep.mubr.f32.mxu0 0.0
      %8328 = vmatmul.mubr.f32.gmra.mrb[0].mxu0 %v6936
      %v8329 = vpop.f32.mrb[0].mxu0
      %v8330 = vadd.f32 0.0, %v8329
      %v8331 = vpop.f32.mrb[0].mxu0
      %8332 = vmatprep.mubr.f32.mxu0 0.0
      %8333 = vmatmul.mubr.f32.gmra.mrb[0].mxu0 %v6938
      %v8334 = vpop.f32.mrb[0].mxu0
      %v8335 = vadd.f32 0.0, %v8334
      %v8336 = vpop.f32.mrb[0].mxu0
      %8337 = vmatprep.mubr.f32.mxu0 0.0
      %8338 = vmatmul.mubr.f32.gmra.mrb[0].mxu0 %v6940
      %v8339 = vpop.f32.mrb[0].mxu0
      %v8340 = vadd.f32 0.0, %v8339
      %v8341 = vpop.f32.mrb[0].mxu0
      %8342 = vmatprep.mubr.f32.mxu0 0.0
      %8343 = vmatmul.mubr.f32.gmra.mrb[0].mxu0 %v6942
      %v8344 = vpop.f32.mrb[0].mxu0
      %v8345 = vadd.f32 0.0, %v8344
      %v8346 = vpop.f32.mrb[0].mxu0
      %8347 = vmatprep.mubr.f32.mxu0 0.0
      %8348 = vmatmul.mubr.f32.gmra.mrb[0].mxu0 %v6944
      %v8349 = vpop.f32.mrb[0].mxu0
      %v8350 = vadd.f32 0.0, %v8349
      %v8351 = vpop.f32.mrb[0].mxu0
      %8352 = vmatprep.mubr.f32.mxu0 0.0
      %8353 = vmatmul.mubr.f32.gmra.mrb[0].mxu0 %v6946
      %v8354 = vpop.f32.mrb[0].mxu0
      %v8355 = vadd.f32 0.0, %v8354
      %v8356 = vpop.f32.mrb[0].mxu0
      %8357 = vmatprep.mubr.f32.mxu0 0.0
      %8358 = vmatmul.mubr.f32.gmra.mrb[0].mxu0 %v6948
      %v8359 = vpop.f32.mrb[0].mxu0
      %v8360 = vadd.f32 0.0, %v8359
      %v8361 = vpop.f32.mrb[0].mxu0
      %8362 = vmatprep.mubr.f32.mxu0 0.0
      %8363 = vmatmul.mubr.f32.gmra.mrb[0].mxu0 %v6950
      %v8364 = vpop.f32.mrb[0].mxu0
      %v8365 = vadd.f32 0.0, %v8364
      %v8366 = vpop.f32.mrb[0].mxu0
      %8367 = vmatprep.mubr.f32.mxu0 0.0
      %8368 = vmatmul.mubr.f32.gmra.mrb[0].mxu0 %v6952
      %v8369 = vpop.f32.mrb[0].mxu0
      %v8370 = vadd.f32 0.0, %v8369
      %v8371 = vpop.f32.mrb[0].mxu0
      %8372 = vmatprep.mubr.f32.mxu0 0.0
      %8373 = vmatmul.mubr.f32.gmra.mrb[0].mxu0 %v8154
      %v8374 = vpop.f32.mrb[0].mxu0
      %v8375 = vadd.f32 0.0, %v8374
      %v8376 = vpop.f32.mrb[0].mxu0
      %8377 = vmatprep.mubr.f32.mxu0 0.0
      %8378 = vmatmul.mubr.f32.gmra.mrb[0].mxu0 %v8156
      %v8379 = vpop.f32.mrb[0].mxu0
      %v8380 = vadd.f32 0.0, %v8379
      %v8381 = vpop.f32.mrb[0].mxu0
      %8382 = vdwg.mxu0
      %v8383 = vadd.f32 %v8122, %v8225
      %v8384 = vadd.f32 %v8123, %v8230
      %v8385 = vadd.f32 %v8124, %v8235
      %v8386 = vadd.f32 %v8125, %v8240
      %v8387 = vadd.f32 %v8126, %v8245
      %v8388 = vadd.f32 %v8127, %v8250
      %v8389 = vadd.f32 %v8128, %v8255
      %v8390 = vadd.f32 %v8129, %v8260
      %v8391 = vadd.f32 %v8130, %v8265
      %v8392 = vadd.f32 %v8131, %v8270
      %v8393 = vadd.f32 %v8132, %v8275
      %v8394 = vadd.f32 %v8133, %v8280
      %v8395 = vadd.f32 %v8134, %v8285
      %v8396 = vadd.f32 %v8135, %v8290
      %v8397 = vadd.f32 %v8136, %v8295
      %v8398 = vadd.f32 %v8137, %v8300
      %v8399 = vadd.f32 %v8138, %v8305
      %v8400 = vadd.f32 %v8139, %v8310
      %v8401 = vadd.f32 %v8140, %v8315
      %v8402 = vadd.f32 %v8141, %v8320
      %v8403 = vadd.f32 %v8142, %v8325
      %v8404 = vadd.f32 %v8143, %v8330
      %v8405 = vadd.f32 %v8144, %v8335
      %v8406 = vadd.f32 %v8145, %v8340
      %v8407 = vadd.f32 %v8146, %v8345
      %v8408 = vadd.f32 %v8147, %v8350
      %v8409 = vadd.f32 %v8148, %v8355
      %v8410 = vadd.f32 %v8149, %v8360
      %v8411 = vadd.f32 %v8150, %v8365
      %v8412 = vadd.f32 %v8151, %v8370
      %v8413 = vadd.f32 %v8152, %v8375
      %v8414 = vadd.f32 %v8153, %v8380
      %v8416 = vrot.slane %v6755, 1
      %v8417 = vrot.slane %v6756, 1
      %v8418 = vsel %vm1749, %v8416, %v8417
      %v8419 = vrot.slane %v6757, 1
      %v8420 = vsel %vm1749, %v8417, %v8419
      %v8421 = vsel %vm448, %v8418, 0
      %v8423 = vsel %vm448, %v8420, 0
      %8425 = vmatprep.subr.mxu0 0.0
      %8426 = vmatpush1.msra.mxu0 %v369
      %8427 = vmatprep.subr.mxu0 0.0
      %8428 = vmatpush1.msra.mxu0 0.0
      %8429 = vmatprep.subr.mxu0 0.0
      %8430 = vmatpush1.msra.mxu0 0.0
      %8431 = vmatprep.subr.mxu0 0.0
      %8432 = vmatpush1.msra.mxu0 0.0
      %8433 = vmatprep.subr.mxu0 0.0
      %8434 = vmatpush1.msra.mxu0 0.0
      %8435 = vmatprep.subr.mxu0 0.0
      %8436 = vmatpush1.msra.mxu0 0.0
      %8437 = vmatprep.subr.mxu0 0.0
      %8438 = vmatpush1.msra.mxu0 0.0
      %8439 = vmatprep.subr.mxu0 0.0
      %8440 = vmatpush1.msra.mxu0 0.0
      %8441 = vmatprep.subr.mxu0 0.0
      %8442 = vmatpush1.msra.mxu0 0.0
      %8443 = vmatprep.subr.mxu0 0.0
      %8444 = vmatpush1.msra.mxu0 0.0
      %8445 = vmatprep.subr.mxu0 0.0
      %8446 = vmatpush1.msra.mxu0 0.0
      %8447 = vmatprep.subr.mxu0 0.0
      %8448 = vmatpush1.msra.mxu0 0.0
      %8449 = vmatprep.subr.mxu0 0.0
      %8450 = vmatpush1.msra.mxu0 0.0
      %8451 = vmatprep.subr.mxu0 0.0
      %8452 = vmatpush1.msra.mxu0 0.0
      %8453 = vmatprep.subr.mxu0 0.0
      %8454 = vmatpush1.msra.mxu0 0.0
      %8455 = vmatprep.subr.mxu0 0.0
      %8456 = vmatpush1.msra.mxu0 0.0
      %8457 = vmatprep.subr.mxu0 0.0
      %8458 = vmatpush1.msra.mxu0 0.0
      %8459 = vmatprep.subr.mxu0 0.0
      %8460 = vmatpush1.msra.mxu0 0.0
      %8461 = vmatprep.subr.mxu0 0.0
      %8462 = vmatpush1.msra.mxu0 0.0
      %8463 = vmatprep.subr.mxu0 0.0
      %8464 = vmatpush1.msra.mxu0 0.0
      %8465 = vmatprep.subr.mxu0 0.0
      %8466 = vmatpush1.msra.mxu0 0.0
      %8467 = vmatprep.subr.mxu0 0.0
      %8468 = vmatpush1.msra.mxu0 0.0
      %8469 = vmatprep.subr.mxu0 0.0
      %8470 = vmatpush1.msra.mxu0 0.0
      %8471 = vmatprep.subr.mxu0 0.0
      %8472 = vmatpush1.msra.mxu0 0.0
      %8473 = vmatprep.subr.mxu0 0.0
      %8474 = vmatpush1.msra.mxu0 0.0
      %8475 = vmatprep.subr.mxu0 0.0
      %8476 = vmatpush1.msra.mxu0 0.0
      %8477 = vmatprep.subr.mxu0 0.0
      %8478 = vmatpush1.msra.mxu0 0.0
      %8479 = vmatprep.subr.mxu0 0.0
      %8480 = vmatpush1.msra.mxu0 0.0
      %8481 = vmatprep.subr.mxu0 0.0
      %8482 = vmatpush1.msra.mxu0 0.0
      %8483 = vmatprep.subr.mxu0 0.0
      %8484 = vmatpush1.msra.mxu0 0.0
      %8485 = vmatprep.subr.mxu0 0.0
      %8486 = vmatpush1.msra.mxu0 0.0
      %8487 = vmatprep.subr.mxu0 0.0
      %8488 = vmatpush1.msra.mxu0 0.0
      %8489 = vmatprep.mubr.f32.mxu0 0.0
      %8490 = vmatmul.mubr.f32.gmra.mrb[0].mxu0 %v7568
      %v8491 = vpop.f32.mrb[0].mxu0
      %v8492 = vadd.f32 0.0, %v8491
      %v8493 = vpop.f32.mrb[0].mxu0
      %8494 = vmatprep.mubr.f32.mxu0 0.0
      %8495 = vmatmul.mubr.f32.gmra.mrb[0].mxu0 %v7570
      %v8496 = vpop.f32.mrb[0].mxu0
      %v8497 = vadd.f32 0.0, %v8496
      %v8498 = vpop.f32.mrb[0].mxu0
      %8499 = vmatprep.mubr.f32.mxu0 0.0
      %8500 = vmatmul.mubr.f32.gmra.mrb[0].mxu0 %v7572
      %v8501 = vpop.f32.mrb[0].mxu0
      %v8502 = vadd.f32 0.0, %v8501
      %v8503 = vpop.f32.mrb[0].mxu0
      %8504 = vmatprep.mubr.f32.mxu0 0.0
      %8505 = vmatmul.mubr.f32.gmra.mrb[0].mxu0 %v7574
      %v8506 = vpop.f32.mrb[0].mxu0
      %v8507 = vadd.f32 0.0, %v8506
      %v8508 = vpop.f32.mrb[0].mxu0
      %8509 = vmatprep.mubr.f32.mxu0 0.0
      %8510 = vmatmul.mubr.f32.gmra.mrb[0].mxu0 %v7576
      %v8511 = vpop.f32.mrb[0].mxu0
      %v8512 = vadd.f32 0.0, %v8511
      %v8513 = vpop.f32.mrb[0].mxu0
      %8514 = vmatprep.mubr.f32.mxu0 0.0
      %8515 = vmatmul.mubr.f32.gmra.mrb[0].mxu0 %v7578
      %v8516 = vpop.f32.mrb[0].mxu0
      %v8517 = vadd.f32 0.0, %v8516
      %v8518 = vpop.f32.mrb[0].mxu0
      %8519 = vmatprep.mubr.f32.mxu0 0.0
      %8520 = vmatmul.mubr.f32.gmra.mrb[0].mxu0 %v7580
      %v8521 = vpop.f32.mrb[0].mxu0
      %v8522 = vadd.f32 0.0, %v8521
      %v8523 = vpop.f32.mrb[0].mxu0
      %8524 = vmatprep.mubr.f32.mxu0 0.0
      %8525 = vmatmul.mubr.f32.gmra.mrb[0].mxu0 %v7582
      %v8526 = vpop.f32.mrb[0].mxu0
      %v8527 = vadd.f32 0.0, %v8526
      %v8528 = vpop.f32.mrb[0].mxu0
      %8529 = vmatprep.mubr.f32.mxu0 0.0
      %8530 = vmatmul.mubr.f32.gmra.mrb[0].mxu0 %v7584
      %v8531 = vpop.f32.mrb[0].mxu0
      %v8532 = vadd.f32 0.0, %v8531
      %v8533 = vpop.f32.mrb[0].mxu0
      %8534 = vmatprep.mubr.f32.mxu0 0.0
      %8535 = vmatmul.mubr.f32.gmra.mrb[0].mxu0 %v7586
      %v8536 = vpop.f32.mrb[0].mxu0
      %v8537 = vadd.f32 0.0, %v8536
      %v8538 = vpop.f32.mrb[0].mxu0
      %8539 = vmatprep.mubr.f32.mxu0 0.0
      %8540 = vmatmul.mubr.f32.gmra.mrb[0].mxu0 %v7588
      %v8541 = vpop.f32.mrb[0].mxu0
      %v8542 = vadd.f32 0.0, %v8541
      %v8543 = vpop.f32.mrb[0].mxu0
      %8544 = vmatprep.mubr.f32.mxu0 0.0
      %8545 = vmatmul.mubr.f32.gmra.mrb[0].mxu0 %v7590
      %v8546 = vpop.f32.mrb[0].mxu0
      %v8547 = vadd.f32 0.0, %v8546
      %v8548 = vpop.f32.mrb[0].mxu0
      %8549 = vmatprep.mubr.f32.mxu0 0.0
      %8550 = vmatmul.mubr.f32.gmra.mrb[0].mxu0 %v7592
      %v8551 = vpop.f32.mrb[0].mxu0
      %v8552 = vadd.f32 0.0, %v8551
      %v8553 = vpop.f32.mrb[0].mxu0
      %8554 = vmatprep.mubr.f32.mxu0 0.0
      %8555 = vmatmul.mubr.f32.gmra.mrb[0].mxu0 %v7594
      %v8556 = vpop.f32.mrb[0].mxu0
      %v8557 = vadd.f32 0.0, %v8556
      %v8558 = vpop.f32.mrb[0].mxu0
      %8559 = vmatprep.mubr.f32.mxu0 0.0
      %8560 = vmatmul.mubr.f32.gmra.mrb[0].mxu0 %v7596
      %v8561 = vpop.f32.mrb[0].mxu0
      %v8562 = vadd.f32 0.0, %v8561
      %v8563 = vpop.f32.mrb[0].mxu0
      %8564 = vmatprep.mubr.f32.mxu0 0.0
      %8565 = vmatmul.mubr.f32.gmra.mrb[0].mxu0 %v7598
      %v8566 = vpop.f32.mrb[0].mxu0
      %v8567 = vadd.f32 0.0, %v8566
      %v8568 = vpop.f32.mrb[0].mxu0
      %8569 = vmatprep.mubr.f32.mxu0 0.0
      %8570 = vmatmul.mubr.f32.gmra.mrb[0].mxu0 %v7600
      %v8571 = vpop.f32.mrb[0].mxu0
      %v8572 = vadd.f32 0.0, %v8571
      %v8573 = vpop.f32.mrb[0].mxu0
      %8574 = vmatprep.mubr.f32.mxu0 0.0
      %8575 = vmatmul.mubr.f32.gmra.mrb[0].mxu0 %v7602
      %v8576 = vpop.f32.mrb[0].mxu0
      %v8577 = vadd.f32 0.0, %v8576
      %v8578 = vpop.f32.mrb[0].mxu0
      %8579 = vmatprep.mubr.f32.mxu0 0.0
      %8580 = vmatmul.mubr.f32.gmra.mrb[0].mxu0 %v7604
      %v8581 = vpop.f32.mrb[0].mxu0
      %v8582 = vadd.f32 0.0, %v8581
      %v8583 = vpop.f32.mrb[0].mxu0
      %8584 = vmatprep.mubr.f32.mxu0 0.0
      %8585 = vmatmul.mubr.f32.gmra.mrb[0].mxu0 %v7606
      %v8586 = vpop.f32.mrb[0].mxu0
      %v8587 = vadd.f32 0.0, %v8586
      %v8588 = vpop.f32.mrb[0].mxu0
      %8589 = vmatprep.mubr.f32.mxu0 0.0
      %8590 = vmatmul.mubr.f32.gmra.mrb[0].mxu0 %v7608
      %v8591 = vpop.f32.mrb[0].mxu0
      %v8592 = vadd.f32 0.0, %v8591
      %v8593 = vpop.f32.mrb[0].mxu0
      %8594 = vmatprep.mubr.f32.mxu0 0.0
      %8595 = vmatmul.mubr.f32.gmra.mrb[0].mxu0 %v7610
      %v8596 = vpop.f32.mrb[0].mxu0
      %v8597 = vadd.f32 0.0, %v8596
      %v8598 = vpop.f32.mrb[0].mxu0
      %8599 = vmatprep.mubr.f32.mxu0 0.0
      %8600 = vmatmul.mubr.f32.gmra.mrb[0].mxu0 %v7612
      %v8601 = vpop.f32.mrb[0].mxu0
      %v8602 = vadd.f32 0.0, %v8601
      %v8603 = vpop.f32.mrb[0].mxu0
      %8604 = vmatprep.mubr.f32.mxu0 0.0
      %8605 = vmatmul.mubr.f32.gmra.mrb[0].mxu0 %v7614
      %v8606 = vpop.f32.mrb[0].mxu0
      %v8607 = vadd.f32 0.0, %v8606
      %v8608 = vpop.f32.mrb[0].mxu0
      %8609 = vmatprep.mubr.f32.mxu0 0.0
      %8610 = vmatmul.mubr.f32.gmra.mrb[0].mxu0 %v7616
      %v8611 = vpop.f32.mrb[0].mxu0
      %v8612 = vadd.f32 0.0, %v8611
      %v8613 = vpop.f32.mrb[0].mxu0
      %8614 = vmatprep.mubr.f32.mxu0 0.0
      %8615 = vmatmul.mubr.f32.gmra.mrb[0].mxu0 %v7618
      %v8616 = vpop.f32.mrb[0].mxu0
      %v8617 = vadd.f32 0.0, %v8616
      %v8618 = vpop.f32.mrb[0].mxu0
      %8619 = vmatprep.mubr.f32.mxu0 0.0
      %8620 = vmatmul.mubr.f32.gmra.mrb[0].mxu0 %v7620
      %v8621 = vpop.f32.mrb[0].mxu0
      %v8622 = vadd.f32 0.0, %v8621
      %v8623 = vpop.f32.mrb[0].mxu0
      %8624 = vmatprep.mubr.f32.mxu0 0.0
      %8625 = vmatmul.mubr.f32.gmra.mrb[0].mxu0 %v7622
      %v8626 = vpop.f32.mrb[0].mxu0
      %v8627 = vadd.f32 0.0, %v8626
      %v8628 = vpop.f32.mrb[0].mxu0
      %8629 = vmatprep.mubr.f32.mxu0 0.0
      %8630 = vmatmul.mubr.f32.gmra.mrb[0].mxu0 %v7624
      %v8631 = vpop.f32.mrb[0].mxu0
      %v8632 = vadd.f32 0.0, %v8631
      %v8633 = vpop.f32.mrb[0].mxu0
      %8634 = vmatprep.mubr.f32.mxu0 0.0
      %8635 = vmatmul.mubr.f32.gmra.mrb[0].mxu0 %v7626
      %v8636 = vpop.f32.mrb[0].mxu0
      %v8637 = vadd.f32 0.0, %v8636
      %v8638 = vpop.f32.mrb[0].mxu0
      %8639 = vmatprep.mubr.f32.mxu0 0.0
      %8640 = vmatmul.mubr.f32.gmra.mrb[0].mxu0 %v8421
      %v8641 = vpop.f32.mrb[0].mxu0
      %v8642 = vadd.f32 0.0, %v8641
      %v8643 = vpop.f32.mrb[0].mxu0
      %8644 = vmatprep.mubr.f32.mxu0 0.0
      %8645 = vmatmul.mubr.f32.gmra.mrb[0].mxu0 %v8423
      %v8646 = vpop.f32.mrb[0].mxu0
      %v8647 = vadd.f32 0.0, %v8646
      %v8648 = vpop.f32.mrb[0].mxu0
      %8649 = vdwg.mxu0
      %v8650 = vadd.f32 %v8383, %v8492
      %v8651 = vadd.f32 %v8384, %v8497
      %v8652 = vadd.f32 %v8385, %v8502
      %v8653 = vadd.f32 %v8386, %v8507
      %v8654 = vadd.f32 %v8387, %v8512
      %v8655 = vadd.f32 %v8388, %v8517
      %v8656 = vadd.f32 %v8389, %v8522
      %v8657 = vadd.f32 %v8390, %v8527
      %v8658 = vadd.f32 %v8391, %v8532
      %v8659 = vadd.f32 %v8392, %v8537
      %v8660 = vadd.f32 %v8393, %v8542
      %v8661 = vadd.f32 %v8394, %v8547
      %v8662 = vadd.f32 %v8395, %v8552
      %v8663 = vadd.f32 %v8396, %v8557
      %v8664 = vadd.f32 %v8397, %v8562
      %v8665 = vadd.f32 %v8398, %v8567
      %v8666 = vadd.f32 %v8399, %v8572
      %v8667 = vadd.f32 %v8400, %v8577
      %v8668 = vadd.f32 %v8401, %v8582
      %v8669 = vadd.f32 %v8402, %v8587
      %v8670 = vadd.f32 %v8403, %v8592
      %v8671 = vadd.f32 %v8404, %v8597
      %v8672 = vadd.f32 %v8405, %v8602
      %v8673 = vadd.f32 %v8406, %v8607
      %v8674 = vadd.f32 %v8407, %v8612
      %v8675 = vadd.f32 %v8408, %v8617
      %v8676 = vadd.f32 %v8409, %v8622
      %v8677 = vadd.f32 %v8410, %v8627
      %v8678 = vadd.f32 %v8411, %v8632
      %v8679 = vadd.f32 %v8412, %v8637
      %v8680 = vadd.f32 %v8413, %v8642
      %v8681 = vadd.f32 %v8414, %v8647
      %v8685 = vrot.slane %v6758, 7
      %v8686 = vrot.slane %v6759, 7
      %v8687 = vsel %vm1067, %v8685, %v8686
      %v8688 = vrot.slane %v6760, 7
      %v8689 = vsel %vm1067, %v8686, %v8688
      %v8690 = vsel %vm448, %v8687, 0
      %v8692 = vsel %vm448, %v8689, 0
      %8694 = vmatprep.subr.mxu0 0.0
      %8695 = vmatpush1.msra.mxu0 %v370
      %8696 = vmatprep.subr.mxu0 0.0
      %8697 = vmatpush1.msra.mxu0 0.0
      %8698 = vmatprep.subr.mxu0 0.0
      %8699 = vmatpush1.msra.mxu0 0.0
      %8700 = vmatprep.subr.mxu0 0.0
      %8701 = vmatpush1.msra.mxu0 0.0
      %8702 = vmatprep.subr.mxu0 0.0
      %8703 = vmatpush1.msra.mxu0 0.0
      %8704 = vmatprep.subr.mxu0 0.0
      %8705 = vmatpush1.msra.mxu0 0.0
      %8706 = vmatprep.subr.mxu0 0.0
      %8707 = vmatpush1.msra.mxu0 0.0
      %8708 = vmatprep.subr.mxu0 0.0
      %8709 = vmatpush1.msra.mxu0 0.0
      %8710 = vmatprep.subr.mxu0 0.0
      %8711 = vmatpush1.msra.mxu0 0.0
      %8712 = vmatprep.subr.mxu0 0.0
      %8713 = vmatpush1.msra.mxu0 0.0
      %8714 = vmatprep.subr.mxu0 0.0
      %8715 = vmatpush1.msra.mxu0 0.0
      %8716 = vmatprep.subr.mxu0 0.0
      %8717 = vmatpush1.msra.mxu0 0.0
      %8718 = vmatprep.subr.mxu0 0.0
      %8719 = vmatpush1.msra.mxu0 0.0
      %8720 = vmatprep.subr.mxu0 0.0
      %8721 = vmatpush1.msra.mxu0 0.0
      %8722 = vmatprep.subr.mxu0 0.0
      %8723 = vmatpush1.msra.mxu0 0.0
      %8724 = vmatprep.subr.mxu0 0.0
      %8725 = vmatpush1.msra.mxu0 0.0
      %8726 = vmatprep.subr.mxu0 0.0
      %8727 = vmatpush1.msra.mxu0 0.0
      %8728 = vmatprep.subr.mxu0 0.0
      %8729 = vmatpush1.msra.mxu0 0.0
      %8730 = vmatprep.subr.mxu0 0.0
      %8731 = vmatpush1.msra.mxu0 0.0
      %8732 = vmatprep.subr.mxu0 0.0
      %8733 = vmatpush1.msra.mxu0 0.0
      %8734 = vmatprep.subr.mxu0 0.0
      %8735 = vmatpush1.msra.mxu0 0.0
      %8736 = vmatprep.subr.mxu0 0.0
      %8737 = vmatpush1.msra.mxu0 0.0
      %8738 = vmatprep.subr.mxu0 0.0
      %8739 = vmatpush1.msra.mxu0 0.0
      %8740 = vmatprep.subr.mxu0 0.0
      %8741 = vmatpush1.msra.mxu0 0.0
      %8742 = vmatprep.subr.mxu0 0.0
      %8743 = vmatpush1.msra.mxu0 0.0
      %8744 = vmatprep.subr.mxu0 0.0
      %8745 = vmatpush1.msra.mxu0 0.0
      %8746 = vmatprep.subr.mxu0 0.0
      %8747 = vmatpush1.msra.mxu0 0.0
      %8748 = vmatprep.subr.mxu0 0.0
      %8749 = vmatpush1.msra.mxu0 0.0
      %8750 = vmatprep.subr.mxu0 0.0
      %8751 = vmatpush1.msra.mxu0 0.0
      %8752 = vmatprep.subr.mxu0 0.0
      %8753 = vmatpush1.msra.mxu0 0.0
      %8754 = vmatprep.subr.mxu0 0.0
      %8755 = vmatpush1.msra.mxu0 0.0
      %8756 = vmatprep.subr.mxu0 0.0
      %8757 = vmatpush1.msra.mxu0 0.0
      %8758 = vmatprep.mubr.f32.mxu0 0.0
      %8759 = vmatmul.mubr.f32.gmra.mrb[0].mxu0 %v7187
      %v8760 = vpop.f32.mrb[0].mxu0
      %v8761 = vadd.f32 0.0, %v8760
      %v8762 = vpop.f32.mrb[0].mxu0
      %8763 = vmatprep.mubr.f32.mxu0 0.0
      %8764 = vmatmul.mubr.f32.gmra.mrb[0].mxu0 %v7189
      %v8765 = vpop.f32.mrb[0].mxu0
      %v8766 = vadd.f32 0.0, %v8765
      %v8767 = vpop.f32.mrb[0].mxu0
      %8768 = vmatprep.mubr.f32.mxu0 0.0
      %8769 = vmatmul.mubr.f32.gmra.mrb[0].mxu0 %v7191
      %v8770 = vpop.f32.mrb[0].mxu0
      %v8771 = vadd.f32 0.0, %v8770
      %v8772 = vpop.f32.mrb[0].mxu0
      %8773 = vmatprep.mubr.f32.mxu0 0.0
      %8774 = vmatmul.mubr.f32.gmra.mrb[0].mxu0 %v7193
      %v8775 = vpop.f32.mrb[0].mxu0
      %v8776 = vadd.f32 0.0, %v8775
      %v8777 = vpop.f32.mrb[0].mxu0
      %8778 = vmatprep.mubr.f32.mxu0 0.0
      %8779 = vmatmul.mubr.f32.gmra.mrb[0].mxu0 %v7195
      %v8780 = vpop.f32.mrb[0].mxu0
      %v8781 = vadd.f32 0.0, %v8780
      %v8782 = vpop.f32.mrb[0].mxu0
      %8783 = vmatprep.mubr.f32.mxu0 0.0
      %8784 = vmatmul.mubr.f32.gmra.mrb[0].mxu0 %v7197
      %v8785 = vpop.f32.mrb[0].mxu0
      %v8786 = vadd.f32 0.0, %v8785
      %v8787 = vpop.f32.mrb[0].mxu0
      %8788 = vmatprep.mubr.f32.mxu0 0.0
      %8789 = vmatmul.mubr.f32.gmra.mrb[0].mxu0 %v7199
      %v8790 = vpop.f32.mrb[0].mxu0
      %v8791 = vadd.f32 0.0, %v8790
      %v8792 = vpop.f32.mrb[0].mxu0
      %8793 = vmatprep.mubr.f32.mxu0 0.0
      %8794 = vmatmul.mubr.f32.gmra.mrb[0].mxu0 %v7201
      %v8795 = vpop.f32.mrb[0].mxu0
      %v8796 = vadd.f32 0.0, %v8795
      %v8797 = vpop.f32.mrb[0].mxu0
      %8798 = vmatprep.mubr.f32.mxu0 0.0
      %8799 = vmatmul.mubr.f32.gmra.mrb[0].mxu0 %v7203
      %v8800 = vpop.f32.mrb[0].mxu0
      %v8801 = vadd.f32 0.0, %v8800
      %v8802 = vpop.f32.mrb[0].mxu0
      %8803 = vmatprep.mubr.f32.mxu0 0.0
      %8804 = vmatmul.mubr.f32.gmra.mrb[0].mxu0 %v7205
      %v8805 = vpop.f32.mrb[0].mxu0
      %v8806 = vadd.f32 0.0, %v8805
      %v8807 = vpop.f32.mrb[0].mxu0
      %8808 = vmatprep.mubr.f32.mxu0 0.0
      %8809 = vmatmul.mubr.f32.gmra.mrb[0].mxu0 %v7207
      %v8810 = vpop.f32.mrb[0].mxu0
      %v8811 = vadd.f32 0.0, %v8810
      %v8812 = vpop.f32.mrb[0].mxu0
      %8813 = vmatprep.mubr.f32.mxu0 0.0
      %8814 = vmatmul.mubr.f32.gmra.mrb[0].mxu0 %v7209
      %v8815 = vpop.f32.mrb[0].mxu0
      %v8816 = vadd.f32 0.0, %v8815
      %v8817 = vpop.f32.mrb[0].mxu0
      %8818 = vmatprep.mubr.f32.mxu0 0.0
      %8819 = vmatmul.mubr.f32.gmra.mrb[0].mxu0 %v7211
      %v8820 = vpop.f32.mrb[0].mxu0
      %v8821 = vadd.f32 0.0, %v8820
      %v8822 = vpop.f32.mrb[0].mxu0
      %8823 = vmatprep.mubr.f32.mxu0 0.0
      %8824 = vmatmul.mubr.f32.gmra.mrb[0].mxu0 %v7213
      %v8825 = vpop.f32.mrb[0].mxu0
      %v8826 = vadd.f32 0.0, %v8825
      %v8827 = vpop.f32.mrb[0].mxu0
      %8828 = vmatprep.mubr.f32.mxu0 0.0
      %8829 = vmatmul.mubr.f32.gmra.mrb[0].mxu0 %v7215
      %v8830 = vpop.f32.mrb[0].mxu0
      %v8831 = vadd.f32 0.0, %v8830
      %v8832 = vpop.f32.mrb[0].mxu0
      %8833 = vmatprep.mubr.f32.mxu0 0.0
      %8834 = vmatmul.mubr.f32.gmra.mrb[0].mxu0 %v7217
      %v8835 = vpop.f32.mrb[0].mxu0
      %v8836 = vadd.f32 0.0, %v8835
      %v8837 = vpop.f32.mrb[0].mxu0
      %8838 = vmatprep.mubr.f32.mxu0 0.0
      %8839 = vmatmul.mubr.f32.gmra.mrb[0].mxu0 %v7219
      %v8840 = vpop.f32.mrb[0].mxu0
      %v8841 = vadd.f32 0.0, %v8840
      %v8842 = vpop.f32.mrb[0].mxu0
      %8843 = vmatprep.mubr.f32.mxu0 0.0
      %8844 = vmatmul.mubr.f32.gmra.mrb[0].mxu0 %v7221
      %v8845 = vpop.f32.mrb[0].mxu0
      %v8846 = vadd.f32 0.0, %v8845
      %v8847 = vpop.f32.mrb[0].mxu0
      %8848 = vmatprep.mubr.f32.mxu0 0.0
      %8849 = vmatmul.mubr.f32.gmra.mrb[0].mxu0 %v7223
      %v8850 = vpop.f32.mrb[0].mxu0
      %v8851 = vadd.f32 0.0, %v8850
      %v8852 = vpop.f32.mrb[0].mxu0
      %8853 = vmatprep.mubr.f32.mxu0 0.0
      %8854 = vmatmul.mubr.f32.gmra.mrb[0].mxu0 %v7225
      %v8855 = vpop.f32.mrb[0].mxu0
      %v8856 = vadd.f32 0.0, %v8855
      %v8857 = vpop.f32.mrb[0].mxu0
      %8858 = vmatprep.mubr.f32.mxu0 0.0
      %8859 = vmatmul.mubr.f32.gmra.mrb[0].mxu0 %v7227
      %v8860 = vpop.f32.mrb[0].mxu0
      %v8861 = vadd.f32 0.0, %v8860
      %v8862 = vpop.f32.mrb[0].mxu0
      %8863 = vmatprep.mubr.f32.mxu0 0.0
      %8864 = vmatmul.mubr.f32.gmra.mrb[0].mxu0 %v7229
      %v8865 = vpop.f32.mrb[0].mxu0
      %v8866 = vadd.f32 0.0, %v8865
      %v8867 = vpop.f32.mrb[0].mxu0
      %8868 = vmatprep.mubr.f32.mxu0 0.0
      %8869 = vmatmul.mubr.f32.gmra.mrb[0].mxu0 %v7231
      %v8870 = vpop.f32.mrb[0].mxu0
      %v8871 = vadd.f32 0.0, %v8870
      %v8872 = vpop.f32.mrb[0].mxu0
      %8873 = vmatprep.mubr.f32.mxu0 0.0
      %8874 = vmatmul.mubr.f32.gmra.mrb[0].mxu0 %v7233
      %v8875 = vpop.f32.mrb[0].mxu0
      %v8876 = vadd.f32 0.0, %v8875
      %v8877 = vpop.f32.mrb[0].mxu0
      %8878 = vmatprep.mubr.f32.mxu0 0.0
      %8879 = vmatmul.mubr.f32.gmra.mrb[0].mxu0 %v7235
      %v8880 = vpop.f32.mrb[0].mxu0
      %v8881 = vadd.f32 0.0, %v8880
      %v8882 = vpop.f32.mrb[0].mxu0
      %8883 = vmatprep.mubr.f32.mxu0 0.0
      %8884 = vmatmul.mubr.f32.gmra.mrb[0].mxu0 %v7237
      %v8885 = vpop.f32.mrb[0].mxu0
      %v8886 = vadd.f32 0.0, %v8885
      %v8887 = vpop.f32.mrb[0].mxu0
      %8888 = vmatprep.mubr.f32.mxu0 0.0
      %8889 = vmatmul.mubr.f32.gmra.mrb[0].mxu0 %v7239
      %v8890 = vpop.f32.mrb[0].mxu0
      %v8891 = vadd.f32 0.0, %v8890
      %v8892 = vpop.f32.mrb[0].mxu0
      %8893 = vmatprep.mubr.f32.mxu0 0.0
      %8894 = vmatmul.mubr.f32.gmra.mrb[0].mxu0 %v7241
      %v8895 = vpop.f32.mrb[0].mxu0
      %v8896 = vadd.f32 0.0, %v8895
      %v8897 = vpop.f32.mrb[0].mxu0
      %8898 = vmatprep.mubr.f32.mxu0 0.0
      %8899 = vmatmul.mubr.f32.gmra.mrb[0].mxu0 %v7893
      %v8900 = vpop.f32.mrb[0].mxu0
      %v8901 = vadd.f32 0.0, %v8900
      %v8902 = vpop.f32.mrb[0].mxu0
      %8903 = vmatprep.mubr.f32.mxu0 0.0
      %8904 = vmatmul.mubr.f32.gmra.mrb[0].mxu0 %v7895
      %v8905 = vpop.f32.mrb[0].mxu0
      %v8906 = vadd.f32 0.0, %v8905
      %v8907 = vpop.f32.mrb[0].mxu0
      %8908 = vmatprep.mubr.f32.mxu0 0.0
      %8909 = vmatmul.mubr.f32.gmra.mrb[0].mxu0 %v8690
      %v8910 = vpop.f32.mrb[0].mxu0
      %v8911 = vadd.f32 0.0, %v8910
      %v8912 = vpop.f32.mrb[0].mxu0
      %8913 = vmatprep.mubr.f32.mxu0 0.0
      %8914 = vmatmul.mubr.f32.gmra.mrb[0].mxu0 %v8692
      %v8915 = vpop.f32.mrb[0].mxu0
      %v8916 = vadd.f32 0.0, %v8915
      %v8917 = vpop.f32.mrb[0].mxu0
      %8918 = vdwg.mxu0
      %v8919 = vadd.f32 %v8650, %v8761
      %v8920 = vadd.f32 %v8651, %v8766
      %v8921 = vadd.f32 %v8652, %v8771
      %v8922 = vadd.f32 %v8653, %v8776
      %v8923 = vadd.f32 %v8654, %v8781
      %v8924 = vadd.f32 %v8655, %v8786
      %v8925 = vadd.f32 %v8656, %v8791
      %v8926 = vadd.f32 %v8657, %v8796
      %v8927 = vadd.f32 %v8658, %v8801
      %v8928 = vadd.f32 %v8659, %v8806
      %v8929 = vadd.f32 %v8660, %v8811
      %v8930 = vadd.f32 %v8661, %v8816
      %v8931 = vadd.f32 %v8662, %v8821
      %v8932 = vadd.f32 %v8663, %v8826
      %v8933 = vadd.f32 %v8664, %v8831
      %v8934 = vadd.f32 %v8665, %v8836
      %v8935 = vadd.f32 %v8666, %v8841
      %v8936 = vadd.f32 %v8667, %v8846
      %v8937 = vadd.f32 %v8668, %v8851
      %v8938 = vadd.f32 %v8669, %v8856
      %v8939 = vadd.f32 %v8670, %v8861
      %v8940 = vadd.f32 %v8671, %v8866
      %v8941 = vadd.f32 %v8672, %v8871
      %v8942 = vadd.f32 %v8673, %v8876
      %v8943 = vadd.f32 %v8674, %v8881
      %v8944 = vadd.f32 %v8675, %v8886
      %v8945 = vadd.f32 %v8676, %v8891
      %v8946 = vadd.f32 %v8677, %v8896
      %v8947 = vadd.f32 %v8678, %v8901
      %v8948 = vadd.f32 %v8679, %v8906
      %v8949 = vadd.f32 %v8680, %v8911
      %v8950 = vadd.f32 %v8681, %v8916
      %v8951 = vsel %vm448, %v6759, 0
      %v8953 = vsel %vm448, %v6760, 0
      %8955 = vmatprep.subr.mxu0 0.0
      %8956 = vmatpush1.msra.mxu0 %v371
      %8957 = vmatprep.subr.mxu0 0.0
      %8958 = vmatpush1.msra.mxu0 0.0
      %8959 = vmatprep.subr.mxu0 0.0
      %8960 = vmatpush1.msra.mxu0 0.0
      %8961 = vmatprep.subr.mxu0 0.0
      %8962 = vmatpush1.msra.mxu0 0.0
      %8963 = vmatprep.subr.mxu0 0.0
      %8964 = vmatpush1.msra.mxu0 0.0
      %8965 = vmatprep.subr.mxu0 0.0
      %8966 = vmatpush1.msra.mxu0 0.0
      %8967 = vmatprep.subr.mxu0 0.0
      %8968 = vmatpush1.msra.mxu0 0.0
      %8969 = vmatprep.subr.mxu0 0.0
      %8970 = vmatpush1.msra.mxu0 0.0
      %8971 = vmatprep.subr.mxu0 0.0
      %8972 = vmatpush1.msra.mxu0 0.0
      %8973 = vmatprep.subr.mxu0 0.0
      %8974 = vmatpush1.msra.mxu0 0.0
      %8975 = vmatprep.subr.mxu0 0.0
      %8976 = vmatpush1.msra.mxu0 0.0
      %8977 = vmatprep.subr.mxu0 0.0
      %8978 = vmatpush1.msra.mxu0 0.0
      %8979 = vmatprep.subr.mxu0 0.0
      %8980 = vmatpush1.msra.mxu0 0.0
      %8981 = vmatprep.subr.mxu0 0.0
      %8982 = vmatpush1.msra.mxu0 0.0
      %8983 = vmatprep.subr.mxu0 0.0
      %8984 = vmatpush1.msra.mxu0 0.0
      %8985 = vmatprep.subr.mxu0 0.0
      %8986 = vmatpush1.msra.mxu0 0.0
      %8987 = vmatprep.subr.mxu0 0.0
      %8988 = vmatpush1.msra.mxu0 0.0
      %8989 = vmatprep.subr.mxu0 0.0
      %8990 = vmatpush1.msra.mxu0 0.0
      %8991 = vmatprep.subr.mxu0 0.0
      %8992 = vmatpush1.msra.mxu0 0.0
      %8993 = vmatprep.subr.mxu0 0.0
      %8994 = vmatpush1.msra.mxu0 0.0
      %8995 = vmatprep.subr.mxu0 0.0
      %8996 = vmatpush1.msra.mxu0 0.0
      %8997 = vmatprep.subr.mxu0 0.0
      %8998 = vmatpush1.msra.mxu0 0.0
      %8999 = vmatprep.subr.mxu0 0.0
      %9000 = vmatpush1.msra.mxu0 0.0
      %9001 = vmatprep.subr.mxu0 0.0
      %9002 = vmatpush1.msra.mxu0 0.0
      %9003 = vmatprep.subr.mxu0 0.0
      %9004 = vmatpush1.msra.mxu0 0.0
      %9005 = vmatprep.subr.mxu0 0.0
      %9006 = vmatpush1.msra.mxu0 0.0
      %9007 = vmatprep.subr.mxu0 0.0
      %9008 = vmatpush1.msra.mxu0 0.0
      %9009 = vmatprep.subr.mxu0 0.0
      %9010 = vmatpush1.msra.mxu0 0.0
      %9011 = vmatprep.subr.mxu0 0.0
      %9012 = vmatpush1.msra.mxu0 0.0
      %9013 = vmatprep.subr.mxu0 0.0
      %9014 = vmatpush1.msra.mxu0 0.0
      %9015 = vmatprep.subr.mxu0 0.0
      %9016 = vmatpush1.msra.mxu0 0.0
      %9017 = vmatprep.subr.mxu0 0.0
      %9018 = vmatpush1.msra.mxu0 0.0
      %9019 = vmatprep.mubr.f32.mxu0 0.0
      %9020 = vmatmul.mubr.f32.gmra.mrb[0].mxu0 %v6898
      %v9021 = vpop.f32.mrb[0].mxu0
      %v9022 = vadd.f32 0.0, %v9021
      %v9023 = vpop.f32.mrb[0].mxu0
      %9024 = vmatprep.mubr.f32.mxu0 0.0
      %9025 = vmatmul.mubr.f32.gmra.mrb[0].mxu0 %v6900
      %v9026 = vpop.f32.mrb[0].mxu0
      %v9027 = vadd.f32 0.0, %v9026
      %v9028 = vpop.f32.mrb[0].mxu0
      %9029 = vmatprep.mubr.f32.mxu0 0.0
      %9030 = vmatmul.mubr.f32.gmra.mrb[0].mxu0 %v6902
      %v9031 = vpop.f32.mrb[0].mxu0
      %v9032 = vadd.f32 0.0, %v9031
      %v9033 = vpop.f32.mrb[0].mxu0
      %9034 = vmatprep.mubr.f32.mxu0 0.0
      %9035 = vmatmul.mubr.f32.gmra.mrb[0].mxu0 %v6904
      %v9036 = vpop.f32.mrb[0].mxu0
      %v9037 = vadd.f32 0.0, %v9036
      %v9038 = vpop.f32.mrb[0].mxu0
      %9039 = vmatprep.mubr.f32.mxu0 0.0
      %9040 = vmatmul.mubr.f32.gmra.mrb[0].mxu0 %v6906
      %v9041 = vpop.f32.mrb[0].mxu0
      %v9042 = vadd.f32 0.0, %v9041
      %v9043 = vpop.f32.mrb[0].mxu0
      %9044 = vmatprep.mubr.f32.mxu0 0.0
      %9045 = vmatmul.mubr.f32.gmra.mrb[0].mxu0 %v6908
      %v9046 = vpop.f32.mrb[0].mxu0
      %v9047 = vadd.f32 0.0, %v9046
      %v9048 = vpop.f32.mrb[0].mxu0
      %9049 = vmatprep.mubr.f32.mxu0 0.0
      %9050 = vmatmul.mubr.f32.gmra.mrb[0].mxu0 %v6910
      %v9051 = vpop.f32.mrb[0].mxu0
      %v9052 = vadd.f32 0.0, %v9051
      %v9053 = vpop.f32.mrb[0].mxu0
      %9054 = vmatprep.mubr.f32.mxu0 0.0
      %9055 = vmatmul.mubr.f32.gmra.mrb[0].mxu0 %v6912
      %v9056 = vpop.f32.mrb[0].mxu0
      %v9057 = vadd.f32 0.0, %v9056
      %v9058 = vpop.f32.mrb[0].mxu0
      %9059 = vmatprep.mubr.f32.mxu0 0.0
      %9060 = vmatmul.mubr.f32.gmra.mrb[0].mxu0 %v6914
      %v9061 = vpop.f32.mrb[0].mxu0
      %v9062 = vadd.f32 0.0, %v9061
      %v9063 = vpop.f32.mrb[0].mxu0
      %9064 = vmatprep.mubr.f32.mxu0 0.0
      %9065 = vmatmul.mubr.f32.gmra.mrb[0].mxu0 %v6916
      %v9066 = vpop.f32.mrb[0].mxu0
      %v9067 = vadd.f32 0.0, %v9066
      %v9068 = vpop.f32.mrb[0].mxu0
      %9069 = vmatprep.mubr.f32.mxu0 0.0
      %9070 = vmatmul.mubr.f32.gmra.mrb[0].mxu0 %v6918
      %v9071 = vpop.f32.mrb[0].mxu0
      %v9072 = vadd.f32 0.0, %v9071
      %v9073 = vpop.f32.mrb[0].mxu0
      %9074 = vmatprep.mubr.f32.mxu0 0.0
      %9075 = vmatmul.mubr.f32.gmra.mrb[0].mxu0 %v6920
      %v9076 = vpop.f32.mrb[0].mxu0
      %v9077 = vadd.f32 0.0, %v9076
      %v9078 = vpop.f32.mrb[0].mxu0
      %9079 = vmatprep.mubr.f32.mxu0 0.0
      %9080 = vmatmul.mubr.f32.gmra.mrb[0].mxu0 %v6922
      %v9081 = vpop.f32.mrb[0].mxu0
      %v9082 = vadd.f32 0.0, %v9081
      %v9083 = vpop.f32.mrb[0].mxu0
      %9084 = vmatprep.mubr.f32.mxu0 0.0
      %9085 = vmatmul.mubr.f32.gmra.mrb[0].mxu0 %v6924
      %v9086 = vpop.f32.mrb[0].mxu0
      %v9087 = vadd.f32 0.0, %v9086
      %v9088 = vpop.f32.mrb[0].mxu0
      %9089 = vmatprep.mubr.f32.mxu0 0.0
      %9090 = vmatmul.mubr.f32.gmra.mrb[0].mxu0 %v6926
      %v9091 = vpop.f32.mrb[0].mxu0
      %v9092 = vadd.f32 0.0, %v9091
      %v9093 = vpop.f32.mrb[0].mxu0
      %9094 = vmatprep.mubr.f32.mxu0 0.0
      %9095 = vmatmul.mubr.f32.gmra.mrb[0].mxu0 %v6928
      %v9096 = vpop.f32.mrb[0].mxu0
      %v9097 = vadd.f32 0.0, %v9096
      %v9098 = vpop.f32.mrb[0].mxu0
      %9099 = vmatprep.mubr.f32.mxu0 0.0
      %9100 = vmatmul.mubr.f32.gmra.mrb[0].mxu0 %v6930
      %v9101 = vpop.f32.mrb[0].mxu0
      %v9102 = vadd.f32 0.0, %v9101
      %v9103 = vpop.f32.mrb[0].mxu0
      %9104 = vmatprep.mubr.f32.mxu0 0.0
      %9105 = vmatmul.mubr.f32.gmra.mrb[0].mxu0 %v6932
      %v9106 = vpop.f32.mrb[0].mxu0
      %v9107 = vadd.f32 0.0, %v9106
      %v9108 = vpop.f32.mrb[0].mxu0
      %9109 = vmatprep.mubr.f32.mxu0 0.0
      %9110 = vmatmul.mubr.f32.gmra.mrb[0].mxu0 %v6934
      %v9111 = vpop.f32.mrb[0].mxu0
      %v9112 = vadd.f32 0.0, %v9111
      %v9113 = vpop.f32.mrb[0].mxu0
      %9114 = vmatprep.mubr.f32.mxu0 0.0
      %9115 = vmatmul.mubr.f32.gmra.mrb[0].mxu0 %v6936
      %v9116 = vpop.f32.mrb[0].mxu0
      %v9117 = vadd.f32 0.0, %v9116
      %v9118 = vpop.f32.mrb[0].mxu0
      %9119 = vmatprep.mubr.f32.mxu0 0.0
      %9120 = vmatmul.mubr.f32.gmra.mrb[0].mxu0 %v6938
      %v9121 = vpop.f32.mrb[0].mxu0
      %v9122 = vadd.f32 0.0, %v9121
      %v9123 = vpop.f32.mrb[0].mxu0
      %9124 = vmatprep.mubr.f32.mxu0 0.0
      %9125 = vmatmul.mubr.f32.gmra.mrb[0].mxu0 %v6940
      %v9126 = vpop.f32.mrb[0].mxu0
      %v9127 = vadd.f32 0.0, %v9126
      %v9128 = vpop.f32.mrb[0].mxu0
      %9129 = vmatprep.mubr.f32.mxu0 0.0
      %9130 = vmatmul.mubr.f32.gmra.mrb[0].mxu0 %v6942
      %v9131 = vpop.f32.mrb[0].mxu0
      %v9132 = vadd.f32 0.0, %v9131
      %v9133 = vpop.f32.mrb[0].mxu0
      %9134 = vmatprep.mubr.f32.mxu0 0.0
      %9135 = vmatmul.mubr.f32.gmra.mrb[0].mxu0 %v6944
      %v9136 = vpop.f32.mrb[0].mxu0
      %v9137 = vadd.f32 0.0, %v9136
      %v9138 = vpop.f32.mrb[0].mxu0
      %9139 = vmatprep.mubr.f32.mxu0 0.0
      %9140 = vmatmul.mubr.f32.gmra.mrb[0].mxu0 %v6946
      %v9141 = vpop.f32.mrb[0].mxu0
      %v9142 = vadd.f32 0.0, %v9141
      %v9143 = vpop.f32.mrb[0].mxu0
      %9144 = vmatprep.mubr.f32.mxu0 0.0
      %9145 = vmatmul.mubr.f32.gmra.mrb[0].mxu0 %v6948
      %v9146 = vpop.f32.mrb[0].mxu0
      %v9147 = vadd.f32 0.0, %v9146
      %v9148 = vpop.f32.mrb[0].mxu0
      %9149 = vmatprep.mubr.f32.mxu0 0.0
      %9150 = vmatmul.mubr.f32.gmra.mrb[0].mxu0 %v6950
      %v9151 = vpop.f32.mrb[0].mxu0
      %v9152 = vadd.f32 0.0, %v9151
      %v9153 = vpop.f32.mrb[0].mxu0
      %9154 = vmatprep.mubr.f32.mxu0 0.0
      %9155 = vmatmul.mubr.f32.gmra.mrb[0].mxu0 %v6952
      %v9156 = vpop.f32.mrb[0].mxu0
      %v9157 = vadd.f32 0.0, %v9156
      %v9158 = vpop.f32.mrb[0].mxu0
      %9159 = vmatprep.mubr.f32.mxu0 0.0
      %9160 = vmatmul.mubr.f32.gmra.mrb[0].mxu0 %v8154
      %v9161 = vpop.f32.mrb[0].mxu0
      %v9162 = vadd.f32 0.0, %v9161
      %v9163 = vpop.f32.mrb[0].mxu0
      %9164 = vmatprep.mubr.f32.mxu0 0.0
      %9165 = vmatmul.mubr.f32.gmra.mrb[0].mxu0 %v8156
      %v9166 = vpop.f32.mrb[0].mxu0
      %v9167 = vadd.f32 0.0, %v9166
      %v9168 = vpop.f32.mrb[0].mxu0
      %9169 = vmatprep.mubr.f32.mxu0 0.0
      %9170 = vmatmul.mubr.f32.gmra.mrb[0].mxu0 %v8951
      %v9171 = vpop.f32.mrb[0].mxu0
      %v9172 = vadd.f32 0.0, %v9171
      %v9173 = vpop.f32.mrb[0].mxu0
      %9174 = vmatprep.mubr.f32.mxu0 0.0
      %9175 = vmatmul.mubr.f32.gmra.mrb[0].mxu0 %v8953
      %v9176 = vpop.f32.mrb[0].mxu0
      %v9177 = vadd.f32 0.0, %v9176
      %v9178 = vpop.f32.mrb[0].mxu0
      %9179 = vdwg.mxu0
      %v9180 = vadd.f32 %v8919, %v9022
      %v9181 = vadd.f32 %v8920, %v9027
      %v9182 = vadd.f32 %v8921, %v9032
      %v9183 = vadd.f32 %v8922, %v9037
      %v9184 = vadd.f32 %v8923, %v9042
      %v9185 = vadd.f32 %v8924, %v9047
      %v9186 = vadd.f32 %v8925, %v9052
      %v9187 = vadd.f32 %v8926, %v9057
      %v9188 = vadd.f32 %v8927, %v9062
      %v9189 = vadd.f32 %v8928, %v9067
      %v9190 = vadd.f32 %v8929, %v9072
      %v9191 = vadd.f32 %v8930, %v9077
      %v9192 = vadd.f32 %v8931, %v9082
      %v9193 = vadd.f32 %v8932, %v9087
      %v9194 = vadd.f32 %v8933, %v9092
      %v9195 = vadd.f32 %v8934, %v9097
      %v9196 = vadd.f32 %v8935, %v9102
      %v9197 = vadd.f32 %v8936, %v9107
      %v9198 = vadd.f32 %v8937, %v9112
      %v9199 = vadd.f32 %v8938, %v9117
      %v9200 = vadd.f32 %v8939, %v9122
      %v9201 = vadd.f32 %v8940, %v9127
      %v9202 = vadd.f32 %v8941, %v9132
      %v9203 = vadd.f32 %v8942, %v9137
      %v9204 = vadd.f32 %v8943, %v9142
      %v9205 = vadd.f32 %v8944, %v9147
      %v9206 = vadd.f32 %v8945, %v9152
      %v9207 = vadd.f32 %v8946, %v9157
      %v9208 = vadd.f32 %v8947, %v9162
      %v9209 = vadd.f32 %v8948, %v9167
      %v9210 = vadd.f32 %v8949, %v9172
      %v9211 = vadd.f32 %v8950, %v9177
      %v9213 = vrot.slane %v6759, 1
      %v9214 = vrot.slane %v6760, 1
      %v9215 = vsel %vm1749, %v9213, %v9214
      %v9216 = vrot.slane %v6761, 1
      %v9217 = vsel %vm1749, %v9214, %v9216
      %v9218 = vsel %vm448, %v9215, 0
      %v9220 = vsel %vm448, %v9217, 0
      %9222 = vmatprep.subr.mxu0 0.0
      %9223 = vmatpush1.msra.mxu0 %v372
      %9224 = vmatprep.subr.mxu0 0.0
      %9225 = vmatpush1.msra.mxu0 0.0
      %9226 = vmatprep.subr.mxu0 0.0
      %9227 = vmatpush1.msra.mxu0 0.0
      %9228 = vmatprep.subr.mxu0 0.0
      %9229 = vmatpush1.msra.mxu0 0.0
      %9230 = vmatprep.subr.mxu0 0.0
      %9231 = vmatpush1.msra.mxu0 0.0
      %9232 = vmatprep.subr.mxu0 0.0
      %9233 = vmatpush1.msra.mxu0 0.0
      %9234 = vmatprep.subr.mxu0 0.0
      %9235 = vmatpush1.msra.mxu0 0.0
      %9236 = vmatprep.subr.mxu0 0.0
      %9237 = vmatpush1.msra.mxu0 0.0
      %9238 = vmatprep.subr.mxu0 0.0
      %9239 = vmatpush1.msra.mxu0 0.0
      %9240 = vmatprep.subr.mxu0 0.0
      %9241 = vmatpush1.msra.mxu0 0.0
      %9242 = vmatprep.subr.mxu0 0.0
      %9243 = vmatpush1.msra.mxu0 0.0
      %9244 = vmatprep.subr.mxu0 0.0
      %9245 = vmatpush1.msra.mxu0 0.0
      %9246 = vmatprep.subr.mxu0 0.0
      %9247 = vmatpush1.msra.mxu0 0.0
      %9248 = vmatprep.subr.mxu0 0.0
      %9249 = vmatpush1.msra.mxu0 0.0
      %9250 = vmatprep.subr.mxu0 0.0
      %9251 = vmatpush1.msra.mxu0 0.0
      %9252 = vmatprep.subr.mxu0 0.0
      %9253 = vmatpush1.msra.mxu0 0.0
      %9254 = vmatprep.subr.mxu0 0.0
      %9255 = vmatpush1.msra.mxu0 0.0
      %9256 = vmatprep.subr.mxu0 0.0
      %9257 = vmatpush1.msra.mxu0 0.0
      %9258 = vmatprep.subr.mxu0 0.0
      %9259 = vmatpush1.msra.mxu0 0.0
      %9260 = vmatprep.subr.mxu0 0.0
      %9261 = vmatpush1.msra.mxu0 0.0
      %9262 = vmatprep.subr.mxu0 0.0
      %9263 = vmatpush1.msra.mxu0 0.0
      %9264 = vmatprep.subr.mxu0 0.0
      %9265 = vmatpush1.msra.mxu0 0.0
      %9266 = vmatprep.subr.mxu0 0.0
      %9267 = vmatpush1.msra.mxu0 0.0
      %9268 = vmatprep.subr.mxu0 0.0
      %9269 = vmatpush1.msra.mxu0 0.0
      %9270 = vmatprep.subr.mxu0 0.0
      %9271 = vmatpush1.msra.mxu0 0.0
      %9272 = vmatprep.subr.mxu0 0.0
      %9273 = vmatpush1.msra.mxu0 0.0
      %9274 = vmatprep.subr.mxu0 0.0
      %9275 = vmatpush1.msra.mxu0 0.0
      %9276 = vmatprep.subr.mxu0 0.0
      %9277 = vmatpush1.msra.mxu0 0.0
      %9278 = vmatprep.subr.mxu0 0.0
      %9279 = vmatpush1.msra.mxu0 0.0
      %9280 = vmatprep.subr.mxu0 0.0
      %9281 = vmatpush1.msra.mxu0 0.0
      %9282 = vmatprep.subr.mxu0 0.0
      %9283 = vmatpush1.msra.mxu0 0.0
      %9284 = vmatprep.subr.mxu0 0.0
      %9285 = vmatpush1.msra.mxu0 0.0
      %9286 = vmatprep.mubr.f32.mxu0 0.0
      %9287 = vmatmul.mubr.f32.gmra.mrb[0].mxu0 %v7572
      %v9288 = vpop.f32.mrb[0].mxu0
      %v9289 = vadd.f32 0.0, %v9288
      %v9290 = vpop.f32.mrb[0].mxu0
      %9291 = vmatprep.mubr.f32.mxu0 0.0
      %9292 = vmatmul.mubr.f32.gmra.mrb[0].mxu0 %v7574
      %v9293 = vpop.f32.mrb[0].mxu0
      %v9294 = vadd.f32 0.0, %v9293
      %v9295 = vpop.f32.mrb[0].mxu0
      %9296 = vmatprep.mubr.f32.mxu0 0.0
      %9297 = vmatmul.mubr.f32.gmra.mrb[0].mxu0 %v7576
      %v9298 = vpop.f32.mrb[0].mxu0
      %v9299 = vadd.f32 0.0, %v9298
      %v9300 = vpop.f32.mrb[0].mxu0
      %9301 = vmatprep.mubr.f32.mxu0 0.0
      %9302 = vmatmul.mubr.f32.gmra.mrb[0].mxu0 %v7578
      %v9303 = vpop.f32.mrb[0].mxu0
      %v9304 = vadd.f32 0.0, %v9303
      %v9305 = vpop.f32.mrb[0].mxu0
      %9306 = vmatprep.mubr.f32.mxu0 0.0
      %9307 = vmatmul.mubr.f32.gmra.mrb[0].mxu0 %v7580
      %v9308 = vpop.f32.mrb[0].mxu0
      %v9309 = vadd.f32 0.0, %v9308
      %v9310 = vpop.f32.mrb[0].mxu0
      %9311 = vmatprep.mubr.f32.mxu0 0.0
      %9312 = vmatmul.mubr.f32.gmra.mrb[0].mxu0 %v7582
      %v9313 = vpop.f32.mrb[0].mxu0
      %v9314 = vadd.f32 0.0, %v9313
      %v9315 = vpop.f32.mrb[0].mxu0
      %9316 = vmatprep.mubr.f32.mxu0 0.0
      %9317 = vmatmul.mubr.f32.gmra.mrb[0].mxu0 %v7584
      %v9318 = vpop.f32.mrb[0].mxu0
      %v9319 = vadd.f32 0.0, %v9318
      %v9320 = vpop.f32.mrb[0].mxu0
      %9321 = vmatprep.mubr.f32.mxu0 0.0
      %9322 = vmatmul.mubr.f32.gmra.mrb[0].mxu0 %v7586
      %v9323 = vpop.f32.mrb[0].mxu0
      %v9324 = vadd.f32 0.0, %v9323
      %v9325 = vpop.f32.mrb[0].mxu0
      %9326 = vmatprep.mubr.f32.mxu0 0.0
      %9327 = vmatmul.mubr.f32.gmra.mrb[0].mxu0 %v7588
      %v9328 = vpop.f32.mrb[0].mxu0
      %v9329 = vadd.f32 0.0, %v9328
      %v9330 = vpop.f32.mrb[0].mxu0
      %9331 = vmatprep.mubr.f32.mxu0 0.0
      %9332 = vmatmul.mubr.f32.gmra.mrb[0].mxu0 %v7590
      %v9333 = vpop.f32.mrb[0].mxu0
      %v9334 = vadd.f32 0.0, %v9333
      %v9335 = vpop.f32.mrb[0].mxu0
      %9336 = vmatprep.mubr.f32.mxu0 0.0
      %9337 = vmatmul.mubr.f32.gmra.mrb[0].mxu0 %v7592
      %v9338 = vpop.f32.mrb[0].mxu0
      %v9339 = vadd.f32 0.0, %v9338
      %v9340 = vpop.f32.mrb[0].mxu0
      %9341 = vmatprep.mubr.f32.mxu0 0.0
      %9342 = vmatmul.mubr.f32.gmra.mrb[0].mxu0 %v7594
      %v9343 = vpop.f32.mrb[0].mxu0
      %v9344 = vadd.f32 0.0, %v9343
      %v9345 = vpop.f32.mrb[0].mxu0
      %9346 = vmatprep.mubr.f32.mxu0 0.0
      %9347 = vmatmul.mubr.f32.gmra.mrb[0].mxu0 %v7596
      %v9348 = vpop.f32.mrb[0].mxu0
      %v9349 = vadd.f32 0.0, %v9348
      %v9350 = vpop.f32.mrb[0].mxu0
      %9351 = vmatprep.mubr.f32.mxu0 0.0
      %9352 = vmatmul.mubr.f32.gmra.mrb[0].mxu0 %v7598
      %v9353 = vpop.f32.mrb[0].mxu0
      %v9354 = vadd.f32 0.0, %v9353
      %v9355 = vpop.f32.mrb[0].mxu0
      %9356 = vmatprep.mubr.f32.mxu0 0.0
      %9357 = vmatmul.mubr.f32.gmra.mrb[0].mxu0 %v7600
      %v9358 = vpop.f32.mrb[0].mxu0
      %v9359 = vadd.f32 0.0, %v9358
      %v9360 = vpop.f32.mrb[0].mxu0
      %9361 = vmatprep.mubr.f32.mxu0 0.0
      %9362 = vmatmul.mubr.f32.gmra.mrb[0].mxu0 %v7602
      %v9363 = vpop.f32.mrb[0].mxu0
      %v9364 = vadd.f32 0.0, %v9363
      %v9365 = vpop.f32.mrb[0].mxu0
      %9366 = vmatprep.mubr.f32.mxu0 0.0
      %9367 = vmatmul.mubr.f32.gmra.mrb[0].mxu0 %v7604
      %v9368 = vpop.f32.mrb[0].mxu0
      %v9369 = vadd.f32 0.0, %v9368
      %v9370 = vpop.f32.mrb[0].mxu0
      %9371 = vmatprep.mubr.f32.mxu0 0.0
      %9372 = vmatmul.mubr.f32.gmra.mrb[0].mxu0 %v7606
      %v9373 = vpop.f32.mrb[0].mxu0
      %v9374 = vadd.f32 0.0, %v9373
      %v9375 = vpop.f32.mrb[0].mxu0
      %9376 = vmatprep.mubr.f32.mxu0 0.0
      %9377 = vmatmul.mubr.f32.gmra.mrb[0].mxu0 %v7608
      %v9378 = vpop.f32.mrb[0].mxu0
      %v9379 = vadd.f32 0.0, %v9378
      %v9380 = vpop.f32.mrb[0].mxu0
      %9381 = vmatprep.mubr.f32.mxu0 0.0
      %9382 = vmatmul.mubr.f32.gmra.mrb[0].mxu0 %v7610
      %v9383 = vpop.f32.mrb[0].mxu0
      %v9384 = vadd.f32 0.0, %v9383
      %v9385 = vpop.f32.mrb[0].mxu0
      %9386 = vmatprep.mubr.f32.mxu0 0.0
      %9387 = vmatmul.mubr.f32.gmra.mrb[0].mxu0 %v7612
      %v9388 = vpop.f32.mrb[0].mxu0
      %v9389 = vadd.f32 0.0, %v9388
      %v9390 = vpop.f32.mrb[0].mxu0
      %9391 = vmatprep.mubr.f32.mxu0 0.0
      %9392 = vmatmul.mubr.f32.gmra.mrb[0].mxu0 %v7614
      %v9393 = vpop.f32.mrb[0].mxu0
      %v9394 = vadd.f32 0.0, %v9393
      %v9395 = vpop.f32.mrb[0].mxu0
      %9396 = vmatprep.mubr.f32.mxu0 0.0
      %9397 = vmatmul.mubr.f32.gmra.mrb[0].mxu0 %v7616
      %v9398 = vpop.f32.mrb[0].mxu0
      %v9399 = vadd.f32 0.0, %v9398
      %v9400 = vpop.f32.mrb[0].mxu0
      %9401 = vmatprep.mubr.f32.mxu0 0.0
      %9402 = vmatmul.mubr.f32.gmra.mrb[0].mxu0 %v7618
      %v9403 = vpop.f32.mrb[0].mxu0
      %v9404 = vadd.f32 0.0, %v9403
      %v9405 = vpop.f32.mrb[0].mxu0
      %9406 = vmatprep.mubr.f32.mxu0 0.0
      %9407 = vmatmul.mubr.f32.gmra.mrb[0].mxu0 %v7620
      %v9408 = vpop.f32.mrb[0].mxu0
      %v9409 = vadd.f32 0.0, %v9408
      %v9410 = vpop.f32.mrb[0].mxu0
      %9411 = vmatprep.mubr.f32.mxu0 0.0
      %9412 = vmatmul.mubr.f32.gmra.mrb[0].mxu0 %v7622
      %v9413 = vpop.f32.mrb[0].mxu0
      %v9414 = vadd.f32 0.0, %v9413
      %v9415 = vpop.f32.mrb[0].mxu0
      %9416 = vmatprep.mubr.f32.mxu0 0.0
      %9417 = vmatmul.mubr.f32.gmra.mrb[0].mxu0 %v7624
      %v9418 = vpop.f32.mrb[0].mxu0
      %v9419 = vadd.f32 0.0, %v9418
      %v9420 = vpop.f32.mrb[0].mxu0
      %9421 = vmatprep.mubr.f32.mxu0 0.0
      %9422 = vmatmul.mubr.f32.gmra.mrb[0].mxu0 %v7626
      %v9423 = vpop.f32.mrb[0].mxu0
      %v9424 = vadd.f32 0.0, %v9423
      %v9425 = vpop.f32.mrb[0].mxu0
      %9426 = vmatprep.mubr.f32.mxu0 0.0
      %9427 = vmatmul.mubr.f32.gmra.mrb[0].mxu0 %v8421
      %v9428 = vpop.f32.mrb[0].mxu0
      %v9429 = vadd.f32 0.0, %v9428
      %v9430 = vpop.f32.mrb[0].mxu0
      %9431 = vmatprep.mubr.f32.mxu0 0.0
      %9432 = vmatmul.mubr.f32.gmra.mrb[0].mxu0 %v8423
      %v9433 = vpop.f32.mrb[0].mxu0
      %v9434 = vadd.f32 0.0, %v9433
      %v9435 = vpop.f32.mrb[0].mxu0
      %9436 = vmatprep.mubr.f32.mxu0 0.0
      %9437 = vmatmul.mubr.f32.gmra.mrb[0].mxu0 %v9218
      %v9438 = vpop.f32.mrb[0].mxu0
      %v9439 = vadd.f32 0.0, %v9438
      %v9440 = vpop.f32.mrb[0].mxu0
      %9441 = vmatprep.mubr.f32.mxu0 0.0
      %9442 = vmatmul.mubr.f32.gmra.mrb[0].mxu0 %v9220
      %v9443 = vpop.f32.mrb[0].mxu0
      %v9444 = vadd.f32 0.0, %v9443
      %v9445 = vpop.f32.mrb[0].mxu0
      %9446 = vdwg.mxu0
      %v9447 = vadd.f32 %v9180, %v9289
      %v9448 = vadd.f32 %v9181, %v9294
      %v9449 = vadd.f32 %v9182, %v9299
      %v9450 = vadd.f32 %v9183, %v9304
      %v9451 = vadd.f32 %v9184, %v9309
      %v9452 = vadd.f32 %v9185, %v9314
      %v9453 = vadd.f32 %v9186, %v9319
      %v9454 = vadd.f32 %v9187, %v9324
      %v9455 = vadd.f32 %v9188, %v9329
      %v9456 = vadd.f32 %v9189, %v9334
      %v9457 = vadd.f32 %v9190, %v9339
      %v9458 = vadd.f32 %v9191, %v9344
      %v9459 = vadd.f32 %v9192, %v9349
      %v9460 = vadd.f32 %v9193, %v9354
      %v9461 = vadd.f32 %v9194, %v9359
      %v9462 = vadd.f32 %v9195, %v9364
      %v9463 = vadd.f32 %v9196, %v9369
      %v9464 = vadd.f32 %v9197, %v9374
      %v9465 = vadd.f32 %v9198, %v9379
      %v9466 = vadd.f32 %v9199, %v9384
      %v9467 = vadd.f32 %v9200, %v9389
      %v9468 = vadd.f32 %v9201, %v9394
      %v9469 = vadd.f32 %v9202, %v9399
      %v9470 = vadd.f32 %v9203, %v9404
      %v9471 = vadd.f32 %v9204, %v9409
      %v9472 = vadd.f32 %v9205, %v9414
      %v9473 = vadd.f32 %v9206, %v9419
      %v9474 = vadd.f32 %v9207, %v9424
      %v9475 = vadd.f32 %v9208, %v9429
      %v9476 = vadd.f32 %v9209, %v9434
      %v9477 = vadd.f32 %v9210, %v9439
      %v9478 = vadd.f32 %v9211, %v9444
      %v9480 = vlaneseq
      %v9481 = vshrl.u32 %v9480, 7
      %v9482 = vsub.s32 0, %v9481
      %v9483 = vrot.slane %v374, %v9482
      %v9485 = vadd.f32 %v9447, %v9483
      %v9486 = vadd.f32 %v9448, %v9483
      %v9487 = vadd.f32 %v9449, %v9483
      %v9488 = vadd.f32 %v9450, %v9483
      %v9489 = vadd.f32 %v9451, %v9483
      %v9490 = vadd.f32 %v9452, %v9483
      %v9491 = vadd.f32 %v9453, %v9483
      %v9492 = vadd.f32 %v9454, %v9483
      %v9493 = vadd.f32 %v9455, %v9483
      %v9494 = vadd.f32 %v9456, %v9483
      %v9495 = vadd.f32 %v9457, %v9483
      %v9496 = vadd.f32 %v9458, %v9483
      %v9497 = vadd.f32 %v9459, %v9483
      %v9498 = vadd.f32 %v9460, %v9483
      %v9499 = vadd.f32 %v9461, %v9483
      %v9500 = vadd.f32 %v9462, %v9483
      %v9501 = vadd.f32 %v9463, %v9483
      %v9502 = vadd.f32 %v9464, %v9483
      %v9503 = vadd.f32 %v9465, %v9483
      %v9504 = vadd.f32 %v9466, %v9483
      %v9505 = vadd.f32 %v9467, %v9483
      %v9506 = vadd.f32 %v9468, %v9483
      %v9507 = vadd.f32 %v9469, %v9483
      %v9508 = vadd.f32 %v9470, %v9483
      %v9509 = vadd.f32 %v9471, %v9483
      %v9510 = vadd.f32 %v9472, %v9483
      %v9511 = vadd.f32 %v9473, %v9483
      %v9512 = vadd.f32 %v9474, %v9483
      %v9513 = vadd.f32 %v9475, %v9483
      %v9514 = vadd.f32 %v9476, %v9483
      %v9515 = vadd.f32 %v9477, %v9483
      %v9516 = vadd.f32 %v9478, %v9483
      %v9517 = vmax.f32 %v9485, 0.0
      %v9518 = vmax.f32 %v9486, 0.0
      %v9519 = vmax.f32 %v9487, 0.0
      %v9520 = vmax.f32 %v9488, 0.0
      %v9521 = vmax.f32 %v9489, 0.0
      %v9522 = vmax.f32 %v9490, 0.0
      %v9523 = vmax.f32 %v9491, 0.0
      %v9524 = vmax.f32 %v9492, 0.0
      %v9525 = vmax.f32 %v9493, 0.0
      %v9526 = vmax.f32 %v9494, 0.0
      %v9527 = vmax.f32 %v9495, 0.0
      %v9528 = vmax.f32 %v9496, 0.0
      %v9529 = vmax.f32 %v9497, 0.0
      %v9530 = vmax.f32 %v9498, 0.0
      %v9531 = vmax.f32 %v9499, 0.0
      %v9532 = vmax.f32 %v9500, 0.0
      %v9533 = vmax.f32 %v9501, 0.0
      %v9534 = vmax.f32 %v9502, 0.0
      %v9535 = vmax.f32 %v9503, 0.0
      %v9536 = vmax.f32 %v9504, 0.0
      %v9537 = vmax.f32 %v9505, 0.0
      %v9538 = vmax.f32 %v9506, 0.0
      %v9539 = vmax.f32 %v9507, 0.0
      %v9540 = vmax.f32 %v9508, 0.0
      %v9541 = vmax.f32 %v9509, 0.0
      %v9542 = vmax.f32 %v9510, 0.0
      %v9543 = vmax.f32 %v9511, 0.0
      %v9544 = vmax.f32 %v9512, 0.0
      %v9545 = vmax.f32 %v9513, 0.0
      %v9546 = vmax.f32 %v9514, 0.0
      %v9547 = vmax.f32 %v9515, 0.0
      %v9548 = vmax.f32 %v9516, 0.0
      %9549 = vst.msk [vmem:[%s345] sm:$0xff] %vm448, %v9517
      %9550 = vst.msk [vmem:[%s345 + $0x8] sm:$0xff] %vm448, %v9518
      %9551 = vst.msk [vmem:[%s345 + $0x10] sm:$0xff] %vm448, %v9519
      %9552 = vst.msk [vmem:[%s345 + $0x18] sm:$0xff] %vm448, %v9520
      %9553 = vst.msk [vmem:[%s345 + $0x20] sm:$0xff] %vm448, %v9521
      %9554 = vst.msk [vmem:[%s345 + $0x28] sm:$0xff] %vm448, %v9522
      %9555 = vst.msk [vmem:[%s345 + $0x30] sm:$0xff] %vm448, %v9523
      %9556 = vst.msk [vmem:[%s345 + $0x38] sm:$0xff] %vm448, %v9524
      %9557 = vst.msk [vmem:[%s345 + $0x40] sm:$0xff] %vm448, %v9525
      %9558 = vst.msk [vmem:[%s345 + $0x48] sm:$0xff] %vm448, %v9526
      %9559 = vst.msk [vmem:[%s345 + $0x50] sm:$0xff] %vm448, %v9527
      %9560 = vst.msk [vmem:[%s345 + $0x58] sm:$0xff] %vm448, %v9528
      %9561 = vst.msk [vmem:[%s345 + $0x60] sm:$0xff] %vm448, %v9529
      %9562 = vst.msk [vmem:[%s345 + $0x68] sm:$0xff] %vm448, %v9530
      %9563 = vst.msk [vmem:[%s345 + $0x70] sm:$0xff] %vm448, %v9531
      %9564 = vst.msk [vmem:[%s345 + $0x78] sm:$0xff] %vm448, %v9532
      %9565 = vst.msk [vmem:[%s345 + $0x80] sm:$0xff] %vm448, %v9533
      %9566 = vst.msk [vmem:[%s345 + $0x88] sm:$0xff] %vm448, %v9534
      %9567 = vst.msk [vmem:[%s345 + $0x90] sm:$0xff] %vm448, %v9535
      %9568 = vst.msk [vmem:[%s345 + $0x98] sm:$0xff] %vm448, %v9536
      %9569 = vst.msk [vmem:[%s345 + $0xa0] sm:$0xff] %vm448, %v9537
      %9570 = vst.msk [vmem:[%s345 + $0xa8] sm:$0xff] %vm448, %v9538
      %9571 = vst.msk [vmem:[%s345 + $0xb0] sm:$0xff] %vm448, %v9539
      %9572 = vst.msk [vmem:[%s345 + $0xb8] sm:$0xff] %vm448, %v9540
      %9573 = vst.msk [vmem:[%s345 + $0xc0] sm:$0xff] %vm448, %v9541
      %9574 = vst.msk [vmem:[%s345 + $0xc8] sm:$0xff] %vm448, %v9542
      %9575 = vst.msk [vmem:[%s345 + $0xd0] sm:$0xff] %vm448, %v9543
      %9576 = vst.msk [vmem:[%s345 + $0xd8] sm:$0xff] %vm448, %v9544
      %9577 = vst.msk [vmem:[%s345 + $0xe0] sm:$0xff] %vm448, %v9545
      %9578 = vst.msk [vmem:[%s345 + $0xe8] sm:$0xff] %vm448, %v9546
      %9579 = vst.msk [vmem:[%s345 + $0xf0] sm:$0xff] %vm448, %v9547
      %9580 = vst.msk [vmem:[%s345 + $0xf8] sm:$0xff] %vm448, %v9548
      %p9581 = scmp.lt.s32.totalorder %s19, 1
      %s9582 = scalar_select %p9581, %s19, 1
      %s9583 = smul.addr %s9582, 32
      %s9584 = smul.addr %s9583, 8
      %s9585 = scalar_lea.vmem %s8, %s9584
      // Predicated region
      $region53: #{upsampling_forward.3} parent=51 // pred_check
        %p9586 = pneg %p220
      $region54: #{upsampling_forward.3} parent=51 // pred_check_branch
        %9588 = sbr.rel (%p9586) target = $region56
      $region55: #{upsampling_forward.3} parent=51 // pred_region
        _
      $region56: #{upsampling_forward.3} parent=51 // pred_fallthru
        _
    $region52: #{upsampling_forward.3} parent=5 // pred_fallthru
      _
    %p9589 = scmp.le.s32.totalorder 2, %s14
    // Predicated region
    $region57: #{upsampling_forward.3} parent=5 // pred_check
      %p9590 = pneg %p9589
    $region58: #{upsampling_forward.3} parent=5 // pred_check_branch
      %9592 = sbr.rel (%p9590) target = $region60
    $region59: #{upsampling_forward.3} parent=5 // pred_region
      %s9593 = ssub.s32 %s14, 2
      // Predicated region
      $region61: #{upsampling_forward.3} parent=59 // pred_check
        %p9594 = pneg %p226
      $region62: #{upsampling_forward.3} parent=59 // pred_check_branch
        %9596 = sbr.rel (%p9594) target = $region64
      $region63: #{upsampling_forward.3} parent=59 // pred_region
        %p9597 = scmp.lt.s32.totalorder %s20, 1
        %s9598 = scalar_select %p9597, %s20, 1
        %s9599 = smul.addr %s9598, 32
        %s9600 = smul.addr %s9599, 8
        %s9601 = scalar_lea.vmem %s8, %s9600
      $region64: #{upsampling_forward.3} parent=59 // pred_fallthru
        _
    $region60: #{upsampling_forward.3} parent=5 // pred_fallthru
      _
  $region6: #{upsampling_forward.3} parent=0 // loop_footer
    %s18 = sadd.s32 1, %s14
  $region7: #{upsampling_forward.3} parent=0 // loop_footer_branch
    %13 = sbr.rel target = $region3
  $region8: #{upsampling_forward.3} parent=0 // loop_exit
    _

</llo_original>
